<compile_context>
chip_gen: v7x
topology: tpu7x:2x2x1
jax: 0.10.0
libtpu: 0.0.40
codegen_flags: <defaults>
</compile_context>

<pallas_src>
import functools

import jax
import jax.numpy as jnp
from jax.experimental import pallas as pl
from jax.experimental.pallas import tpu as pltpu

EPS = 1e-5
LANE = 128


def _conv_bn_tanh_kernel(x_ref, w_ref, g_ref, be_ref, o_ref, *,
                         n_batch, n_groups, ho, wo, wo_pad):
    """Fused conv (wide-MXU kh-pair matmuls) + training-mode BN + tanh.

    x_ref : (N, Hq*Wo_pad, 2*KW*Cin) bf16   H-phase-concat, KW-unrolled input
    w_ref : (n_groups, 2*KW*Cin, 256) bf16  two kh-pair weight slabs per group,
                                            packed side by side along lanes
    g_ref, be_ref : (1, 128) f32            BN gamma / beta (Cout padded)
    o_ref : (N*Ho*Wo_pad, 128)   f32
    """
    mb = ho * wo_pad                 # output rows per batch element (incl. pad cols)
    mbx = mb + wo_pad                # extended rows: odd kh-pair lands one row late
    ncp = o_ref.shape[1]             # 128
    inv_cnt = 1.0 / float(n_batch * ho * wo)

    tot_s = jnp.zeros((1, ncp), jnp.float32)
    tot_s2 = jnp.zeros((1, ncp), jnp.float32)

    # ---- pass 1: convolution + per-channel sum / sum-of-squares ----
    for n in range(n_batch):
        acc2 = None
        for g in range(n_groups):
            r0 = 2 * g * wo_pad                       # multiple of 16 -> aligned slice
            lhs = x_ref[n, r0:r0 + mbx, :]            # (mbx, 2*KW*Cin) bf16
            p = jnp.dot(lhs, w_ref[g], preferred_element_type=jnp.float32)
            acc2 = p if acc2 is None else acc2 + p    # (mbx, 256) f32
        # Lanes [128,256) hold the odd kh-pair of each group, computed one output
        # row "late": shift down by one Wo_pad row block and fold onto lanes [0,128).
        acc = acc2[:mb, :ncp] + acc2[wo_pad:wo_pad + mb, ncp:]

        # BN statistics over the real (non-padded) output columns only.
        ridx = jax.lax.broadcasted_iota(jnp.int32, (mb, ncp), 0)
        valid = (ridx % wo_pad) < wo
        am = jnp.where(valid, acc, 0.0)
        tot_s = tot_s + jnp.sum(am, axis=0, keepdims=True)
        tot_s2 = tot_s2 + jnp.sum(am * acc, axis=0, keepdims=True)
        o_ref[n * mb:(n + 1) * mb, :] = acc           # raw conv output (pre-BN)

    mean = tot_s * inv_cnt
    var = tot_s2 * inv_cnt - mean * mean              # biased (training-mode) variance
    scale = jax.lax.rsqrt(var + EPS) * g_ref[...]
    shift = be_ref[...] - mean * scale

    # ---- pass 2: normalize + affine + tanh (conv rows re-read from VMEM) ----
    for n in range(n_batch):
        y = o_ref[n * mb:(n + 1) * mb, :]
        o_ref[n * mb:(n + 1) * mb, :] = jnp.tanh(y * scale + shift)


def model_forward(x_nchw, weight, bias, gamma, beta):
    """x_nchw: (N, 33, H, W) f32. weight: (83, 33, 8, 8). Returns (N, 83, Ho, Wo)."""
    N, Cin, H, W = x_nchw.shape
    Cout, _, KH, KW = weight.shape
    stride, pad = 2, 2
    Ho = (H + 2 * pad - KH) // stride + 1
    Wo = (W + 2 * pad - KW) // stride + 1

    # Lane / sublane friendly padded sizes.
    Wo_pad = ((Wo + 15) // 16) * 16          # bf16 sublane tile multiple
    Cout_pad = LANE                          # lane-dense output
    KH_pad = KH + (KH % 2)                   # even number of kh taps
    n_pairs = KH_pad // 2                    # kh pairs (even/odd phase)
    n_groups = (n_pairs + 1) // 2            # two pairs per 256-wide MXU pass
    n_pairs_pad = 2 * n_groups
    Kd = KW * Cin

    Hq = max(Ho + 2 * n_groups - 1, -(-(H + 2 * pad) // 2))   # rows per H-phase
    Hpad = 2 * Hq
    Wpad = max(W + 2 * pad, (KW - 1) + stride * (Wo_pad - 1) + 1)

    # ---- wrapper glue (cast to bf16 first to halve the glue bandwidth) ----
    x = jnp.transpose(x_nchw.astype(jnp.bfloat16), (0, 2, 3, 1))          # NHWC bf16
    xp = jnp.pad(x, ((0, 0), (pad, Hpad - H - pad),
                     (pad, Wpad - W - pad), (0, 0)))                      # (N,Hpad,Wpad,Cin)
    # KW-unroll along channels: a_w[n,h,ow, kw*Cin+c] = xp[n, h, 2*ow+kw, c]
    a_w = jnp.concatenate(
        [xp[:, :, kw:kw + stride * Wo_pad:stride, :] for kw in range(KW)],
        axis=-1)                                                          # (N,Hpad,Wo_pad,KW*Cin)
    # Concatenate the even/odd H phases along the contraction axis (K = 2*KW*Cin).
    x_k = (a_w.reshape(N, Hq, 2, Wo_pad, Kd)
              .transpose(0, 1, 3, 2, 4)
              .reshape(N, Hq * Wo_pad, 2 * Kd))                           # bf16

    # Weights: (Cout,Cin,KH,KW) -> kh-pair slabs (n_pairs, 2*Kd, Cout_pad), then
    # pack two pairs side by side along lanes -> (n_groups, 2*Kd, 2*Cout_pad).
    w_t = jnp.transpose(weight, (2, 3, 1, 0)).reshape(KH, Kd, Cout)
    w_t = jnp.pad(w_t, ((0, 2 * n_pairs_pad - KH), (0, 0), (0, Cout_pad - Cout)))
    w_g = (w_t.reshape(n_pairs_pad, 2 * Kd, Cout_pad)
              .reshape(n_groups, 2, 2 * Kd, Cout_pad)
              .transpose(0, 2, 1, 3)
              .reshape(n_groups, 2 * Kd, 2 * Cout_pad)
              .astype(jnp.bfloat16))

    def pad_vec(v):
        return jnp.pad(v.astype(jnp.float32), (0, Cout_pad - Cout)).reshape(1, Cout_pad)

    g2, be2 = pad_vec(gamma), pad_vec(beta)
    # Conv bias is dropped on purpose: a per-channel constant added before
    # training-mode BatchNorm cancels exactly in (y - mean(y)).
    del bias

    M_pad = N * Ho * Wo_pad
    kernel = functools.partial(_conv_bn_tanh_kernel, n_batch=N, n_groups=n_groups,
                               ho=Ho, wo=Wo, wo_pad=Wo_pad)
    vmem_spec = pl.BlockSpec(memory_space=pltpu.MemorySpace.VMEM)

    io_bytes = (x_k.size * 2 + w_g.size * 2 + 2 * Cout_pad * 4 + M_pad * Cout_pad * 4)
    # ~16 MiB covers the real footprint (~8 MiB at the reference size) with margin
    # for compiler temporaries, while leaving most of v7x's 64 MiB VMEM free.
    vmem_limit = min(100 * 1024 * 1024, max(16 * 1024 * 1024, int(io_bytes) * 6))
    cost = pl.CostEstimate(
        flops=2 * N * Ho * Wo * (Cin * KH * KW) * Cout,
        transcendentals=N * Ho * Wo * Cout,
        bytes_accessed=int(io_bytes))

    out = pl.pallas_call(
        kernel,
        out_shape=jax.ShapeDtypeStruct((M_pad, Cout_pad), jnp.float32),
        in_specs=[vmem_spec] * 4,
        out_specs=vmem_spec,
        compiler_params=pltpu.CompilerParams(vmem_limit_bytes=vmem_limit),
        cost_estimate=cost,
    )(x_k, w_g, g2, be2)

    # (M_pad, 128) -> (N, Ho, Wo, Cout) -> NCHW
    out = out.reshape(N, Ho, Wo_pad, Cout_pad)[:, :, :Wo, :Cout]
    return jnp.transpose(out, (0, 3, 1, 2))


def reference_forward(x_nchw, weight, bias, gamma, beta):
    """Pure-JAX f32 reference for sanity checking."""
    y = jax.lax.conv_general_dilated(
        x_nchw, weight, window_strides=(2, 2), padding=((2, 2), (2, 2)),
        dimension_numbers=("NCHW", "OIHW", "NCHW"))
    y = y + bias.reshape(1, -1, 1, 1)
    mean = jnp.mean(y, axis=(0, 2, 3), keepdims=True)
    var = jnp.mean((y - mean) ** 2, axis=(0, 2, 3), keepdims=True)
    y = (y - mean) * jax.lax.rsqrt(var + EPS)
    y = y * gamma.reshape(1, -1, 1, 1) + beta.reshape(1, -1, 1, 1)
    return jnp.tanh(y)


if __name__ == "__main__":
    key = jax.random.PRNGKey(0)
    k_x, k_w, k_b, k_g, k_be = jax.random.split(key, 5)

    N, Cin, H, W = 1, 33, 51, 91
    Cout, KH, KW = 83, 8, 8

    x = jax.random.normal(k_x, (N, Cin, H, W), dtype=jnp.float32)
    weight = jax.random.normal(k_w, (Cout, Cin, KH, KW), dtype=jnp.float32) * 0.05
    bias = jax.random.normal(k_b, (Cout,), dtype=jnp.float32) * 0.1
    # BatchNorm2d(142) affine params; only the first 83 are usable (see TODO).
    gamma_full = 1.0 + 0.1 * jax.random.normal(k_g, (142,), dtype=jnp.float32)
    beta_full = 0.1 * jax.random.normal(k_be, (142,), dtype=jnp.float32)
    gamma = gamma_full[:Cout]
    beta = beta_full[:Cout]

    fwd = jax.jit(model_forward)
    out = jax.block_until_ready(fwd(x, weight, bias, gamma, beta))
    assert out.shape == (N, Cout, 24, 44), out.shape

    ref = jax.block_until_ready(
        jax.jit(reference_forward)(x, weight, bias, gamma, beta))
    max_err = float(jnp.max(jnp.abs(out - ref)))
    # bf16 MXU operands with f32 accumulation -> relaxed tolerance.
    assert jnp.allclose(out, ref, atol=3e-2, rtol=3e-2), f"max_err={max_err}"

    print("KERNEL_OK")
</pallas_src>

<mosaic_0001>
module attributes {stable_mosaic.version = 11 : i64} {
  func.func @_conv_bn_tanh_kernel(%arg0: memref<1x1344x528xbf16, #tpu.memory_space<vmem>>, %arg1: memref<2x528x256xbf16, #tpu.memory_space<vmem>>, %arg2: memref<1x128xf32, #tpu.memory_space<vmem>>, %arg3: memref<1x128xf32, #tpu.memory_space<vmem>>, %arg4: memref<1152x128xf32, #tpu.memory_space<vmem>>) attributes {dimension_semantics = [], scalar_prefetch = 0 : i64, scratch_operands = 0 : i64, tpu.core_type = #tpu.core_type<tc>} {
    %cst = arith.constant 0.000000e+00 : f32
    %0 = vector.broadcast %cst : f32 to vector<1x128xf32>
    %cst_0 = arith.constant 0.000000e+00 : f32
    %1 = vector.broadcast %cst_0 : f32 to vector<1x128xf32>
    %c0 = arith.constant 0 : index
    %c0_1 = arith.constant 0 : index
    %c0_2 = arith.constant 0 : index
    %2 = vector.load %arg0[%c0, %c0_1, %c0_2] : memref<1x1344x528xbf16, #tpu.memory_space<vmem>>, vector<1x1200x528xbf16>
    %3 = vector.shape_cast %2 : vector<1x1200x528xbf16> to vector<1200x528xbf16>
    %c0_3 = arith.constant 0 : index
    %c0_4 = arith.constant 0 : index
    %c0_5 = arith.constant 0 : index
    %4 = vector.load %arg1[%c0_3, %c0_4, %c0_5] : memref<2x528x256xbf16, #tpu.memory_space<vmem>>, vector<1x528x256xbf16>
    %5 = vector.shape_cast %4 : vector<1x528x256xbf16> to vector<528x256xbf16>
    %cst_6 = arith.constant dense<0.000000e+00> : vector<1200x256xf32>
    %6 = tpu.matmul %3, %5, %cst_6 {dimension_numbers = #tpu.dot_dimension_numbers<[1], [0], [0], [1], [0, 0, 1, 1], [], []>} : vector<1200x528xbf16>, vector<528x256xbf16>, vector<1200x256xf32> -> vector<1200x256xf32>
    %c0_7 = arith.constant 0 : index
    %c96 = arith.constant 96 : index
    %c0_8 = arith.constant 0 : index
    %7 = vector.load %arg0[%c0_7, %c96, %c0_8] : memref<1x1344x528xbf16, #tpu.memory_space<vmem>>, vector<1x1200x528xbf16>
    %8 = vector.shape_cast %7 : vector<1x1200x528xbf16> to vector<1200x528xbf16>
    %c1 = arith.constant 1 : index
    %c0_9 = arith.constant 0 : index
    %c0_10 = arith.constant 0 : index
    %9 = vector.load %arg1[%c1, %c0_9, %c0_10] : memref<2x528x256xbf16, #tpu.memory_space<vmem>>, vector<1x528x256xbf16>
    %10 = vector.shape_cast %9 : vector<1x528x256xbf16> to vector<528x256xbf16>
    %cst_11 = arith.constant dense<0.000000e+00> : vector<1200x256xf32>
    %11 = tpu.matmul %8, %10, %cst_11 {dimension_numbers = #tpu.dot_dimension_numbers<[1], [0], [0], [1], [0, 0, 1, 1], [], []>} : vector<1200x528xbf16>, vector<528x256xbf16>, vector<1200x256xf32> -> vector<1200x256xf32>
    %12 = arith.addf %6, %11 : vector<1200x256xf32>
    %13 = vector.extract_strided_slice %12 {offsets = [0, 0], sizes = [1152, 128], strides = [1, 1]} : vector<1200x256xf32> to vector<1152x128xf32>
    %14 = vector.extract_strided_slice %12 {offsets = [48, 128], sizes = [1152, 128], strides = [1, 1]} : vector<1200x256xf32> to vector<1152x128xf32>
    %15 = arith.addf %13, %14 : vector<1152x128xf32>
    %16 = tpu.iota {dimensions = array<i32: 0>} : vector<1152x128xi32>
    %c48_i32 = arith.constant 48 : i32
    %c0_i32 = arith.constant 0 : i32
    %17 = arith.cmpi eq, %c48_i32, %c0_i32 : i32
    %c1_i32 = arith.constant 1 : i32
    %18 = arith.select %17, %c1_i32, %c48_i32 : i32
    %19 = vector.broadcast %18 : i32 to vector<1152x128xi32>
    %20 = arith.remsi %16, %19 : vector<1152x128xi32>
    %c0_i32_12 = arith.constant 0 : i32
    %21 = vector.broadcast %c0_i32_12 : i32 to vector<1152x128xi32>
    %22 = arith.cmpi ne, %20, %21 : vector<1152x128xi32>
    %c0_i32_13 = arith.constant 0 : i32
    %23 = vector.broadcast %c0_i32_13 : i32 to vector<1152x128xi32>
    %24 = arith.cmpi slt, %20, %23 : vector<1152x128xi32>
    %c0_i32_14 = arith.constant 0 : i32
    %25 = arith.cmpi slt, %18, %c0_i32_14 : i32
    %26 = vector.broadcast %25 : i1 to vector<1152x128xi1>
    %27 = vector.broadcast %26 : vector<1152x128xi1> to vector<1152x128xi1>
    %28 = arith.xori %24, %27 : vector<1152x128xi1>
    %29 = arith.andi %28, %22 : vector<1152x128xi1>
    %30 = vector.broadcast %18 : i32 to vector<1152x128xi32>
    %31 = arith.addi %20, %30 : vector<1152x128xi32>
    %32 = arith.select %29, %31, %20 : vector<1152x128xi1>, vector<1152x128xi32>
    %c44_i32 = arith.constant 44 : i32
    %33 = vector.broadcast %c44_i32 : i32 to vector<1152x128xi32>
    %34 = arith.cmpi slt, %32, %33 : vector<1152x128xi32>
    %cst_15 = arith.constant 0.000000e+00 : f32
    %35 = vector.broadcast %cst_15 : f32 to vector<1152x128xf32>
    %36 = arith.select %34, %15, %35 : vector<1152x128xi1>, vector<1152x128xf32>
    %cst_16 = arith.constant dense<0.000000e+00> : vector<128xf32>
    %37 = vector.multi_reduction <add>, %36, %cst_16 [0] : vector<1152x128xf32> to vector<128xf32>
    %38 = vector.shape_cast %37 : vector<128xf32> to vector<1x128xf32>
    %39 = arith.addf %0, %38 : vector<1x128xf32>
    %40 = arith.mulf %36, %15 : vector<1152x128xf32>
    %cst_17 = arith.constant dense<0.000000e+00> : vector<128xf32>
    %41 = vector.multi_reduction <add>, %40, %cst_17 [0] : vector<1152x128xf32> to vector<128xf32>
    %42 = vector.shape_cast %41 : vector<128xf32> to vector<1x128xf32>
    %43 = arith.addf %1, %42 : vector<1x128xf32>
    %c0_18 = arith.constant 0 : index
    %c0_19 = arith.constant 0 : index
    %44 = vector.load %arg4[%c0_18, %c0_19] : memref<1152x128xf32, #tpu.memory_space<vmem>>, vector<1152x128xf32>
    tpu.vector_store %arg4[%c0_18, %c0_19], %15 {strides = array<i32>} : memref<1152x128xf32, #tpu.memory_space<vmem>>, vector<1152x128xf32>,
    %cst_20 = arith.constant 9.46969725E-4 : f32
    %45 = vector.broadcast %cst_20 : f32 to vector<1x128xf32>
    %46 = arith.mulf %39, %45 : vector<1x128xf32>
    %cst_21 = arith.constant 9.46969725E-4 : f32
    %47 = vector.broadcast %cst_21 : f32 to vector<1x128xf32>
    %48 = arith.mulf %43, %47 : vector<1x128xf32>
    %49 = arith.mulf %46, %46 : vector<1x128xf32>
    %50 = arith.subf %48, %49 : vector<1x128xf32>
    %cst_22 = arith.constant 9.99999974E-6 : f32
    %51 = vector.broadcast %cst_22 : f32 to vector<1x128xf32>
    %52 = arith.addf %50, %51 : vector<1x128xf32>
    %53 = math.rsqrt %52 : vector<1x128xf32>
    %c0_23 = arith.constant 0 : index
    %c0_24 = arith.constant 0 : index
    %54 = vector.load %arg2[%c0_23, %c0_24] : memref<1x128xf32, #tpu.memory_space<vmem>>, vector<1x128xf32>
    %55 = arith.mulf %53, %54 : vector<1x128xf32>
    %c0_25 = arith.constant 0 : index
    %c0_26 = arith.constant 0 : index
    %56 = vector.load %arg3[%c0_25, %c0_26] : memref<1x128xf32, #tpu.memory_space<vmem>>, vector<1x128xf32>
    %57 = arith.mulf %46, %55 : vector<1x128xf32>
    %58 = arith.subf %56, %57 : vector<1x128xf32>
    %c0_27 = arith.constant 0 : index
    %c0_28 = arith.constant 0 : index
    %59 = vector.load %arg4[%c0_27, %c0_28] : memref<1152x128xf32, #tpu.memory_space<vmem>>, vector<1152x128xf32>
    %60 = vector.broadcast %55 : vector<1x128xf32> to vector<1152x128xf32>
    %61 = arith.mulf %59, %60 : vector<1152x128xf32>
    %62 = vector.broadcast %58 : vector<1x128xf32> to vector<1152x128xf32>
    %63 = arith.addf %61, %62 : vector<1152x128xf32>
    %64 = math.tanh %63 : vector<1152x128xf32>
    %c0_29 = arith.constant 0 : index
    %c0_30 = arith.constant 0 : index
    %65 = vector.load %arg4[%c0_29, %c0_30] : memref<1152x128xf32, #tpu.memory_space<vmem>>, vector<1152x128xf32>
    tpu.vector_store %arg4[%c0_29, %c0_30], %64 {strides = array<i32>} : memref<1152x128xf32, #tpu.memory_space<vmem>>, vector<1152x128xf32>,
    return
  }
}

</mosaic_0001>

<llo_original>
// kernel: model_forward.1
$region0: #{model_forward.1}
  #allocation0 [shape = 'u32[]', space=smem, size = 0x4, offset = 0x4, fixed_abs, tag = 'smem constant byte address 0x4 - core index']
  #allocation1 [shape = 'u32[144,128]{1,0:T(1,128)}', space=vmem, size = 0x12000, scoped, tag = 'internal scratch']
  %s0 = inlined_call_operand.vmem [shape: bf16[1,1344,528], index: 0, kind: input, shape index: {}]
  %s1 = inlined_call_operand.vmem [shape: bf16[2,528,256], index: 1, kind: input, shape index: {}]
  %s2 = inlined_call_operand.vmem [shape: f32[1,128], index: 2, kind: input, shape index: {}]
  %s3 = inlined_call_operand.vmem [shape: f32[1,128], index: 3, kind: input, shape index: {}]
  %s4 = inlined_call_operand.vmem [shape: f32[1152,128], index: 4, kind: output, shape index: {}]
  %s5 = sld [smem:[#allocation0]]
  $region26: #{model_forward.1} parent=0
    _
  %s7 = ssub.s32 1, %s5
  %s8 = scalar_select 0, %s7, %s5
  // Predicated region
  $region2: #{model_forward.1} parent=0 // pred_check
    _
  $region3: #{model_forward.1} parent=0 // pred_check_branch
    %10 = sbr.rel (0) target = $region5
  $region4: #{model_forward.1} parent=0 // pred_region
    _
  $region5: #{model_forward.1} parent=0 // pred_fallthru
    _
  // Predicated region
  $region6: #{model_forward.1} parent=0 // pred_check
    _
  $region7: #{model_forward.1} parent=0 // pred_check_branch
    %12 = sbr.rel (0) target = $region9
  $region8: #{model_forward.1} parent=0 // pred_region
    _
  $region9: #{model_forward.1} parent=0 // pred_fallthru
    _
  // Predicated region
  $region10: #{model_forward.1} parent=0 // pred_check
    _
  $region11: #{model_forward.1} parent=0 // pred_check_branch
    %14 = sbr.rel (0) target = $region13
  $region12: #{model_forward.1} parent=0 // pred_region
    _
  $region13: #{model_forward.1} parent=0 // pred_fallthru
    _
  // Predicated region
  $region14: #{model_forward.1} parent=0 // pred_check
    _
  $region15: #{model_forward.1} parent=0 // pred_check_branch
    %16 = sbr.rel (0) target = $region17
  $region16: #{model_forward.1} parent=0 // pred_region
    _
  $region17: #{model_forward.1} parent=0 // pred_fallthru
    _
  %v18 = vld [vmem:[%s0] sm:$0xff]
  %v19 = vld [vmem:[%s0 + $0x8] sm:$0xff]
  %v20 = vld [vmem:[%s0 + $0x10] sm:$0xf]
  %v21 = vld [vmem:[%s0 + $0x14] sm:$0xff]
  %v22 = vld [vmem:[%s0 + $0x1c] sm:$0xff]
  %v23 = vld [vmem:[%s0 + $0x24] sm:$0xf]
  %v24 = vld [vmem:[%s0 + $0x28] sm:$0xff]
  %v25 = vld [vmem:[%s0 + $0x30] sm:$0xff]
  %v26 = vld [vmem:[%s0 + $0x38] sm:$0xf]
  %v27 = vld [vmem:[%s0 + $0x3c] sm:$0xff]
  %v28 = vld [vmem:[%s0 + $0x44] sm:$0xff]
  %v29 = vld [vmem:[%s0 + $0x4c] sm:$0xf]
  %v30 = vld [vmem:[%s0 + $0x50] sm:$0xff]
  %v31 = vld [vmem:[%s0 + $0x58] sm:$0xff]
  %v32 = vld [vmem:[%s0 + $0x60] sm:$0xf]
  %v33 = vld [vmem:[%s0 + $0x64] sm:$0xff]
  %v34 = vld [vmem:[%s0 + $0x6c] sm:$0xff]
  %v35 = vld [vmem:[%s0 + $0x74] sm:$0xf]
  %v36 = vld [vmem:[%s0 + $0x78] sm:$0xff]
  %v37 = vld [vmem:[%s0 + $0x80] sm:$0xff]
  %v38 = vld [vmem:[%s0 + $0x88] sm:$0xf]
  %v39 = vld [vmem:[%s0 + $0x8c] sm:$0xff]
  %v40 = vld [vmem:[%s0 + $0x94] sm:$0xff]
  %v41 = vld [vmem:[%s0 + $0x9c] sm:$0xf]
  %v42 = vld [vmem:[%s0 + $0xa0] sm:$0xff]
  %v43 = vld [vmem:[%s0 + $0xa8] sm:$0xff]
  %v44 = vld [vmem:[%s0 + $0xb0] sm:$0xf]
  %v45 = vld [vmem:[%s0 + $0xb4] sm:$0xff]
  %v46 = vld [vmem:[%s0 + $0xbc] sm:$0xff]
  %v47 = vld [vmem:[%s0 + $0xc4] sm:$0xf]
  %v48 = vld [vmem:[%s0 + $0xc8] sm:$0xff]
  %v49 = vld [vmem:[%s0 + $0xd0] sm:$0xff]
  %v50 = vld [vmem:[%s0 + $0xd8] sm:$0xf]
  %v51 = vld [vmem:[%s0 + $0xdc] sm:$0xff]
  %v52 = vld [vmem:[%s0 + $0xe4] sm:$0xff]
  %v53 = vld [vmem:[%s0 + $0xec] sm:$0xf]
  %v54 = vld [vmem:[%s0 + $0xf0] sm:$0xff]
  %v55 = vld [vmem:[%s0 + $0xf8] sm:$0xff]
  %v56 = vld [vmem:[%s0 + $0x100] sm:$0xf]
  %v57 = vld [vmem:[%s0 + $0x104] sm:$0xff]
  %v58 = vld [vmem:[%s0 + $0x10c] sm:$0xff]
  %v59 = vld [vmem:[%s0 + $0x114] sm:$0xf]
  %v60 = vld [vmem:[%s0 + $0x118] sm:$0xff]
  %v61 = vld [vmem:[%s0 + $0x120] sm:$0xff]
  %v62 = vld [vmem:[%s0 + $0x128] sm:$0xf]
  %v63 = vld [vmem:[%s0 + $0x12c] sm:$0xff]
  %v64 = vld [vmem:[%s0 + $0x134] sm:$0xff]
  %v65 = vld [vmem:[%s0 + $0x13c] sm:$0xf]
  %v66 = vld [vmem:[%s0 + $0x140] sm:$0xff]
  %v67 = vld [vmem:[%s0 + $0x148] sm:$0xff]
  %v68 = vld [vmem:[%s0 + $0x150] sm:$0xf]
  %v69 = vld [vmem:[%s0 + $0x154] sm:$0xff]
  %v70 = vld [vmem:[%s0 + $0x15c] sm:$0xff]
  %v71 = vld [vmem:[%s0 + $0x164] sm:$0xf]
  %v72 = vld [vmem:[%s0 + $0x168] sm:$0xff]
  %v73 = vld [vmem:[%s0 + $0x170] sm:$0xff]
  %v74 = vld [vmem:[%s0 + $0x178] sm:$0xf]
  %v75 = vld [vmem:[%s0 + $0x17c] sm:$0xff]
  %v76 = vld [vmem:[%s0 + $0x184] sm:$0xff]
  %v77 = vld [vmem:[%s0 + $0x18c] sm:$0xf]
  %v78 = vld [vmem:[%s0 + $0x190] sm:$0xff]
  %v79 = vld [vmem:[%s0 + $0x198] sm:$0xff]
  %v80 = vld [vmem:[%s0 + $0x1a0] sm:$0xf]
  %v81 = vld [vmem:[%s0 + $0x1a4] sm:$0xff]
  %v82 = vld [vmem:[%s0 + $0x1ac] sm:$0xff]
  %v83 = vld [vmem:[%s0 + $0x1b4] sm:$0xf]
  %v84 = vld [vmem:[%s0 + $0x1b8] sm:$0xff]
  %v85 = vld [vmem:[%s0 + $0x1c0] sm:$0xff]
  %v86 = vld [vmem:[%s0 + $0x1c8] sm:$0xf]
  %v87 = vld [vmem:[%s0 + $0x1cc] sm:$0xff]
  %v88 = vld [vmem:[%s0 + $0x1d4] sm:$0xff]
  %v89 = vld [vmem:[%s0 + $0x1dc] sm:$0xf]
  %v90 = vld [vmem:[%s0 + $0x1e0] sm:$0xff]
  %v91 = vld [vmem:[%s0 + $0x1e8] sm:$0xff]
  %v92 = vld [vmem:[%s0 + $0x1f0] sm:$0xf]
  %v93 = vld [vmem:[%s0 + $0x1f4] sm:$0xff]
  %v94 = vld [vmem:[%s0 + $0x1fc] sm:$0xff]
  %v95 = vld [vmem:[%s0 + $0x204] sm:$0xf]
  %v96 = vld [vmem:[%s0 + $0x208] sm:$0xff]
  %v97 = vld [vmem:[%s0 + $0x210] sm:$0xff]
  %v98 = vld [vmem:[%s0 + $0x218] sm:$0xf]
  %v99 = vld [vmem:[%s0 + $0x21c] sm:$0xff]
  %v100 = vld [vmem:[%s0 + $0x224] sm:$0xff]
  %v101 = vld [vmem:[%s0 + $0x22c] sm:$0xf]
  %v102 = vld [vmem:[%s0 + $0x230] sm:$0xff]
  %v103 = vld [vmem:[%s0 + $0x238] sm:$0xff]
  %v104 = vld [vmem:[%s0 + $0x240] sm:$0xf]
  %v105 = vld [vmem:[%s0 + $0x244] sm:$0xff]
  %v106 = vld [vmem:[%s0 + $0x24c] sm:$0xff]
  %v107 = vld [vmem:[%s0 + $0x254] sm:$0xf]
  %v108 = vld [vmem:[%s0 + $0x258] sm:$0xff]
  %v109 = vld [vmem:[%s0 + $0x260] sm:$0xff]
  %v110 = vld [vmem:[%s0 + $0x268] sm:$0xf]
  %v111 = vld [vmem:[%s0 + $0x26c] sm:$0xff]
  %v112 = vld [vmem:[%s0 + $0x274] sm:$0xff]
  %v113 = vld [vmem:[%s0 + $0x27c] sm:$0xf]
  %v114 = vld [vmem:[%s0 + $0x280] sm:$0xff]
  %v115 = vld [vmem:[%s0 + $0x288] sm:$0xff]
  %v116 = vld [vmem:[%s0 + $0x290] sm:$0xf]
  %v117 = vld [vmem:[%s0 + $0x294] sm:$0xff]
  %v118 = vld [vmem:[%s0 + $0x29c] sm:$0xff]
  %v119 = vld [vmem:[%s0 + $0x2a4] sm:$0xf]
  %v120 = vld [vmem:[%s0 + $0x2a8] sm:$0xff]
  %v121 = vld [vmem:[%s0 + $0x2b0] sm:$0xff]
  %v122 = vld [vmem:[%s0 + $0x2b8] sm:$0xf]
  %v123 = vld [vmem:[%s0 + $0x2bc] sm:$0xff]
  %v124 = vld [vmem:[%s0 + $0x2c4] sm:$0xff]
  %v125 = vld [vmem:[%s0 + $0x2cc] sm:$0xf]
  %v126 = vld [vmem:[%s0 + $0x2d0] sm:$0xff]
  %v127 = vld [vmem:[%s0 + $0x2d8] sm:$0xff]
  %v128 = vld [vmem:[%s0 + $0x2e0] sm:$0xf]
  %v129 = vld [vmem:[%s0 + $0x2e4] sm:$0xff]
  %v130 = vld [vmem:[%s0 + $0x2ec] sm:$0xff]
  %v131 = vld [vmem:[%s0 + $0x2f4] sm:$0xf]
  %v132 = vld [vmem:[%s0 + $0x2f8] sm:$0xff]
  %v133 = vld [vmem:[%s0 + $0x300] sm:$0xff]
  %v134 = vld [vmem:[%s0 + $0x308] sm:$0xf]
  %v135 = vld [vmem:[%s0 + $0x30c] sm:$0xff]
  %v136 = vld [vmem:[%s0 + $0x314] sm:$0xff]
  %v137 = vld [vmem:[%s0 + $0x31c] sm:$0xf]
  %v138 = vld [vmem:[%s0 + $0x320] sm:$0xff]
  %v139 = vld [vmem:[%s0 + $0x328] sm:$0xff]
  %v140 = vld [vmem:[%s0 + $0x330] sm:$0xf]
  %v141 = vld [vmem:[%s0 + $0x334] sm:$0xff]
  %v142 = vld [vmem:[%s0 + $0x33c] sm:$0xff]
  %v143 = vld [vmem:[%s0 + $0x344] sm:$0xf]
  %v144 = vld [vmem:[%s0 + $0x348] sm:$0xff]
  %v145 = vld [vmem:[%s0 + $0x350] sm:$0xff]
  %v146 = vld [vmem:[%s0 + $0x358] sm:$0xf]
  %v147 = vld [vmem:[%s0 + $0x35c] sm:$0xff]
  %v148 = vld [vmem:[%s0 + $0x364] sm:$0xff]
  %v149 = vld [vmem:[%s0 + $0x36c] sm:$0xf]
  %v150 = vld [vmem:[%s0 + $0x370] sm:$0xff]
  %v151 = vld [vmem:[%s0 + $0x378] sm:$0xff]
  %v152 = vld [vmem:[%s0 + $0x380] sm:$0xf]
  %v153 = vld [vmem:[%s0 + $0x384] sm:$0xff]
  %v154 = vld [vmem:[%s0 + $0x38c] sm:$0xff]
  %v155 = vld [vmem:[%s0 + $0x394] sm:$0xf]
  %v156 = vld [vmem:[%s0 + $0x398] sm:$0xff]
  %v157 = vld [vmem:[%s0 + $0x3a0] sm:$0xff]
  %v158 = vld [vmem:[%s0 + $0x3a8] sm:$0xf]
  %v159 = vld [vmem:[%s0 + $0x3ac] sm:$0xff]
  %v160 = vld [vmem:[%s0 + $0x3b4] sm:$0xff]
  %v161 = vld [vmem:[%s0 + $0x3bc] sm:$0xf]
  %v162 = vld [vmem:[%s0 + $0x3c0] sm:$0xff]
  %v163 = vld [vmem:[%s0 + $0x3c8] sm:$0xff]
  %v164 = vld [vmem:[%s0 + $0x3d0] sm:$0xf]
  %v165 = vld [vmem:[%s0 + $0x3d4] sm:$0xff]
  %v166 = vld [vmem:[%s0 + $0x3dc] sm:$0xff]
  %v167 = vld [vmem:[%s0 + $0x3e4] sm:$0xf]
  %v168 = vld [vmem:[%s0 + $0x3e8] sm:$0xff]
  %v169 = vld [vmem:[%s0 + $0x3f0] sm:$0xff]
  %v170 = vld [vmem:[%s0 + $0x3f8] sm:$0xf]
  %v171 = vld [vmem:[%s0 + $0x3fc] sm:$0xff]
  %v172 = vld [vmem:[%s0 + $0x404] sm:$0xff]
  %v173 = vld [vmem:[%s0 + $0x40c] sm:$0xf]
  %v174 = vld [vmem:[%s0 + $0x410] sm:$0xff]
  %v175 = vld [vmem:[%s0 + $0x418] sm:$0xff]
  %v176 = vld [vmem:[%s0 + $0x420] sm:$0xf]
  %v177 = vld [vmem:[%s0 + $0x424] sm:$0xff]
  %v178 = vld [vmem:[%s0 + $0x42c] sm:$0xff]
  %v179 = vld [vmem:[%s0 + $0x434] sm:$0xf]
  %v180 = vld [vmem:[%s0 + $0x438] sm:$0xff]
  %v181 = vld [vmem:[%s0 + $0x440] sm:$0xff]
  %v182 = vld [vmem:[%s0 + $0x448] sm:$0xf]
  %v183 = vld [vmem:[%s0 + $0x44c] sm:$0xff]
  %v184 = vld [vmem:[%s0 + $0x454] sm:$0xff]
  %v185 = vld [vmem:[%s0 + $0x45c] sm:$0xf]
  %v186 = vld [vmem:[%s0 + $0x460] sm:$0xff]
  %v187 = vld [vmem:[%s0 + $0x468] sm:$0xff]
  %v188 = vld [vmem:[%s0 + $0x470] sm:$0xf]
  %v189 = vld [vmem:[%s0 + $0x474] sm:$0xff]
  %v190 = vld [vmem:[%s0 + $0x47c] sm:$0xff]
  %v191 = vld [vmem:[%s0 + $0x484] sm:$0xf]
  %v192 = vld [vmem:[%s0 + $0x488] sm:$0xff]
  %v193 = vld [vmem:[%s0 + $0x490] sm:$0xff]
  %v194 = vld [vmem:[%s0 + $0x498] sm:$0xf]
  %v195 = vld [vmem:[%s0 + $0x49c] sm:$0xff]
  %v196 = vld [vmem:[%s0 + $0x4a4] sm:$0xff]
  %v197 = vld [vmem:[%s0 + $0x4ac] sm:$0xf]
  %v198 = vld [vmem:[%s0 + $0x4b0] sm:$0xff]
  %v199 = vld [vmem:[%s0 + $0x4b8] sm:$0xff]
  %v200 = vld [vmem:[%s0 + $0x4c0] sm:$0xf]
  %v201 = vld [vmem:[%s0 + $0x4c4] sm:$0xff]
  %v202 = vld [vmem:[%s0 + $0x4cc] sm:$0xff]
  %v203 = vld [vmem:[%s0 + $0x4d4] sm:$0xf]
  %v204 = vld [vmem:[%s0 + $0x4d8] sm:$0xff]
  %v205 = vld [vmem:[%s0 + $0x4e0] sm:$0xff]
  %v206 = vld [vmem:[%s0 + $0x4e8] sm:$0xf]
  %v207 = vld [vmem:[%s0 + $0x4ec] sm:$0xff]
  %v208 = vld [vmem:[%s0 + $0x4f4] sm:$0xff]
  %v209 = vld [vmem:[%s0 + $0x4fc] sm:$0xf]
  %v210 = vld [vmem:[%s0 + $0x500] sm:$0xff]
  %v211 = vld [vmem:[%s0 + $0x508] sm:$0xff]
  %v212 = vld [vmem:[%s0 + $0x510] sm:$0xf]
  %v213 = vld [vmem:[%s0 + $0x514] sm:$0xff]
  %v214 = vld [vmem:[%s0 + $0x51c] sm:$0xff]
  %v215 = vld [vmem:[%s0 + $0x524] sm:$0xf]
  %v216 = vld [vmem:[%s0 + $0x528] sm:$0xff]
  %v217 = vld [vmem:[%s0 + $0x530] sm:$0xff]
  %v218 = vld [vmem:[%s0 + $0x538] sm:$0xf]
  %v219 = vld [vmem:[%s0 + $0x53c] sm:$0xff]
  %v220 = vld [vmem:[%s0 + $0x544] sm:$0xff]
  %v221 = vld [vmem:[%s0 + $0x54c] sm:$0xf]
  %v222 = vld [vmem:[%s0 + $0x550] sm:$0xff]
  %v223 = vld [vmem:[%s0 + $0x558] sm:$0xff]
  %v224 = vld [vmem:[%s0 + $0x560] sm:$0xf]
  %v225 = vld [vmem:[%s0 + $0x564] sm:$0xff]
  %v226 = vld [vmem:[%s0 + $0x56c] sm:$0xff]
  %v227 = vld [vmem:[%s0 + $0x574] sm:$0xf]
  %v228 = vld [vmem:[%s0 + $0x578] sm:$0xff]
  %v229 = vld [vmem:[%s0 + $0x580] sm:$0xff]
  %v230 = vld [vmem:[%s0 + $0x588] sm:$0xf]
  %v231 = vld [vmem:[%s0 + $0x58c] sm:$0xff]
  %v232 = vld [vmem:[%s0 + $0x594] sm:$0xff]
  %v233 = vld [vmem:[%s0 + $0x59c] sm:$0xf]
  %v234 = vld [vmem:[%s0 + $0x5a0] sm:$0xff]
  %v235 = vld [vmem:[%s0 + $0x5a8] sm:$0xff]
  %v236 = vld [vmem:[%s0 + $0x5b0] sm:$0xf]
  %v237 = vld [vmem:[%s0 + $0x5b4] sm:$0xff]
  %v238 = vld [vmem:[%s0 + $0x5bc] sm:$0xff]
  %v239 = vld [vmem:[%s0 + $0x5c4] sm:$0xf]
  %v240 = vld [vmem:[%s0 + $0x5c8] sm:$0xff]
  %v241 = vld [vmem:[%s0 + $0x5d0] sm:$0xff]
  %v242 = vld [vmem:[%s0 + $0x5d8] sm:$0xf]
  %v243 = vld [vmem:[%s0 + $0x5dc] sm:$0xff]
  %v244 = vld [vmem:[%s0 + $0x5e4] sm:$0xff]
  %v245 = vld [vmem:[%s0 + $0x5ec] sm:$0xf]
  %v246 = vld [vmem:[%s0 + $0x5f0] sm:$0xff]
  %v247 = vld [vmem:[%s0 + $0x5f8] sm:$0xff]
  %v248 = vld [vmem:[%s0 + $0x600] sm:$0xf]
  %v249 = vld [vmem:[%s0 + $0x604] sm:$0xff]
  %v250 = vld [vmem:[%s0 + $0x60c] sm:$0xff]
  %v251 = vld [vmem:[%s0 + $0x614] sm:$0xf]
  %v252 = vld [vmem:[%s0 + $0x618] sm:$0xff]
  %v253 = vld [vmem:[%s0 + $0x620] sm:$0xff]
  %v254 = vld [vmem:[%s0 + $0x628] sm:$0xf]
  %v255 = vld [vmem:[%s0 + $0x62c] sm:$0xff]
  %v256 = vld [vmem:[%s0 + $0x634] sm:$0xff]
  %v257 = vld [vmem:[%s0 + $0x63c] sm:$0xf]
  %v258 = vld [vmem:[%s0 + $0x640] sm:$0xff]
  %v259 = vld [vmem:[%s0 + $0x648] sm:$0xff]
  %v260 = vld [vmem:[%s0 + $0x650] sm:$0xf]
  %v261 = vld [vmem:[%s0 + $0x654] sm:$0xff]
  %v262 = vld [vmem:[%s0 + $0x65c] sm:$0xff]
  %v263 = vld [vmem:[%s0 + $0x664] sm:$0xf]
  %v264 = vld [vmem:[%s0 + $0x668] sm:$0xff]
  %v265 = vld [vmem:[%s0 + $0x670] sm:$0xff]
  %v266 = vld [vmem:[%s0 + $0x678] sm:$0xf]
  %v267 = vld [vmem:[%s0 + $0x67c] sm:$0xff]
  %v268 = vld [vmem:[%s0 + $0x684] sm:$0xff]
  %v269 = vld [vmem:[%s0 + $0x68c] sm:$0xf]
  %v270 = vld [vmem:[%s0 + $0x690] sm:$0xff]
  %v271 = vld [vmem:[%s0 + $0x698] sm:$0xff]
  %v272 = vld [vmem:[%s0 + $0x6a0] sm:$0xf]
  %v273 = vld [vmem:[%s0 + $0x6a4] sm:$0xff]
  %v274 = vld [vmem:[%s0 + $0x6ac] sm:$0xff]
  %v275 = vld [vmem:[%s0 + $0x6b4] sm:$0xf]
  %v276 = vld [vmem:[%s0 + $0x6b8] sm:$0xff]
  %v277 = vld [vmem:[%s0 + $0x6c0] sm:$0xff]
  %v278 = vld [vmem:[%s0 + $0x6c8] sm:$0xf]
  %v279 = vld [vmem:[%s0 + $0x6cc] sm:$0xff]
  %v280 = vld [vmem:[%s0 + $0x6d4] sm:$0xff]
  %v281 = vld [vmem:[%s0 + $0x6dc] sm:$0xf]
  %v282 = vld [vmem:[%s0 + $0x6e0] sm:$0xff]
  %v283 = vld [vmem:[%s0 + $0x6e8] sm:$0xff]
  %v284 = vld [vmem:[%s0 + $0x6f0] sm:$0xf]
  %v285 = vld [vmem:[%s0 + $0x6f4] sm:$0xff]
  %v286 = vld [vmem:[%s0 + $0x6fc] sm:$0xff]
  %v287 = vld [vmem:[%s0 + $0x704] sm:$0xf]
  %v288 = vld [vmem:[%s0 + $0x708] sm:$0xff]
  %v289 = vld [vmem:[%s0 + $0x710] sm:$0xff]
  %v290 = vld [vmem:[%s0 + $0x718] sm:$0xf]
  %v291 = vld [vmem:[%s0 + $0x71c] sm:$0xff]
  %v292 = vld [vmem:[%s0 + $0x724] sm:$0xff]
  %v293 = vld [vmem:[%s0 + $0x72c] sm:$0xf]
  %v294 = vld [vmem:[%s0 + $0x730] sm:$0xff]
  %v295 = vld [vmem:[%s0 + $0x738] sm:$0xff]
  %v296 = vld [vmem:[%s0 + $0x740] sm:$0xf]
  %v297 = vld [vmem:[%s0 + $0x744] sm:$0xff]
  %v298 = vld [vmem:[%s0 + $0x74c] sm:$0xff]
  %v299 = vld [vmem:[%s0 + $0x754] sm:$0xf]
  %v300 = vld [vmem:[%s0 + $0x758] sm:$0xff]
  %v301 = vld [vmem:[%s0 + $0x760] sm:$0xff]
  %v302 = vld [vmem:[%s0 + $0x768] sm:$0xf]
  %v303 = vld [vmem:[%s0 + $0x76c] sm:$0xff]
  %v304 = vld [vmem:[%s0 + $0x774] sm:$0xff]
  %v305 = vld [vmem:[%s0 + $0x77c] sm:$0xf]
  %v306 = vld [vmem:[%s0 + $0x780] sm:$0xff]
  %v307 = vld [vmem:[%s0 + $0x788] sm:$0xff]
  %v308 = vld [vmem:[%s0 + $0x790] sm:$0xf]
  %v309 = vld [vmem:[%s0 + $0x794] sm:$0xff]
  %v310 = vld [vmem:[%s0 + $0x79c] sm:$0xff]
  %v311 = vld [vmem:[%s0 + $0x7a4] sm:$0xf]
  %v312 = vld [vmem:[%s0 + $0x7a8] sm:$0xff]
  %v313 = vld [vmem:[%s0 + $0x7b0] sm:$0xff]
  %v314 = vld [vmem:[%s0 + $0x7b8] sm:$0xf]
  %v315 = vld [vmem:[%s0 + $0x7bc] sm:$0xff]
  %v316 = vld [vmem:[%s0 + $0x7c4] sm:$0xff]
  %v317 = vld [vmem:[%s0 + $0x7cc] sm:$0xf]
  %v318 = vld [vmem:[%s0 + $0x7d0] sm:$0xff]
  %v319 = vld [vmem:[%s0 + $0x7d8] sm:$0xff]
  %v320 = vld [vmem:[%s0 + $0x7e0] sm:$0xf]
  %v321 = vld [vmem:[%s0 + $0x7e4] sm:$0xff]
  %v322 = vld [vmem:[%s0 + $0x7ec] sm:$0xff]
  %v323 = vld [vmem:[%s0 + $0x7f4] sm:$0xf]
  %v324 = vld [vmem:[%s0 + $0x7f8] sm:$0xff]
  %v325 = vld [vmem:[%s0 + $0x800] sm:$0xff]
  %v326 = vld [vmem:[%s0 + $0x808] sm:$0xf]
  %v327 = vld [vmem:[%s0 + $0x80c] sm:$0xff]
  %v328 = vld [vmem:[%s0 + $0x814] sm:$0xff]
  %v329 = vld [vmem:[%s0 + $0x81c] sm:$0xf]
  %v330 = vld [vmem:[%s0 + $0x820] sm:$0xff]
  %v331 = vld [vmem:[%s0 + $0x828] sm:$0xff]
  %v332 = vld [vmem:[%s0 + $0x830] sm:$0xf]
  %v333 = vld [vmem:[%s0 + $0x834] sm:$0xff]
  %v334 = vld [vmem:[%s0 + $0x83c] sm:$0xff]
  %v335 = vld [vmem:[%s0 + $0x844] sm:$0xf]
  %v336 = vld [vmem:[%s0 + $0x848] sm:$0xff]
  %v337 = vld [vmem:[%s0 + $0x850] sm:$0xff]
  %v338 = vld [vmem:[%s0 + $0x858] sm:$0xf]
  %v339 = vld [vmem:[%s0 + $0x85c] sm:$0xff]
  %v340 = vld [vmem:[%s0 + $0x864] sm:$0xff]
  %v341 = vld [vmem:[%s0 + $0x86c] sm:$0xf]
  %v342 = vld [vmem:[%s0 + $0x870] sm:$0xff]
  %v343 = vld [vmem:[%s0 + $0x878] sm:$0xff]
  %v344 = vld [vmem:[%s0 + $0x880] sm:$0xf]
  %v345 = vld [vmem:[%s0 + $0x884] sm:$0xff]
  %v346 = vld [vmem:[%s0 + $0x88c] sm:$0xff]
  %v347 = vld [vmem:[%s0 + $0x894] sm:$0xf]
  %v348 = vld [vmem:[%s0 + $0x898] sm:$0xff]
  %v349 = vld [vmem:[%s0 + $0x8a0] sm:$0xff]
  %v350 = vld [vmem:[%s0 + $0x8a8] sm:$0xf]
  %v351 = vld [vmem:[%s0 + $0x8ac] sm:$0xff]
  %v352 = vld [vmem:[%s0 + $0x8b4] sm:$0xff]
  %v353 = vld [vmem:[%s0 + $0x8bc] sm:$0xf]
  %v354 = vld [vmem:[%s0 + $0x8c0] sm:$0xff]
  %v355 = vld [vmem:[%s0 + $0x8c8] sm:$0xff]
  %v356 = vld [vmem:[%s0 + $0x8d0] sm:$0xf]
  %v357 = vld [vmem:[%s0 + $0x8d4] sm:$0xff]
  %v358 = vld [vmem:[%s0 + $0x8dc] sm:$0xff]
  %v359 = vld [vmem:[%s0 + $0x8e4] sm:$0xf]
  %v360 = vld [vmem:[%s0 + $0x8e8] sm:$0xff]
  %v361 = vld [vmem:[%s0 + $0x8f0] sm:$0xff]
  %v362 = vld [vmem:[%s0 + $0x8f8] sm:$0xf]
  %v363 = vld [vmem:[%s0 + $0x8fc] sm:$0xff]
  %v364 = vld [vmem:[%s0 + $0x904] sm:$0xff]
  %v365 = vld [vmem:[%s0 + $0x90c] sm:$0xf]
  %v366 = vld [vmem:[%s0 + $0x910] sm:$0xff]
  %v367 = vld [vmem:[%s0 + $0x918] sm:$0xff]
  %v368 = vld [vmem:[%s0 + $0x920] sm:$0xf]
  %v369 = vld [vmem:[%s0 + $0x924] sm:$0xff]
  %v370 = vld [vmem:[%s0 + $0x92c] sm:$0xff]
  %v371 = vld [vmem:[%s0 + $0x934] sm:$0xf]
  %v372 = vld [vmem:[%s0 + $0x938] sm:$0xff]
  %v373 = vld [vmem:[%s0 + $0x940] sm:$0xff]
  %v374 = vld [vmem:[%s0 + $0x948] sm:$0xf]
  %v375 = vld [vmem:[%s0 + $0x94c] sm:$0xff]
  %v376 = vld [vmem:[%s0 + $0x954] sm:$0xff]
  %v377 = vld [vmem:[%s0 + $0x95c] sm:$0xf]
  %v378 = vld [vmem:[%s0 + $0x960] sm:$0xff]
  %v379 = vld [vmem:[%s0 + $0x968] sm:$0xff]
  %v380 = vld [vmem:[%s0 + $0x970] sm:$0xf]
  %v381 = vld [vmem:[%s0 + $0x974] sm:$0xff]
  %v382 = vld [vmem:[%s0 + $0x97c] sm:$0xff]
  %v383 = vld [vmem:[%s0 + $0x984] sm:$0xf]
  %v384 = vld [vmem:[%s0 + $0x988] sm:$0xff]
  %v385 = vld [vmem:[%s0 + $0x990] sm:$0xff]
  %v386 = vld [vmem:[%s0 + $0x998] sm:$0xf]
  %v387 = vld [vmem:[%s0 + $0x99c] sm:$0xff]
  %v388 = vld [vmem:[%s0 + $0x9a4] sm:$0xff]
  %v389 = vld [vmem:[%s0 + $0x9ac] sm:$0xf]
  %v390 = vld [vmem:[%s0 + $0x9b0] sm:$0xff]
  %v391 = vld [vmem:[%s0 + $0x9b8] sm:$0xff]
  %v392 = vld [vmem:[%s0 + $0x9c0] sm:$0xf]
  %v393 = vld [vmem:[%s0 + $0x9c4] sm:$0xff]
  %v394 = vld [vmem:[%s0 + $0x9cc] sm:$0xff]
  %v395 = vld [vmem:[%s0 + $0x9d4] sm:$0xf]
  %v396 = vld [vmem:[%s0 + $0x9d8] sm:$0xff]
  %v397 = vld [vmem:[%s0 + $0x9e0] sm:$0xff]
  %v398 = vld [vmem:[%s0 + $0x9e8] sm:$0xf]
  %v399 = vld [vmem:[%s0 + $0x9ec] sm:$0xff]
  %v400 = vld [vmem:[%s0 + $0x9f4] sm:$0xff]
  %v401 = vld [vmem:[%s0 + $0x9fc] sm:$0xf]
  %v402 = vld [vmem:[%s0 + $0xa00] sm:$0xff]
  %v403 = vld [vmem:[%s0 + $0xa08] sm:$0xff]
  %v404 = vld [vmem:[%s0 + $0xa10] sm:$0xf]
  %v405 = vld [vmem:[%s0 + $0xa14] sm:$0xff]
  %v406 = vld [vmem:[%s0 + $0xa1c] sm:$0xff]
  %v407 = vld [vmem:[%s0 + $0xa24] sm:$0xf]
  %v408 = vld [vmem:[%s0 + $0xa28] sm:$0xff]
  %v409 = vld [vmem:[%s0 + $0xa30] sm:$0xff]
  %v410 = vld [vmem:[%s0 + $0xa38] sm:$0xf]
  %v411 = vld [vmem:[%s0 + $0xa3c] sm:$0xff]
  %v412 = vld [vmem:[%s0 + $0xa44] sm:$0xff]
  %v413 = vld [vmem:[%s0 + $0xa4c] sm:$0xf]
  %v414 = vld [vmem:[%s0 + $0xa50] sm:$0xff]
  %v415 = vld [vmem:[%s0 + $0xa58] sm:$0xff]
  %v416 = vld [vmem:[%s0 + $0xa60] sm:$0xf]
  %v417 = vld [vmem:[%s0 + $0xa64] sm:$0xff]
  %v418 = vld [vmem:[%s0 + $0xa6c] sm:$0xff]
  %v419 = vld [vmem:[%s0 + $0xa74] sm:$0xf]
  %v420 = vld [vmem:[%s0 + $0xa78] sm:$0xff]
  %v421 = vld [vmem:[%s0 + $0xa80] sm:$0xff]
  %v422 = vld [vmem:[%s0 + $0xa88] sm:$0xf]
  %v423 = vld [vmem:[%s0 + $0xa8c] sm:$0xff]
  %v424 = vld [vmem:[%s0 + $0xa94] sm:$0xff]
  %v425 = vld [vmem:[%s0 + $0xa9c] sm:$0xf]
  %v426 = vld [vmem:[%s0 + $0xaa0] sm:$0xff]
  %v427 = vld [vmem:[%s0 + $0xaa8] sm:$0xff]
  %v428 = vld [vmem:[%s0 + $0xab0] sm:$0xf]
  %v429 = vld [vmem:[%s0 + $0xab4] sm:$0xff]
  %v430 = vld [vmem:[%s0 + $0xabc] sm:$0xff]
  %v431 = vld [vmem:[%s0 + $0xac4] sm:$0xf]
  %v432 = vld [vmem:[%s0 + $0xac8] sm:$0xff]
  %v433 = vld [vmem:[%s0 + $0xad0] sm:$0xff]
  %v434 = vld [vmem:[%s0 + $0xad8] sm:$0xf]
  %v435 = vld [vmem:[%s0 + $0xadc] sm:$0xff]
  %v436 = vld [vmem:[%s0 + $0xae4] sm:$0xff]
  %v437 = vld [vmem:[%s0 + $0xaec] sm:$0xf]
  %v438 = vld [vmem:[%s0 + $0xaf0] sm:$0xff]
  %v439 = vld [vmem:[%s0 + $0xaf8] sm:$0xff]
  %v440 = vld [vmem:[%s0 + $0xb00] sm:$0xf]
  %v441 = vld [vmem:[%s0 + $0xb04] sm:$0xff]
  %v442 = vld [vmem:[%s0 + $0xb0c] sm:$0xff]
  %v443 = vld [vmem:[%s0 + $0xb14] sm:$0xf]
  %v444 = vld [vmem:[%s0 + $0xb18] sm:$0xff]
  %v445 = vld [vmem:[%s0 + $0xb20] sm:$0xff]
  %v446 = vld [vmem:[%s0 + $0xb28] sm:$0xf]
  %v447 = vld [vmem:[%s0 + $0xb2c] sm:$0xff]
  %v448 = vld [vmem:[%s0 + $0xb34] sm:$0xff]
  %v449 = vld [vmem:[%s0 + $0xb3c] sm:$0xf]
  %v450 = vld [vmem:[%s0 + $0xb40] sm:$0xff]
  %v451 = vld [vmem:[%s0 + $0xb48] sm:$0xff]
  %v452 = vld [vmem:[%s0 + $0xb50] sm:$0xf]
  %v453 = vld [vmem:[%s0 + $0xb54] sm:$0xff]
  %v454 = vld [vmem:[%s0 + $0xb5c] sm:$0xff]
  %v455 = vld [vmem:[%s0 + $0xb64] sm:$0xf]
  %v456 = vld [vmem:[%s0 + $0xb68] sm:$0xff]
  %v457 = vld [vmem:[%s0 + $0xb70] sm:$0xff]
  %v458 = vld [vmem:[%s0 + $0xb78] sm:$0xf]
  %v459 = vld [vmem:[%s0 + $0xb7c] sm:$0xff]
  %v460 = vld [vmem:[%s0 + $0xb84] sm:$0xff]
  %v461 = vld [vmem:[%s0 + $0xb8c] sm:$0xf]
  %v462 = vld [vmem:[%s0 + $0xb90] sm:$0xff]
  %v463 = vld [vmem:[%s0 + $0xb98] sm:$0xff]
  %v464 = vld [vmem:[%s0 + $0xba0] sm:$0xf]
  %v465 = vld [vmem:[%s0 + $0xba4] sm:$0xff]
  %v466 = vld [vmem:[%s0 + $0xbac] sm:$0xff]
  %v467 = vld [vmem:[%s0 + $0xbb4] sm:$0xf]
  %v468 = vld [vmem:[%s1] sm:$0xff]
  %v469 = vld [vmem:[%s1 + $0x8] sm:$0xff]
  %v470 = vld [vmem:[%s1 + $0x10] sm:$0xff]
  %v471 = vld [vmem:[%s1 + $0x18] sm:$0xff]
  %v472 = vld [vmem:[%s1 + $0x20] sm:$0xff]
  %v473 = vld [vmem:[%s1 + $0x28] sm:$0xff]
  %v474 = vld [vmem:[%s1 + $0x30] sm:$0xff]
  %v475 = vld [vmem:[%s1 + $0x38] sm:$0xff]
  %v476 = vld [vmem:[%s1 + $0x40] sm:$0xff]
  %v477 = vld [vmem:[%s1 + $0x48] sm:$0xff]
  %v478 = vld [vmem:[%s1 + $0x50] sm:$0xff]
  %v479 = vld [vmem:[%s1 + $0x58] sm:$0xff]
  %v480 = vld [vmem:[%s1 + $0x60] sm:$0xff]
  %v481 = vld [vmem:[%s1 + $0x68] sm:$0xff]
  %v482 = vld [vmem:[%s1 + $0x70] sm:$0xff]
  %v483 = vld [vmem:[%s1 + $0x78] sm:$0xff]
  %v484 = vld [vmem:[%s1 + $0x80] sm:$0xff]
  %v485 = vld [vmem:[%s1 + $0x88] sm:$0xff]
  %v486 = vld [vmem:[%s1 + $0x90] sm:$0xff]
  %v487 = vld [vmem:[%s1 + $0x98] sm:$0xff]
  %v488 = vld [vmem:[%s1 + $0xa0] sm:$0xff]
  %v489 = vld [vmem:[%s1 + $0xa8] sm:$0xff]
  %v490 = vld [vmem:[%s1 + $0xb0] sm:$0xff]
  %v491 = vld [vmem:[%s1 + $0xb8] sm:$0xff]
  %v492 = vld [vmem:[%s1 + $0xc0] sm:$0xff]
  %v493 = vld [vmem:[%s1 + $0xc8] sm:$0xff]
  %v494 = vld [vmem:[%s1 + $0xd0] sm:$0xff]
  %v495 = vld [vmem:[%s1 + $0xd8] sm:$0xff]
  %v496 = vld [vmem:[%s1 + $0xe0] sm:$0xff]
  %v497 = vld [vmem:[%s1 + $0xe8] sm:$0xff]
  %v498 = vld [vmem:[%s1 + $0xf0] sm:$0xff]
  %v499 = vld [vmem:[%s1 + $0xf8] sm:$0xff]
  %v500 = vld [vmem:[%s1 + $0x100] sm:$0xff]
  %v501 = vld [vmem:[%s1 + $0x108] sm:$0xff]
  %v502 = vld [vmem:[%s1 + $0x110] sm:$0xff]
  %v503 = vld [vmem:[%s1 + $0x118] sm:$0xff]
  %v504 = vld [vmem:[%s1 + $0x120] sm:$0xff]
  %v505 = vld [vmem:[%s1 + $0x128] sm:$0xff]
  %v506 = vld [vmem:[%s1 + $0x130] sm:$0xff]
  %v507 = vld [vmem:[%s1 + $0x138] sm:$0xff]
  %v508 = vld [vmem:[%s1 + $0x140] sm:$0xff]
  %v509 = vld [vmem:[%s1 + $0x148] sm:$0xff]
  %v510 = vld [vmem:[%s1 + $0x150] sm:$0xff]
  %v511 = vld [vmem:[%s1 + $0x158] sm:$0xff]
  %v512 = vld [vmem:[%s1 + $0x160] sm:$0xff]
  %v513 = vld [vmem:[%s1 + $0x168] sm:$0xff]
  %v514 = vld [vmem:[%s1 + $0x170] sm:$0xff]
  %v515 = vld [vmem:[%s1 + $0x178] sm:$0xff]
  %v516 = vld [vmem:[%s1 + $0x180] sm:$0xff]
  %v517 = vld [vmem:[%s1 + $0x188] sm:$0xff]
  %v518 = vld [vmem:[%s1 + $0x190] sm:$0xff]
  %v519 = vld [vmem:[%s1 + $0x198] sm:$0xff]
  %v520 = vld [vmem:[%s1 + $0x1a0] sm:$0xff]
  %v521 = vld [vmem:[%s1 + $0x1a8] sm:$0xff]
  %v522 = vld [vmem:[%s1 + $0x1b0] sm:$0xff]
  %v523 = vld [vmem:[%s1 + $0x1b8] sm:$0xff]
  %v524 = vld [vmem:[%s1 + $0x1c0] sm:$0xff]
  %v525 = vld [vmem:[%s1 + $0x1c8] sm:$0xff]
  %v526 = vld [vmem:[%s1 + $0x1d0] sm:$0xff]
  %v527 = vld [vmem:[%s1 + $0x1d8] sm:$0xff]
  %v528 = vld [vmem:[%s1 + $0x1e0] sm:$0xff]
  %v529 = vld [vmem:[%s1 + $0x1e8] sm:$0xff]
  %v530 = vld [vmem:[%s1 + $0x1f0] sm:$0xff]
  %v531 = vld [vmem:[%s1 + $0x1f8] sm:$0xff]
  %v532 = vld [vmem:[%s1 + $0x200] sm:$0xff]
  %v533 = vld [vmem:[%s1 + $0x208] sm:$0xff]
  %v534 = vld [vmem:[%s0 + $0xbb8] sm:$0xff]
  %v535 = vld [vmem:[%s0 + $0xbc0] sm:$0xff]
  %v536 = vld [vmem:[%s0 + $0xbc8] sm:$0xf]
  %v537 = vld [vmem:[%s0 + $0xbcc] sm:$0xff]
  %v538 = vld [vmem:[%s0 + $0xbd4] sm:$0xff]
  %v539 = vld [vmem:[%s0 + $0xbdc] sm:$0xf]
  %v540 = vld [vmem:[%s0 + $0xbe0] sm:$0xff]
  %v541 = vld [vmem:[%s0 + $0xbe8] sm:$0xff]
  %v542 = vld [vmem:[%s0 + $0xbf0] sm:$0xf]
  %v543 = vld [vmem:[%s0 + $0xbf4] sm:$0xff]
  %v544 = vld [vmem:[%s0 + $0xbfc] sm:$0xff]
  %v545 = vld [vmem:[%s0 + $0xc04] sm:$0xf]
  %v546 = vld [vmem:[%s0 + $0xc08] sm:$0xff]
  %v547 = vld [vmem:[%s0 + $0xc10] sm:$0xff]
  %v548 = vld [vmem:[%s0 + $0xc18] sm:$0xf]
  %v549 = vld [vmem:[%s0 + $0xc1c] sm:$0xff]
  %v550 = vld [vmem:[%s0 + $0xc24] sm:$0xff]
  %v551 = vld [vmem:[%s0 + $0xc2c] sm:$0xf]
  %v552 = vld [vmem:[%s0 + $0xc30] sm:$0xff]
  %v553 = vld [vmem:[%s0 + $0xc38] sm:$0xff]
  %v554 = vld [vmem:[%s0 + $0xc40] sm:$0xf]
  %v555 = vld [vmem:[%s0 + $0xc44] sm:$0xff]
  %v556 = vld [vmem:[%s0 + $0xc4c] sm:$0xff]
  %v557 = vld [vmem:[%s0 + $0xc54] sm:$0xf]
  %v558 = vld [vmem:[%s0 + $0xc58] sm:$0xff]
  %v559 = vld [vmem:[%s0 + $0xc60] sm:$0xff]
  %v560 = vld [vmem:[%s0 + $0xc68] sm:$0xf]
  %v561 = vld [vmem:[%s0 + $0xc6c] sm:$0xff]
  %v562 = vld [vmem:[%s0 + $0xc74] sm:$0xff]
  %v563 = vld [vmem:[%s0 + $0xc7c] sm:$0xf]
  %v564 = vld [vmem:[%s0 + $0xc80] sm:$0xff]
  %v565 = vld [vmem:[%s0 + $0xc88] sm:$0xff]
  %v566 = vld [vmem:[%s0 + $0xc90] sm:$0xf]
  %v567 = vld [vmem:[%s0 + $0xc94] sm:$0xff]
  %v568 = vld [vmem:[%s0 + $0xc9c] sm:$0xff]
  %v569 = vld [vmem:[%s0 + $0xca4] sm:$0xf]
  %s570 = scalar_lea.vmem %s1, 528
  %v571 = vld [vmem:[%s570] sm:$0xff]
  %v572 = vld [vmem:[%s570 + $0x8] sm:$0xff]
  %v573 = vld [vmem:[%s570 + $0x10] sm:$0xff]
  %v574 = vld [vmem:[%s570 + $0x18] sm:$0xff]
  %v575 = vld [vmem:[%s570 + $0x20] sm:$0xff]
  %v576 = vld [vmem:[%s570 + $0x28] sm:$0xff]
  %v577 = vld [vmem:[%s570 + $0x30] sm:$0xff]
  %v578 = vld [vmem:[%s570 + $0x38] sm:$0xff]
  %v579 = vld [vmem:[%s570 + $0x40] sm:$0xff]
  %v580 = vld [vmem:[%s570 + $0x48] sm:$0xff]
  %v581 = vld [vmem:[%s570 + $0x50] sm:$0xff]
  %v582 = vld [vmem:[%s570 + $0x58] sm:$0xff]
  %v583 = vld [vmem:[%s570 + $0x60] sm:$0xff]
  %v584 = vld [vmem:[%s570 + $0x68] sm:$0xff]
  %v585 = vld [vmem:[%s570 + $0x70] sm:$0xff]
  %v586 = vld [vmem:[%s570 + $0x78] sm:$0xff]
  %v587 = vld [vmem:[%s570 + $0x80] sm:$0xff]
  %v588 = vld [vmem:[%s570 + $0x88] sm:$0xff]
  %v589 = vld [vmem:[%s570 + $0x90] sm:$0xff]
  %v590 = vld [vmem:[%s570 + $0x98] sm:$0xff]
  %v591 = vld [vmem:[%s570 + $0xa0] sm:$0xff]
  %v592 = vld [vmem:[%s570 + $0xa8] sm:$0xff]
  %v593 = vld [vmem:[%s570 + $0xb0] sm:$0xff]
  %v594 = vld [vmem:[%s570 + $0xb8] sm:$0xff]
  %v595 = vld [vmem:[%s570 + $0xc0] sm:$0xff]
  %v596 = vld [vmem:[%s570 + $0xc8] sm:$0xff]
  %v597 = vld [vmem:[%s570 + $0xd0] sm:$0xff]
  %v598 = vld [vmem:[%s570 + $0xd8] sm:$0xff]
  %v599 = vld [vmem:[%s570 + $0xe0] sm:$0xff]
  %v600 = vld [vmem:[%s570 + $0xe8] sm:$0xff]
  %v601 = vld [vmem:[%s570 + $0xf0] sm:$0xff]
  %v602 = vld [vmem:[%s570 + $0xf8] sm:$0xff]
  %v603 = vld [vmem:[%s570 + $0x100] sm:$0xff]
  %v604 = vld [vmem:[%s570 + $0x108] sm:$0xff]
  %v605 = vld [vmem:[%s570 + $0x110] sm:$0xff]
  %v606 = vld [vmem:[%s570 + $0x118] sm:$0xff]
  %v607 = vld [vmem:[%s570 + $0x120] sm:$0xff]
  %v608 = vld [vmem:[%s570 + $0x128] sm:$0xff]
  %v609 = vld [vmem:[%s570 + $0x130] sm:$0xff]
  %v610 = vld [vmem:[%s570 + $0x138] sm:$0xff]
  %v611 = vld [vmem:[%s570 + $0x140] sm:$0xff]
  %v612 = vld [vmem:[%s570 + $0x148] sm:$0xff]
  %v613 = vld [vmem:[%s570 + $0x150] sm:$0xff]
  %v614 = vld [vmem:[%s570 + $0x158] sm:$0xff]
  %v615 = vld [vmem:[%s570 + $0x160] sm:$0xff]
  %v616 = vld [vmem:[%s570 + $0x168] sm:$0xff]
  %v617 = vld [vmem:[%s570 + $0x170] sm:$0xff]
  %v618 = vld [vmem:[%s570 + $0x178] sm:$0xff]
  %v619 = vld [vmem:[%s570 + $0x180] sm:$0xff]
  %v620 = vld [vmem:[%s570 + $0x188] sm:$0xff]
  %v621 = vld [vmem:[%s570 + $0x190] sm:$0xff]
  %v622 = vld [vmem:[%s570 + $0x198] sm:$0xff]
  %v623 = vld [vmem:[%s570 + $0x1a0] sm:$0xff]
  %v624 = vld [vmem:[%s570 + $0x1a8] sm:$0xff]
  %v625 = vld [vmem:[%s570 + $0x1b0] sm:$0xff]
  %v626 = vld [vmem:[%s570 + $0x1b8] sm:$0xff]
  %v627 = vld [vmem:[%s570 + $0x1c0] sm:$0xff]
  %v628 = vld [vmem:[%s570 + $0x1c8] sm:$0xff]
  %v629 = vld [vmem:[%s570 + $0x1d0] sm:$0xff]
  %v630 = vld [vmem:[%s570 + $0x1d8] sm:$0xff]
  %v631 = vld [vmem:[%s570 + $0x1e0] sm:$0xff]
  %v632 = vld [vmem:[%s570 + $0x1e8] sm:$0xff]
  %v633 = vld [vmem:[%s570 + $0x1f0] sm:$0xff]
  %v634 = vld [vmem:[%s570 + $0x1f8] sm:$0xff]
  %v635 = vld [vmem:[%s570 + $0x200] sm:$0xff]
  %v636 = vld [vmem:[%s570 + $0x208] sm:$0xff]
  %v1087 = vunpack.c.l.b16 %v54
  %v1088 = vunpack.c.h.b16 %v54
  %v1089 = vunpack.c.l.b16 %v55
  %v1090 = vunpack.c.h.b16 %v55
  %v1091 = vunpack.c.l.b16 %v56
  %v1092 = vunpack.c.l.b16 %v57
  %v1093 = vunpack.c.h.b16 %v57
  %v1094 = vunpack.c.l.b16 %v58
  %v1095 = vunpack.c.h.b16 %v58
  %v1096 = vunpack.c.l.b16 %v59
  %v1097 = vunpack.c.l.b16 %v60
  %v1098 = vunpack.c.h.b16 %v60
  %v1099 = vunpack.c.l.b16 %v61
  %v1100 = vunpack.c.h.b16 %v61
  %v1101 = vunpack.c.l.b16 %v62
  %v1102 = vunpack.c.l.b16 %v63
  %v1103 = vunpack.c.h.b16 %v63
  %v1104 = vunpack.c.l.b16 %v64
  %v1105 = vunpack.c.h.b16 %v64
  %v1106 = vunpack.c.l.b16 %v65
  %v1107 = vunpack.c.l.b16 %v66
  %v1108 = vunpack.c.h.b16 %v66
  %v1109 = vunpack.c.l.b16 %v67
  %v1110 = vunpack.c.h.b16 %v67
  %v1111 = vunpack.c.l.b16 %v68
  %v1112 = vunpack.c.l.b16 %v69
  %v1113 = vunpack.c.h.b16 %v69
  %v1114 = vunpack.c.l.b16 %v70
  %v1115 = vunpack.c.h.b16 %v70
  %v1116 = vunpack.c.l.b16 %v71
  %v1117 = vunpack.c.l.b16 %v72
  %v1118 = vunpack.c.h.b16 %v72
  %v1119 = vunpack.c.l.b16 %v73
  %v1120 = vunpack.c.h.b16 %v73
  %v1121 = vunpack.c.l.b16 %v74
  %v1122 = vunpack.c.l.b16 %v75
  %v1123 = vunpack.c.h.b16 %v75
  %v1124 = vunpack.c.l.b16 %v76
  %v1125 = vunpack.c.h.b16 %v76
  %v1126 = vunpack.c.l.b16 %v77
  %v1127 = vunpack.c.l.b16 %v78
  %v1128 = vunpack.c.h.b16 %v78
  %v1129 = vunpack.c.l.b16 %v79
  %v1130 = vunpack.c.h.b16 %v79
  %v1131 = vunpack.c.l.b16 %v80
  %v1132 = vunpack.c.l.b16 %v81
  %v1133 = vunpack.c.h.b16 %v81
  %v1134 = vunpack.c.l.b16 %v82
  %v1135 = vunpack.c.h.b16 %v82
  %v1136 = vunpack.c.l.b16 %v83
  %v1137 = vunpack.c.l.b16 %v84
  %v1138 = vunpack.c.h.b16 %v84
  %v1139 = vunpack.c.l.b16 %v85
  %v1140 = vunpack.c.h.b16 %v85
  %v1141 = vunpack.c.l.b16 %v86
  %v1142 = vunpack.c.l.b16 %v87
  %v1143 = vunpack.c.h.b16 %v87
  %v1144 = vunpack.c.l.b16 %v88
  %v1145 = vunpack.c.h.b16 %v88
  %v1146 = vunpack.c.l.b16 %v89
  %v1147 = vunpack.c.l.b16 %v90
  %v1148 = vunpack.c.h.b16 %v90
  %v1149 = vunpack.c.l.b16 %v91
  %v1150 = vunpack.c.h.b16 %v91
  %v1151 = vunpack.c.l.b16 %v92
  %v1152 = vunpack.c.l.b16 %v93
  %v1153 = vunpack.c.h.b16 %v93
  %v1154 = vunpack.c.l.b16 %v94
  %v1155 = vunpack.c.h.b16 %v94
  %v1156 = vunpack.c.l.b16 %v95
  %v1157 = vunpack.c.l.b16 %v96
  %v1158 = vunpack.c.h.b16 %v96
  %v1159 = vunpack.c.l.b16 %v97
  %v1160 = vunpack.c.h.b16 %v97
  %v1161 = vunpack.c.l.b16 %v98
  %v1162 = vunpack.c.l.b16 %v99
  %v1163 = vunpack.c.h.b16 %v99
  %v1164 = vunpack.c.l.b16 %v100
  %v1165 = vunpack.c.h.b16 %v100
  %v1166 = vunpack.c.l.b16 %v101
  %v1167 = vunpack.c.l.b16 %v102
  %v1168 = vunpack.c.h.b16 %v102
  %v1169 = vunpack.c.l.b16 %v103
  %v1170 = vunpack.c.h.b16 %v103
  %v1171 = vunpack.c.l.b16 %v104
  %v1172 = vunpack.c.l.b16 %v105
  %v1173 = vunpack.c.h.b16 %v105
  %v1174 = vunpack.c.l.b16 %v106
  %v1175 = vunpack.c.h.b16 %v106
  %v1176 = vunpack.c.l.b16 %v107
  %v1177 = vunpack.c.l.b16 %v108
  %v1178 = vunpack.c.h.b16 %v108
  %v1179 = vunpack.c.l.b16 %v109
  %v1180 = vunpack.c.h.b16 %v109
  %v1181 = vunpack.c.l.b16 %v110
  %v1182 = vunpack.c.l.b16 %v111
  %v1183 = vunpack.c.h.b16 %v111
  %v1184 = vunpack.c.l.b16 %v112
  %v1185 = vunpack.c.h.b16 %v112
  %v1186 = vunpack.c.l.b16 %v113
  %v1187 = vunpack.c.l.b16 %v114
  %v1188 = vunpack.c.h.b16 %v114
  %v1189 = vunpack.c.l.b16 %v115
  %v1190 = vunpack.c.h.b16 %v115
  %v1191 = vunpack.c.l.b16 %v116
  %v1192 = vunpack.c.l.b16 %v117
  %v1193 = vunpack.c.h.b16 %v117
  %v1194 = vunpack.c.l.b16 %v118
  %v1195 = vunpack.c.h.b16 %v118
  %v1196 = vunpack.c.l.b16 %v119
  %v1197 = vunpack.c.l.b16 %v120
  %v1198 = vunpack.c.h.b16 %v120
  %v1199 = vunpack.c.l.b16 %v121
  %v1200 = vunpack.c.h.b16 %v121
  %v1201 = vunpack.c.l.b16 %v122
  %v1202 = vunpack.c.l.b16 %v123
  %v1203 = vunpack.c.h.b16 %v123
  %v1204 = vunpack.c.l.b16 %v124
  %v1205 = vunpack.c.h.b16 %v124
  %v1206 = vunpack.c.l.b16 %v125
  %v1207 = vunpack.c.l.b16 %v126
  %v1208 = vunpack.c.h.b16 %v126
  %v1209 = vunpack.c.l.b16 %v127
  %v1210 = vunpack.c.h.b16 %v127
  %v1211 = vunpack.c.l.b16 %v128
  %v1212 = vunpack.c.l.b16 %v129
  %v1213 = vunpack.c.h.b16 %v129
  %v1214 = vunpack.c.l.b16 %v130
  %v1215 = vunpack.c.h.b16 %v130
  %v1216 = vunpack.c.l.b16 %v131
  %v1217 = vunpack.c.l.b16 %v132
  %v1218 = vunpack.c.h.b16 %v132
  %v1219 = vunpack.c.l.b16 %v133
  %v1220 = vunpack.c.h.b16 %v133
  %v1221 = vunpack.c.l.b16 %v134
  %v1222 = vunpack.c.l.b16 %v135
  %v1223 = vunpack.c.h.b16 %v135
  %v1224 = vunpack.c.l.b16 %v136
  %v1225 = vunpack.c.h.b16 %v136
  %v1226 = vunpack.c.l.b16 %v137
  %v1227 = vunpack.c.l.b16 %v138
  %v1228 = vunpack.c.h.b16 %v138
  %v1229 = vunpack.c.l.b16 %v139
  %v1230 = vunpack.c.h.b16 %v139
  %v1231 = vunpack.c.l.b16 %v140
  %v1232 = vunpack.c.l.b16 %v141
  %v1233 = vunpack.c.h.b16 %v141
  %v1234 = vunpack.c.l.b16 %v142
  %v1235 = vunpack.c.h.b16 %v142
  %v1236 = vunpack.c.l.b16 %v143
  %v1237 = vunpack.c.l.b16 %v144
  %v1238 = vunpack.c.h.b16 %v144
  %v1239 = vunpack.c.l.b16 %v145
  %v1240 = vunpack.c.h.b16 %v145
  %v1241 = vunpack.c.l.b16 %v146
  %v1242 = vunpack.c.l.b16 %v147
  %v1243 = vunpack.c.h.b16 %v147
  %v1244 = vunpack.c.l.b16 %v148
  %v1245 = vunpack.c.h.b16 %v148
  %v1246 = vunpack.c.l.b16 %v149
  %v1247 = vunpack.c.l.b16 %v150
  %v1248 = vunpack.c.h.b16 %v150
  %v1249 = vunpack.c.l.b16 %v151
  %v1250 = vunpack.c.h.b16 %v151
  %v1251 = vunpack.c.l.b16 %v152
  %v1252 = vunpack.c.l.b16 %v153
  %v1253 = vunpack.c.h.b16 %v153
  %v1254 = vunpack.c.l.b16 %v154
  %v1255 = vunpack.c.h.b16 %v154
  %v1256 = vunpack.c.l.b16 %v155
  %v1257 = vunpack.c.l.b16 %v156
  %v1258 = vunpack.c.h.b16 %v156
  %v1259 = vunpack.c.l.b16 %v157
  %v1260 = vunpack.c.h.b16 %v157
  %v1261 = vunpack.c.l.b16 %v158
  %v1262 = vunpack.c.l.b16 %v159
  %v1263 = vunpack.c.h.b16 %v159
  %v1264 = vunpack.c.l.b16 %v160
  %v1265 = vunpack.c.h.b16 %v160
  %v1266 = vunpack.c.l.b16 %v161
  %v1267 = vunpack.c.l.b16 %v162
  %v1268 = vunpack.c.h.b16 %v162
  %v1269 = vunpack.c.l.b16 %v163
  %v1270 = vunpack.c.h.b16 %v163
  %v1271 = vunpack.c.l.b16 %v164
  %v1272 = vunpack.c.l.b16 %v165
  %v1273 = vunpack.c.h.b16 %v165
  %v1274 = vunpack.c.l.b16 %v166
  %v1275 = vunpack.c.h.b16 %v166
  %v1276 = vunpack.c.l.b16 %v167
  %v1277 = vunpack.c.l.b16 %v168
  %v1278 = vunpack.c.h.b16 %v168
  %v1279 = vunpack.c.l.b16 %v169
  %v1280 = vunpack.c.h.b16 %v169
  %v1281 = vunpack.c.l.b16 %v170
  %v1282 = vunpack.c.l.b16 %v171
  %v1283 = vunpack.c.h.b16 %v171
  %v1284 = vunpack.c.l.b16 %v172
  %v1285 = vunpack.c.h.b16 %v172
  %v1286 = vunpack.c.l.b16 %v173
  %v1287 = vunpack.c.l.b16 %v174
  %v1288 = vunpack.c.h.b16 %v174
  %v1289 = vunpack.c.l.b16 %v175
  %v1290 = vunpack.c.h.b16 %v175
  %v1291 = vunpack.c.l.b16 %v176
  %v1292 = vunpack.c.l.b16 %v177
  %v1293 = vunpack.c.h.b16 %v177
  %v1294 = vunpack.c.l.b16 %v178
  %v1295 = vunpack.c.h.b16 %v178
  %v1296 = vunpack.c.l.b16 %v179
  %v1297 = vunpack.c.l.b16 %v180
  %v1298 = vunpack.c.h.b16 %v180
  %v1299 = vunpack.c.l.b16 %v181
  %v1300 = vunpack.c.h.b16 %v181
  %v1301 = vunpack.c.l.b16 %v182
  %v1302 = vunpack.c.l.b16 %v183
  %v1303 = vunpack.c.h.b16 %v183
  %v1304 = vunpack.c.l.b16 %v184
  %v1305 = vunpack.c.h.b16 %v184
  %v1306 = vunpack.c.l.b16 %v185
  %v1307 = vunpack.c.l.b16 %v186
  %v1308 = vunpack.c.h.b16 %v186
  %v1309 = vunpack.c.l.b16 %v187
  %v1310 = vunpack.c.h.b16 %v187
  %v1311 = vunpack.c.l.b16 %v188
  %v1312 = vunpack.c.l.b16 %v189
  %v1313 = vunpack.c.h.b16 %v189
  %v1314 = vunpack.c.l.b16 %v190
  %v1315 = vunpack.c.h.b16 %v190
  %v1316 = vunpack.c.l.b16 %v191
  %v1317 = vunpack.c.l.b16 %v192
  %v1318 = vunpack.c.h.b16 %v192
  %v1319 = vunpack.c.l.b16 %v193
  %v1320 = vunpack.c.h.b16 %v193
  %v1321 = vunpack.c.l.b16 %v194
  %v1322 = vunpack.c.l.b16 %v195
  %v1323 = vunpack.c.h.b16 %v195
  %v1324 = vunpack.c.l.b16 %v196
  %v1325 = vunpack.c.h.b16 %v196
  %v1326 = vunpack.c.l.b16 %v197
  %v1327 = vunpack.c.l.b16 %v198
  %v1328 = vunpack.c.h.b16 %v198
  %v1329 = vunpack.c.l.b16 %v199
  %v1330 = vunpack.c.h.b16 %v199
  %v1331 = vunpack.c.l.b16 %v200
  %v1332 = vunpack.c.l.b16 %v201
  %v1333 = vunpack.c.h.b16 %v201
  %v1334 = vunpack.c.l.b16 %v202
  %v1335 = vunpack.c.h.b16 %v202
  %v1336 = vunpack.c.l.b16 %v203
  %v1337 = vunpack.c.l.b16 %v204
  %v1338 = vunpack.c.h.b16 %v204
  %v1339 = vunpack.c.l.b16 %v205
  %v1340 = vunpack.c.h.b16 %v205
  %v1341 = vunpack.c.l.b16 %v206
  %v1342 = vunpack.c.l.b16 %v207
  %v1343 = vunpack.c.h.b16 %v207
  %v1344 = vunpack.c.l.b16 %v208
  %v1345 = vunpack.c.h.b16 %v208
  %v1346 = vunpack.c.l.b16 %v209
  %v1347 = vunpack.c.l.b16 %v210
  %v1348 = vunpack.c.h.b16 %v210
  %v1349 = vunpack.c.l.b16 %v211
  %v1350 = vunpack.c.h.b16 %v211
  %v1351 = vunpack.c.l.b16 %v212
  %v1352 = vunpack.c.l.b16 %v213
  %v1353 = vunpack.c.h.b16 %v213
  %v1354 = vunpack.c.l.b16 %v214
  %v1355 = vunpack.c.h.b16 %v214
  %v1356 = vunpack.c.l.b16 %v215
  %v1357 = vunpack.c.l.b16 %v216
  %v1358 = vunpack.c.h.b16 %v216
  %v1359 = vunpack.c.l.b16 %v217
  %v1360 = vunpack.c.h.b16 %v217
  %v1361 = vunpack.c.l.b16 %v218
  %v1362 = vunpack.c.l.b16 %v219
  %v1363 = vunpack.c.h.b16 %v219
  %v1364 = vunpack.c.l.b16 %v220
  %v1365 = vunpack.c.h.b16 %v220
  %v1366 = vunpack.c.l.b16 %v221
  %v1367 = vunpack.c.l.b16 %v222
  %v1368 = vunpack.c.h.b16 %v222
  %v1369 = vunpack.c.l.b16 %v223
  %v1370 = vunpack.c.h.b16 %v223
  %v1371 = vunpack.c.l.b16 %v224
  %v1372 = vunpack.c.l.b16 %v225
  %v1373 = vunpack.c.h.b16 %v225
  %v1374 = vunpack.c.l.b16 %v226
  %v1375 = vunpack.c.h.b16 %v226
  %v1376 = vunpack.c.l.b16 %v227
  %v1377 = vunpack.c.l.b16 %v228
  %v1378 = vunpack.c.h.b16 %v228
  %v1379 = vunpack.c.l.b16 %v229
  %v1380 = vunpack.c.h.b16 %v229
  %v1381 = vunpack.c.l.b16 %v230
  %v1382 = vunpack.c.l.b16 %v231
  %v1383 = vunpack.c.h.b16 %v231
  %v1384 = vunpack.c.l.b16 %v232
  %v1385 = vunpack.c.h.b16 %v232
  %v1386 = vunpack.c.l.b16 %v233
  %v1387 = vunpack.c.l.b16 %v234
  %v1388 = vunpack.c.h.b16 %v234
  %v1389 = vunpack.c.l.b16 %v235
  %v1390 = vunpack.c.h.b16 %v235
  %v1391 = vunpack.c.l.b16 %v236
  %v1392 = vunpack.c.l.b16 %v237
  %v1393 = vunpack.c.h.b16 %v237
  %v1394 = vunpack.c.l.b16 %v238
  %v1395 = vunpack.c.h.b16 %v238
  %v1396 = vunpack.c.l.b16 %v239
  %v1397 = vunpack.c.l.b16 %v240
  %v1398 = vunpack.c.h.b16 %v240
  %v1399 = vunpack.c.l.b16 %v241
  %v1400 = vunpack.c.h.b16 %v241
  %v1401 = vunpack.c.l.b16 %v242
  %v1402 = vunpack.c.l.b16 %v243
  %v1403 = vunpack.c.h.b16 %v243
  %v1404 = vunpack.c.l.b16 %v244
  %v1405 = vunpack.c.h.b16 %v244
  %v1406 = vunpack.c.l.b16 %v245
  %v1407 = vunpack.c.l.b16 %v246
  %v1408 = vunpack.c.h.b16 %v246
  %v1409 = vunpack.c.l.b16 %v247
  %v1410 = vunpack.c.h.b16 %v247
  %v1411 = vunpack.c.l.b16 %v248
  %v1412 = vunpack.c.l.b16 %v249
  %v1413 = vunpack.c.h.b16 %v249
  %v1414 = vunpack.c.l.b16 %v250
  %v1415 = vunpack.c.h.b16 %v250
  %v1416 = vunpack.c.l.b16 %v251
  %v1417 = vunpack.c.l.b16 %v252
  %v1418 = vunpack.c.h.b16 %v252
  %v1419 = vunpack.c.l.b16 %v253
  %v1420 = vunpack.c.h.b16 %v253
  %v1421 = vunpack.c.l.b16 %v254
  %v1422 = vunpack.c.l.b16 %v255
  %v1423 = vunpack.c.h.b16 %v255
  %v1424 = vunpack.c.l.b16 %v256
  %v1425 = vunpack.c.h.b16 %v256
  %v1426 = vunpack.c.l.b16 %v257
  %v1427 = vunpack.c.l.b16 %v258
  %v1428 = vunpack.c.h.b16 %v258
  %v1429 = vunpack.c.l.b16 %v259
  %v1430 = vunpack.c.h.b16 %v259
  %v1431 = vunpack.c.l.b16 %v260
  %v1432 = vunpack.c.l.b16 %v261
  %v1433 = vunpack.c.h.b16 %v261
  %v1434 = vunpack.c.l.b16 %v262
  %v1435 = vunpack.c.h.b16 %v262
  %v1436 = vunpack.c.l.b16 %v263
  %v1437 = vunpack.c.l.b16 %v264
  %v1438 = vunpack.c.h.b16 %v264
  %v1439 = vunpack.c.l.b16 %v265
  %v1440 = vunpack.c.h.b16 %v265
  %v1441 = vunpack.c.l.b16 %v266
  %v1442 = vunpack.c.l.b16 %v267
  %v1443 = vunpack.c.h.b16 %v267
  %v1444 = vunpack.c.l.b16 %v268
  %v1445 = vunpack.c.h.b16 %v268
  %v1446 = vunpack.c.l.b16 %v269
  %v1447 = vunpack.c.l.b16 %v270
  %v1448 = vunpack.c.h.b16 %v270
  %v1449 = vunpack.c.l.b16 %v271
  %v1450 = vunpack.c.h.b16 %v271
  %v1451 = vunpack.c.l.b16 %v272
  %v1452 = vunpack.c.l.b16 %v273
  %v1453 = vunpack.c.h.b16 %v273
  %v1454 = vunpack.c.l.b16 %v274
  %v1455 = vunpack.c.h.b16 %v274
  %v1456 = vunpack.c.l.b16 %v275
  %v1457 = vunpack.c.l.b16 %v276
  %v1458 = vunpack.c.h.b16 %v276
  %v1459 = vunpack.c.l.b16 %v277
  %v1460 = vunpack.c.h.b16 %v277
  %v1461 = vunpack.c.l.b16 %v278
  %v1462 = vunpack.c.l.b16 %v279
  %v1463 = vunpack.c.h.b16 %v279
  %v1464 = vunpack.c.l.b16 %v280
  %v1465 = vunpack.c.h.b16 %v280
  %v1466 = vunpack.c.l.b16 %v281
  %v1467 = vunpack.c.l.b16 %v282
  %v1468 = vunpack.c.h.b16 %v282
  %v1469 = vunpack.c.l.b16 %v283
  %v1470 = vunpack.c.h.b16 %v283
  %v1471 = vunpack.c.l.b16 %v284
  %v1472 = vunpack.c.l.b16 %v285
  %v1473 = vunpack.c.h.b16 %v285
  %v1474 = vunpack.c.l.b16 %v286
  %v1475 = vunpack.c.h.b16 %v286
  %v1476 = vunpack.c.l.b16 %v287
  %v1477 = vunpack.c.l.b16 %v288
  %v1478 = vunpack.c.h.b16 %v288
  %v1479 = vunpack.c.l.b16 %v289
  %v1480 = vunpack.c.h.b16 %v289
  %v1481 = vunpack.c.l.b16 %v290
  %v1482 = vunpack.c.l.b16 %v291
  %v1483 = vunpack.c.h.b16 %v291
  %v1484 = vunpack.c.l.b16 %v292
  %v1485 = vunpack.c.h.b16 %v292
  %v1486 = vunpack.c.l.b16 %v293
  %v1487 = vunpack.c.l.b16 %v294
  %v1488 = vunpack.c.h.b16 %v294
  %v1489 = vunpack.c.l.b16 %v295
  %v1490 = vunpack.c.h.b16 %v295
  %v1491 = vunpack.c.l.b16 %v296
  %v1492 = vunpack.c.l.b16 %v297
  %v1493 = vunpack.c.h.b16 %v297
  %v1494 = vunpack.c.l.b16 %v298
  %v1495 = vunpack.c.h.b16 %v298
  %v1496 = vunpack.c.l.b16 %v299
  %v1497 = vunpack.c.l.b16 %v300
  %v1498 = vunpack.c.h.b16 %v300
  %v1499 = vunpack.c.l.b16 %v301
  %v1500 = vunpack.c.h.b16 %v301
  %v1501 = vunpack.c.l.b16 %v302
  %v1502 = vunpack.c.l.b16 %v303
  %v1503 = vunpack.c.h.b16 %v303
  %v1504 = vunpack.c.l.b16 %v304
  %v1505 = vunpack.c.h.b16 %v304
  %v1506 = vunpack.c.l.b16 %v305
  %v1507 = vunpack.c.l.b16 %v306
  %v1508 = vunpack.c.h.b16 %v306
  %v1509 = vunpack.c.l.b16 %v307
  %v1510 = vunpack.c.h.b16 %v307
  %v1511 = vunpack.c.l.b16 %v308
  %v1512 = vunpack.c.l.b16 %v309
  %v1513 = vunpack.c.h.b16 %v309
  %v1514 = vunpack.c.l.b16 %v310
  %v1515 = vunpack.c.h.b16 %v310
  %v1516 = vunpack.c.l.b16 %v311
  %v1517 = vunpack.c.l.b16 %v312
  %v1518 = vunpack.c.h.b16 %v312
  %v1519 = vunpack.c.l.b16 %v313
  %v1520 = vunpack.c.h.b16 %v313
  %v1521 = vunpack.c.l.b16 %v314
  %v1522 = vunpack.c.l.b16 %v315
  %v1523 = vunpack.c.h.b16 %v315
  %v1524 = vunpack.c.l.b16 %v316
  %v1525 = vunpack.c.h.b16 %v316
  %v1526 = vunpack.c.l.b16 %v317
  %v1527 = vunpack.c.l.b16 %v318
  %v1528 = vunpack.c.h.b16 %v318
  %v1529 = vunpack.c.l.b16 %v319
  %v1530 = vunpack.c.h.b16 %v319
  %v1531 = vunpack.c.l.b16 %v320
  %v1532 = vunpack.c.l.b16 %v321
  %v1533 = vunpack.c.h.b16 %v321
  %v1534 = vunpack.c.l.b16 %v322
  %v1535 = vunpack.c.h.b16 %v322
  %v1536 = vunpack.c.l.b16 %v323
  %v1537 = vunpack.c.l.b16 %v324
  %v1538 = vunpack.c.h.b16 %v324
  %v1539 = vunpack.c.l.b16 %v325
  %v1540 = vunpack.c.h.b16 %v325
  %v1541 = vunpack.c.l.b16 %v326
  %v1542 = vunpack.c.l.b16 %v327
  %v1543 = vunpack.c.h.b16 %v327
  %v1544 = vunpack.c.l.b16 %v328
  %v1545 = vunpack.c.h.b16 %v328
  %v1546 = vunpack.c.l.b16 %v329
  %v1547 = vunpack.c.l.b16 %v330
  %v1548 = vunpack.c.h.b16 %v330
  %v1549 = vunpack.c.l.b16 %v331
  %v1550 = vunpack.c.h.b16 %v331
  %v1551 = vunpack.c.l.b16 %v332
  %v1552 = vunpack.c.l.b16 %v333
  %v1553 = vunpack.c.h.b16 %v333
  %v1554 = vunpack.c.l.b16 %v334
  %v1555 = vunpack.c.h.b16 %v334
  %v1556 = vunpack.c.l.b16 %v335
  %v1557 = vunpack.c.l.b16 %v336
  %v1558 = vunpack.c.h.b16 %v336
  %v1559 = vunpack.c.l.b16 %v337
  %v1560 = vunpack.c.h.b16 %v337
  %v1561 = vunpack.c.l.b16 %v338
  %v1562 = vunpack.c.l.b16 %v339
  %v1563 = vunpack.c.h.b16 %v339
  %v1564 = vunpack.c.l.b16 %v340
  %v1565 = vunpack.c.h.b16 %v340
  %v1566 = vunpack.c.l.b16 %v341
  %v1567 = vunpack.c.l.b16 %v342
  %v1568 = vunpack.c.h.b16 %v342
  %v1569 = vunpack.c.l.b16 %v343
  %v1570 = vunpack.c.h.b16 %v343
  %v1571 = vunpack.c.l.b16 %v344
  %v1572 = vunpack.c.l.b16 %v345
  %v1573 = vunpack.c.h.b16 %v345
  %v1574 = vunpack.c.l.b16 %v346
  %v1575 = vunpack.c.h.b16 %v346
  %v1576 = vunpack.c.l.b16 %v347
  %v1577 = vunpack.c.l.b16 %v348
  %v1578 = vunpack.c.h.b16 %v348
  %v1579 = vunpack.c.l.b16 %v349
  %v1580 = vunpack.c.h.b16 %v349
  %v1581 = vunpack.c.l.b16 %v350
  %v1582 = vunpack.c.l.b16 %v351
  %v1583 = vunpack.c.h.b16 %v351
  %v1584 = vunpack.c.l.b16 %v352
  %v1585 = vunpack.c.h.b16 %v352
  %v1586 = vunpack.c.l.b16 %v353
  %v1587 = vunpack.c.l.b16 %v354
  %v1588 = vunpack.c.h.b16 %v354
  %v1589 = vunpack.c.l.b16 %v355
  %v1590 = vunpack.c.h.b16 %v355
  %v1591 = vunpack.c.l.b16 %v356
  %v1592 = vunpack.c.l.b16 %v357
  %v1593 = vunpack.c.h.b16 %v357
  %v1594 = vunpack.c.l.b16 %v358
  %v1595 = vunpack.c.h.b16 %v358
  %v1596 = vunpack.c.l.b16 %v359
  %v1597 = vunpack.c.l.b16 %v360
  %v1598 = vunpack.c.h.b16 %v360
  %v1599 = vunpack.c.l.b16 %v361
  %v1600 = vunpack.c.h.b16 %v361
  %v1601 = vunpack.c.l.b16 %v362
  %v1602 = vunpack.c.l.b16 %v363
  %v1603 = vunpack.c.h.b16 %v363
  %v1604 = vunpack.c.l.b16 %v364
  %v1605 = vunpack.c.h.b16 %v364
  %v1606 = vunpack.c.l.b16 %v365
  %v1607 = vunpack.c.l.b16 %v366
  %v1608 = vunpack.c.h.b16 %v366
  %v1609 = vunpack.c.l.b16 %v367
  %v1610 = vunpack.c.h.b16 %v367
  %v1611 = vunpack.c.l.b16 %v368
  %v1612 = vunpack.c.l.b16 %v369
  %v1613 = vunpack.c.h.b16 %v369
  %v1614 = vunpack.c.l.b16 %v370
  %v1615 = vunpack.c.h.b16 %v370
  %v1616 = vunpack.c.l.b16 %v371
  %v1617 = vunpack.c.l.b16 %v372
  %v1618 = vunpack.c.h.b16 %v372
  %v1619 = vunpack.c.l.b16 %v373
  %v1620 = vunpack.c.h.b16 %v373
  %v1621 = vunpack.c.l.b16 %v374
  %v1622 = vunpack.c.l.b16 %v375
  %v1623 = vunpack.c.h.b16 %v375
  %v1624 = vunpack.c.l.b16 %v376
  %v1625 = vunpack.c.h.b16 %v376
  %v1626 = vunpack.c.l.b16 %v377
  %v1627 = vunpack.c.l.b16 %v378
  %v1628 = vunpack.c.h.b16 %v378
  %v1629 = vunpack.c.l.b16 %v379
  %v1630 = vunpack.c.h.b16 %v379
  %v1631 = vunpack.c.l.b16 %v380
  %v1632 = vunpack.c.l.b16 %v381
  %v1633 = vunpack.c.h.b16 %v381
  %v1634 = vunpack.c.l.b16 %v382
  %v1635 = vunpack.c.h.b16 %v382
  %v1636 = vunpack.c.l.b16 %v383
  %v1637 = vunpack.c.l.b16 %v384
  %v1638 = vunpack.c.h.b16 %v384
  %v1639 = vunpack.c.l.b16 %v385
  %v1640 = vunpack.c.h.b16 %v385
  %v1641 = vunpack.c.l.b16 %v386
  %v1642 = vunpack.c.l.b16 %v387
  %v1643 = vunpack.c.h.b16 %v387
  %v1644 = vunpack.c.l.b16 %v388
  %v1645 = vunpack.c.h.b16 %v388
  %v1646 = vunpack.c.l.b16 %v389
  %v1647 = vunpack.c.l.b16 %v390
  %v1648 = vunpack.c.h.b16 %v390
  %v1649 = vunpack.c.l.b16 %v391
  %v1650 = vunpack.c.h.b16 %v391
  %v1651 = vunpack.c.l.b16 %v392
  %v1652 = vunpack.c.l.b16 %v393
  %v1653 = vunpack.c.h.b16 %v393
  %v1654 = vunpack.c.l.b16 %v394
  %v1655 = vunpack.c.h.b16 %v394
  %v1656 = vunpack.c.l.b16 %v395
  %v1657 = vunpack.c.l.b16 %v396
  %v1658 = vunpack.c.h.b16 %v396
  %v1659 = vunpack.c.l.b16 %v397
  %v1660 = vunpack.c.h.b16 %v397
  %v1661 = vunpack.c.l.b16 %v398
  %v1662 = vunpack.c.l.b16 %v399
  %v1663 = vunpack.c.h.b16 %v399
  %v1664 = vunpack.c.l.b16 %v400
  %v1665 = vunpack.c.h.b16 %v400
  %v1666 = vunpack.c.l.b16 %v401
  %v1667 = vunpack.c.l.b16 %v402
  %v1668 = vunpack.c.h.b16 %v402
  %v1669 = vunpack.c.l.b16 %v403
  %v1670 = vunpack.c.h.b16 %v403
  %v1671 = vunpack.c.l.b16 %v404
  %v1672 = vunpack.c.l.b16 %v405
  %v1673 = vunpack.c.h.b16 %v405
  %v1674 = vunpack.c.l.b16 %v406
  %v1675 = vunpack.c.h.b16 %v406
  %v1676 = vunpack.c.l.b16 %v407
  %v1677 = vunpack.c.l.b16 %v408
  %v1678 = vunpack.c.h.b16 %v408
  %v1679 = vunpack.c.l.b16 %v409
  %v1680 = vunpack.c.h.b16 %v409
  %v1681 = vunpack.c.l.b16 %v410
  %v1682 = vunpack.c.l.b16 %v411
  %v1683 = vunpack.c.h.b16 %v411
  %v1684 = vunpack.c.l.b16 %v412
  %v1685 = vunpack.c.h.b16 %v412
  %v1686 = vunpack.c.l.b16 %v413
  %v1687 = vunpack.c.l.b16 %v414
  %v1688 = vunpack.c.h.b16 %v414
  %v1689 = vunpack.c.l.b16 %v415
  %v1690 = vunpack.c.h.b16 %v415
  %v1691 = vunpack.c.l.b16 %v416
  %v1692 = vunpack.c.l.b16 %v417
  %v1693 = vunpack.c.h.b16 %v417
  %v1694 = vunpack.c.l.b16 %v418
  %v1695 = vunpack.c.h.b16 %v418
  %v1696 = vunpack.c.l.b16 %v419
  %v1697 = vunpack.c.l.b16 %v420
  %v1698 = vunpack.c.h.b16 %v420
  %v1699 = vunpack.c.l.b16 %v421
  %v1700 = vunpack.c.h.b16 %v421
  %v1701 = vunpack.c.l.b16 %v422
  %v1702 = vunpack.c.l.b16 %v423
  %v1703 = vunpack.c.h.b16 %v423
  %v1704 = vunpack.c.l.b16 %v424
  %v1705 = vunpack.c.h.b16 %v424
  %v1706 = vunpack.c.l.b16 %v425
  %v1707 = vunpack.c.l.b16 %v426
  %v1708 = vunpack.c.h.b16 %v426
  %v1709 = vunpack.c.l.b16 %v427
  %v1710 = vunpack.c.h.b16 %v427
  %v1711 = vunpack.c.l.b16 %v428
  %v1712 = vunpack.c.l.b16 %v429
  %v1713 = vunpack.c.h.b16 %v429
  %v1714 = vunpack.c.l.b16 %v430
  %v1715 = vunpack.c.h.b16 %v430
  %v1716 = vunpack.c.l.b16 %v431
  %v1717 = vunpack.c.l.b16 %v432
  %v1718 = vunpack.c.h.b16 %v432
  %v1719 = vunpack.c.l.b16 %v433
  %v1720 = vunpack.c.h.b16 %v433
  %v1721 = vunpack.c.l.b16 %v434
  %v1722 = vunpack.c.l.b16 %v435
  %v1723 = vunpack.c.h.b16 %v435
  %v1724 = vunpack.c.l.b16 %v436
  %v1725 = vunpack.c.h.b16 %v436
  %v1726 = vunpack.c.l.b16 %v437
  %v1727 = vunpack.c.l.b16 %v438
  %v1728 = vunpack.c.h.b16 %v438
  %v1729 = vunpack.c.l.b16 %v439
  %v1730 = vunpack.c.h.b16 %v439
  %v1731 = vunpack.c.l.b16 %v440
  %v1732 = vunpack.c.l.b16 %v441
  %v1733 = vunpack.c.h.b16 %v441
  %v1734 = vunpack.c.l.b16 %v442
  %v1735 = vunpack.c.h.b16 %v442
  %v1736 = vunpack.c.l.b16 %v443
  %v1737 = vunpack.c.l.b16 %v444
  %v1738 = vunpack.c.h.b16 %v444
  %v1739 = vunpack.c.l.b16 %v445
  %v1740 = vunpack.c.h.b16 %v445
  %v1741 = vunpack.c.l.b16 %v446
  %v1742 = vunpack.c.l.b16 %v447
  %v1743 = vunpack.c.h.b16 %v447
  %v1744 = vunpack.c.l.b16 %v448
  %v1745 = vunpack.c.h.b16 %v448
  %v1746 = vunpack.c.l.b16 %v449
  %v1747 = vunpack.c.l.b16 %v450
  %v1748 = vunpack.c.h.b16 %v450
  %v1749 = vunpack.c.l.b16 %v451
  %v1750 = vunpack.c.h.b16 %v451
  %v1751 = vunpack.c.l.b16 %v452
  %v1752 = vunpack.c.l.b16 %v453
  %v1753 = vunpack.c.h.b16 %v453
  %v1754 = vunpack.c.l.b16 %v454
  %v1755 = vunpack.c.h.b16 %v454
  %v1756 = vunpack.c.l.b16 %v455
  %v1757 = vunpack.c.l.b16 %v456
  %v1758 = vunpack.c.h.b16 %v456
  %v1759 = vunpack.c.l.b16 %v457
  %v1760 = vunpack.c.h.b16 %v457
  %v1761 = vunpack.c.l.b16 %v458
  %v1762 = vunpack.c.l.b16 %v459
  %v1763 = vunpack.c.h.b16 %v459
  %v1764 = vunpack.c.l.b16 %v460
  %v1765 = vunpack.c.h.b16 %v460
  %v1766 = vunpack.c.l.b16 %v461
  %v1767 = vunpack.c.l.b16 %v462
  %v1768 = vunpack.c.h.b16 %v462
  %v1769 = vunpack.c.l.b16 %v463
  %v1770 = vunpack.c.h.b16 %v463
  %v1771 = vunpack.c.l.b16 %v464
  %v1772 = vunpack.c.l.b16 %v465
  %v1773 = vunpack.c.h.b16 %v465
  %v1774 = vunpack.c.l.b16 %v466
  %v1775 = vunpack.c.h.b16 %v466
  %v1776 = vunpack.c.l.b16 %v467
  %v1777 = vunpack.c.l.b16 %v534
  %v1778 = vunpack.c.h.b16 %v534
  %v1779 = vunpack.c.l.b16 %v535
  %v1780 = vunpack.c.h.b16 %v535
  %v1781 = vunpack.c.l.b16 %v536
  %v1782 = vunpack.c.l.b16 %v537
  %v1783 = vunpack.c.h.b16 %v537
  %v1784 = vunpack.c.l.b16 %v538
  %v1785 = vunpack.c.h.b16 %v538
  %v1786 = vunpack.c.l.b16 %v539
  %v1787 = vunpack.c.l.b16 %v540
  %v1788 = vunpack.c.h.b16 %v540
  %v1789 = vunpack.c.l.b16 %v541
  %v1790 = vunpack.c.h.b16 %v541
  %v1791 = vunpack.c.l.b16 %v542
  %v1792 = vunpack.c.l.b16 %v543
  %v1793 = vunpack.c.h.b16 %v543
  %v1794 = vunpack.c.l.b16 %v544
  %v1795 = vunpack.c.h.b16 %v544
  %v1796 = vunpack.c.l.b16 %v545
  %v1797 = vunpack.c.l.b16 %v546
  %v1798 = vunpack.c.h.b16 %v546
  %v1799 = vunpack.c.l.b16 %v547
  %v1800 = vunpack.c.h.b16 %v547
  %v1801 = vunpack.c.l.b16 %v548
  %v1802 = vunpack.c.l.b16 %v549
  %v1803 = vunpack.c.h.b16 %v549
  %v1804 = vunpack.c.l.b16 %v550
  %v1805 = vunpack.c.h.b16 %v550
  %v1806 = vunpack.c.l.b16 %v551
  %v1807 = vunpack.c.l.b16 %v552
  %v1808 = vunpack.c.h.b16 %v552
  %v1809 = vunpack.c.l.b16 %v553
  %v1810 = vunpack.c.h.b16 %v553
  %v1811 = vunpack.c.l.b16 %v554
  %v1812 = vunpack.c.l.b16 %v555
  %v1813 = vunpack.c.h.b16 %v555
  %v1814 = vunpack.c.l.b16 %v556
  %v1815 = vunpack.c.h.b16 %v556
  %v1816 = vunpack.c.l.b16 %v557
  %v1817 = vunpack.c.l.b16 %v558
  %v1818 = vunpack.c.h.b16 %v558
  %v1819 = vunpack.c.l.b16 %v559
  %v1820 = vunpack.c.h.b16 %v559
  %v1821 = vunpack.c.l.b16 %v560
  %v1822 = vunpack.c.l.b16 %v561
  %v1823 = vunpack.c.h.b16 %v561
  %v1824 = vunpack.c.l.b16 %v562
  %v1825 = vunpack.c.h.b16 %v562
  %v1826 = vunpack.c.l.b16 %v563
  %v1827 = vunpack.c.l.b16 %v564
  %v1828 = vunpack.c.h.b16 %v564
  %v1829 = vunpack.c.l.b16 %v565
  %v1830 = vunpack.c.h.b16 %v565
  %v1831 = vunpack.c.l.b16 %v566
  %v1832 = vunpack.c.l.b16 %v567
  %v1833 = vunpack.c.h.b16 %v567
  %v1834 = vunpack.c.l.b16 %v568
  %v1835 = vunpack.c.h.b16 %v568
  %v1836 = vunpack.c.l.b16 %v569
  %v1837 = vpack.c.b16 %v1092, %v1087
  %v1838 = vpack.c.b16 %v1093, %v1088
  %v1839 = vpack.c.b16 %v1094, %v1089
  %v1840 = vpack.c.b16 %v1095, %v1090
  %v1841 = vpack.c.b16 %v1096, %v1091
  %v1842 = vpack.c.b16 %v1102, %v1097
  %v1843 = vpack.c.b16 %v1103, %v1098
  %v1844 = vpack.c.b16 %v1104, %v1099
  %v1845 = vpack.c.b16 %v1105, %v1100
  %v1846 = vpack.c.b16 %v1106, %v1101
  %v1847 = vpack.c.b16 %v1112, %v1107
  %v1848 = vpack.c.b16 %v1113, %v1108
  %v1849 = vpack.c.b16 %v1114, %v1109
  %v1850 = vpack.c.b16 %v1115, %v1110
  %v1851 = vpack.c.b16 %v1116, %v1111
  %v1852 = vpack.c.b16 %v1122, %v1117
  %v1853 = vpack.c.b16 %v1123, %v1118
  %v1854 = vpack.c.b16 %v1124, %v1119
  %v1855 = vpack.c.b16 %v1125, %v1120
  %v1856 = vpack.c.b16 %v1126, %v1121
  %v1857 = vpack.c.b16 %v1132, %v1127
  %v1858 = vpack.c.b16 %v1133, %v1128
  %v1859 = vpack.c.b16 %v1134, %v1129
  %v1860 = vpack.c.b16 %v1135, %v1130
  %v1861 = vpack.c.b16 %v1136, %v1131
  %v1862 = vpack.c.b16 %v1142, %v1137
  %v1863 = vpack.c.b16 %v1143, %v1138
  %v1864 = vpack.c.b16 %v1144, %v1139
  %v1865 = vpack.c.b16 %v1145, %v1140
  %v1866 = vpack.c.b16 %v1146, %v1141
  %v1867 = vpack.c.b16 %v1152, %v1147
  %v1868 = vpack.c.b16 %v1153, %v1148
  %v1869 = vpack.c.b16 %v1154, %v1149
  %v1870 = vpack.c.b16 %v1155, %v1150
  %v1871 = vpack.c.b16 %v1156, %v1151
  %v1872 = vpack.c.b16 %v1162, %v1157
  %v1873 = vpack.c.b16 %v1163, %v1158
  %v1874 = vpack.c.b16 %v1164, %v1159
  %v1875 = vpack.c.b16 %v1165, %v1160
  %v1876 = vpack.c.b16 %v1166, %v1161
  %v1877 = vpack.c.b16 %v1172, %v1167
  %v1878 = vpack.c.b16 %v1173, %v1168
  %v1879 = vpack.c.b16 %v1174, %v1169
  %v1880 = vpack.c.b16 %v1175, %v1170
  %v1881 = vpack.c.b16 %v1176, %v1171
  %v1882 = vpack.c.b16 %v1182, %v1177
  %v1883 = vpack.c.b16 %v1183, %v1178
  %v1884 = vpack.c.b16 %v1184, %v1179
  %v1885 = vpack.c.b16 %v1185, %v1180
  %v1886 = vpack.c.b16 %v1186, %v1181
  %v1887 = vpack.c.b16 %v1192, %v1187
  %v1888 = vpack.c.b16 %v1193, %v1188
  %v1889 = vpack.c.b16 %v1194, %v1189
  %v1890 = vpack.c.b16 %v1195, %v1190
  %v1891 = vpack.c.b16 %v1196, %v1191
  %v1892 = vpack.c.b16 %v1202, %v1197
  %v1893 = vpack.c.b16 %v1203, %v1198
  %v1894 = vpack.c.b16 %v1204, %v1199
  %v1895 = vpack.c.b16 %v1205, %v1200
  %v1896 = vpack.c.b16 %v1206, %v1201
  %v1897 = vpack.c.b16 %v1212, %v1207
  %v1898 = vpack.c.b16 %v1213, %v1208
  %v1899 = vpack.c.b16 %v1214, %v1209
  %v1900 = vpack.c.b16 %v1215, %v1210
  %v1901 = vpack.c.b16 %v1216, %v1211
  %v1902 = vpack.c.b16 %v1222, %v1217
  %v1903 = vpack.c.b16 %v1223, %v1218
  %v1904 = vpack.c.b16 %v1224, %v1219
  %v1905 = vpack.c.b16 %v1225, %v1220
  %v1906 = vpack.c.b16 %v1226, %v1221
  %v1907 = vpack.c.b16 %v1232, %v1227
  %v1908 = vpack.c.b16 %v1233, %v1228
  %v1909 = vpack.c.b16 %v1234, %v1229
  %v1910 = vpack.c.b16 %v1235, %v1230
  %v1911 = vpack.c.b16 %v1236, %v1231
  %v1912 = vpack.c.b16 %v1242, %v1237
  %v1913 = vpack.c.b16 %v1243, %v1238
  %v1914 = vpack.c.b16 %v1244, %v1239
  %v1915 = vpack.c.b16 %v1245, %v1240
  %v1916 = vpack.c.b16 %v1246, %v1241
  %v1917 = vpack.c.b16 %v1252, %v1247
  %v1918 = vpack.c.b16 %v1253, %v1248
  %v1919 = vpack.c.b16 %v1254, %v1249
  %v1920 = vpack.c.b16 %v1255, %v1250
  %v1921 = vpack.c.b16 %v1256, %v1251
  %v1922 = vpack.c.b16 %v1262, %v1257
  %v1923 = vpack.c.b16 %v1263, %v1258
  %v1924 = vpack.c.b16 %v1264, %v1259
  %v1925 = vpack.c.b16 %v1265, %v1260
  %v1926 = vpack.c.b16 %v1266, %v1261
  %v1927 = vpack.c.b16 %v1272, %v1267
  %v1928 = vpack.c.b16 %v1273, %v1268
  %v1929 = vpack.c.b16 %v1274, %v1269
  %v1930 = vpack.c.b16 %v1275, %v1270
  %v1931 = vpack.c.b16 %v1276, %v1271
  %v1932 = vpack.c.b16 %v1282, %v1277
  %v1933 = vpack.c.b16 %v1283, %v1278
  %v1934 = vpack.c.b16 %v1284, %v1279
  %v1935 = vpack.c.b16 %v1285, %v1280
  %v1936 = vpack.c.b16 %v1286, %v1281
  %v1937 = vpack.c.b16 %v1292, %v1287
  %v1938 = vpack.c.b16 %v1293, %v1288
  %v1939 = vpack.c.b16 %v1294, %v1289
  %v1940 = vpack.c.b16 %v1295, %v1290
  %v1941 = vpack.c.b16 %v1296, %v1291
  %v1942 = vpack.c.b16 %v1302, %v1297
  %v1943 = vpack.c.b16 %v1303, %v1298
  %v1944 = vpack.c.b16 %v1304, %v1299
  %v1945 = vpack.c.b16 %v1305, %v1300
  %v1946 = vpack.c.b16 %v1306, %v1301
  %v1947 = vpack.c.b16 %v1312, %v1307
  %v1948 = vpack.c.b16 %v1313, %v1308
  %v1949 = vpack.c.b16 %v1314, %v1309
  %v1950 = vpack.c.b16 %v1315, %v1310
  %v1951 = vpack.c.b16 %v1316, %v1311
  %v1952 = vpack.c.b16 %v1322, %v1317
  %v1953 = vpack.c.b16 %v1323, %v1318
  %v1954 = vpack.c.b16 %v1324, %v1319
  %v1955 = vpack.c.b16 %v1325, %v1320
  %v1956 = vpack.c.b16 %v1326, %v1321
  %v1957 = vpack.c.b16 %v1332, %v1327
  %v1958 = vpack.c.b16 %v1333, %v1328
  %v1959 = vpack.c.b16 %v1334, %v1329
  %v1960 = vpack.c.b16 %v1335, %v1330
  %v1961 = vpack.c.b16 %v1336, %v1331
  %v1962 = vpack.c.b16 %v1342, %v1337
  %v1963 = vpack.c.b16 %v1343, %v1338
  %v1964 = vpack.c.b16 %v1344, %v1339
  %v1965 = vpack.c.b16 %v1345, %v1340
  %v1966 = vpack.c.b16 %v1346, %v1341
  %v1967 = vpack.c.b16 %v1352, %v1347
  %v1968 = vpack.c.b16 %v1353, %v1348
  %v1969 = vpack.c.b16 %v1354, %v1349
  %v1970 = vpack.c.b16 %v1355, %v1350
  %v1971 = vpack.c.b16 %v1356, %v1351
  %v1972 = vpack.c.b16 %v1362, %v1357
  %v1973 = vpack.c.b16 %v1363, %v1358
  %v1974 = vpack.c.b16 %v1364, %v1359
  %v1975 = vpack.c.b16 %v1365, %v1360
  %v1976 = vpack.c.b16 %v1366, %v1361
  %v1977 = vpack.c.b16 %v1372, %v1367
  %v1978 = vpack.c.b16 %v1373, %v1368
  %v1979 = vpack.c.b16 %v1374, %v1369
  %v1980 = vpack.c.b16 %v1375, %v1370
  %v1981 = vpack.c.b16 %v1376, %v1371
  %v1982 = vpack.c.b16 %v1382, %v1377
  %v1983 = vpack.c.b16 %v1383, %v1378
  %v1984 = vpack.c.b16 %v1384, %v1379
  %v1985 = vpack.c.b16 %v1385, %v1380
  %v1986 = vpack.c.b16 %v1386, %v1381
  %v1987 = vpack.c.b16 %v1392, %v1387
  %v1988 = vpack.c.b16 %v1393, %v1388
  %v1989 = vpack.c.b16 %v1394, %v1389
  %v1990 = vpack.c.b16 %v1395, %v1390
  %v1991 = vpack.c.b16 %v1396, %v1391
  %v1992 = vpack.c.b16 %v1402, %v1397
  %v1993 = vpack.c.b16 %v1403, %v1398
  %v1994 = vpack.c.b16 %v1404, %v1399
  %v1995 = vpack.c.b16 %v1405, %v1400
  %v1996 = vpack.c.b16 %v1406, %v1401
  %v1997 = vpack.c.b16 %v1412, %v1407
  %v1998 = vpack.c.b16 %v1413, %v1408
  %v1999 = vpack.c.b16 %v1414, %v1409
  %v2000 = vpack.c.b16 %v1415, %v1410
  %v2001 = vpack.c.b16 %v1416, %v1411
  %v2002 = vpack.c.b16 %v1422, %v1417
  %v2003 = vpack.c.b16 %v1423, %v1418
  %v2004 = vpack.c.b16 %v1424, %v1419
  %v2005 = vpack.c.b16 %v1425, %v1420
  %v2006 = vpack.c.b16 %v1426, %v1421
  %v2007 = vpack.c.b16 %v1432, %v1427
  %v2008 = vpack.c.b16 %v1433, %v1428
  %v2009 = vpack.c.b16 %v1434, %v1429
  %v2010 = vpack.c.b16 %v1435, %v1430
  %v2011 = vpack.c.b16 %v1436, %v1431
  %v2012 = vpack.c.b16 %v1442, %v1437
  %v2013 = vpack.c.b16 %v1443, %v1438
  %v2014 = vpack.c.b16 %v1444, %v1439
  %v2015 = vpack.c.b16 %v1445, %v1440
  %v2016 = vpack.c.b16 %v1446, %v1441
  %v2017 = vpack.c.b16 %v1452, %v1447
  %v2018 = vpack.c.b16 %v1453, %v1448
  %v2019 = vpack.c.b16 %v1454, %v1449
  %v2020 = vpack.c.b16 %v1455, %v1450
  %v2021 = vpack.c.b16 %v1456, %v1451
  %v2022 = vpack.c.b16 %v1462, %v1457
  %v2023 = vpack.c.b16 %v1463, %v1458
  %v2024 = vpack.c.b16 %v1464, %v1459
  %v2025 = vpack.c.b16 %v1465, %v1460
  %v2026 = vpack.c.b16 %v1466, %v1461
  %v2027 = vpack.c.b16 %v1472, %v1467
  %v2028 = vpack.c.b16 %v1473, %v1468
  %v2029 = vpack.c.b16 %v1474, %v1469
  %v2030 = vpack.c.b16 %v1475, %v1470
  %v2031 = vpack.c.b16 %v1476, %v1471
  %v2032 = vpack.c.b16 %v1482, %v1477
  %v2033 = vpack.c.b16 %v1483, %v1478
  %v2034 = vpack.c.b16 %v1484, %v1479
  %v2035 = vpack.c.b16 %v1485, %v1480
  %v2036 = vpack.c.b16 %v1486, %v1481
  %v2037 = vpack.c.b16 %v1492, %v1487
  %v2038 = vpack.c.b16 %v1493, %v1488
  %v2039 = vpack.c.b16 %v1494, %v1489
  %v2040 = vpack.c.b16 %v1495, %v1490
  %v2041 = vpack.c.b16 %v1496, %v1491
  %v2042 = vpack.c.b16 %v1502, %v1497
  %v2043 = vpack.c.b16 %v1503, %v1498
  %v2044 = vpack.c.b16 %v1504, %v1499
  %v2045 = vpack.c.b16 %v1505, %v1500
  %v2046 = vpack.c.b16 %v1506, %v1501
  %v2047 = vpack.c.b16 %v1512, %v1507
  %v2048 = vpack.c.b16 %v1513, %v1508
  %v2049 = vpack.c.b16 %v1514, %v1509
  %v2050 = vpack.c.b16 %v1515, %v1510
  %v2051 = vpack.c.b16 %v1516, %v1511
  %v2052 = vpack.c.b16 %v1522, %v1517
  %v2053 = vpack.c.b16 %v1523, %v1518
  %v2054 = vpack.c.b16 %v1524, %v1519
  %v2055 = vpack.c.b16 %v1525, %v1520
  %v2056 = vpack.c.b16 %v1526, %v1521
  %v2057 = vpack.c.b16 %v1532, %v1527
  %v2058 = vpack.c.b16 %v1533, %v1528
  %v2059 = vpack.c.b16 %v1534, %v1529
  %v2060 = vpack.c.b16 %v1535, %v1530
  %v2061 = vpack.c.b16 %v1536, %v1531
  %v2062 = vpack.c.b16 %v1542, %v1537
  %v2063 = vpack.c.b16 %v1543, %v1538
  %v2064 = vpack.c.b16 %v1544, %v1539
  %v2065 = vpack.c.b16 %v1545, %v1540
  %v2066 = vpack.c.b16 %v1546, %v1541
  %v2067 = vpack.c.b16 %v1552, %v1547
  %v2068 = vpack.c.b16 %v1553, %v1548
  %v2069 = vpack.c.b16 %v1554, %v1549
  %v2070 = vpack.c.b16 %v1555, %v1550
  %v2071 = vpack.c.b16 %v1556, %v1551
  %v2072 = vpack.c.b16 %v1562, %v1557
  %v2073 = vpack.c.b16 %v1563, %v1558
  %v2074 = vpack.c.b16 %v1564, %v1559
  %v2075 = vpack.c.b16 %v1565, %v1560
  %v2076 = vpack.c.b16 %v1566, %v1561
  %v2077 = vpack.c.b16 %v1572, %v1567
  %v2078 = vpack.c.b16 %v1573, %v1568
  %v2079 = vpack.c.b16 %v1574, %v1569
  %v2080 = vpack.c.b16 %v1575, %v1570
  %v2081 = vpack.c.b16 %v1576, %v1571
  %v2082 = vpack.c.b16 %v1582, %v1577
  %v2083 = vpack.c.b16 %v1583, %v1578
  %v2084 = vpack.c.b16 %v1584, %v1579
  %v2085 = vpack.c.b16 %v1585, %v1580
  %v2086 = vpack.c.b16 %v1586, %v1581
  %v2087 = vpack.c.b16 %v1592, %v1587
  %v2088 = vpack.c.b16 %v1593, %v1588
  %v2089 = vpack.c.b16 %v1594, %v1589
  %v2090 = vpack.c.b16 %v1595, %v1590
  %v2091 = vpack.c.b16 %v1596, %v1591
  %v2092 = vpack.c.b16 %v1602, %v1597
  %v2093 = vpack.c.b16 %v1603, %v1598
  %v2094 = vpack.c.b16 %v1604, %v1599
  %v2095 = vpack.c.b16 %v1605, %v1600
  %v2096 = vpack.c.b16 %v1606, %v1601
  %v2097 = vpack.c.b16 %v1612, %v1607
  %v2098 = vpack.c.b16 %v1613, %v1608
  %v2099 = vpack.c.b16 %v1614, %v1609
  %v2100 = vpack.c.b16 %v1615, %v1610
  %v2101 = vpack.c.b16 %v1616, %v1611
  %v2102 = vpack.c.b16 %v1622, %v1617
  %v2103 = vpack.c.b16 %v1623, %v1618
  %v2104 = vpack.c.b16 %v1624, %v1619
  %v2105 = vpack.c.b16 %v1625, %v1620
  %v2106 = vpack.c.b16 %v1626, %v1621
  %v2107 = vpack.c.b16 %v1632, %v1627
  %v2108 = vpack.c.b16 %v1633, %v1628
  %v2109 = vpack.c.b16 %v1634, %v1629
  %v2110 = vpack.c.b16 %v1635, %v1630
  %v2111 = vpack.c.b16 %v1636, %v1631
  %v2112 = vpack.c.b16 %v1642, %v1637
  %v2113 = vpack.c.b16 %v1643, %v1638
  %v2114 = vpack.c.b16 %v1644, %v1639
  %v2115 = vpack.c.b16 %v1645, %v1640
  %v2116 = vpack.c.b16 %v1646, %v1641
  %v2117 = vpack.c.b16 %v1652, %v1647
  %v2118 = vpack.c.b16 %v1653, %v1648
  %v2119 = vpack.c.b16 %v1654, %v1649
  %v2120 = vpack.c.b16 %v1655, %v1650
  %v2121 = vpack.c.b16 %v1656, %v1651
  %v2122 = vpack.c.b16 %v1662, %v1657
  %v2123 = vpack.c.b16 %v1663, %v1658
  %v2124 = vpack.c.b16 %v1664, %v1659
  %v2125 = vpack.c.b16 %v1665, %v1660
  %v2126 = vpack.c.b16 %v1666, %v1661
  %v2127 = vpack.c.b16 %v1672, %v1667
  %v2128 = vpack.c.b16 %v1673, %v1668
  %v2129 = vpack.c.b16 %v1674, %v1669
  %v2130 = vpack.c.b16 %v1675, %v1670
  %v2131 = vpack.c.b16 %v1676, %v1671
  %v2132 = vpack.c.b16 %v1682, %v1677
  %v2133 = vpack.c.b16 %v1683, %v1678
  %v2134 = vpack.c.b16 %v1684, %v1679
  %v2135 = vpack.c.b16 %v1685, %v1680
  %v2136 = vpack.c.b16 %v1686, %v1681
  %v2137 = vpack.c.b16 %v1692, %v1687
  %v2138 = vpack.c.b16 %v1693, %v1688
  %v2139 = vpack.c.b16 %v1694, %v1689
  %v2140 = vpack.c.b16 %v1695, %v1690
  %v2141 = vpack.c.b16 %v1696, %v1691
  %v2142 = vpack.c.b16 %v1702, %v1697
  %v2143 = vpack.c.b16 %v1703, %v1698
  %v2144 = vpack.c.b16 %v1704, %v1699
  %v2145 = vpack.c.b16 %v1705, %v1700
  %v2146 = vpack.c.b16 %v1706, %v1701
  %v2147 = vpack.c.b16 %v1712, %v1707
  %v2148 = vpack.c.b16 %v1713, %v1708
  %v2149 = vpack.c.b16 %v1714, %v1709
  %v2150 = vpack.c.b16 %v1715, %v1710
  %v2151 = vpack.c.b16 %v1716, %v1711
  %v2152 = vpack.c.b16 %v1722, %v1717
  %v2153 = vpack.c.b16 %v1723, %v1718
  %v2154 = vpack.c.b16 %v1724, %v1719
  %v2155 = vpack.c.b16 %v1725, %v1720
  %v2156 = vpack.c.b16 %v1726, %v1721
  %v2157 = vpack.c.b16 %v1732, %v1727
  %v2158 = vpack.c.b16 %v1733, %v1728
  %v2159 = vpack.c.b16 %v1734, %v1729
  %v2160 = vpack.c.b16 %v1735, %v1730
  %v2161 = vpack.c.b16 %v1736, %v1731
  %v2162 = vpack.c.b16 %v1742, %v1737
  %v2163 = vpack.c.b16 %v1743, %v1738
  %v2164 = vpack.c.b16 %v1744, %v1739
  %v2165 = vpack.c.b16 %v1745, %v1740
  %v2166 = vpack.c.b16 %v1746, %v1741
  %v2167 = vpack.c.b16 %v1752, %v1747
  %v2168 = vpack.c.b16 %v1753, %v1748
  %v2169 = vpack.c.b16 %v1754, %v1749
  %v2170 = vpack.c.b16 %v1755, %v1750
  %v2171 = vpack.c.b16 %v1756, %v1751
  %v2172 = vpack.c.b16 %v1762, %v1757
  %v2173 = vpack.c.b16 %v1763, %v1758
  %v2174 = vpack.c.b16 %v1764, %v1759
  %v2175 = vpack.c.b16 %v1765, %v1760
  %v2176 = vpack.c.b16 %v1766, %v1761
  %v2177 = vpack.c.b16 %v1772, %v1767
  %v2178 = vpack.c.b16 %v1773, %v1768
  %v2179 = vpack.c.b16 %v1774, %v1769
  %v2180 = vpack.c.b16 %v1775, %v1770
  %v2181 = vpack.c.b16 %v1776, %v1771
  %v2182 = vpack.c.b16 %v1782, %v1777
  %v2183 = vpack.c.b16 %v1783, %v1778
  %v2184 = vpack.c.b16 %v1784, %v1779
  %v2185 = vpack.c.b16 %v1785, %v1780
  %v2186 = vpack.c.b16 %v1786, %v1781
  %v2187 = vpack.c.b16 %v1792, %v1787
  %v2188 = vpack.c.b16 %v1793, %v1788
  %v2189 = vpack.c.b16 %v1794, %v1789
  %v2190 = vpack.c.b16 %v1795, %v1790
  %v2191 = vpack.c.b16 %v1796, %v1791
  %v2192 = vpack.c.b16 %v1802, %v1797
  %v2193 = vpack.c.b16 %v1803, %v1798
  %v2194 = vpack.c.b16 %v1804, %v1799
  %v2195 = vpack.c.b16 %v1805, %v1800
  %v2196 = vpack.c.b16 %v1806, %v1801
  %v2197 = vpack.c.b16 %v1812, %v1807
  %v2198 = vpack.c.b16 %v1813, %v1808
  %v2199 = vpack.c.b16 %v1814, %v1809
  %v2200 = vpack.c.b16 %v1815, %v1810
  %v2201 = vpack.c.b16 %v1816, %v1811
  %v2202 = vpack.c.b16 %v1822, %v1817
  %v2203 = vpack.c.b16 %v1823, %v1818
  %v2204 = vpack.c.b16 %v1824, %v1819
  %v2205 = vpack.c.b16 %v1825, %v1820
  %v2206 = vpack.c.b16 %v1826, %v1821
  %v2207 = vpack.c.b16 %v1832, %v1827
  %v2208 = vpack.c.b16 %v1833, %v1828
  %v2209 = vpack.c.b16 %v1834, %v1829
  %v2210 = vpack.c.b16 %v1835, %v1830
  %v2211 = vpack.c.b16 %v1836, %v1831
  %v2578 = vunpack.c.l.b16 %v571
  %v2579 = vunpack.c.h.b16 %v571
  %v2580 = vunpack.c.l.b16 %v572
  %v2581 = vunpack.c.h.b16 %v572
  %v2582 = vunpack.c.l.b16 %v573
  %v2583 = vunpack.c.h.b16 %v573
  %v2584 = vunpack.c.l.b16 %v574
  %v2585 = vunpack.c.h.b16 %v574
  %v2586 = vunpack.c.l.b16 %v575
  %v2587 = vunpack.c.h.b16 %v575
  %v2588 = vunpack.c.l.b16 %v576
  %v2589 = vunpack.c.h.b16 %v576
  %v2590 = vunpack.c.l.b16 %v577
  %v2591 = vunpack.c.h.b16 %v577
  %v2592 = vunpack.c.l.b16 %v578
  %v2593 = vunpack.c.h.b16 %v578
  %v2594 = vunpack.c.l.b16 %v579
  %v2595 = vunpack.c.h.b16 %v579
  %v2596 = vunpack.c.l.b16 %v580
  %v2597 = vunpack.c.h.b16 %v580
  %v2598 = vunpack.c.l.b16 %v581
  %v2599 = vunpack.c.h.b16 %v581
  %v2600 = vunpack.c.l.b16 %v582
  %v2601 = vunpack.c.h.b16 %v582
  %v2602 = vunpack.c.l.b16 %v583
  %v2603 = vunpack.c.h.b16 %v583
  %v2604 = vunpack.c.l.b16 %v584
  %v2605 = vunpack.c.h.b16 %v584
  %v2606 = vunpack.c.l.b16 %v585
  %v2607 = vunpack.c.h.b16 %v585
  %v2608 = vunpack.c.l.b16 %v586
  %v2609 = vunpack.c.h.b16 %v586
  %v2610 = vunpack.c.l.b16 %v587
  %v2611 = vunpack.c.h.b16 %v587
  %v2612 = vunpack.c.l.b16 %v588
  %v2613 = vunpack.c.h.b16 %v588
  %v2614 = vunpack.c.l.b16 %v589
  %v2615 = vunpack.c.h.b16 %v589
  %v2616 = vunpack.c.l.b16 %v590
  %v2617 = vunpack.c.h.b16 %v590
  %v2618 = vunpack.c.l.b16 %v591
  %v2619 = vunpack.c.h.b16 %v591
  %v2620 = vunpack.c.l.b16 %v592
  %v2621 = vunpack.c.h.b16 %v592
  %v2622 = vunpack.c.l.b16 %v593
  %v2623 = vunpack.c.h.b16 %v593
  %v2624 = vunpack.c.l.b16 %v594
  %v2625 = vunpack.c.h.b16 %v594
  %v2626 = vunpack.c.l.b16 %v595
  %v2627 = vunpack.c.h.b16 %v595
  %v2628 = vunpack.c.l.b16 %v596
  %v2629 = vunpack.c.h.b16 %v596
  %v2630 = vunpack.c.l.b16 %v597
  %v2631 = vunpack.c.h.b16 %v597
  %v2632 = vunpack.c.l.b16 %v598
  %v2633 = vunpack.c.h.b16 %v598
  %v2634 = vunpack.c.l.b16 %v599
  %v2635 = vunpack.c.h.b16 %v599
  %v2636 = vunpack.c.l.b16 %v600
  %v2637 = vunpack.c.h.b16 %v600
  %v2638 = vunpack.c.l.b16 %v601
  %v2639 = vunpack.c.h.b16 %v601
  %v2640 = vunpack.c.l.b16 %v602
  %v2641 = vunpack.c.h.b16 %v602
  %v2642 = vunpack.c.l.b16 %v603
  %v2643 = vunpack.c.h.b16 %v603
  %v2644 = vunpack.c.l.b16 %v604
  %v2645 = vunpack.c.h.b16 %v604
  %v2646 = vunpack.c.l.b16 %v605
  %v2647 = vunpack.c.h.b16 %v605
  %v2648 = vunpack.c.l.b16 %v606
  %v2649 = vunpack.c.h.b16 %v606
  %v2650 = vunpack.c.l.b16 %v607
  %v2651 = vunpack.c.h.b16 %v607
  %v2652 = vunpack.c.l.b16 %v608
  %v2653 = vunpack.c.h.b16 %v608
  %v2654 = vunpack.c.l.b16 %v609
  %v2655 = vunpack.c.h.b16 %v609
  %v2656 = vunpack.c.l.b16 %v610
  %v2657 = vunpack.c.h.b16 %v610
  %v2658 = vunpack.c.l.b16 %v611
  %v2659 = vunpack.c.h.b16 %v611
  %v2660 = vunpack.c.l.b16 %v612
  %v2661 = vunpack.c.h.b16 %v612
  %v2662 = vunpack.c.l.b16 %v613
  %v2663 = vunpack.c.h.b16 %v613
  %v2664 = vunpack.c.l.b16 %v614
  %v2665 = vunpack.c.h.b16 %v614
  %v2666 = vunpack.c.l.b16 %v615
  %v2667 = vunpack.c.h.b16 %v615
  %v2668 = vunpack.c.l.b16 %v616
  %v2669 = vunpack.c.h.b16 %v616
  %v2670 = vunpack.c.l.b16 %v617
  %v2671 = vunpack.c.h.b16 %v617
  %v2672 = vunpack.c.l.b16 %v618
  %v2673 = vunpack.c.h.b16 %v618
  %v2674 = vunpack.c.l.b16 %v619
  %v2675 = vunpack.c.h.b16 %v619
  %v2676 = vunpack.c.l.b16 %v620
  %v2677 = vunpack.c.h.b16 %v620
  %v2678 = vunpack.c.l.b16 %v621
  %v2679 = vunpack.c.h.b16 %v621
  %v2680 = vunpack.c.l.b16 %v622
  %v2681 = vunpack.c.h.b16 %v622
  %v2682 = vunpack.c.l.b16 %v623
  %v2683 = vunpack.c.h.b16 %v623
  %v2684 = vunpack.c.l.b16 %v624
  %v2685 = vunpack.c.h.b16 %v624
  %v2686 = vunpack.c.l.b16 %v625
  %v2687 = vunpack.c.h.b16 %v625
  %v2688 = vunpack.c.l.b16 %v626
  %v2689 = vunpack.c.h.b16 %v626
  %v2690 = vunpack.c.l.b16 %v627
  %v2691 = vunpack.c.h.b16 %v627
  %v2692 = vunpack.c.l.b16 %v628
  %v2693 = vunpack.c.h.b16 %v628
  %v2694 = vunpack.c.l.b16 %v629
  %v2695 = vunpack.c.h.b16 %v629
  %v2696 = vunpack.c.l.b16 %v630
  %v2697 = vunpack.c.h.b16 %v630
  %v2698 = vunpack.c.l.b16 %v631
  %v2699 = vunpack.c.h.b16 %v631
  %v2700 = vunpack.c.l.b16 %v632
  %v2701 = vunpack.c.h.b16 %v632
  %v2702 = vunpack.c.l.b16 %v633
  %v2703 = vunpack.c.h.b16 %v633
  %v2704 = vunpack.c.l.b16 %v634
  %v2705 = vunpack.c.h.b16 %v634
  %v2706 = vunpack.c.l.b16 %v635
  %v2707 = vunpack.c.h.b16 %v635
  %v2708 = vunpack.c.l.b16 %v636
  %v2709 = vunpack.c.h.b16 %v636
  %v2710 = vpack.c.b16 %v2580, %v2578
  %v2711 = vpack.c.b16 %v2581, %v2579
  %v2712 = vpack.c.b16 %v2584, %v2582
  %v2713 = vpack.c.b16 %v2585, %v2583
  %v2714 = vpack.c.b16 %v2588, %v2586
  %v2715 = vpack.c.b16 %v2589, %v2587
  %v2716 = vpack.c.b16 %v2592, %v2590
  %v2717 = vpack.c.b16 %v2593, %v2591
  %v2718 = vpack.c.b16 %v2596, %v2594
  %v2719 = vpack.c.b16 %v2597, %v2595
  %v2720 = vpack.c.b16 %v2600, %v2598
  %v2721 = vpack.c.b16 %v2601, %v2599
  %v2722 = vpack.c.b16 %v2604, %v2602
  %v2723 = vpack.c.b16 %v2605, %v2603
  %v2724 = vpack.c.b16 %v2608, %v2606
  %v2725 = vpack.c.b16 %v2609, %v2607
  %v2726 = vpack.c.b16 %v2612, %v2610
  %v2727 = vpack.c.b16 %v2613, %v2611
  %v2728 = vpack.c.b16 %v2616, %v2614
  %v2729 = vpack.c.b16 %v2617, %v2615
  %v2730 = vpack.c.b16 %v2620, %v2618
  %v2731 = vpack.c.b16 %v2621, %v2619
  %v2732 = vpack.c.b16 %v2624, %v2622
  %v2733 = vpack.c.b16 %v2625, %v2623
  %v2734 = vpack.c.b16 %v2628, %v2626
  %v2735 = vpack.c.b16 %v2629, %v2627
  %v2736 = vpack.c.b16 %v2632, %v2630
  %v2737 = vpack.c.b16 %v2633, %v2631
  %v2738 = vpack.c.b16 %v2636, %v2634
  %v2739 = vpack.c.b16 %v2637, %v2635
  %v2740 = vpack.c.b16 %v2640, %v2638
  %v2741 = vpack.c.b16 %v2641, %v2639
  %v2742 = vpack.c.b16 %v2644, %v2642
  %v2743 = vpack.c.b16 %v2645, %v2643
  %v2744 = vpack.c.b16 %v2648, %v2646
  %v2745 = vpack.c.b16 %v2649, %v2647
  %v2746 = vpack.c.b16 %v2652, %v2650
  %v2747 = vpack.c.b16 %v2653, %v2651
  %v2748 = vpack.c.b16 %v2656, %v2654
  %v2749 = vpack.c.b16 %v2657, %v2655
  %v2750 = vpack.c.b16 %v2660, %v2658
  %v2751 = vpack.c.b16 %v2661, %v2659
  %v2752 = vpack.c.b16 %v2664, %v2662
  %v2753 = vpack.c.b16 %v2665, %v2663
  %v2754 = vpack.c.b16 %v2668, %v2666
  %v2755 = vpack.c.b16 %v2669, %v2667
  %v2756 = vpack.c.b16 %v2672, %v2670
  %v2757 = vpack.c.b16 %v2673, %v2671
  %v2758 = vpack.c.b16 %v2676, %v2674
  %v2759 = vpack.c.b16 %v2677, %v2675
  %v2760 = vpack.c.b16 %v2680, %v2678
  %v2761 = vpack.c.b16 %v2681, %v2679
  %v2762 = vpack.c.b16 %v2684, %v2682
  %v2763 = vpack.c.b16 %v2685, %v2683
  %v2764 = vpack.c.b16 %v2688, %v2686
  %v2765 = vpack.c.b16 %v2689, %v2687
  %v2766 = vpack.c.b16 %v2692, %v2690
  %v2767 = vpack.c.b16 %v2693, %v2691
  %v2768 = vpack.c.b16 %v2696, %v2694
  %v2769 = vpack.c.b16 %v2697, %v2695
  %v2770 = vpack.c.b16 %v2700, %v2698
  %v2771 = vpack.c.b16 %v2701, %v2699
  %v2772 = vpack.c.b16 %v2704, %v2702
  %v2773 = vpack.c.b16 %v2705, %v2703
  %v2774 = vpack.c.b16 %v2708, %v2706
  %v2775 = vpack.c.b16 %v2709, %v2707
  %vm2842 = vcmask 130048
  %v2844 = vsel %vm2842, %v1841, 0
  %v2847 = vsel %vm2842, %v1846, 0
  %v2850 = vsel %vm2842, %v1851, 0
  %v2853 = vsel %vm2842, %v1856, 0
  %v2856 = vsel %vm2842, %v1861, 0
  %v2859 = vsel %vm2842, %v1866, 0
  %v2862 = vsel %vm2842, %v1871, 0
  %v2865 = vsel %vm2842, %v1876, 0
  %v2868 = vsel %vm2842, %v1881, 0
  %v2871 = vsel %vm2842, %v1886, 0
  %v2874 = vsel %vm2842, %v1891, 0
  %v2877 = vsel %vm2842, %v1896, 0
  %v2880 = vsel %vm2842, %v1901, 0
  %v2883 = vsel %vm2842, %v1906, 0
  %v2886 = vsel %vm2842, %v1911, 0
  %v2889 = vsel %vm2842, %v1916, 0
  %v2892 = vsel %vm2842, %v1921, 0
  %v2895 = vsel %vm2842, %v1926, 0
  %v2898 = vsel %vm2842, %v1931, 0
  %v2901 = vsel %vm2842, %v1936, 0
  %v2904 = vsel %vm2842, %v1941, 0
  %v2907 = vsel %vm2842, %v1946, 0
  %v2910 = vsel %vm2842, %v1951, 0
  %v2913 = vsel %vm2842, %v1956, 0
  %v2916 = vsel %vm2842, %v1961, 0
  %v2919 = vsel %vm2842, %v1966, 0
  %v2922 = vsel %vm2842, %v1971, 0
  %v2925 = vsel %vm2842, %v1976, 0
  %v2928 = vsel %vm2842, %v1981, 0
  %v2931 = vsel %vm2842, %v1986, 0
  %v2934 = vsel %vm2842, %v1991, 0
  %v2937 = vsel %vm2842, %v1996, 0
  %v2940 = vsel %vm2842, %v2001, 0
  %v2943 = vsel %vm2842, %v2006, 0
  %v2946 = vsel %vm2842, %v2011, 0
  %v2949 = vsel %vm2842, %v2016, 0
  %v2952 = vsel %vm2842, %v2021, 0
  %v2955 = vsel %vm2842, %v2026, 0
  %v2958 = vsel %vm2842, %v2031, 0
  %v2961 = vsel %vm2842, %v2036, 0
  %v2964 = vsel %vm2842, %v2041, 0
  %v2967 = vsel %vm2842, %v2046, 0
  %v2970 = vsel %vm2842, %v2051, 0
  %v2973 = vsel %vm2842, %v2056, 0
  %v2976 = vsel %vm2842, %v2061, 0
  %v2979 = vsel %vm2842, %v2066, 0
  %v2982 = vsel %vm2842, %v2071, 0
  %v2985 = vsel %vm2842, %v2076, 0
  %v2988 = vsel %vm2842, %v2081, 0
  %v2991 = vsel %vm2842, %v2086, 0
  %v2994 = vsel %vm2842, %v2091, 0
  %v2997 = vsel %vm2842, %v2096, 0
  %v3000 = vsel %vm2842, %v2101, 0
  %v3003 = vsel %vm2842, %v2106, 0
  %v3006 = vsel %vm2842, %v2111, 0
  %v3009 = vsel %vm2842, %v2116, 0
  %v3012 = vsel %vm2842, %v2121, 0
  %v3015 = vsel %vm2842, %v2126, 0
  %v3018 = vsel %vm2842, %v2131, 0
  %v3021 = vsel %vm2842, %v2136, 0
  %v3024 = vsel %vm2842, %v2141, 0
  %v3027 = vsel %vm2842, %v2146, 0
  %v3030 = vsel %vm2842, %v2151, 0
  %v3033 = vsel %vm2842, %v2156, 0
  %v3036 = vsel %vm2842, %v2161, 0
  %v3039 = vsel %vm2842, %v2166, 0
  %v3042 = vsel %vm2842, %v2171, 0
  %v3045 = vsel %vm2842, %v2176, 0
  %v3048 = vsel %vm2842, %v2181, 0
  %v3051 = vsel %vm2842, %v2186, 0
  %v3054 = vsel %vm2842, %v2191, 0
  %v3057 = vsel %vm2842, %v2196, 0
  %v3060 = vsel %vm2842, %v2201, 0
  %v3063 = vsel %vm2842, %v2206, 0
  %v3066 = vsel %vm2842, %v2211, 0
  %3068 = vmatprep.subr.bf16.mxu0 %v2711
  %3069 = vmatpush1.bf16.msra.mxu0 %v2710
  %3070 = vmatprep.subr.bf16.mxu0 %v2713
  %3071 = vmatpush1.bf16.msra.mxu0 %v2712
  %3072 = vmatprep.subr.bf16.mxu0 %v2715
  %3073 = vmatpush1.bf16.msra.mxu0 %v2714
  %3074 = vmatprep.subr.bf16.mxu0 %v2717
  %3075 = vmatpush1.bf16.msra.mxu0 %v2716
  %3076 = vmatprep.subr.bf16.mxu0 %v2719
  %3077 = vmatpush1.bf16.msra.mxu0 %v2718
  %3078 = vmatprep.subr.bf16.mxu0 %v2721
  %3079 = vmatpush1.bf16.msra.mxu0 %v2720
  %3080 = vmatprep.subr.bf16.mxu0 %v2723
  %3081 = vmatpush1.bf16.msra.mxu0 %v2722
  %3082 = vmatprep.subr.bf16.mxu0 %v2725
  %3083 = vmatpush1.bf16.msra.mxu0 %v2724
  %3084 = vmatprep.subr.bf16.mxu0 %v2727
  %3085 = vmatpush1.bf16.msra.mxu0 %v2726
  %3086 = vmatprep.subr.bf16.mxu0 %v2729
  %3087 = vmatpush1.bf16.msra.mxu0 %v2728
  %3088 = vmatprep.subr.bf16.mxu0 %v2731
  %3089 = vmatpush1.bf16.msra.mxu0 %v2730
  %3090 = vmatprep.subr.bf16.mxu0 %v2733
  %3091 = vmatpush1.bf16.msra.mxu0 %v2732
  %3092 = vmatprep.subr.bf16.mxu0 %v2735
  %3093 = vmatpush1.bf16.msra.mxu0 %v2734
  %3094 = vmatprep.subr.bf16.mxu0 %v2737
  %3095 = vmatpush1.bf16.msra.mxu0 %v2736
  %3096 = vmatprep.subr.bf16.mxu0 %v2739
  %3097 = vmatpush1.bf16.msra.mxu0 %v2738
  %3098 = vmatprep.subr.bf16.mxu0 %v2741
  %3099 = vmatpush1.bf16.msra.mxu0 %v2740
  %3100 = vmatprep.mubr.bf16.mxu0 %v1838
  %3101 = vmatmul.mubr.bf16.gmra.mrb[0].mxu0 %v1837
  %v3102 = vpop.f32.mrb[0].mxu0
  %v3103 = vadd.f32 0.0, %v3102
  %v3104 = vpop.f32.mrb[0].mxu0
  %v3105 = vpop.f32.mrb[0].mxu0
  %v3106 = vadd.f32 0.0, %v3105
  %v3107 = vpop.f32.mrb[0].mxu0
  %3108 = vmatprep.mubr.bf16.mxu0 %v1843
  %3109 = vmatmul.mubr.bf16.gmra.mrb[0].mxu0 %v1842
  %v3110 = vpop.f32.mrb[0].mxu0
  %v3111 = vadd.f32 0.0, %v3110
  %v3112 = vpop.f32.mrb[0].mxu0
  %v3113 = vpop.f32.mrb[0].mxu0
  %v3114 = vadd.f32 0.0, %v3113
  %v3115 = vpop.f32.mrb[0].mxu0
  %3116 = vmatprep.mubr.bf16.mxu0 %v1848
  %3117 = vmatmul.mubr.bf16.gmra.mrb[0].mxu0 %v1847
  %v3118 = vpop.f32.mrb[0].mxu0
  %v3119 = vadd.f32 0.0, %v3118
  %v3120 = vpop.f32.mrb[0].mxu0
  %v3121 = vpop.f32.mrb[0].mxu0
  %v3122 = vadd.f32 0.0, %v3121
  %v3123 = vpop.f32.mrb[0].mxu0
  %3124 = vmatprep.mubr.bf16.mxu0 %v1853
  %3125 = vmatmul.mubr.bf16.gmra.mrb[0].mxu0 %v1852
  %v3126 = vpop.f32.mrb[0].mxu0
  %v3127 = vadd.f32 0.0, %v3126
  %v3128 = vpop.f32.mrb[0].mxu0
  %v3129 = vadd.f32 0.0, %v3128
  %v3130 = vpop.f32.mrb[0].mxu0
  %v3131 = vadd.f32 0.0, %v3130
  %v3132 = vpop.f32.mrb[0].mxu0
  %v3133 = vadd.f32 0.0, %v3132
  %3134 = vmatprep.mubr.bf16.mxu0 %v1858
  %3135 = vmatmul.mubr.bf16.gmra.mrb[0].mxu0 %v1857
  %v3136 = vpop.f32.mrb[0].mxu0
  %v3137 = vadd.f32 0.0, %v3136
  %v3138 = vpop.f32.mrb[0].mxu0
  %v3139 = vadd.f32 0.0, %v3138
  %v3140 = vpop.f32.mrb[0].mxu0
  %v3141 = vadd.f32 0.0, %v3140
  %v3142 = vpop.f32.mrb[0].mxu0
  %v3143 = vadd.f32 0.0, %v3142
  %3144 = vmatprep.mubr.bf16.mxu0 %v1863
  %3145 = vmatmul.mubr.bf16.gmra.mrb[0].mxu0 %v1862
  %v3146 = vpop.f32.mrb[0].mxu0
  %v3147 = vadd.f32 0.0, %v3146
  %v3148 = vpop.f32.mrb[0].mxu0
  %v3149 = vadd.f32 0.0, %v3148
  %v3150 = vpop.f32.mrb[0].mxu0
  %v3151 = vadd.f32 0.0, %v3150
  %v3152 = vpop.f32.mrb[0].mxu0
  %v3153 = vadd.f32 0.0, %v3152
  %3154 = vmatprep.mubr.bf16.mxu0 %v1868
  %3155 = vmatmul.mubr.bf16.gmra.mrb[0].mxu0 %v1867
  %v3156 = vpop.f32.mrb[0].mxu0
  %v3157 = vadd.f32 0.0, %v3156
  %v3158 = vpop.f32.mrb[0].mxu0
  %v3159 = vadd.f32 0.0, %v3158
  %v3160 = vpop.f32.mrb[0].mxu0
  %v3161 = vadd.f32 0.0, %v3160
  %v3162 = vpop.f32.mrb[0].mxu0
  %v3163 = vadd.f32 0.0, %v3162
  %3164 = vmatprep.mubr.bf16.mxu0 %v1873
  %3165 = vmatmul.mubr.bf16.gmra.mrb[0].mxu0 %v1872
  %v3166 = vpop.f32.mrb[0].mxu0
  %v3167 = vadd.f32 0.0, %v3166
  %v3168 = vpop.f32.mrb[0].mxu0
  %v3169 = vadd.f32 0.0, %v3168
  %v3170 = vpop.f32.mrb[0].mxu0
  %v3171 = vadd.f32 0.0, %v3170
  %v3172 = vpop.f32.mrb[0].mxu0
  %v3173 = vadd.f32 0.0, %v3172
  %3174 = vmatprep.mubr.bf16.mxu0 %v1878
  %3175 = vmatmul.mubr.bf16.gmra.mrb[0].mxu0 %v1877
  %v3176 = vpop.f32.mrb[0].mxu0
  %v3177 = vadd.f32 0.0, %v3176
  %v3178 = vpop.f32.mrb[0].mxu0
  %v3179 = vadd.f32 0.0, %v3178
  %v3180 = vpop.f32.mrb[0].mxu0
  %v3181 = vadd.f32 0.0, %v3180
  %v3182 = vpop.f32.mrb[0].mxu0
  %v3183 = vadd.f32 0.0, %v3182
  %3184 = vmatprep.mubr.bf16.mxu0 %v1883
  %3185 = vmatmul.mubr.bf16.gmra.mrb[0].mxu0 %v1882
  %v3186 = vpop.f32.mrb[0].mxu0
  %v3187 = vadd.f32 0.0, %v3186
  %v3188 = vpop.f32.mrb[0].mxu0
  %v3189 = vadd.f32 0.0, %v3188
  %v3190 = vpop.f32.mrb[0].mxu0
  %v3191 = vadd.f32 0.0, %v3190
  %v3192 = vpop.f32.mrb[0].mxu0
  %v3193 = vadd.f32 0.0, %v3192
  %3194 = vmatprep.mubr.bf16.mxu0 %v1888
  %3195 = vmatmul.mubr.bf16.gmra.mrb[0].mxu0 %v1887
  %v3196 = vpop.f32.mrb[0].mxu0
  %v3197 = vadd.f32 0.0, %v3196
  %v3198 = vpop.f32.mrb[0].mxu0
  %v3199 = vadd.f32 0.0, %v3198
  %v3200 = vpop.f32.mrb[0].mxu0
  %v3201 = vadd.f32 0.0, %v3200
  %v3202 = vpop.f32.mrb[0].mxu0
  %v3203 = vadd.f32 0.0, %v3202
  %3204 = vmatprep.mubr.bf16.mxu0 %v1893
  %3205 = vmatmul.mubr.bf16.gmra.mrb[0].mxu0 %v1892
  %v3206 = vpop.f32.mrb[0].mxu0
  %v3207 = vadd.f32 0.0, %v3206
  %v3208 = vpop.f32.mrb[0].mxu0
  %v3209 = vadd.f32 0.0, %v3208
  %v3210 = vpop.f32.mrb[0].mxu0
  %v3211 = vadd.f32 0.0, %v3210
  %v3212 = vpop.f32.mrb[0].mxu0
  %v3213 = vadd.f32 0.0, %v3212
  %3214 = vmatprep.mubr.bf16.mxu0 %v1898
  %3215 = vmatmul.mubr.bf16.gmra.mrb[0].mxu0 %v1897
  %v3216 = vpop.f32.mrb[0].mxu0
  %v3217 = vadd.f32 0.0, %v3216
  %v3218 = vpop.f32.mrb[0].mxu0
  %v3219 = vadd.f32 0.0, %v3218
  %v3220 = vpop.f32.mrb[0].mxu0
  %v3221 = vadd.f32 0.0, %v3220
  %v3222 = vpop.f32.mrb[0].mxu0
  %v3223 = vadd.f32 0.0, %v3222
  %3224 = vmatprep.mubr.bf16.mxu0 %v1903
  %3225 = vmatmul.mubr.bf16.gmra.mrb[0].mxu0 %v1902
  %v3226 = vpop.f32.mrb[0].mxu0
  %v3227 = vadd.f32 0.0, %v3226
  %v3228 = vpop.f32.mrb[0].mxu0
  %v3229 = vadd.f32 0.0, %v3228
  %v3230 = vpop.f32.mrb[0].mxu0
  %v3231 = vadd.f32 0.0, %v3230
  %v3232 = vpop.f32.mrb[0].mxu0
  %v3233 = vadd.f32 0.0, %v3232
  %3234 = vmatprep.mubr.bf16.mxu0 %v1908
  %3235 = vmatmul.mubr.bf16.gmra.mrb[0].mxu0 %v1907
  %v3236 = vpop.f32.mrb[0].mxu0
  %v3237 = vadd.f32 0.0, %v3236
  %v3238 = vpop.f32.mrb[0].mxu0
  %v3239 = vadd.f32 0.0, %v3238
  %v3240 = vpop.f32.mrb[0].mxu0
  %v3241 = vadd.f32 0.0, %v3240
  %v3242 = vpop.f32.mrb[0].mxu0
  %v3243 = vadd.f32 0.0, %v3242
  %3244 = vmatprep.mubr.bf16.mxu0 %v1913
  %3245 = vmatmul.mubr.bf16.gmra.mrb[0].mxu0 %v1912
  %v3246 = vpop.f32.mrb[0].mxu0
  %v3247 = vadd.f32 0.0, %v3246
  %v3248 = vpop.f32.mrb[0].mxu0
  %v3249 = vadd.f32 0.0, %v3248
  %v3250 = vpop.f32.mrb[0].mxu0
  %v3251 = vadd.f32 0.0, %v3250
  %v3252 = vpop.f32.mrb[0].mxu0
  %v3253 = vadd.f32 0.0, %v3252
  %3254 = vmatprep.mubr.bf16.mxu0 %v1918
  %3255 = vmatmul.mubr.bf16.gmra.mrb[0].mxu0 %v1917
  %v3256 = vpop.f32.mrb[0].mxu0
  %v3257 = vadd.f32 0.0, %v3256
  %v3258 = vpop.f32.mrb[0].mxu0
  %v3259 = vadd.f32 0.0, %v3258
  %v3260 = vpop.f32.mrb[0].mxu0
  %v3261 = vadd.f32 0.0, %v3260
  %v3262 = vpop.f32.mrb[0].mxu0
  %v3263 = vadd.f32 0.0, %v3262
  %3264 = vmatprep.mubr.bf16.mxu0 %v1923
  %3265 = vmatmul.mubr.bf16.gmra.mrb[0].mxu0 %v1922
  %v3266 = vpop.f32.mrb[0].mxu0
  %v3267 = vadd.f32 0.0, %v3266
  %v3268 = vpop.f32.mrb[0].mxu0
  %v3269 = vadd.f32 0.0, %v3268
  %v3270 = vpop.f32.mrb[0].mxu0
  %v3271 = vadd.f32 0.0, %v3270
  %v3272 = vpop.f32.mrb[0].mxu0
  %v3273 = vadd.f32 0.0, %v3272
  %3274 = vmatprep.mubr.bf16.mxu0 %v1928
  %3275 = vmatmul.mubr.bf16.gmra.mrb[0].mxu0 %v1927
  %v3276 = vpop.f32.mrb[0].mxu0
  %v3277 = vadd.f32 0.0, %v3276
  %v3278 = vpop.f32.mrb[0].mxu0
  %v3279 = vadd.f32 0.0, %v3278
  %v3280 = vpop.f32.mrb[0].mxu0
  %v3281 = vadd.f32 0.0, %v3280
  %v3282 = vpop.f32.mrb[0].mxu0
  %v3283 = vadd.f32 0.0, %v3282
  %3284 = vmatprep.mubr.bf16.mxu0 %v1933
  %3285 = vmatmul.mubr.bf16.gmra.mrb[0].mxu0 %v1932
  %v3286 = vpop.f32.mrb[0].mxu0
  %v3287 = vadd.f32 0.0, %v3286
  %v3288 = vpop.f32.mrb[0].mxu0
  %v3289 = vadd.f32 0.0, %v3288
  %v3290 = vpop.f32.mrb[0].mxu0
  %v3291 = vadd.f32 0.0, %v3290
  %v3292 = vpop.f32.mrb[0].mxu0
  %v3293 = vadd.f32 0.0, %v3292
  %3294 = vmatprep.mubr.bf16.mxu0 %v1938
  %3295 = vmatmul.mubr.bf16.gmra.mrb[0].mxu0 %v1937
  %v3296 = vpop.f32.mrb[0].mxu0
  %v3297 = vadd.f32 0.0, %v3296
  %v3298 = vpop.f32.mrb[0].mxu0
  %v3299 = vadd.f32 0.0, %v3298
  %v3300 = vpop.f32.mrb[0].mxu0
  %v3301 = vadd.f32 0.0, %v3300
  %v3302 = vpop.f32.mrb[0].mxu0
  %v3303 = vadd.f32 0.0, %v3302
  %3304 = vmatprep.mubr.bf16.mxu0 %v1943
  %3305 = vmatmul.mubr.bf16.gmra.mrb[0].mxu0 %v1942
  %v3306 = vpop.f32.mrb[0].mxu0
  %v3307 = vadd.f32 0.0, %v3306
  %v3308 = vpop.f32.mrb[0].mxu0
  %v3309 = vadd.f32 0.0, %v3308
  %v3310 = vpop.f32.mrb[0].mxu0
  %v3311 = vadd.f32 0.0, %v3310
  %v3312 = vpop.f32.mrb[0].mxu0
  %v3313 = vadd.f32 0.0, %v3312
  %3314 = vmatprep.mubr.bf16.mxu0 %v1948
  %3315 = vmatmul.mubr.bf16.gmra.mrb[0].mxu0 %v1947
  %v3316 = vpop.f32.mrb[0].mxu0
  %v3317 = vadd.f32 0.0, %v3316
  %v3318 = vpop.f32.mrb[0].mxu0
  %v3319 = vadd.f32 0.0, %v3318
  %v3320 = vpop.f32.mrb[0].mxu0
  %v3321 = vadd.f32 0.0, %v3320
  %v3322 = vpop.f32.mrb[0].mxu0
  %v3323 = vadd.f32 0.0, %v3322
  %3324 = vmatprep.mubr.bf16.mxu0 %v1953
  %3325 = vmatmul.mubr.bf16.gmra.mrb[0].mxu0 %v1952
  %v3326 = vpop.f32.mrb[0].mxu0
  %v3327 = vadd.f32 0.0, %v3326
  %v3328 = vpop.f32.mrb[0].mxu0
  %v3329 = vadd.f32 0.0, %v3328
  %v3330 = vpop.f32.mrb[0].mxu0
  %v3331 = vadd.f32 0.0, %v3330
  %v3332 = vpop.f32.mrb[0].mxu0
  %v3333 = vadd.f32 0.0, %v3332
  %3334 = vmatprep.mubr.bf16.mxu0 %v1958
  %3335 = vmatmul.mubr.bf16.gmra.mrb[0].mxu0 %v1957
  %v3336 = vpop.f32.mrb[0].mxu0
  %v3337 = vadd.f32 0.0, %v3336
  %v3338 = vpop.f32.mrb[0].mxu0
  %v3339 = vadd.f32 0.0, %v3338
  %v3340 = vpop.f32.mrb[0].mxu0
  %v3341 = vadd.f32 0.0, %v3340
  %v3342 = vpop.f32.mrb[0].mxu0
  %v3343 = vadd.f32 0.0, %v3342
  %3344 = vmatprep.mubr.bf16.mxu0 %v1963
  %3345 = vmatmul.mubr.bf16.gmra.mrb[0].mxu0 %v1962
  %v3346 = vpop.f32.mrb[0].mxu0
  %v3347 = vadd.f32 0.0, %v3346
  %v3348 = vpop.f32.mrb[0].mxu0
  %v3349 = vadd.f32 0.0, %v3348
  %v3350 = vpop.f32.mrb[0].mxu0
  %v3351 = vadd.f32 0.0, %v3350
  %v3352 = vpop.f32.mrb[0].mxu0
  %v3353 = vadd.f32 0.0, %v3352
  %3354 = vmatprep.mubr.bf16.mxu0 %v1968
  %3355 = vmatmul.mubr.bf16.gmra.mrb[0].mxu0 %v1967
  %v3356 = vpop.f32.mrb[0].mxu0
  %v3357 = vadd.f32 0.0, %v3356
  %v3358 = vpop.f32.mrb[0].mxu0
  %v3359 = vadd.f32 0.0, %v3358
  %v3360 = vpop.f32.mrb[0].mxu0
  %v3361 = vadd.f32 0.0, %v3360
  %v3362 = vpop.f32.mrb[0].mxu0
  %v3363 = vadd.f32 0.0, %v3362
  %3364 = vmatprep.mubr.bf16.mxu0 %v1973
  %3365 = vmatmul.mubr.bf16.gmra.mrb[0].mxu0 %v1972
  %v3366 = vpop.f32.mrb[0].mxu0
  %v3367 = vadd.f32 0.0, %v3366
  %v3368 = vpop.f32.mrb[0].mxu0
  %v3369 = vadd.f32 0.0, %v3368
  %v3370 = vpop.f32.mrb[0].mxu0
  %v3371 = vadd.f32 0.0, %v3370
  %v3372 = vpop.f32.mrb[0].mxu0
  %v3373 = vadd.f32 0.0, %v3372
  %3374 = vmatprep.mubr.bf16.mxu0 %v1978
  %3375 = vmatmul.mubr.bf16.gmra.mrb[0].mxu0 %v1977
  %v3376 = vpop.f32.mrb[0].mxu0
  %v3377 = vadd.f32 0.0, %v3376
  %v3378 = vpop.f32.mrb[0].mxu0
  %v3379 = vadd.f32 0.0, %v3378
  %v3380 = vpop.f32.mrb[0].mxu0
  %v3381 = vadd.f32 0.0, %v3380
  %v3382 = vpop.f32.mrb[0].mxu0
  %v3383 = vadd.f32 0.0, %v3382
  %3384 = vmatprep.mubr.bf16.mxu0 %v1983
  %3385 = vmatmul.mubr.bf16.gmra.mrb[0].mxu0 %v1982
  %v3386 = vpop.f32.mrb[0].mxu0
  %v3387 = vadd.f32 0.0, %v3386
  %v3388 = vpop.f32.mrb[0].mxu0
  %v3389 = vadd.f32 0.0, %v3388
  %v3390 = vpop.f32.mrb[0].mxu0
  %v3391 = vadd.f32 0.0, %v3390
  %v3392 = vpop.f32.mrb[0].mxu0
  %v3393 = vadd.f32 0.0, %v3392
  %3394 = vmatprep.mubr.bf16.mxu0 %v1988
  %3395 = vmatmul.mubr.bf16.gmra.mrb[0].mxu0 %v1987
  %v3396 = vpop.f32.mrb[0].mxu0
  %v3397 = vadd.f32 0.0, %v3396
  %v3398 = vpop.f32.mrb[0].mxu0
  %v3399 = vadd.f32 0.0, %v3398
  %v3400 = vpop.f32.mrb[0].mxu0
  %v3401 = vadd.f32 0.0, %v3400
  %v3402 = vpop.f32.mrb[0].mxu0
  %v3403 = vadd.f32 0.0, %v3402
  %3404 = vmatprep.mubr.bf16.mxu0 %v1993
  %3405 = vmatmul.mubr.bf16.gmra.mrb[0].mxu0 %v1992
  %v3406 = vpop.f32.mrb[0].mxu0
  %v3407 = vadd.f32 0.0, %v3406
  %v3408 = vpop.f32.mrb[0].mxu0
  %v3409 = vadd.f32 0.0, %v3408
  %v3410 = vpop.f32.mrb[0].mxu0
  %v3411 = vadd.f32 0.0, %v3410
  %v3412 = vpop.f32.mrb[0].mxu0
  %v3413 = vadd.f32 0.0, %v3412
  %3414 = vmatprep.mubr.bf16.mxu0 %v1998
  %3415 = vmatmul.mubr.bf16.gmra.mrb[0].mxu0 %v1997
  %v3416 = vpop.f32.mrb[0].mxu0
  %v3417 = vadd.f32 0.0, %v3416
  %v3418 = vpop.f32.mrb[0].mxu0
  %v3419 = vadd.f32 0.0, %v3418
  %v3420 = vpop.f32.mrb[0].mxu0
  %v3421 = vadd.f32 0.0, %v3420
  %v3422 = vpop.f32.mrb[0].mxu0
  %v3423 = vadd.f32 0.0, %v3422
  %3424 = vmatprep.mubr.bf16.mxu0 %v2003
  %3425 = vmatmul.mubr.bf16.gmra.mrb[0].mxu0 %v2002
  %v3426 = vpop.f32.mrb[0].mxu0
  %v3427 = vadd.f32 0.0, %v3426
  %v3428 = vpop.f32.mrb[0].mxu0
  %v3429 = vadd.f32 0.0, %v3428
  %v3430 = vpop.f32.mrb[0].mxu0
  %v3431 = vadd.f32 0.0, %v3430
  %v3432 = vpop.f32.mrb[0].mxu0
  %v3433 = vadd.f32 0.0, %v3432
  %3434 = vmatprep.mubr.bf16.mxu0 %v2008
  %3435 = vmatmul.mubr.bf16.gmra.mrb[0].mxu0 %v2007
  %v3436 = vpop.f32.mrb[0].mxu0
  %v3437 = vadd.f32 0.0, %v3436
  %v3438 = vpop.f32.mrb[0].mxu0
  %v3439 = vadd.f32 0.0, %v3438
  %v3440 = vpop.f32.mrb[0].mxu0
  %v3441 = vadd.f32 0.0, %v3440
  %v3442 = vpop.f32.mrb[0].mxu0
  %v3443 = vadd.f32 0.0, %v3442
  %3444 = vmatprep.mubr.bf16.mxu0 %v2013
  %3445 = vmatmul.mubr.bf16.gmra.mrb[0].mxu0 %v2012
  %v3446 = vpop.f32.mrb[0].mxu0
  %v3447 = vadd.f32 0.0, %v3446
  %v3448 = vpop.f32.mrb[0].mxu0
  %v3449 = vadd.f32 0.0, %v3448
  %v3450 = vpop.f32.mrb[0].mxu0
  %v3451 = vadd.f32 0.0, %v3450
  %v3452 = vpop.f32.mrb[0].mxu0
  %v3453 = vadd.f32 0.0, %v3452
  %3454 = vmatprep.mubr.bf16.mxu0 %v2018
  %3455 = vmatmul.mubr.bf16.gmra.mrb[0].mxu0 %v2017
  %v3456 = vpop.f32.mrb[0].mxu0
  %v3457 = vadd.f32 0.0, %v3456
  %v3458 = vpop.f32.mrb[0].mxu0
  %v3459 = vadd.f32 0.0, %v3458
  %v3460 = vpop.f32.mrb[0].mxu0
  %v3461 = vadd.f32 0.0, %v3460
  %v3462 = vpop.f32.mrb[0].mxu0
  %v3463 = vadd.f32 0.0, %v3462
  %3464 = vmatprep.mubr.bf16.mxu0 %v2023
  %3465 = vmatmul.mubr.bf16.gmra.mrb[0].mxu0 %v2022
  %v3466 = vpop.f32.mrb[0].mxu0
  %v3467 = vadd.f32 0.0, %v3466
  %v3468 = vpop.f32.mrb[0].mxu0
  %v3469 = vadd.f32 0.0, %v3468
  %v3470 = vpop.f32.mrb[0].mxu0
  %v3471 = vadd.f32 0.0, %v3470
  %v3472 = vpop.f32.mrb[0].mxu0
  %v3473 = vadd.f32 0.0, %v3472
  %3474 = vmatprep.mubr.bf16.mxu0 %v2028
  %3475 = vmatmul.mubr.bf16.gmra.mrb[0].mxu0 %v2027
  %v3476 = vpop.f32.mrb[0].mxu0
  %v3477 = vadd.f32 0.0, %v3476
  %v3478 = vpop.f32.mrb[0].mxu0
  %v3479 = vadd.f32 0.0, %v3478
  %v3480 = vpop.f32.mrb[0].mxu0
  %v3481 = vadd.f32 0.0, %v3480
  %v3482 = vpop.f32.mrb[0].mxu0
  %v3483 = vadd.f32 0.0, %v3482
  %3484 = vmatprep.mubr.bf16.mxu0 %v2033
  %3485 = vmatmul.mubr.bf16.gmra.mrb[0].mxu0 %v2032
  %v3486 = vpop.f32.mrb[0].mxu0
  %v3487 = vadd.f32 0.0, %v3486
  %v3488 = vpop.f32.mrb[0].mxu0
  %v3489 = vadd.f32 0.0, %v3488
  %v3490 = vpop.f32.mrb[0].mxu0
  %v3491 = vadd.f32 0.0, %v3490
  %v3492 = vpop.f32.mrb[0].mxu0
  %v3493 = vadd.f32 0.0, %v3492
  %3494 = vmatprep.mubr.bf16.mxu0 %v2038
  %3495 = vmatmul.mubr.bf16.gmra.mrb[0].mxu0 %v2037
  %v3496 = vpop.f32.mrb[0].mxu0
  %v3497 = vadd.f32 0.0, %v3496
  %v3498 = vpop.f32.mrb[0].mxu0
  %v3499 = vadd.f32 0.0, %v3498
  %v3500 = vpop.f32.mrb[0].mxu0
  %v3501 = vadd.f32 0.0, %v3500
  %v3502 = vpop.f32.mrb[0].mxu0
  %v3503 = vadd.f32 0.0, %v3502
  %3504 = vmatprep.mubr.bf16.mxu0 %v2043
  %3505 = vmatmul.mubr.bf16.gmra.mrb[0].mxu0 %v2042
  %v3506 = vpop.f32.mrb[0].mxu0
  %v3507 = vadd.f32 0.0, %v3506
  %v3508 = vpop.f32.mrb[0].mxu0
  %v3509 = vadd.f32 0.0, %v3508
  %v3510 = vpop.f32.mrb[0].mxu0
  %v3511 = vadd.f32 0.0, %v3510
  %v3512 = vpop.f32.mrb[0].mxu0
  %v3513 = vadd.f32 0.0, %v3512
  %3514 = vmatprep.mubr.bf16.mxu0 %v2048
  %3515 = vmatmul.mubr.bf16.gmra.mrb[0].mxu0 %v2047
  %v3516 = vpop.f32.mrb[0].mxu0
  %v3517 = vadd.f32 0.0, %v3516
  %v3518 = vpop.f32.mrb[0].mxu0
  %v3519 = vadd.f32 0.0, %v3518
  %v3520 = vpop.f32.mrb[0].mxu0
  %v3521 = vadd.f32 0.0, %v3520
  %v3522 = vpop.f32.mrb[0].mxu0
  %v3523 = vadd.f32 0.0, %v3522
  %3524 = vmatprep.mubr.bf16.mxu0 %v2053
  %3525 = vmatmul.mubr.bf16.gmra.mrb[0].mxu0 %v2052
  %v3526 = vpop.f32.mrb[0].mxu0
  %v3527 = vadd.f32 0.0, %v3526
  %v3528 = vpop.f32.mrb[0].mxu0
  %v3529 = vadd.f32 0.0, %v3528
  %v3530 = vpop.f32.mrb[0].mxu0
  %v3531 = vadd.f32 0.0, %v3530
  %v3532 = vpop.f32.mrb[0].mxu0
  %v3533 = vadd.f32 0.0, %v3532
  %3534 = vmatprep.mubr.bf16.mxu0 %v2058
  %3535 = vmatmul.mubr.bf16.gmra.mrb[0].mxu0 %v2057
  %v3536 = vpop.f32.mrb[0].mxu0
  %v3537 = vadd.f32 0.0, %v3536
  %v3538 = vpop.f32.mrb[0].mxu0
  %v3539 = vadd.f32 0.0, %v3538
  %v3540 = vpop.f32.mrb[0].mxu0
  %v3541 = vadd.f32 0.0, %v3540
  %v3542 = vpop.f32.mrb[0].mxu0
  %v3543 = vadd.f32 0.0, %v3542
  %3544 = vmatprep.mubr.bf16.mxu0 %v2063
  %3545 = vmatmul.mubr.bf16.gmra.mrb[0].mxu0 %v2062
  %v3546 = vpop.f32.mrb[0].mxu0
  %v3547 = vadd.f32 0.0, %v3546
  %v3548 = vpop.f32.mrb[0].mxu0
  %v3549 = vadd.f32 0.0, %v3548
  %v3550 = vpop.f32.mrb[0].mxu0
  %v3551 = vadd.f32 0.0, %v3550
  %v3552 = vpop.f32.mrb[0].mxu0
  %v3553 = vadd.f32 0.0, %v3552
  %3554 = vmatprep.mubr.bf16.mxu0 %v2068
  %3555 = vmatmul.mubr.bf16.gmra.mrb[0].mxu0 %v2067
  %v3556 = vpop.f32.mrb[0].mxu0
  %v3557 = vadd.f32 0.0, %v3556
  %v3558 = vpop.f32.mrb[0].mxu0
  %v3559 = vadd.f32 0.0, %v3558
  %v3560 = vpop.f32.mrb[0].mxu0
  %v3561 = vadd.f32 0.0, %v3560
  %v3562 = vpop.f32.mrb[0].mxu0
  %v3563 = vadd.f32 0.0, %v3562
  %3564 = vmatprep.mubr.bf16.mxu0 %v2073
  %3565 = vmatmul.mubr.bf16.gmra.mrb[0].mxu0 %v2072
  %v3566 = vpop.f32.mrb[0].mxu0
  %v3567 = vadd.f32 0.0, %v3566
  %v3568 = vpop.f32.mrb[0].mxu0
  %v3569 = vadd.f32 0.0, %v3568
  %v3570 = vpop.f32.mrb[0].mxu0
  %v3571 = vadd.f32 0.0, %v3570
  %v3572 = vpop.f32.mrb[0].mxu0
  %v3573 = vadd.f32 0.0, %v3572
  %3574 = vmatprep.mubr.bf16.mxu0 %v2078
  %3575 = vmatmul.mubr.bf16.gmra.mrb[0].mxu0 %v2077
  %v3576 = vpop.f32.mrb[0].mxu0
  %v3577 = vadd.f32 0.0, %v3576
  %v3578 = vpop.f32.mrb[0].mxu0
  %v3579 = vadd.f32 0.0, %v3578
  %v3580 = vpop.f32.mrb[0].mxu0
  %v3581 = vadd.f32 0.0, %v3580
  %v3582 = vpop.f32.mrb[0].mxu0
  %v3583 = vadd.f32 0.0, %v3582
  %3584 = vmatprep.mubr.bf16.mxu0 %v2083
  %3585 = vmatmul.mubr.bf16.gmra.mrb[0].mxu0 %v2082
  %v3586 = vpop.f32.mrb[0].mxu0
  %v3587 = vadd.f32 0.0, %v3586
  %v3588 = vpop.f32.mrb[0].mxu0
  %v3589 = vadd.f32 0.0, %v3588
  %v3590 = vpop.f32.mrb[0].mxu0
  %v3591 = vadd.f32 0.0, %v3590
  %v3592 = vpop.f32.mrb[0].mxu0
  %v3593 = vadd.f32 0.0, %v3592
  %3594 = vmatprep.mubr.bf16.mxu0 %v2088
  %3595 = vmatmul.mubr.bf16.gmra.mrb[0].mxu0 %v2087
  %v3596 = vpop.f32.mrb[0].mxu0
  %v3597 = vadd.f32 0.0, %v3596
  %v3598 = vpop.f32.mrb[0].mxu0
  %v3599 = vadd.f32 0.0, %v3598
  %v3600 = vpop.f32.mrb[0].mxu0
  %v3601 = vadd.f32 0.0, %v3600
  %v3602 = vpop.f32.mrb[0].mxu0
  %v3603 = vadd.f32 0.0, %v3602
  %3604 = vmatprep.mubr.bf16.mxu0 %v2093
  %3605 = vmatmul.mubr.bf16.gmra.mrb[0].mxu0 %v2092
  %v3606 = vpop.f32.mrb[0].mxu0
  %v3607 = vadd.f32 0.0, %v3606
  %v3608 = vpop.f32.mrb[0].mxu0
  %v3609 = vadd.f32 0.0, %v3608
  %v3610 = vpop.f32.mrb[0].mxu0
  %v3611 = vadd.f32 0.0, %v3610
  %v3612 = vpop.f32.mrb[0].mxu0
  %v3613 = vadd.f32 0.0, %v3612
  %3614 = vmatprep.mubr.bf16.mxu0 %v2098
  %3615 = vmatmul.mubr.bf16.gmra.mrb[0].mxu0 %v2097
  %v3616 = vpop.f32.mrb[0].mxu0
  %v3617 = vadd.f32 0.0, %v3616
  %v3618 = vpop.f32.mrb[0].mxu0
  %v3619 = vadd.f32 0.0, %v3618
  %v3620 = vpop.f32.mrb[0].mxu0
  %v3621 = vadd.f32 0.0, %v3620
  %v3622 = vpop.f32.mrb[0].mxu0
  %v3623 = vadd.f32 0.0, %v3622
  %3624 = vmatprep.mubr.bf16.mxu0 %v2103
  %3625 = vmatmul.mubr.bf16.gmra.mrb[0].mxu0 %v2102
  %v3626 = vpop.f32.mrb[0].mxu0
  %v3627 = vadd.f32 0.0, %v3626
  %v3628 = vpop.f32.mrb[0].mxu0
  %v3629 = vadd.f32 0.0, %v3628
  %v3630 = vpop.f32.mrb[0].mxu0
  %v3631 = vadd.f32 0.0, %v3630
  %v3632 = vpop.f32.mrb[0].mxu0
  %v3633 = vadd.f32 0.0, %v3632
  %3634 = vmatprep.mubr.bf16.mxu0 %v2108
  %3635 = vmatmul.mubr.bf16.gmra.mrb[0].mxu0 %v2107
  %v3636 = vpop.f32.mrb[0].mxu0
  %v3637 = vadd.f32 0.0, %v3636
  %v3638 = vpop.f32.mrb[0].mxu0
  %v3639 = vadd.f32 0.0, %v3638
  %v3640 = vpop.f32.mrb[0].mxu0
  %v3641 = vadd.f32 0.0, %v3640
  %v3642 = vpop.f32.mrb[0].mxu0
  %v3643 = vadd.f32 0.0, %v3642
  %3644 = vmatprep.mubr.bf16.mxu0 %v2113
  %3645 = vmatmul.mubr.bf16.gmra.mrb[0].mxu0 %v2112
  %v3646 = vpop.f32.mrb[0].mxu0
  %v3647 = vadd.f32 0.0, %v3646
  %v3648 = vpop.f32.mrb[0].mxu0
  %v3649 = vadd.f32 0.0, %v3648
  %v3650 = vpop.f32.mrb[0].mxu0
  %v3651 = vadd.f32 0.0, %v3650
  %v3652 = vpop.f32.mrb[0].mxu0
  %v3653 = vadd.f32 0.0, %v3652
  %3654 = vmatprep.mubr.bf16.mxu0 %v2118
  %3655 = vmatmul.mubr.bf16.gmra.mrb[0].mxu0 %v2117
  %v3656 = vpop.f32.mrb[0].mxu0
  %v3657 = vadd.f32 0.0, %v3656
  %v3658 = vpop.f32.mrb[0].mxu0
  %v3659 = vadd.f32 0.0, %v3658
  %v3660 = vpop.f32.mrb[0].mxu0
  %v3661 = vadd.f32 0.0, %v3660
  %v3662 = vpop.f32.mrb[0].mxu0
  %v3663 = vadd.f32 0.0, %v3662
  %3664 = vmatprep.mubr.bf16.mxu0 %v2123
  %3665 = vmatmul.mubr.bf16.gmra.mrb[0].mxu0 %v2122
  %v3666 = vpop.f32.mrb[0].mxu0
  %v3667 = vadd.f32 0.0, %v3666
  %v3668 = vpop.f32.mrb[0].mxu0
  %v3669 = vadd.f32 0.0, %v3668
  %v3670 = vpop.f32.mrb[0].mxu0
  %v3671 = vadd.f32 0.0, %v3670
  %v3672 = vpop.f32.mrb[0].mxu0
  %v3673 = vadd.f32 0.0, %v3672
  %3674 = vmatprep.mubr.bf16.mxu0 %v2128
  %3675 = vmatmul.mubr.bf16.gmra.mrb[0].mxu0 %v2127
  %v3676 = vpop.f32.mrb[0].mxu0
  %v3677 = vadd.f32 0.0, %v3676
  %v3678 = vpop.f32.mrb[0].mxu0
  %v3679 = vadd.f32 0.0, %v3678
  %v3680 = vpop.f32.mrb[0].mxu0
  %v3681 = vadd.f32 0.0, %v3680
  %v3682 = vpop.f32.mrb[0].mxu0
  %v3683 = vadd.f32 0.0, %v3682
  %3684 = vmatprep.mubr.bf16.mxu0 %v2133
  %3685 = vmatmul.mubr.bf16.gmra.mrb[0].mxu0 %v2132
  %v3686 = vpop.f32.mrb[0].mxu0
  %v3687 = vadd.f32 0.0, %v3686
  %v3688 = vpop.f32.mrb[0].mxu0
  %v3689 = vadd.f32 0.0, %v3688
  %v3690 = vpop.f32.mrb[0].mxu0
  %v3691 = vadd.f32 0.0, %v3690
  %v3692 = vpop.f32.mrb[0].mxu0
  %v3693 = vadd.f32 0.0, %v3692
  %3694 = vmatprep.mubr.bf16.mxu0 %v2138
  %3695 = vmatmul.mubr.bf16.gmra.mrb[0].mxu0 %v2137
  %v3696 = vpop.f32.mrb[0].mxu0
  %v3697 = vadd.f32 0.0, %v3696
  %v3698 = vpop.f32.mrb[0].mxu0
  %v3699 = vadd.f32 0.0, %v3698
  %v3700 = vpop.f32.mrb[0].mxu0
  %v3701 = vadd.f32 0.0, %v3700
  %v3702 = vpop.f32.mrb[0].mxu0
  %v3703 = vadd.f32 0.0, %v3702
  %3704 = vmatprep.mubr.bf16.mxu0 %v2143
  %3705 = vmatmul.mubr.bf16.gmra.mrb[0].mxu0 %v2142
  %v3706 = vpop.f32.mrb[0].mxu0
  %v3707 = vadd.f32 0.0, %v3706
  %v3708 = vpop.f32.mrb[0].mxu0
  %v3709 = vadd.f32 0.0, %v3708
  %v3710 = vpop.f32.mrb[0].mxu0
  %v3711 = vadd.f32 0.0, %v3710
  %v3712 = vpop.f32.mrb[0].mxu0
  %v3713 = vadd.f32 0.0, %v3712
  %3714 = vmatprep.mubr.bf16.mxu0 %v2148
  %3715 = vmatmul.mubr.bf16.gmra.mrb[0].mxu0 %v2147
  %v3716 = vpop.f32.mrb[0].mxu0
  %v3717 = vadd.f32 0.0, %v3716
  %v3718 = vpop.f32.mrb[0].mxu0
  %v3719 = vadd.f32 0.0, %v3718
  %v3720 = vpop.f32.mrb[0].mxu0
  %v3721 = vadd.f32 0.0, %v3720
  %v3722 = vpop.f32.mrb[0].mxu0
  %v3723 = vadd.f32 0.0, %v3722
  %3724 = vmatprep.mubr.bf16.mxu0 %v2153
  %3725 = vmatmul.mubr.bf16.gmra.mrb[0].mxu0 %v2152
  %v3726 = vpop.f32.mrb[0].mxu0
  %v3727 = vadd.f32 0.0, %v3726
  %v3728 = vpop.f32.mrb[0].mxu0
  %v3729 = vadd.f32 0.0, %v3728
  %v3730 = vpop.f32.mrb[0].mxu0
  %v3731 = vadd.f32 0.0, %v3730
  %v3732 = vpop.f32.mrb[0].mxu0
  %v3733 = vadd.f32 0.0, %v3732
  %3734 = vmatprep.mubr.bf16.mxu0 %v2158
  %3735 = vmatmul.mubr.bf16.gmra.mrb[0].mxu0 %v2157
  %v3736 = vpop.f32.mrb[0].mxu0
  %v3737 = vadd.f32 0.0, %v3736
  %v3738 = vpop.f32.mrb[0].mxu0
  %v3739 = vadd.f32 0.0, %v3738
  %v3740 = vpop.f32.mrb[0].mxu0
  %v3741 = vadd.f32 0.0, %v3740
  %v3742 = vpop.f32.mrb[0].mxu0
  %v3743 = vadd.f32 0.0, %v3742
  %3744 = vmatprep.mubr.bf16.mxu0 %v2163
  %3745 = vmatmul.mubr.bf16.gmra.mrb[0].mxu0 %v2162
  %v3746 = vpop.f32.mrb[0].mxu0
  %v3747 = vadd.f32 0.0, %v3746
  %v3748 = vpop.f32.mrb[0].mxu0
  %v3749 = vadd.f32 0.0, %v3748
  %v3750 = vpop.f32.mrb[0].mxu0
  %v3751 = vadd.f32 0.0, %v3750
  %v3752 = vpop.f32.mrb[0].mxu0
  %v3753 = vadd.f32 0.0, %v3752
  %3754 = vmatprep.mubr.bf16.mxu0 %v2168
  %3755 = vmatmul.mubr.bf16.gmra.mrb[0].mxu0 %v2167
  %v3756 = vpop.f32.mrb[0].mxu0
  %v3757 = vadd.f32 0.0, %v3756
  %v3758 = vpop.f32.mrb[0].mxu0
  %v3759 = vadd.f32 0.0, %v3758
  %v3760 = vpop.f32.mrb[0].mxu0
  %v3761 = vadd.f32 0.0, %v3760
  %v3762 = vpop.f32.mrb[0].mxu0
  %v3763 = vadd.f32 0.0, %v3762
  %3764 = vmatprep.mubr.bf16.mxu0 %v2173
  %3765 = vmatmul.mubr.bf16.gmra.mrb[0].mxu0 %v2172
  %v3766 = vpop.f32.mrb[0].mxu0
  %v3767 = vadd.f32 0.0, %v3766
  %v3768 = vpop.f32.mrb[0].mxu0
  %v3769 = vadd.f32 0.0, %v3768
  %v3770 = vpop.f32.mrb[0].mxu0
  %v3771 = vadd.f32 0.0, %v3770
  %v3772 = vpop.f32.mrb[0].mxu0
  %v3773 = vadd.f32 0.0, %v3772
  %3774 = vmatprep.mubr.bf16.mxu0 %v2178
  %3775 = vmatmul.mubr.bf16.gmra.mrb[0].mxu0 %v2177
  %v3776 = vpop.f32.mrb[0].mxu0
  %v3777 = vadd.f32 0.0, %v3776
  %v3778 = vpop.f32.mrb[0].mxu0
  %v3779 = vadd.f32 0.0, %v3778
  %v3780 = vpop.f32.mrb[0].mxu0
  %v3781 = vadd.f32 0.0, %v3780
  %v3782 = vpop.f32.mrb[0].mxu0
  %v3783 = vadd.f32 0.0, %v3782
  %3784 = vmatprep.mubr.bf16.mxu0 %v2183
  %3785 = vmatmul.mubr.bf16.gmra.mrb[0].mxu0 %v2182
  %v3786 = vpop.f32.mrb[0].mxu0
  %v3787 = vadd.f32 0.0, %v3786
  %v3788 = vpop.f32.mrb[0].mxu0
  %v3789 = vadd.f32 0.0, %v3788
  %v3790 = vpop.f32.mrb[0].mxu0
  %v3791 = vadd.f32 0.0, %v3790
  %v3792 = vpop.f32.mrb[0].mxu0
  %v3793 = vadd.f32 0.0, %v3792
  %3794 = vmatprep.mubr.bf16.mxu0 %v2188
  %3795 = vmatmul.mubr.bf16.gmra.mrb[0].mxu0 %v2187
  %v3796 = vpop.f32.mrb[0].mxu0
  %v3797 = vadd.f32 0.0, %v3796
  %v3798 = vpop.f32.mrb[0].mxu0
  %v3799 = vadd.f32 0.0, %v3798
  %v3800 = vpop.f32.mrb[0].mxu0
  %v3801 = vadd.f32 0.0, %v3800
  %v3802 = vpop.f32.mrb[0].mxu0
  %v3803 = vadd.f32 0.0, %v3802
  %3804 = vmatprep.mubr.bf16.mxu0 %v2193
  %3805 = vmatmul.mubr.bf16.gmra.mrb[0].mxu0 %v2192
  %v3806 = vpop.f32.mrb[0].mxu0
  %v3807 = vadd.f32 0.0, %v3806
  %v3808 = vpop.f32.mrb[0].mxu0
  %v3809 = vadd.f32 0.0, %v3808
  %v3810 = vpop.f32.mrb[0].mxu0
  %v3811 = vadd.f32 0.0, %v3810
  %v3812 = vpop.f32.mrb[0].mxu0
  %v3813 = vadd.f32 0.0, %v3812
  %3814 = vmatprep.mubr.bf16.mxu0 %v2198
  %3815 = vmatmul.mubr.bf16.gmra.mrb[0].mxu0 %v2197
  %v3816 = vpop.f32.mrb[0].mxu0
  %v3817 = vpop.f32.mrb[0].mxu0
  %v3818 = vadd.f32 0.0, %v3817
  %v3819 = vpop.f32.mrb[0].mxu0
  %v3820 = vpop.f32.mrb[0].mxu0
  %v3821 = vadd.f32 0.0, %v3820
  %3822 = vmatprep.mubr.bf16.mxu0 %v2203
  %3823 = vmatmul.mubr.bf16.gmra.mrb[0].mxu0 %v2202
  %v3824 = vpop.f32.mrb[0].mxu0
  %v3825 = vpop.f32.mrb[0].mxu0
  %v3826 = vadd.f32 0.0, %v3825
  %v3827 = vpop.f32.mrb[0].mxu0
  %v3828 = vpop.f32.mrb[0].mxu0
  %v3829 = vadd.f32 0.0, %v3828
  %3830 = vmatprep.mubr.bf16.mxu0 %v2208
  %3831 = vmatmul.mubr.bf16.gmra.mrb[0].mxu0 %v2207
  %v3832 = vpop.f32.mrb[0].mxu0
  %v3833 = vpop.f32.mrb[0].mxu0
  %v3834 = vadd.f32 0.0, %v3833
  %v3835 = vpop.f32.mrb[0].mxu0
  %v3836 = vpop.f32.mrb[0].mxu0
  %v3837 = vadd.f32 0.0, %v3836
  %3838 = vdwg.mxu0
  %3839 = vmatprep.subr.bf16.mxu0 %v2743
  %3840 = vmatpush1.bf16.msra.mxu0 %v2742
  %3841 = vmatprep.subr.bf16.mxu0 %v2745
  %3842 = vmatpush1.bf16.msra.mxu0 %v2744
  %3843 = vmatprep.subr.bf16.mxu0 %v2747
  %3844 = vmatpush1.bf16.msra.mxu0 %v2746
  %3845 = vmatprep.subr.bf16.mxu0 %v2749
  %3846 = vmatpush1.bf16.msra.mxu0 %v2748
  %3847 = vmatprep.subr.bf16.mxu0 %v2751
  %3848 = vmatpush1.bf16.msra.mxu0 %v2750
  %3849 = vmatprep.subr.bf16.mxu0 %v2753
  %3850 = vmatpush1.bf16.msra.mxu0 %v2752
  %3851 = vmatprep.subr.bf16.mxu0 %v2755
  %3852 = vmatpush1.bf16.msra.mxu0 %v2754
  %3853 = vmatprep.subr.bf16.mxu0 %v2757
  %3854 = vmatpush1.bf16.msra.mxu0 %v2756
  %3855 = vmatprep.subr.bf16.mxu0 %v2759
  %3856 = vmatpush1.bf16.msra.mxu0 %v2758
  %3857 = vmatprep.subr.bf16.mxu0 %v2761
  %3858 = vmatpush1.bf16.msra.mxu0 %v2760
  %3859 = vmatprep.subr.bf16.mxu0 %v2763
  %3860 = vmatpush1.bf16.msra.mxu0 %v2762
  %3861 = vmatprep.subr.bf16.mxu0 %v2765
  %3862 = vmatpush1.bf16.msra.mxu0 %v2764
  %3863 = vmatprep.subr.bf16.mxu0 %v2767
  %3864 = vmatpush1.bf16.msra.mxu0 %v2766
  %3865 = vmatprep.subr.bf16.mxu0 %v2769
  %3866 = vmatpush1.bf16.msra.mxu0 %v2768
  %3867 = vmatprep.subr.bf16.mxu0 %v2771
  %3868 = vmatpush1.bf16.msra.mxu0 %v2770
  %3869 = vmatprep.subr.bf16.mxu0 %v2773
  %3870 = vmatpush1.bf16.msra.mxu0 %v2772
  %3871 = vmatprep.mubr.bf16.mxu0 %v1840
  %3872 = vmatmul.mubr.bf16.gmra.mrb[0].mxu0 %v1839
  %v3873 = vpop.f32.mrb[0].mxu0
  %v3874 = vadd.f32 %v3103, %v3873
  %v3875 = vpop.f32.mrb[0].mxu0
  %v3876 = vpop.f32.mrb[0].mxu0
  %v3877 = vadd.f32 %v3106, %v3876
  %v3878 = vpop.f32.mrb[0].mxu0
  %3879 = vmatprep.mubr.bf16.mxu0 %v1845
  %3880 = vmatmul.mubr.bf16.gmra.mrb[0].mxu0 %v1844
  %v3881 = vpop.f32.mrb[0].mxu0
  %v3882 = vadd.f32 %v3111, %v3881
  %v3883 = vpop.f32.mrb[0].mxu0
  %v3884 = vpop.f32.mrb[0].mxu0
  %v3885 = vadd.f32 %v3114, %v3884
  %v3886 = vpop.f32.mrb[0].mxu0
  %3887 = vmatprep.mubr.bf16.mxu0 %v1850
  %3888 = vmatmul.mubr.bf16.gmra.mrb[0].mxu0 %v1849
  %v3889 = vpop.f32.mrb[0].mxu0
  %v3890 = vadd.f32 %v3119, %v3889
  %v3891 = vpop.f32.mrb[0].mxu0
  %v3892 = vpop.f32.mrb[0].mxu0
  %v3893 = vadd.f32 %v3122, %v3892
  %v3894 = vpop.f32.mrb[0].mxu0
  %3895 = vmatprep.mubr.bf16.mxu0 %v1855
  %3896 = vmatmul.mubr.bf16.gmra.mrb[0].mxu0 %v1854
  %v3897 = vpop.f32.mrb[0].mxu0
  %v3898 = vadd.f32 %v3127, %v3897
  %v3899 = vpop.f32.mrb[0].mxu0
  %v3900 = vadd.f32 %v3129, %v3899
  %v3901 = vpop.f32.mrb[0].mxu0
  %v3902 = vadd.f32 %v3131, %v3901
  %v3903 = vpop.f32.mrb[0].mxu0
  %v3904 = vadd.f32 %v3133, %v3903
  %3905 = vmatprep.mubr.bf16.mxu0 %v1860
  %3906 = vmatmul.mubr.bf16.gmra.mrb[0].mxu0 %v1859
  %v3907 = vpop.f32.mrb[0].mxu0
  %v3908 = vadd.f32 %v3137, %v3907
  %v3909 = vpop.f32.mrb[0].mxu0
  %v3910 = vadd.f32 %v3139, %v3909
  %v3911 = vpop.f32.mrb[0].mxu0
  %v3912 = vadd.f32 %v3141, %v3911
  %v3913 = vpop.f32.mrb[0].mxu0
  %v3914 = vadd.f32 %v3143, %v3913
  %3915 = vmatprep.mubr.bf16.mxu0 %v1865
  %3916 = vmatmul.mubr.bf16.gmra.mrb[0].mxu0 %v1864
  %v3917 = vpop.f32.mrb[0].mxu0
  %v3918 = vadd.f32 %v3147, %v3917
  %v3919 = vpop.f32.mrb[0].mxu0
  %v3920 = vadd.f32 %v3149, %v3919
  %v3921 = vpop.f32.mrb[0].mxu0
  %v3922 = vadd.f32 %v3151, %v3921
  %v3923 = vpop.f32.mrb[0].mxu0
  %v3924 = vadd.f32 %v3153, %v3923
  %3925 = vmatprep.mubr.bf16.mxu0 %v1870
  %3926 = vmatmul.mubr.bf16.gmra.mrb[0].mxu0 %v1869
  %v3927 = vpop.f32.mrb[0].mxu0
  %v3928 = vadd.f32 %v3157, %v3927
  %v3929 = vpop.f32.mrb[0].mxu0
  %v3930 = vadd.f32 %v3159, %v3929
  %v3931 = vpop.f32.mrb[0].mxu0
  %v3932 = vadd.f32 %v3161, %v3931
  %v3933 = vpop.f32.mrb[0].mxu0
  %v3934 = vadd.f32 %v3163, %v3933
  %3935 = vmatprep.mubr.bf16.mxu0 %v1875
  %3936 = vmatmul.mubr.bf16.gmra.mrb[0].mxu0 %v1874
  %v3937 = vpop.f32.mrb[0].mxu0
  %v3938 = vadd.f32 %v3167, %v3937
  %v3939 = vpop.f32.mrb[0].mxu0
  %v3940 = vadd.f32 %v3169, %v3939
  %v3941 = vpop.f32.mrb[0].mxu0
  %v3942 = vadd.f32 %v3171, %v3941
  %v3943 = vpop.f32.mrb[0].mxu0
  %v3944 = vadd.f32 %v3173, %v3943
  %3945 = vmatprep.mubr.bf16.mxu0 %v1880
  %3946 = vmatmul.mubr.bf16.gmra.mrb[0].mxu0 %v1879
  %v3947 = vpop.f32.mrb[0].mxu0
  %v3948 = vadd.f32 %v3177, %v3947
  %v3949 = vpop.f32.mrb[0].mxu0
  %v3950 = vadd.f32 %v3179, %v3949
  %v3951 = vpop.f32.mrb[0].mxu0
  %v3952 = vadd.f32 %v3181, %v3951
  %v3953 = vpop.f32.mrb[0].mxu0
  %v3954 = vadd.f32 %v3183, %v3953
  %3955 = vmatprep.mubr.bf16.mxu0 %v1885
  %3956 = vmatmul.mubr.bf16.gmra.mrb[0].mxu0 %v1884
  %v3957 = vpop.f32.mrb[0].mxu0
  %v3958 = vadd.f32 %v3187, %v3957
  %v3959 = vpop.f32.mrb[0].mxu0
  %v3960 = vadd.f32 %v3189, %v3959
  %v3961 = vpop.f32.mrb[0].mxu0
  %v3962 = vadd.f32 %v3191, %v3961
  %v3963 = vpop.f32.mrb[0].mxu0
  %v3964 = vadd.f32 %v3193, %v3963
  %3965 = vmatprep.mubr.bf16.mxu0 %v1890
  %3966 = vmatmul.mubr.bf16.gmra.mrb[0].mxu0 %v1889
  %v3967 = vpop.f32.mrb[0].mxu0
  %v3968 = vadd.f32 %v3197, %v3967
  %v3969 = vpop.f32.mrb[0].mxu0
  %v3970 = vadd.f32 %v3199, %v3969
  %v3971 = vpop.f32.mrb[0].mxu0
  %v3972 = vadd.f32 %v3201, %v3971
  %v3973 = vpop.f32.mrb[0].mxu0
  %v3974 = vadd.f32 %v3203, %v3973
  %3975 = vmatprep.mubr.bf16.mxu0 %v1895
  %3976 = vmatmul.mubr.bf16.gmra.mrb[0].mxu0 %v1894
  %v3977 = vpop.f32.mrb[0].mxu0
  %v3978 = vadd.f32 %v3207, %v3977
  %v3979 = vpop.f32.mrb[0].mxu0
  %v3980 = vadd.f32 %v3209, %v3979
  %v3981 = vpop.f32.mrb[0].mxu0
  %v3982 = vadd.f32 %v3211, %v3981
  %v3983 = vpop.f32.mrb[0].mxu0
  %v3984 = vadd.f32 %v3213, %v3983
  %3985 = vmatprep.mubr.bf16.mxu0 %v1900
  %3986 = vmatmul.mubr.bf16.gmra.mrb[0].mxu0 %v1899
  %v3987 = vpop.f32.mrb[0].mxu0
  %v3988 = vadd.f32 %v3217, %v3987
  %v3989 = vpop.f32.mrb[0].mxu0
  %v3990 = vadd.f32 %v3219, %v3989
  %v3991 = vpop.f32.mrb[0].mxu0
  %v3992 = vadd.f32 %v3221, %v3991
  %v3993 = vpop.f32.mrb[0].mxu0
  %v3994 = vadd.f32 %v3223, %v3993
  %3995 = vmatprep.mubr.bf16.mxu0 %v1905
  %3996 = vmatmul.mubr.bf16.gmra.mrb[0].mxu0 %v1904
  %v3997 = vpop.f32.mrb[0].mxu0
  %v3998 = vadd.f32 %v3227, %v3997
  %v3999 = vpop.f32.mrb[0].mxu0
  %v4000 = vadd.f32 %v3229, %v3999
  %v4001 = vpop.f32.mrb[0].mxu0
  %v4002 = vadd.f32 %v3231, %v4001
  %v4003 = vpop.f32.mrb[0].mxu0
  %v4004 = vadd.f32 %v3233, %v4003
  %4005 = vmatprep.mubr.bf16.mxu0 %v1910
  %4006 = vmatmul.mubr.bf16.gmra.mrb[0].mxu0 %v1909
  %v4007 = vpop.f32.mrb[0].mxu0
  %v4008 = vadd.f32 %v3237, %v4007
  %v4009 = vpop.f32.mrb[0].mxu0
  %v4010 = vadd.f32 %v3239, %v4009
  %v4011 = vpop.f32.mrb[0].mxu0
  %v4012 = vadd.f32 %v3241, %v4011
  %v4013 = vpop.f32.mrb[0].mxu0
  %v4014 = vadd.f32 %v3243, %v4013
  %4015 = vmatprep.mubr.bf16.mxu0 %v1915
  %4016 = vmatmul.mubr.bf16.gmra.mrb[0].mxu0 %v1914
  %v4017 = vpop.f32.mrb[0].mxu0
  %v4018 = vadd.f32 %v3247, %v4017
  %v4019 = vpop.f32.mrb[0].mxu0
  %v4020 = vadd.f32 %v3249, %v4019
  %v4021 = vpop.f32.mrb[0].mxu0
  %v4022 = vadd.f32 %v3251, %v4021
  %v4023 = vpop.f32.mrb[0].mxu0
  %v4024 = vadd.f32 %v3253, %v4023
  %4025 = vmatprep.mubr.bf16.mxu0 %v1920
  %4026 = vmatmul.mubr.bf16.gmra.mrb[0].mxu0 %v1919
  %v4027 = vpop.f32.mrb[0].mxu0
  %v4028 = vadd.f32 %v3257, %v4027
  %v4029 = vpop.f32.mrb[0].mxu0
  %v4030 = vadd.f32 %v3259, %v4029
  %v4031 = vpop.f32.mrb[0].mxu0
  %v4032 = vadd.f32 %v3261, %v4031
  %v4033 = vpop.f32.mrb[0].mxu0
  %v4034 = vadd.f32 %v3263, %v4033
  %4035 = vmatprep.mubr.bf16.mxu0 %v1925
  %4036 = vmatmul.mubr.bf16.gmra.mrb[0].mxu0 %v1924
  %v4037 = vpop.f32.mrb[0].mxu0
  %v4038 = vadd.f32 %v3267, %v4037
  %v4039 = vpop.f32.mrb[0].mxu0
  %v4040 = vadd.f32 %v3269, %v4039
  %v4041 = vpop.f32.mrb[0].mxu0
  %v4042 = vadd.f32 %v3271, %v4041
  %v4043 = vpop.f32.mrb[0].mxu0
  %v4044 = vadd.f32 %v3273, %v4043
  %4045 = vmatprep.mubr.bf16.mxu0 %v1930
  %4046 = vmatmul.mubr.bf16.gmra.mrb[0].mxu0 %v1929
  %v4047 = vpop.f32.mrb[0].mxu0
  %v4048 = vadd.f32 %v3277, %v4047
  %v4049 = vpop.f32.mrb[0].mxu0
  %v4050 = vadd.f32 %v3279, %v4049
  %v4051 = vpop.f32.mrb[0].mxu0
  %v4052 = vadd.f32 %v3281, %v4051
  %v4053 = vpop.f32.mrb[0].mxu0
  %v4054 = vadd.f32 %v3283, %v4053
  %4055 = vmatprep.mubr.bf16.mxu0 %v1935
  %4056 = vmatmul.mubr.bf16.gmra.mrb[0].mxu0 %v1934
  %v4057 = vpop.f32.mrb[0].mxu0
  %v4058 = vadd.f32 %v3287, %v4057
  %v4059 = vpop.f32.mrb[0].mxu0
  %v4060 = vadd.f32 %v3289, %v4059
  %v4061 = vpop.f32.mrb[0].mxu0
  %v4062 = vadd.f32 %v3291, %v4061
  %v4063 = vpop.f32.mrb[0].mxu0
  %v4064 = vadd.f32 %v3293, %v4063
  %4065 = vmatprep.mubr.bf16.mxu0 %v1940
  %4066 = vmatmul.mubr.bf16.gmra.mrb[0].mxu0 %v1939
  %v4067 = vpop.f32.mrb[0].mxu0
  %v4068 = vadd.f32 %v3297, %v4067
  %v4069 = vpop.f32.mrb[0].mxu0
  %v4070 = vadd.f32 %v3299, %v4069
  %v4071 = vpop.f32.mrb[0].mxu0
  %v4072 = vadd.f32 %v3301, %v4071
  %v4073 = vpop.f32.mrb[0].mxu0
  %v4074 = vadd.f32 %v3303, %v4073
  %4075 = vmatprep.mubr.bf16.mxu0 %v1945
  %4076 = vmatmul.mubr.bf16.gmra.mrb[0].mxu0 %v1944
  %v4077 = vpop.f32.mrb[0].mxu0
  %v4078 = vadd.f32 %v3307, %v4077
  %v4079 = vpop.f32.mrb[0].mxu0
  %v4080 = vadd.f32 %v3309, %v4079
  %v4081 = vpop.f32.mrb[0].mxu0
  %v4082 = vadd.f32 %v3311, %v4081
  %v4083 = vpop.f32.mrb[0].mxu0
  %v4084 = vadd.f32 %v3313, %v4083
  %4085 = vmatprep.mubr.bf16.mxu0 %v1950
  %4086 = vmatmul.mubr.bf16.gmra.mrb[0].mxu0 %v1949
  %v4087 = vpop.f32.mrb[0].mxu0
  %v4088 = vadd.f32 %v3317, %v4087
  %v4089 = vpop.f32.mrb[0].mxu0
  %v4090 = vadd.f32 %v3319, %v4089
  %v4091 = vpop.f32.mrb[0].mxu0
  %v4092 = vadd.f32 %v3321, %v4091
  %v4093 = vpop.f32.mrb[0].mxu0
  %v4094 = vadd.f32 %v3323, %v4093
  %4095 = vmatprep.mubr.bf16.mxu0 %v1955
  %4096 = vmatmul.mubr.bf16.gmra.mrb[0].mxu0 %v1954
  %v4097 = vpop.f32.mrb[0].mxu0
  %v4098 = vadd.f32 %v3327, %v4097
  %v4099 = vpop.f32.mrb[0].mxu0
  %v4100 = vadd.f32 %v3329, %v4099
  %v4101 = vpop.f32.mrb[0].mxu0
  %v4102 = vadd.f32 %v3331, %v4101
  %v4103 = vpop.f32.mrb[0].mxu0
  %v4104 = vadd.f32 %v3333, %v4103
  %4105 = vmatprep.mubr.bf16.mxu0 %v1960
  %4106 = vmatmul.mubr.bf16.gmra.mrb[0].mxu0 %v1959
  %v4107 = vpop.f32.mrb[0].mxu0
  %v4108 = vadd.f32 %v3337, %v4107
  %v4109 = vpop.f32.mrb[0].mxu0
  %v4110 = vadd.f32 %v3339, %v4109
  %v4111 = vpop.f32.mrb[0].mxu0
  %v4112 = vadd.f32 %v3341, %v4111
  %v4113 = vpop.f32.mrb[0].mxu0
  %v4114 = vadd.f32 %v3343, %v4113
  %4115 = vmatprep.mubr.bf16.mxu0 %v1965
  %4116 = vmatmul.mubr.bf16.gmra.mrb[0].mxu0 %v1964
  %v4117 = vpop.f32.mrb[0].mxu0
  %v4118 = vadd.f32 %v3347, %v4117
  %v4119 = vpop.f32.mrb[0].mxu0
  %v4120 = vadd.f32 %v3349, %v4119
  %v4121 = vpop.f32.mrb[0].mxu0
  %v4122 = vadd.f32 %v3351, %v4121
  %v4123 = vpop.f32.mrb[0].mxu0
  %v4124 = vadd.f32 %v3353, %v4123
  %4125 = vmatprep.mubr.bf16.mxu0 %v1970
  %4126 = vmatmul.mubr.bf16.gmra.mrb[0].mxu0 %v1969
  %v4127 = vpop.f32.mrb[0].mxu0
  %v4128 = vadd.f32 %v3357, %v4127
  %v4129 = vpop.f32.mrb[0].mxu0
  %v4130 = vadd.f32 %v3359, %v4129
  %v4131 = vpop.f32.mrb[0].mxu0
  %v4132 = vadd.f32 %v3361, %v4131
  %v4133 = vpop.f32.mrb[0].mxu0
  %v4134 = vadd.f32 %v3363, %v4133
  %4135 = vmatprep.mubr.bf16.mxu0 %v1975
  %4136 = vmatmul.mubr.bf16.gmra.mrb[0].mxu0 %v1974
  %v4137 = vpop.f32.mrb[0].mxu0
  %v4138 = vadd.f32 %v3367, %v4137
  %v4139 = vpop.f32.mrb[0].mxu0
  %v4140 = vadd.f32 %v3369, %v4139
  %v4141 = vpop.f32.mrb[0].mxu0
  %v4142 = vadd.f32 %v3371, %v4141
  %v4143 = vpop.f32.mrb[0].mxu0
  %v4144 = vadd.f32 %v3373, %v4143
  %4145 = vmatprep.mubr.bf16.mxu0 %v1980
  %4146 = vmatmul.mubr.bf16.gmra.mrb[0].mxu0 %v1979
  %v4147 = vpop.f32.mrb[0].mxu0
  %v4148 = vadd.f32 %v3377, %v4147
  %v4149 = vpop.f32.mrb[0].mxu0
  %v4150 = vadd.f32 %v3379, %v4149
  %v4151 = vpop.f32.mrb[0].mxu0
  %v4152 = vadd.f32 %v3381, %v4151
  %v4153 = vpop.f32.mrb[0].mxu0
  %v4154 = vadd.f32 %v3383, %v4153
  %4155 = vmatprep.mubr.bf16.mxu0 %v1985
  %4156 = vmatmul.mubr.bf16.gmra.mrb[0].mxu0 %v1984
  %v4157 = vpop.f32.mrb[0].mxu0
  %v4158 = vadd.f32 %v3387, %v4157
  %v4159 = vpop.f32.mrb[0].mxu0
  %v4160 = vadd.f32 %v3389, %v4159
  %v4161 = vpop.f32.mrb[0].mxu0
  %v4162 = vadd.f32 %v3391, %v4161
  %v4163 = vpop.f32.mrb[0].mxu0
  %v4164 = vadd.f32 %v3393, %v4163
  %4165 = vmatprep.mubr.bf16.mxu0 %v1990
  %4166 = vmatmul.mubr.bf16.gmra.mrb[0].mxu0 %v1989
  %v4167 = vpop.f32.mrb[0].mxu0
  %v4168 = vadd.f32 %v3397, %v4167
  %v4169 = vpop.f32.mrb[0].mxu0
  %v4170 = vadd.f32 %v3399, %v4169
  %v4171 = vpop.f32.mrb[0].mxu0
  %v4172 = vadd.f32 %v3401, %v4171
  %v4173 = vpop.f32.mrb[0].mxu0
  %v4174 = vadd.f32 %v3403, %v4173
  %4175 = vmatprep.mubr.bf16.mxu0 %v1995
  %4176 = vmatmul.mubr.bf16.gmra.mrb[0].mxu0 %v1994
  %v4177 = vpop.f32.mrb[0].mxu0
  %v4178 = vadd.f32 %v3407, %v4177
  %v4179 = vpop.f32.mrb[0].mxu0
  %v4180 = vadd.f32 %v3409, %v4179
  %v4181 = vpop.f32.mrb[0].mxu0
  %v4182 = vadd.f32 %v3411, %v4181
  %v4183 = vpop.f32.mrb[0].mxu0
  %v4184 = vadd.f32 %v3413, %v4183
  %4185 = vmatprep.mubr.bf16.mxu0 %v2000
  %4186 = vmatmul.mubr.bf16.gmra.mrb[0].mxu0 %v1999
  %v4187 = vpop.f32.mrb[0].mxu0
  %v4188 = vadd.f32 %v3417, %v4187
  %v4189 = vpop.f32.mrb[0].mxu0
  %v4190 = vadd.f32 %v3419, %v4189
  %v4191 = vpop.f32.mrb[0].mxu0
  %v4192 = vadd.f32 %v3421, %v4191
  %v4193 = vpop.f32.mrb[0].mxu0
  %v4194 = vadd.f32 %v3423, %v4193
  %4195 = vmatprep.mubr.bf16.mxu0 %v2005
  %4196 = vmatmul.mubr.bf16.gmra.mrb[0].mxu0 %v2004
  %v4197 = vpop.f32.mrb[0].mxu0
  %v4198 = vadd.f32 %v3427, %v4197
  %v4199 = vpop.f32.mrb[0].mxu0
  %v4200 = vadd.f32 %v3429, %v4199
  %v4201 = vpop.f32.mrb[0].mxu0
  %v4202 = vadd.f32 %v3431, %v4201
  %v4203 = vpop.f32.mrb[0].mxu0
  %v4204 = vadd.f32 %v3433, %v4203
  %4205 = vmatprep.mubr.bf16.mxu0 %v2010
  %4206 = vmatmul.mubr.bf16.gmra.mrb[0].mxu0 %v2009
  %v4207 = vpop.f32.mrb[0].mxu0
  %v4208 = vadd.f32 %v3437, %v4207
  %v4209 = vpop.f32.mrb[0].mxu0
  %v4210 = vadd.f32 %v3439, %v4209
  %v4211 = vpop.f32.mrb[0].mxu0
  %v4212 = vadd.f32 %v3441, %v4211
  %v4213 = vpop.f32.mrb[0].mxu0
  %v4214 = vadd.f32 %v3443, %v4213
  %4215 = vmatprep.mubr.bf16.mxu0 %v2015
  %4216 = vmatmul.mubr.bf16.gmra.mrb[0].mxu0 %v2014
  %v4217 = vpop.f32.mrb[0].mxu0
  %v4218 = vadd.f32 %v3447, %v4217
  %v4219 = vpop.f32.mrb[0].mxu0
  %v4220 = vadd.f32 %v3449, %v4219
  %v4221 = vpop.f32.mrb[0].mxu0
  %v4222 = vadd.f32 %v3451, %v4221
  %v4223 = vpop.f32.mrb[0].mxu0
  %v4224 = vadd.f32 %v3453, %v4223
  %4225 = vmatprep.mubr.bf16.mxu0 %v2020
  %4226 = vmatmul.mubr.bf16.gmra.mrb[0].mxu0 %v2019
  %v4227 = vpop.f32.mrb[0].mxu0
  %v4228 = vadd.f32 %v3457, %v4227
  %v4229 = vpop.f32.mrb[0].mxu0
  %v4230 = vadd.f32 %v3459, %v4229
  %v4231 = vpop.f32.mrb[0].mxu0
  %v4232 = vadd.f32 %v3461, %v4231
  %v4233 = vpop.f32.mrb[0].mxu0
  %v4234 = vadd.f32 %v3463, %v4233
  %4235 = vmatprep.mubr.bf16.mxu0 %v2025
  %4236 = vmatmul.mubr.bf16.gmra.mrb[0].mxu0 %v2024
  %v4237 = vpop.f32.mrb[0].mxu0
  %v4238 = vadd.f32 %v3467, %v4237
  %v4239 = vpop.f32.mrb[0].mxu0
  %v4240 = vadd.f32 %v3469, %v4239
  %v4241 = vpop.f32.mrb[0].mxu0
  %v4242 = vadd.f32 %v3471, %v4241
  %v4243 = vpop.f32.mrb[0].mxu0
  %v4244 = vadd.f32 %v3473, %v4243
  %4245 = vmatprep.mubr.bf16.mxu0 %v2030
  %4246 = vmatmul.mubr.bf16.gmra.mrb[0].mxu0 %v2029
  %v4247 = vpop.f32.mrb[0].mxu0
  %v4248 = vadd.f32 %v3477, %v4247
  %v4249 = vpop.f32.mrb[0].mxu0
  %v4250 = vadd.f32 %v3479, %v4249
  %v4251 = vpop.f32.mrb[0].mxu0
  %v4252 = vadd.f32 %v3481, %v4251
  %v4253 = vpop.f32.mrb[0].mxu0
  %v4254 = vadd.f32 %v3483, %v4253
  %4255 = vmatprep.mubr.bf16.mxu0 %v2035
  %4256 = vmatmul.mubr.bf16.gmra.mrb[0].mxu0 %v2034
  %v4257 = vpop.f32.mrb[0].mxu0
  %v4258 = vadd.f32 %v3487, %v4257
  %v4259 = vpop.f32.mrb[0].mxu0
  %v4260 = vadd.f32 %v3489, %v4259
  %v4261 = vpop.f32.mrb[0].mxu0
  %v4262 = vadd.f32 %v3491, %v4261
  %v4263 = vpop.f32.mrb[0].mxu0
  %v4264 = vadd.f32 %v3493, %v4263
  %4265 = vmatprep.mubr.bf16.mxu0 %v2040
  %4266 = vmatmul.mubr.bf16.gmra.mrb[0].mxu0 %v2039
  %v4267 = vpop.f32.mrb[0].mxu0
  %v4268 = vadd.f32 %v3497, %v4267
  %v4269 = vpop.f32.mrb[0].mxu0
  %v4270 = vadd.f32 %v3499, %v4269
  %v4271 = vpop.f32.mrb[0].mxu0
  %v4272 = vadd.f32 %v3501, %v4271
  %v4273 = vpop.f32.mrb[0].mxu0
  %v4274 = vadd.f32 %v3503, %v4273
  %4275 = vmatprep.mubr.bf16.mxu0 %v2045
  %4276 = vmatmul.mubr.bf16.gmra.mrb[0].mxu0 %v2044
  %v4277 = vpop.f32.mrb[0].mxu0
  %v4278 = vadd.f32 %v3507, %v4277
  %v4279 = vpop.f32.mrb[0].mxu0
  %v4280 = vadd.f32 %v3509, %v4279
  %v4281 = vpop.f32.mrb[0].mxu0
  %v4282 = vadd.f32 %v3511, %v4281
  %v4283 = vpop.f32.mrb[0].mxu0
  %v4284 = vadd.f32 %v3513, %v4283
  %4285 = vmatprep.mubr.bf16.mxu0 %v2050
  %4286 = vmatmul.mubr.bf16.gmra.mrb[0].mxu0 %v2049
  %v4287 = vpop.f32.mrb[0].mxu0
  %v4288 = vadd.f32 %v3517, %v4287
  %v4289 = vpop.f32.mrb[0].mxu0
  %v4290 = vadd.f32 %v3519, %v4289
  %v4291 = vpop.f32.mrb[0].mxu0
  %v4292 = vadd.f32 %v3521, %v4291
  %v4293 = vpop.f32.mrb[0].mxu0
  %v4294 = vadd.f32 %v3523, %v4293
  %4295 = vmatprep.mubr.bf16.mxu0 %v2055
  %4296 = vmatmul.mubr.bf16.gmra.mrb[0].mxu0 %v2054
  %v4297 = vpop.f32.mrb[0].mxu0
  %v4298 = vadd.f32 %v3527, %v4297
  %v4299 = vpop.f32.mrb[0].mxu0
  %v4300 = vadd.f32 %v3529, %v4299
  %v4301 = vpop.f32.mrb[0].mxu0
  %v4302 = vadd.f32 %v3531, %v4301
  %v4303 = vpop.f32.mrb[0].mxu0
  %v4304 = vadd.f32 %v3533, %v4303
  %4305 = vmatprep.mubr.bf16.mxu0 %v2060
  %4306 = vmatmul.mubr.bf16.gmra.mrb[0].mxu0 %v2059
  %v4307 = vpop.f32.mrb[0].mxu0
  %v4308 = vadd.f32 %v3537, %v4307
  %v4309 = vpop.f32.mrb[0].mxu0
  %v4310 = vadd.f32 %v3539, %v4309
  %v4311 = vpop.f32.mrb[0].mxu0
  %v4312 = vadd.f32 %v3541, %v4311
  %v4313 = vpop.f32.mrb[0].mxu0
  %v4314 = vadd.f32 %v3543, %v4313
  %4315 = vmatprep.mubr.bf16.mxu0 %v2065
  %4316 = vmatmul.mubr.bf16.gmra.mrb[0].mxu0 %v2064
  %v4317 = vpop.f32.mrb[0].mxu0
  %v4318 = vadd.f32 %v3547, %v4317
  %v4319 = vpop.f32.mrb[0].mxu0
  %v4320 = vadd.f32 %v3549, %v4319
  %v4321 = vpop.f32.mrb[0].mxu0
  %v4322 = vadd.f32 %v3551, %v4321
  %v4323 = vpop.f32.mrb[0].mxu0
  %v4324 = vadd.f32 %v3553, %v4323
  %4325 = vmatprep.mubr.bf16.mxu0 %v2070
  %4326 = vmatmul.mubr.bf16.gmra.mrb[0].mxu0 %v2069
  %v4327 = vpop.f32.mrb[0].mxu0
  %v4328 = vadd.f32 %v3557, %v4327
  %v4329 = vpop.f32.mrb[0].mxu0
  %v4330 = vadd.f32 %v3559, %v4329
  %v4331 = vpop.f32.mrb[0].mxu0
  %v4332 = vadd.f32 %v3561, %v4331
  %v4333 = vpop.f32.mrb[0].mxu0
  %v4334 = vadd.f32 %v3563, %v4333
  %4335 = vmatprep.mubr.bf16.mxu0 %v2075
  %4336 = vmatmul.mubr.bf16.gmra.mrb[0].mxu0 %v2074
  %v4337 = vpop.f32.mrb[0].mxu0
  %v4338 = vadd.f32 %v3567, %v4337
  %v4339 = vpop.f32.mrb[0].mxu0
  %v4340 = vadd.f32 %v3569, %v4339
  %v4341 = vpop.f32.mrb[0].mxu0
  %v4342 = vadd.f32 %v3571, %v4341
  %v4343 = vpop.f32.mrb[0].mxu0
  %v4344 = vadd.f32 %v3573, %v4343
  %4345 = vmatprep.mubr.bf16.mxu0 %v2080
  %4346 = vmatmul.mubr.bf16.gmra.mrb[0].mxu0 %v2079
  %v4347 = vpop.f32.mrb[0].mxu0
  %v4348 = vadd.f32 %v3577, %v4347
  %v4349 = vpop.f32.mrb[0].mxu0
  %v4350 = vadd.f32 %v3579, %v4349
  %v4351 = vpop.f32.mrb[0].mxu0
  %v4352 = vadd.f32 %v3581, %v4351
  %v4353 = vpop.f32.mrb[0].mxu0
  %v4354 = vadd.f32 %v3583, %v4353
  %4355 = vmatprep.mubr.bf16.mxu0 %v2085
  %4356 = vmatmul.mubr.bf16.gmra.mrb[0].mxu0 %v2084
  %v4357 = vpop.f32.mrb[0].mxu0
  %v4358 = vadd.f32 %v3587, %v4357
  %v4359 = vpop.f32.mrb[0].mxu0
  %v4360 = vadd.f32 %v3589, %v4359
  %v4361 = vpop.f32.mrb[0].mxu0
  %v4362 = vadd.f32 %v3591, %v4361
  %v4363 = vpop.f32.mrb[0].mxu0
  %v4364 = vadd.f32 %v3593, %v4363
  %4365 = vmatprep.mubr.bf16.mxu0 %v2090
  %4366 = vmatmul.mubr.bf16.gmra.mrb[0].mxu0 %v2089
  %v4367 = vpop.f32.mrb[0].mxu0
  %v4368 = vadd.f32 %v3597, %v4367
  %v4369 = vpop.f32.mrb[0].mxu0
  %v4370 = vadd.f32 %v3599, %v4369
  %v4371 = vpop.f32.mrb[0].mxu0
  %v4372 = vadd.f32 %v3601, %v4371
  %v4373 = vpop.f32.mrb[0].mxu0
  %v4374 = vadd.f32 %v3603, %v4373
  %4375 = vmatprep.mubr.bf16.mxu0 %v2095
  %4376 = vmatmul.mubr.bf16.gmra.mrb[0].mxu0 %v2094
  %v4377 = vpop.f32.mrb[0].mxu0
  %v4378 = vadd.f32 %v3607, %v4377
  %v4379 = vpop.f32.mrb[0].mxu0
  %v4380 = vadd.f32 %v3609, %v4379
  %v4381 = vpop.f32.mrb[0].mxu0
  %v4382 = vadd.f32 %v3611, %v4381
  %v4383 = vpop.f32.mrb[0].mxu0
  %v4384 = vadd.f32 %v3613, %v4383
  %4385 = vmatprep.mubr.bf16.mxu0 %v2100
  %4386 = vmatmul.mubr.bf16.gmra.mrb[0].mxu0 %v2099
  %v4387 = vpop.f32.mrb[0].mxu0
  %v4388 = vadd.f32 %v3617, %v4387
  %v4389 = vpop.f32.mrb[0].mxu0
  %v4390 = vadd.f32 %v3619, %v4389
  %v4391 = vpop.f32.mrb[0].mxu0
  %v4392 = vadd.f32 %v3621, %v4391
  %v4393 = vpop.f32.mrb[0].mxu0
  %v4394 = vadd.f32 %v3623, %v4393
  %4395 = vmatprep.mubr.bf16.mxu0 %v2105
  %4396 = vmatmul.mubr.bf16.gmra.mrb[0].mxu0 %v2104
  %v4397 = vpop.f32.mrb[0].mxu0
  %v4398 = vadd.f32 %v3627, %v4397
  %v4399 = vpop.f32.mrb[0].mxu0
  %v4400 = vadd.f32 %v3629, %v4399
  %v4401 = vpop.f32.mrb[0].mxu0
  %v4402 = vadd.f32 %v3631, %v4401
  %v4403 = vpop.f32.mrb[0].mxu0
  %v4404 = vadd.f32 %v3633, %v4403
  %4405 = vmatprep.mubr.bf16.mxu0 %v2110
  %4406 = vmatmul.mubr.bf16.gmra.mrb[0].mxu0 %v2109
  %v4407 = vpop.f32.mrb[0].mxu0
  %v4408 = vadd.f32 %v3637, %v4407
  %v4409 = vpop.f32.mrb[0].mxu0
  %v4410 = vadd.f32 %v3639, %v4409
  %v4411 = vpop.f32.mrb[0].mxu0
  %v4412 = vadd.f32 %v3641, %v4411
  %v4413 = vpop.f32.mrb[0].mxu0
  %v4414 = vadd.f32 %v3643, %v4413
  %4415 = vmatprep.mubr.bf16.mxu0 %v2115
  %4416 = vmatmul.mubr.bf16.gmra.mrb[0].mxu0 %v2114
  %v4417 = vpop.f32.mrb[0].mxu0
  %v4418 = vadd.f32 %v3647, %v4417
  %v4419 = vpop.f32.mrb[0].mxu0
  %v4420 = vadd.f32 %v3649, %v4419
  %v4421 = vpop.f32.mrb[0].mxu0
  %v4422 = vadd.f32 %v3651, %v4421
  %v4423 = vpop.f32.mrb[0].mxu0
  %v4424 = vadd.f32 %v3653, %v4423
  %4425 = vmatprep.mubr.bf16.mxu0 %v2120
  %4426 = vmatmul.mubr.bf16.gmra.mrb[0].mxu0 %v2119
  %v4427 = vpop.f32.mrb[0].mxu0
  %v4428 = vadd.f32 %v3657, %v4427
  %v4429 = vpop.f32.mrb[0].mxu0
  %v4430 = vadd.f32 %v3659, %v4429
  %v4431 = vpop.f32.mrb[0].mxu0
  %v4432 = vadd.f32 %v3661, %v4431
  %v4433 = vpop.f32.mrb[0].mxu0
  %v4434 = vadd.f32 %v3663, %v4433
  %4435 = vmatprep.mubr.bf16.mxu0 %v2125
  %4436 = vmatmul.mubr.bf16.gmra.mrb[0].mxu0 %v2124
  %v4437 = vpop.f32.mrb[0].mxu0
  %v4438 = vadd.f32 %v3667, %v4437
  %v4439 = vpop.f32.mrb[0].mxu0
  %v4440 = vadd.f32 %v3669, %v4439
  %v4441 = vpop.f32.mrb[0].mxu0
  %v4442 = vadd.f32 %v3671, %v4441
  %v4443 = vpop.f32.mrb[0].mxu0
  %v4444 = vadd.f32 %v3673, %v4443
  %4445 = vmatprep.mubr.bf16.mxu0 %v2130
  %4446 = vmatmul.mubr.bf16.gmra.mrb[0].mxu0 %v2129
  %v4447 = vpop.f32.mrb[0].mxu0
  %v4448 = vadd.f32 %v3677, %v4447
  %v4449 = vpop.f32.mrb[0].mxu0
  %v4450 = vadd.f32 %v3679, %v4449
  %v4451 = vpop.f32.mrb[0].mxu0
  %v4452 = vadd.f32 %v3681, %v4451
  %v4453 = vpop.f32.mrb[0].mxu0
  %v4454 = vadd.f32 %v3683, %v4453
  %4455 = vmatprep.mubr.bf16.mxu0 %v2135
  %4456 = vmatmul.mubr.bf16.gmra.mrb[0].mxu0 %v2134
  %v4457 = vpop.f32.mrb[0].mxu0
  %v4458 = vadd.f32 %v3687, %v4457
  %v4459 = vpop.f32.mrb[0].mxu0
  %v4460 = vadd.f32 %v3689, %v4459
  %v4461 = vpop.f32.mrb[0].mxu0
  %v4462 = vadd.f32 %v3691, %v4461
  %v4463 = vpop.f32.mrb[0].mxu0
  %v4464 = vadd.f32 %v3693, %v4463
  %4465 = vmatprep.mubr.bf16.mxu0 %v2140
  %4466 = vmatmul.mubr.bf16.gmra.mrb[0].mxu0 %v2139
  %v4467 = vpop.f32.mrb[0].mxu0
  %v4468 = vadd.f32 %v3697, %v4467
  %v4469 = vpop.f32.mrb[0].mxu0
  %v4470 = vadd.f32 %v3699, %v4469
  %v4471 = vpop.f32.mrb[0].mxu0
  %v4472 = vadd.f32 %v3701, %v4471
  %v4473 = vpop.f32.mrb[0].mxu0
  %v4474 = vadd.f32 %v3703, %v4473
  %4475 = vmatprep.mubr.bf16.mxu0 %v2145
  %4476 = vmatmul.mubr.bf16.gmra.mrb[0].mxu0 %v2144
  %v4477 = vpop.f32.mrb[0].mxu0
  %v4478 = vadd.f32 %v3707, %v4477
  %v4479 = vpop.f32.mrb[0].mxu0
  %v4480 = vadd.f32 %v3709, %v4479
  %v4481 = vpop.f32.mrb[0].mxu0
  %v4482 = vadd.f32 %v3711, %v4481
  %v4483 = vpop.f32.mrb[0].mxu0
  %v4484 = vadd.f32 %v3713, %v4483
  %4485 = vmatprep.mubr.bf16.mxu0 %v2150
  %4486 = vmatmul.mubr.bf16.gmra.mrb[0].mxu0 %v2149
  %v4487 = vpop.f32.mrb[0].mxu0
  %v4488 = vadd.f32 %v3717, %v4487
  %v4489 = vpop.f32.mrb[0].mxu0
  %v4490 = vadd.f32 %v3719, %v4489
  %v4491 = vpop.f32.mrb[0].mxu0
  %v4492 = vadd.f32 %v3721, %v4491
  %v4493 = vpop.f32.mrb[0].mxu0
  %v4494 = vadd.f32 %v3723, %v4493
  %4495 = vmatprep.mubr.bf16.mxu0 %v2155
  %4496 = vmatmul.mubr.bf16.gmra.mrb[0].mxu0 %v2154
  %v4497 = vpop.f32.mrb[0].mxu0
  %v4498 = vadd.f32 %v3727, %v4497
  %v4499 = vpop.f32.mrb[0].mxu0
  %v4500 = vadd.f32 %v3729, %v4499
  %v4501 = vpop.f32.mrb[0].mxu0
  %v4502 = vadd.f32 %v3731, %v4501
  %v4503 = vpop.f32.mrb[0].mxu0
  %v4504 = vadd.f32 %v3733, %v4503
  %4505 = vmatprep.mubr.bf16.mxu0 %v2160
  %4506 = vmatmul.mubr.bf16.gmra.mrb[0].mxu0 %v2159
  %v4507 = vpop.f32.mrb[0].mxu0
  %v4508 = vadd.f32 %v3737, %v4507
  %v4509 = vpop.f32.mrb[0].mxu0
  %v4510 = vadd.f32 %v3739, %v4509
  %v4511 = vpop.f32.mrb[0].mxu0
  %v4512 = vadd.f32 %v3741, %v4511
  %v4513 = vpop.f32.mrb[0].mxu0
  %v4514 = vadd.f32 %v3743, %v4513
  %4515 = vmatprep.mubr.bf16.mxu0 %v2165
  %4516 = vmatmul.mubr.bf16.gmra.mrb[0].mxu0 %v2164
  %v4517 = vpop.f32.mrb[0].mxu0
  %v4518 = vadd.f32 %v3747, %v4517
  %v4519 = vpop.f32.mrb[0].mxu0
  %v4520 = vadd.f32 %v3749, %v4519
  %v4521 = vpop.f32.mrb[0].mxu0
  %v4522 = vadd.f32 %v3751, %v4521
  %v4523 = vpop.f32.mrb[0].mxu0
  %v4524 = vadd.f32 %v3753, %v4523
  %4525 = vmatprep.mubr.bf16.mxu0 %v2170
  %4526 = vmatmul.mubr.bf16.gmra.mrb[0].mxu0 %v2169
  %v4527 = vpop.f32.mrb[0].mxu0
  %v4528 = vadd.f32 %v3757, %v4527
  %v4529 = vpop.f32.mrb[0].mxu0
  %v4530 = vadd.f32 %v3759, %v4529
  %v4531 = vpop.f32.mrb[0].mxu0
  %v4532 = vadd.f32 %v3761, %v4531
  %v4533 = vpop.f32.mrb[0].mxu0
  %v4534 = vadd.f32 %v3763, %v4533
  %4535 = vmatprep.mubr.bf16.mxu0 %v2175
  %4536 = vmatmul.mubr.bf16.gmra.mrb[0].mxu0 %v2174
  %v4537 = vpop.f32.mrb[0].mxu0
  %v4538 = vadd.f32 %v3767, %v4537
  %v4539 = vpop.f32.mrb[0].mxu0
  %v4540 = vadd.f32 %v3769, %v4539
  %v4541 = vpop.f32.mrb[0].mxu0
  %v4542 = vadd.f32 %v3771, %v4541
  %v4543 = vpop.f32.mrb[0].mxu0
  %v4544 = vadd.f32 %v3773, %v4543
  %4545 = vmatprep.mubr.bf16.mxu0 %v2180
  %4546 = vmatmul.mubr.bf16.gmra.mrb[0].mxu0 %v2179
  %v4547 = vpop.f32.mrb[0].mxu0
  %v4548 = vadd.f32 %v3777, %v4547
  %v4549 = vpop.f32.mrb[0].mxu0
  %v4550 = vadd.f32 %v3779, %v4549
  %v4551 = vpop.f32.mrb[0].mxu0
  %v4552 = vadd.f32 %v3781, %v4551
  %v4553 = vpop.f32.mrb[0].mxu0
  %v4554 = vadd.f32 %v3783, %v4553
  %4555 = vmatprep.mubr.bf16.mxu0 %v2185
  %4556 = vmatmul.mubr.bf16.gmra.mrb[0].mxu0 %v2184
  %v4557 = vpop.f32.mrb[0].mxu0
  %v4558 = vadd.f32 %v3787, %v4557
  %v4559 = vpop.f32.mrb[0].mxu0
  %v4560 = vadd.f32 %v3789, %v4559
  %v4561 = vpop.f32.mrb[0].mxu0
  %v4562 = vadd.f32 %v3791, %v4561
  %v4563 = vpop.f32.mrb[0].mxu0
  %v4564 = vadd.f32 %v3793, %v4563
  %4565 = vmatprep.mubr.bf16.mxu0 %v2190
  %4566 = vmatmul.mubr.bf16.gmra.mrb[0].mxu0 %v2189
  %v4567 = vpop.f32.mrb[0].mxu0
  %v4568 = vadd.f32 %v3797, %v4567
  %v4569 = vpop.f32.mrb[0].mxu0
  %v4570 = vadd.f32 %v3799, %v4569
  %v4571 = vpop.f32.mrb[0].mxu0
  %v4572 = vadd.f32 %v3801, %v4571
  %v4573 = vpop.f32.mrb[0].mxu0
  %v4574 = vadd.f32 %v3803, %v4573
  %4575 = vmatprep.mubr.bf16.mxu0 %v2195
  %4576 = vmatmul.mubr.bf16.gmra.mrb[0].mxu0 %v2194
  %v4577 = vpop.f32.mrb[0].mxu0
  %v4578 = vadd.f32 %v3807, %v4577
  %v4579 = vpop.f32.mrb[0].mxu0
  %v4580 = vadd.f32 %v3809, %v4579
  %v4581 = vpop.f32.mrb[0].mxu0
  %v4582 = vadd.f32 %v3811, %v4581
  %v4583 = vpop.f32.mrb[0].mxu0
  %v4584 = vadd.f32 %v3813, %v4583
  %4585 = vmatprep.mubr.bf16.mxu0 %v2200
  %4586 = vmatmul.mubr.bf16.gmra.mrb[0].mxu0 %v2199
  %v4587 = vpop.f32.mrb[0].mxu0
  %v4588 = vpop.f32.mrb[0].mxu0
  %v4589 = vadd.f32 %v3818, %v4588
  %v4590 = vpop.f32.mrb[0].mxu0
  %v4591 = vpop.f32.mrb[0].mxu0
  %v4592 = vadd.f32 %v3821, %v4591
  %4593 = vmatprep.mubr.bf16.mxu0 %v2205
  %4594 = vmatmul.mubr.bf16.gmra.mrb[0].mxu0 %v2204
  %v4595 = vpop.f32.mrb[0].mxu0
  %v4596 = vpop.f32.mrb[0].mxu0
  %v4597 = vadd.f32 %v3826, %v4596
  %v4598 = vpop.f32.mrb[0].mxu0
  %v4599 = vpop.f32.mrb[0].mxu0
  %v4600 = vadd.f32 %v3829, %v4599
  %4601 = vmatprep.mubr.bf16.mxu0 %v2210
  %4602 = vmatmul.mubr.bf16.gmra.mrb[0].mxu0 %v2209
  %v4603 = vpop.f32.mrb[0].mxu0
  %v4604 = vpop.f32.mrb[0].mxu0
  %v4605 = vadd.f32 %v3834, %v4604
  %v4606 = vpop.f32.mrb[0].mxu0
  %v4607 = vpop.f32.mrb[0].mxu0
  %v4608 = vadd.f32 %v3837, %v4607
  %4609 = vdwg.mxu0
  %4610 = vmatprep.subr.bf16.mxu0 %v2775
  %4611 = vmatpush1.bf16.msra.mxu0 %v2774
  %4612 = vmatprep.subr.bf16.mxu0 0
  %4613 = vmatpush1.bf16.msra.mxu0 0
  %4614 = vmatprep.subr.bf16.mxu0 0
  %4615 = vmatpush1.bf16.msra.mxu0 0
  %4616 = vmatprep.subr.bf16.mxu0 0
  %4617 = vmatpush1.bf16.msra.mxu0 0
  %4618 = vmatprep.subr.bf16.mxu0 0
  %4619 = vmatpush1.bf16.msra.mxu0 0
  %4620 = vmatprep.subr.bf16.mxu0 0
  %4621 = vmatpush1.bf16.msra.mxu0 0
  %4622 = vmatprep.subr.bf16.mxu0 0
  %4623 = vmatpush1.bf16.msra.mxu0 0
  %4624 = vmatprep.subr.bf16.mxu0 0
  %4625 = vmatpush1.bf16.msra.mxu0 0
  %4626 = vmatprep.subr.bf16.mxu0 0
  %4627 = vmatpush1.bf16.msra.mxu0 0
  %4628 = vmatprep.subr.bf16.mxu0 0
  %4629 = vmatpush1.bf16.msra.mxu0 0
  %4630 = vmatprep.subr.bf16.mxu0 0
  %4631 = vmatpush1.bf16.msra.mxu0 0
  %4632 = vmatprep.subr.bf16.mxu0 0
  %4633 = vmatpush1.bf16.msra.mxu0 0
  %4634 = vmatprep.subr.bf16.mxu0 0
  %4635 = vmatpush1.bf16.msra.mxu0 0
  %4636 = vmatprep.subr.bf16.mxu0 0
  %4637 = vmatpush1.bf16.msra.mxu0 0
  %4638 = vmatprep.subr.bf16.mxu0 0
  %4639 = vmatpush1.bf16.msra.mxu0 0
  %4640 = vmatprep.subr.bf16.mxu0 0
  %4641 = vmatpush1.bf16.msra.mxu0 0
  %4642 = vmatprep.mubr.bf16.mxu0 0
  %4643 = vmatmul.mubr.bf16.gmra.mrb[0].mxu0 %v2844
  %v4644 = vpop.f32.mrb[0].mxu0
  %v4645 = vadd.f32 %v3874, %v4644
  %v4646 = vpop.f32.mrb[0].mxu0
  %v4647 = vpop.f32.mrb[0].mxu0
  %v4648 = vadd.f32 %v3877, %v4647
  %v4649 = vpop.f32.mrb[0].mxu0
  %4650 = vmatprep.mubr.bf16.mxu0 0
  %4651 = vmatmul.mubr.bf16.gmra.mrb[0].mxu0 %v2847
  %v4652 = vpop.f32.mrb[0].mxu0
  %v4653 = vadd.f32 %v3882, %v4652
  %v4654 = vpop.f32.mrb[0].mxu0
  %v4655 = vpop.f32.mrb[0].mxu0
  %v4656 = vadd.f32 %v3885, %v4655
  %v4657 = vpop.f32.mrb[0].mxu0
  %4658 = vmatprep.mubr.bf16.mxu0 0
  %4659 = vmatmul.mubr.bf16.gmra.mrb[0].mxu0 %v2850
  %v4660 = vpop.f32.mrb[0].mxu0
  %v4661 = vadd.f32 %v3890, %v4660
  %v4662 = vpop.f32.mrb[0].mxu0
  %v4663 = vpop.f32.mrb[0].mxu0
  %v4664 = vadd.f32 %v3893, %v4663
  %v4665 = vpop.f32.mrb[0].mxu0
  %4666 = vmatprep.mubr.bf16.mxu0 0
  %4667 = vmatmul.mubr.bf16.gmra.mrb[0].mxu0 %v2853
  %v4668 = vpop.f32.mrb[0].mxu0
  %v4669 = vadd.f32 %v3898, %v4668
  %v4670 = vpop.f32.mrb[0].mxu0
  %v4671 = vadd.f32 %v3900, %v4670
  %v4672 = vpop.f32.mrb[0].mxu0
  %v4673 = vadd.f32 %v3902, %v4672
  %v4674 = vpop.f32.mrb[0].mxu0
  %v4675 = vadd.f32 %v3904, %v4674
  %4676 = vmatprep.mubr.bf16.mxu0 0
  %4677 = vmatmul.mubr.bf16.gmra.mrb[0].mxu0 %v2856
  %v4678 = vpop.f32.mrb[0].mxu0
  %v4679 = vadd.f32 %v3908, %v4678
  %v4680 = vpop.f32.mrb[0].mxu0
  %v4681 = vadd.f32 %v3910, %v4680
  %v4682 = vpop.f32.mrb[0].mxu0
  %v4683 = vadd.f32 %v3912, %v4682
  %v4684 = vpop.f32.mrb[0].mxu0
  %v4685 = vadd.f32 %v3914, %v4684
  %4686 = vmatprep.mubr.bf16.mxu0 0
  %4687 = vmatmul.mubr.bf16.gmra.mrb[0].mxu0 %v2859
  %v4688 = vpop.f32.mrb[0].mxu0
  %v4689 = vadd.f32 %v3918, %v4688
  %v4690 = vpop.f32.mrb[0].mxu0
  %v4691 = vadd.f32 %v3920, %v4690
  %v4692 = vpop.f32.mrb[0].mxu0
  %v4693 = vadd.f32 %v3922, %v4692
  %v4694 = vpop.f32.mrb[0].mxu0
  %v4695 = vadd.f32 %v3924, %v4694
  %4696 = vmatprep.mubr.bf16.mxu0 0
  %4697 = vmatmul.mubr.bf16.gmra.mrb[0].mxu0 %v2862
  %v4698 = vpop.f32.mrb[0].mxu0
  %v4699 = vadd.f32 %v3928, %v4698
  %v4700 = vpop.f32.mrb[0].mxu0
  %v4701 = vadd.f32 %v3930, %v4700
  %v4702 = vpop.f32.mrb[0].mxu0
  %v4703 = vadd.f32 %v3932, %v4702
  %v4704 = vpop.f32.mrb[0].mxu0
  %v4705 = vadd.f32 %v3934, %v4704
  %4706 = vmatprep.mubr.bf16.mxu0 0
  %4707 = vmatmul.mubr.bf16.gmra.mrb[0].mxu0 %v2865
  %v4708 = vpop.f32.mrb[0].mxu0
  %v4709 = vadd.f32 %v3938, %v4708
  %v4710 = vpop.f32.mrb[0].mxu0
  %v4711 = vadd.f32 %v3940, %v4710
  %v4712 = vpop.f32.mrb[0].mxu0
  %v4713 = vadd.f32 %v3942, %v4712
  %v4714 = vpop.f32.mrb[0].mxu0
  %v4715 = vadd.f32 %v3944, %v4714
  %4716 = vmatprep.mubr.bf16.mxu0 0
  %4717 = vmatmul.mubr.bf16.gmra.mrb[0].mxu0 %v2868
  %v4718 = vpop.f32.mrb[0].mxu0
  %v4719 = vadd.f32 %v3948, %v4718
  %v4720 = vpop.f32.mrb[0].mxu0
  %v4721 = vadd.f32 %v3950, %v4720
  %v4722 = vpop.f32.mrb[0].mxu0
  %v4723 = vadd.f32 %v3952, %v4722
  %v4724 = vpop.f32.mrb[0].mxu0
  %v4725 = vadd.f32 %v3954, %v4724
  %4726 = vmatprep.mubr.bf16.mxu0 0
  %4727 = vmatmul.mubr.bf16.gmra.mrb[0].mxu0 %v2871
  %v4728 = vpop.f32.mrb[0].mxu0
  %v4729 = vadd.f32 %v3958, %v4728
  %v4730 = vpop.f32.mrb[0].mxu0
  %v4731 = vadd.f32 %v3960, %v4730
  %v4732 = vpop.f32.mrb[0].mxu0
  %v4733 = vadd.f32 %v3962, %v4732
  %v4734 = vpop.f32.mrb[0].mxu0
  %v4735 = vadd.f32 %v3964, %v4734
  %4736 = vmatprep.mubr.bf16.mxu0 0
  %4737 = vmatmul.mubr.bf16.gmra.mrb[0].mxu0 %v2874
  %v4738 = vpop.f32.mrb[0].mxu0
  %v4739 = vadd.f32 %v3968, %v4738
  %v4740 = vpop.f32.mrb[0].mxu0
  %v4741 = vadd.f32 %v3970, %v4740
  %v4742 = vpop.f32.mrb[0].mxu0
  %v4743 = vadd.f32 %v3972, %v4742
  %v4744 = vpop.f32.mrb[0].mxu0
  %v4745 = vadd.f32 %v3974, %v4744
  %4746 = vmatprep.mubr.bf16.mxu0 0
  %4747 = vmatmul.mubr.bf16.gmra.mrb[0].mxu0 %v2877
  %v4748 = vpop.f32.mrb[0].mxu0
  %v4749 = vadd.f32 %v3978, %v4748
  %v4750 = vpop.f32.mrb[0].mxu0
  %v4751 = vadd.f32 %v3980, %v4750
  %v4752 = vpop.f32.mrb[0].mxu0
  %v4753 = vadd.f32 %v3982, %v4752
  %v4754 = vpop.f32.mrb[0].mxu0
  %v4755 = vadd.f32 %v3984, %v4754
  %4756 = vmatprep.mubr.bf16.mxu0 0
  %4757 = vmatmul.mubr.bf16.gmra.mrb[0].mxu0 %v2880
  %v4758 = vpop.f32.mrb[0].mxu0
  %v4759 = vadd.f32 %v3988, %v4758
  %v4760 = vpop.f32.mrb[0].mxu0
  %v4761 = vadd.f32 %v3990, %v4760
  %v4762 = vpop.f32.mrb[0].mxu0
  %v4763 = vadd.f32 %v3992, %v4762
  %v4764 = vpop.f32.mrb[0].mxu0
  %v4765 = vadd.f32 %v3994, %v4764
  %4766 = vmatprep.mubr.bf16.mxu0 0
  %4767 = vmatmul.mubr.bf16.gmra.mrb[0].mxu0 %v2883
  %v4768 = vpop.f32.mrb[0].mxu0
  %v4769 = vadd.f32 %v3998, %v4768
  %v4770 = vpop.f32.mrb[0].mxu0
  %v4771 = vadd.f32 %v4000, %v4770
  %v4772 = vpop.f32.mrb[0].mxu0
  %v4773 = vadd.f32 %v4002, %v4772
  %v4774 = vpop.f32.mrb[0].mxu0
  %v4775 = vadd.f32 %v4004, %v4774
  %4776 = vmatprep.mubr.bf16.mxu0 0
  %4777 = vmatmul.mubr.bf16.gmra.mrb[0].mxu0 %v2886
  %v4778 = vpop.f32.mrb[0].mxu0
  %v4779 = vadd.f32 %v4008, %v4778
  %v4780 = vpop.f32.mrb[0].mxu0
  %v4781 = vadd.f32 %v4010, %v4780
  %v4782 = vpop.f32.mrb[0].mxu0
  %v4783 = vadd.f32 %v4012, %v4782
  %v4784 = vpop.f32.mrb[0].mxu0
  %v4785 = vadd.f32 %v4014, %v4784
  %4786 = vmatprep.mubr.bf16.mxu0 0
  %4787 = vmatmul.mubr.bf16.gmra.mrb[0].mxu0 %v2889
  %v4788 = vpop.f32.mrb[0].mxu0
  %v4789 = vadd.f32 %v4018, %v4788
  %v4790 = vpop.f32.mrb[0].mxu0
  %v4791 = vadd.f32 %v4020, %v4790
  %v4792 = vpop.f32.mrb[0].mxu0
  %v4793 = vadd.f32 %v4022, %v4792
  %v4794 = vpop.f32.mrb[0].mxu0
  %v4795 = vadd.f32 %v4024, %v4794
  %4796 = vmatprep.mubr.bf16.mxu0 0
  %4797 = vmatmul.mubr.bf16.gmra.mrb[0].mxu0 %v2892
  %v4798 = vpop.f32.mrb[0].mxu0
  %v4799 = vadd.f32 %v4028, %v4798
  %v4800 = vpop.f32.mrb[0].mxu0
  %v4801 = vadd.f32 %v4030, %v4800
  %v4802 = vpop.f32.mrb[0].mxu0
  %v4803 = vadd.f32 %v4032, %v4802
  %v4804 = vpop.f32.mrb[0].mxu0
  %v4805 = vadd.f32 %v4034, %v4804
  %4806 = vmatprep.mubr.bf16.mxu0 0
  %4807 = vmatmul.mubr.bf16.gmra.mrb[0].mxu0 %v2895
  %v4808 = vpop.f32.mrb[0].mxu0
  %v4809 = vadd.f32 %v4038, %v4808
  %v4810 = vpop.f32.mrb[0].mxu0
  %v4811 = vadd.f32 %v4040, %v4810
  %v4812 = vpop.f32.mrb[0].mxu0
  %v4813 = vadd.f32 %v4042, %v4812
  %v4814 = vpop.f32.mrb[0].mxu0
  %v4815 = vadd.f32 %v4044, %v4814
  %4816 = vmatprep.mubr.bf16.mxu0 0
  %4817 = vmatmul.mubr.bf16.gmra.mrb[0].mxu0 %v2898
  %v4818 = vpop.f32.mrb[0].mxu0
  %v4819 = vadd.f32 %v4048, %v4818
  %v4820 = vpop.f32.mrb[0].mxu0
  %v4821 = vadd.f32 %v4050, %v4820
  %v4822 = vpop.f32.mrb[0].mxu0
  %v4823 = vadd.f32 %v4052, %v4822
  %v4824 = vpop.f32.mrb[0].mxu0
  %v4825 = vadd.f32 %v4054, %v4824
  %4826 = vmatprep.mubr.bf16.mxu0 0
  %4827 = vmatmul.mubr.bf16.gmra.mrb[0].mxu0 %v2901
  %v4828 = vpop.f32.mrb[0].mxu0
  %v4829 = vadd.f32 %v4058, %v4828
  %v4830 = vpop.f32.mrb[0].mxu0
  %v4831 = vadd.f32 %v4060, %v4830
  %v4832 = vpop.f32.mrb[0].mxu0
  %v4833 = vadd.f32 %v4062, %v4832
  %v4834 = vpop.f32.mrb[0].mxu0
  %v4835 = vadd.f32 %v4064, %v4834
  %4836 = vmatprep.mubr.bf16.mxu0 0
  %4837 = vmatmul.mubr.bf16.gmra.mrb[0].mxu0 %v2904
  %v4838 = vpop.f32.mrb[0].mxu0
  %v4839 = vadd.f32 %v4068, %v4838
  %v4840 = vpop.f32.mrb[0].mxu0
  %v4841 = vadd.f32 %v4070, %v4840
  %v4842 = vpop.f32.mrb[0].mxu0
  %v4843 = vadd.f32 %v4072, %v4842
  %v4844 = vpop.f32.mrb[0].mxu0
  %v4845 = vadd.f32 %v4074, %v4844
  %4846 = vmatprep.mubr.bf16.mxu0 0
  %4847 = vmatmul.mubr.bf16.gmra.mrb[0].mxu0 %v2907
  %v4848 = vpop.f32.mrb[0].mxu0
  %v4849 = vadd.f32 %v4078, %v4848
  %v4850 = vpop.f32.mrb[0].mxu0
  %v4851 = vadd.f32 %v4080, %v4850
  %v4852 = vpop.f32.mrb[0].mxu0
  %v4853 = vadd.f32 %v4082, %v4852
  %v4854 = vpop.f32.mrb[0].mxu0
  %v4855 = vadd.f32 %v4084, %v4854
  %4856 = vmatprep.mubr.bf16.mxu0 0
  %4857 = vmatmul.mubr.bf16.gmra.mrb[0].mxu0 %v2910
  %v4858 = vpop.f32.mrb[0].mxu0
  %v4859 = vadd.f32 %v4088, %v4858
  %v4860 = vpop.f32.mrb[0].mxu0
  %v4861 = vadd.f32 %v4090, %v4860
  %v4862 = vpop.f32.mrb[0].mxu0
  %v4863 = vadd.f32 %v4092, %v4862
  %v4864 = vpop.f32.mrb[0].mxu0
  %v4865 = vadd.f32 %v4094, %v4864
  %4866 = vmatprep.mubr.bf16.mxu0 0
  %4867 = vmatmul.mubr.bf16.gmra.mrb[0].mxu0 %v2913
  %v4868 = vpop.f32.mrb[0].mxu0
  %v4869 = vadd.f32 %v4098, %v4868
  %v4870 = vpop.f32.mrb[0].mxu0
  %v4871 = vadd.f32 %v4100, %v4870
  %v4872 = vpop.f32.mrb[0].mxu0
  %v4873 = vadd.f32 %v4102, %v4872
  %v4874 = vpop.f32.mrb[0].mxu0
  %v4875 = vadd.f32 %v4104, %v4874
  %4876 = vmatprep.mubr.bf16.mxu0 0
  %4877 = vmatmul.mubr.bf16.gmra.mrb[0].mxu0 %v2916
  %v4878 = vpop.f32.mrb[0].mxu0
  %v4879 = vadd.f32 %v4108, %v4878
  %v4880 = vpop.f32.mrb[0].mxu0
  %v4881 = vadd.f32 %v4110, %v4880
  %v4882 = vpop.f32.mrb[0].mxu0
  %v4883 = vadd.f32 %v4112, %v4882
  %v4884 = vpop.f32.mrb[0].mxu0
  %v4885 = vadd.f32 %v4114, %v4884
  %4886 = vmatprep.mubr.bf16.mxu0 0
  %4887 = vmatmul.mubr.bf16.gmra.mrb[0].mxu0 %v2919
  %v4888 = vpop.f32.mrb[0].mxu0
  %v4889 = vadd.f32 %v4118, %v4888
  %v4890 = vpop.f32.mrb[0].mxu0
  %v4891 = vadd.f32 %v4120, %v4890
  %v4892 = vpop.f32.mrb[0].mxu0
  %v4893 = vadd.f32 %v4122, %v4892
  %v4894 = vpop.f32.mrb[0].mxu0
  %v4895 = vadd.f32 %v4124, %v4894
  %4896 = vmatprep.mubr.bf16.mxu0 0
  %4897 = vmatmul.mubr.bf16.gmra.mrb[0].mxu0 %v2922
  %v4898 = vpop.f32.mrb[0].mxu0
  %v4899 = vadd.f32 %v4128, %v4898
  %v4900 = vpop.f32.mrb[0].mxu0
  %v4901 = vadd.f32 %v4130, %v4900
  %v4902 = vpop.f32.mrb[0].mxu0
  %v4903 = vadd.f32 %v4132, %v4902
  %v4904 = vpop.f32.mrb[0].mxu0
  %v4905 = vadd.f32 %v4134, %v4904
  %4906 = vmatprep.mubr.bf16.mxu0 0
  %4907 = vmatmul.mubr.bf16.gmra.mrb[0].mxu0 %v2925
  %v4908 = vpop.f32.mrb[0].mxu0
  %v4909 = vadd.f32 %v4138, %v4908
  %v4910 = vpop.f32.mrb[0].mxu0
  %v4911 = vadd.f32 %v4140, %v4910
  %v4912 = vpop.f32.mrb[0].mxu0
  %v4913 = vadd.f32 %v4142, %v4912
  %v4914 = vpop.f32.mrb[0].mxu0
  %v4915 = vadd.f32 %v4144, %v4914
  %4916 = vmatprep.mubr.bf16.mxu0 0
  %4917 = vmatmul.mubr.bf16.gmra.mrb[0].mxu0 %v2928
  %v4918 = vpop.f32.mrb[0].mxu0
  %v4919 = vadd.f32 %v4148, %v4918
  %v4920 = vpop.f32.mrb[0].mxu0
  %v4921 = vadd.f32 %v4150, %v4920
  %v4922 = vpop.f32.mrb[0].mxu0
  %v4923 = vadd.f32 %v4152, %v4922
  %v4924 = vpop.f32.mrb[0].mxu0
  %v4925 = vadd.f32 %v4154, %v4924
  %4926 = vmatprep.mubr.bf16.mxu0 0
  %4927 = vmatmul.mubr.bf16.gmra.mrb[0].mxu0 %v2931
  %v4928 = vpop.f32.mrb[0].mxu0
  %v4929 = vadd.f32 %v4158, %v4928
  %v4930 = vpop.f32.mrb[0].mxu0
  %v4931 = vadd.f32 %v4160, %v4930
  %v4932 = vpop.f32.mrb[0].mxu0
  %v4933 = vadd.f32 %v4162, %v4932
  %v4934 = vpop.f32.mrb[0].mxu0
  %v4935 = vadd.f32 %v4164, %v4934
  %4936 = vmatprep.mubr.bf16.mxu0 0
  %4937 = vmatmul.mubr.bf16.gmra.mrb[0].mxu0 %v2934
  %v4938 = vpop.f32.mrb[0].mxu0
  %v4939 = vadd.f32 %v4168, %v4938
  %v4940 = vpop.f32.mrb[0].mxu0
  %v4941 = vadd.f32 %v4170, %v4940
  %v4942 = vpop.f32.mrb[0].mxu0
  %v4943 = vadd.f32 %v4172, %v4942
  %v4944 = vpop.f32.mrb[0].mxu0
  %v4945 = vadd.f32 %v4174, %v4944
  %4946 = vmatprep.mubr.bf16.mxu0 0
  %4947 = vmatmul.mubr.bf16.gmra.mrb[0].mxu0 %v2937
  %v4948 = vpop.f32.mrb[0].mxu0
  %v4949 = vadd.f32 %v4178, %v4948
  %v4950 = vpop.f32.mrb[0].mxu0
  %v4951 = vadd.f32 %v4180, %v4950
  %v4952 = vpop.f32.mrb[0].mxu0
  %v4953 = vadd.f32 %v4182, %v4952
  %v4954 = vpop.f32.mrb[0].mxu0
  %v4955 = vadd.f32 %v4184, %v4954
  %4956 = vmatprep.mubr.bf16.mxu0 0
  %4957 = vmatmul.mubr.bf16.gmra.mrb[0].mxu0 %v2940
  %v4958 = vpop.f32.mrb[0].mxu0
  %v4959 = vadd.f32 %v4188, %v4958
  %v4960 = vpop.f32.mrb[0].mxu0
  %v4961 = vadd.f32 %v4190, %v4960
  %v4962 = vpop.f32.mrb[0].mxu0
  %v4963 = vadd.f32 %v4192, %v4962
  %v4964 = vpop.f32.mrb[0].mxu0
  %v4965 = vadd.f32 %v4194, %v4964
  %4966 = vmatprep.mubr.bf16.mxu0 0
  %4967 = vmatmul.mubr.bf16.gmra.mrb[0].mxu0 %v2943
  %v4968 = vpop.f32.mrb[0].mxu0
  %v4969 = vadd.f32 %v4198, %v4968
  %v4970 = vpop.f32.mrb[0].mxu0
  %v4971 = vadd.f32 %v4200, %v4970
  %v4972 = vpop.f32.mrb[0].mxu0
  %v4973 = vadd.f32 %v4202, %v4972
  %v4974 = vpop.f32.mrb[0].mxu0
  %v4975 = vadd.f32 %v4204, %v4974
  %4976 = vmatprep.mubr.bf16.mxu0 0
  %4977 = vmatmul.mubr.bf16.gmra.mrb[0].mxu0 %v2946
  %v4978 = vpop.f32.mrb[0].mxu0
  %v4979 = vadd.f32 %v4208, %v4978
  %v4980 = vpop.f32.mrb[0].mxu0
  %v4981 = vadd.f32 %v4210, %v4980
  %v4982 = vpop.f32.mrb[0].mxu0
  %v4983 = vadd.f32 %v4212, %v4982
  %v4984 = vpop.f32.mrb[0].mxu0
  %v4985 = vadd.f32 %v4214, %v4984
  %4986 = vmatprep.mubr.bf16.mxu0 0
  %4987 = vmatmul.mubr.bf16.gmra.mrb[0].mxu0 %v2949
  %v4988 = vpop.f32.mrb[0].mxu0
  %v4989 = vadd.f32 %v4218, %v4988
  %v4990 = vpop.f32.mrb[0].mxu0
  %v4991 = vadd.f32 %v4220, %v4990
  %v4992 = vpop.f32.mrb[0].mxu0
  %v4993 = vadd.f32 %v4222, %v4992
  %v4994 = vpop.f32.mrb[0].mxu0
  %v4995 = vadd.f32 %v4224, %v4994
  %4996 = vmatprep.mubr.bf16.mxu0 0
  %4997 = vmatmul.mubr.bf16.gmra.mrb[0].mxu0 %v2952
  %v4998 = vpop.f32.mrb[0].mxu0
  %v4999 = vadd.f32 %v4228, %v4998
  %v5000 = vpop.f32.mrb[0].mxu0
  %v5001 = vadd.f32 %v4230, %v5000
  %v5002 = vpop.f32.mrb[0].mxu0
  %v5003 = vadd.f32 %v4232, %v5002
  %v5004 = vpop.f32.mrb[0].mxu0
  %v5005 = vadd.f32 %v4234, %v5004
  %5006 = vmatprep.mubr.bf16.mxu0 0
  %5007 = vmatmul.mubr.bf16.gmra.mrb[0].mxu0 %v2955
  %v5008 = vpop.f32.mrb[0].mxu0
  %v5009 = vadd.f32 %v4238, %v5008
  %v5010 = vpop.f32.mrb[0].mxu0
  %v5011 = vadd.f32 %v4240, %v5010
  %v5012 = vpop.f32.mrb[0].mxu0
  %v5013 = vadd.f32 %v4242, %v5012
  %v5014 = vpop.f32.mrb[0].mxu0
  %v5015 = vadd.f32 %v4244, %v5014
  %5016 = vmatprep.mubr.bf16.mxu0 0
  %5017 = vmatmul.mubr.bf16.gmra.mrb[0].mxu0 %v2958
  %v5018 = vpop.f32.mrb[0].mxu0
  %v5019 = vadd.f32 %v4248, %v5018
  %v5020 = vpop.f32.mrb[0].mxu0
  %v5021 = vadd.f32 %v4250, %v5020
  %v5022 = vpop.f32.mrb[0].mxu0
  %v5023 = vadd.f32 %v4252, %v5022
  %v5024 = vpop.f32.mrb[0].mxu0
  %v5025 = vadd.f32 %v4254, %v5024
  %5026 = vmatprep.mubr.bf16.mxu0 0
  %5027 = vmatmul.mubr.bf16.gmra.mrb[0].mxu0 %v2961
  %v5028 = vpop.f32.mrb[0].mxu0
  %v5029 = vadd.f32 %v4258, %v5028
  %v5030 = vpop.f32.mrb[0].mxu0
  %v5031 = vadd.f32 %v4260, %v5030
  %v5032 = vpop.f32.mrb[0].mxu0
  %v5033 = vadd.f32 %v4262, %v5032
  %v5034 = vpop.f32.mrb[0].mxu0
  %v5035 = vadd.f32 %v4264, %v5034
  %5036 = vmatprep.mubr.bf16.mxu0 0
  %5037 = vmatmul.mubr.bf16.gmra.mrb[0].mxu0 %v2964
  %v5038 = vpop.f32.mrb[0].mxu0
  %v5039 = vadd.f32 %v4268, %v5038
  %v5040 = vpop.f32.mrb[0].mxu0
  %v5041 = vadd.f32 %v4270, %v5040
  %v5042 = vpop.f32.mrb[0].mxu0
  %v5043 = vadd.f32 %v4272, %v5042
  %v5044 = vpop.f32.mrb[0].mxu0
  %v5045 = vadd.f32 %v4274, %v5044
  %5046 = vmatprep.mubr.bf16.mxu0 0
  %5047 = vmatmul.mubr.bf16.gmra.mrb[0].mxu0 %v2967
  %v5048 = vpop.f32.mrb[0].mxu0
  %v5049 = vadd.f32 %v4278, %v5048
  %v5050 = vpop.f32.mrb[0].mxu0
  %v5051 = vadd.f32 %v4280, %v5050
  %v5052 = vpop.f32.mrb[0].mxu0
  %v5053 = vadd.f32 %v4282, %v5052
  %v5054 = vpop.f32.mrb[0].mxu0
  %v5055 = vadd.f32 %v4284, %v5054
  %5056 = vmatprep.mubr.bf16.mxu0 0
  %5057 = vmatmul.mubr.bf16.gmra.mrb[0].mxu0 %v2970
  %v5058 = vpop.f32.mrb[0].mxu0
  %v5059 = vadd.f32 %v4288, %v5058
  %v5060 = vpop.f32.mrb[0].mxu0
  %v5061 = vadd.f32 %v4290, %v5060
  %v5062 = vpop.f32.mrb[0].mxu0
  %v5063 = vadd.f32 %v4292, %v5062
  %v5064 = vpop.f32.mrb[0].mxu0
  %v5065 = vadd.f32 %v4294, %v5064
  %5066 = vmatprep.mubr.bf16.mxu0 0
  %5067 = vmatmul.mubr.bf16.gmra.mrb[0].mxu0 %v2973
  %v5068 = vpop.f32.mrb[0].mxu0
  %v5069 = vadd.f32 %v4298, %v5068
  %v5070 = vpop.f32.mrb[0].mxu0
  %v5071 = vadd.f32 %v4300, %v5070
  %v5072 = vpop.f32.mrb[0].mxu0
  %v5073 = vadd.f32 %v4302, %v5072
  %v5074 = vpop.f32.mrb[0].mxu0
  %v5075 = vadd.f32 %v4304, %v5074
  %5076 = vmatprep.mubr.bf16.mxu0 0
  %5077 = vmatmul.mubr.bf16.gmra.mrb[0].mxu0 %v2976
  %v5078 = vpop.f32.mrb[0].mxu0
  %v5079 = vadd.f32 %v4308, %v5078
  %v5080 = vpop.f32.mrb[0].mxu0
  %v5081 = vadd.f32 %v4310, %v5080
  %v5082 = vpop.f32.mrb[0].mxu0
  %v5083 = vadd.f32 %v4312, %v5082
  %v5084 = vpop.f32.mrb[0].mxu0
  %v5085 = vadd.f32 %v4314, %v5084
  %5086 = vmatprep.mubr.bf16.mxu0 0
  %5087 = vmatmul.mubr.bf16.gmra.mrb[0].mxu0 %v2979
  %v5088 = vpop.f32.mrb[0].mxu0
  %v5089 = vadd.f32 %v4318, %v5088
  %v5090 = vpop.f32.mrb[0].mxu0
  %v5091 = vadd.f32 %v4320, %v5090
  %v5092 = vpop.f32.mrb[0].mxu0
  %v5093 = vadd.f32 %v4322, %v5092
  %v5094 = vpop.f32.mrb[0].mxu0
  %v5095 = vadd.f32 %v4324, %v5094
  %5096 = vmatprep.mubr.bf16.mxu0 0
  %5097 = vmatmul.mubr.bf16.gmra.mrb[0].mxu0 %v2982
  %v5098 = vpop.f32.mrb[0].mxu0
  %v5099 = vadd.f32 %v4328, %v5098
  %v5100 = vpop.f32.mrb[0].mxu0
  %v5101 = vadd.f32 %v4330, %v5100
  %v5102 = vpop.f32.mrb[0].mxu0
  %v5103 = vadd.f32 %v4332, %v5102
  %v5104 = vpop.f32.mrb[0].mxu0
  %v5105 = vadd.f32 %v4334, %v5104
  %5106 = vmatprep.mubr.bf16.mxu0 0
  %5107 = vmatmul.mubr.bf16.gmra.mrb[0].mxu0 %v2985
  %v5108 = vpop.f32.mrb[0].mxu0
  %v5109 = vadd.f32 %v4338, %v5108
  %v5110 = vpop.f32.mrb[0].mxu0
  %v5111 = vadd.f32 %v4340, %v5110
  %v5112 = vpop.f32.mrb[0].mxu0
  %v5113 = vadd.f32 %v4342, %v5112
  %v5114 = vpop.f32.mrb[0].mxu0
  %v5115 = vadd.f32 %v4344, %v5114
  %5116 = vmatprep.mubr.bf16.mxu0 0
  %5117 = vmatmul.mubr.bf16.gmra.mrb[0].mxu0 %v2988
  %v5118 = vpop.f32.mrb[0].mxu0
  %v5119 = vadd.f32 %v4348, %v5118
  %v5120 = vpop.f32.mrb[0].mxu0
  %v5121 = vadd.f32 %v4350, %v5120
  %v5122 = vpop.f32.mrb[0].mxu0
  %v5123 = vadd.f32 %v4352, %v5122
  %v5124 = vpop.f32.mrb[0].mxu0
  %v5125 = vadd.f32 %v4354, %v5124
  %5126 = vmatprep.mubr.bf16.mxu0 0
  %5127 = vmatmul.mubr.bf16.gmra.mrb[0].mxu0 %v2991
  %v5128 = vpop.f32.mrb[0].mxu0
  %v5129 = vadd.f32 %v4358, %v5128
  %v5130 = vpop.f32.mrb[0].mxu0
  %v5131 = vadd.f32 %v4360, %v5130
  %v5132 = vpop.f32.mrb[0].mxu0
  %v5133 = vadd.f32 %v4362, %v5132
  %v5134 = vpop.f32.mrb[0].mxu0
  %v5135 = vadd.f32 %v4364, %v5134
  %5136 = vmatprep.mubr.bf16.mxu0 0
  %5137 = vmatmul.mubr.bf16.gmra.mrb[0].mxu0 %v2994
  %v5138 = vpop.f32.mrb[0].mxu0
  %v5139 = vadd.f32 %v4368, %v5138
  %v5140 = vpop.f32.mrb[0].mxu0
  %v5141 = vadd.f32 %v4370, %v5140
  %v5142 = vpop.f32.mrb[0].mxu0
  %v5143 = vadd.f32 %v4372, %v5142
  %v5144 = vpop.f32.mrb[0].mxu0
  %v5145 = vadd.f32 %v4374, %v5144
  %5146 = vmatprep.mubr.bf16.mxu0 0
  %5147 = vmatmul.mubr.bf16.gmra.mrb[0].mxu0 %v2997
  %v5148 = vpop.f32.mrb[0].mxu0
  %v5149 = vadd.f32 %v4378, %v5148
  %v5150 = vpop.f32.mrb[0].mxu0
  %v5151 = vadd.f32 %v4380, %v5150
  %v5152 = vpop.f32.mrb[0].mxu0
  %v5153 = vadd.f32 %v4382, %v5152
  %v5154 = vpop.f32.mrb[0].mxu0
  %v5155 = vadd.f32 %v4384, %v5154
  %5156 = vmatprep.mubr.bf16.mxu0 0
  %5157 = vmatmul.mubr.bf16.gmra.mrb[0].mxu0 %v3000
  %v5158 = vpop.f32.mrb[0].mxu0
  %v5159 = vadd.f32 %v4388, %v5158
  %v5160 = vpop.f32.mrb[0].mxu0
  %v5161 = vadd.f32 %v4390, %v5160
  %v5162 = vpop.f32.mrb[0].mxu0
  %v5163 = vadd.f32 %v4392, %v5162
  %v5164 = vpop.f32.mrb[0].mxu0
  %v5165 = vadd.f32 %v4394, %v5164
  %5166 = vmatprep.mubr.bf16.mxu0 0
  %5167 = vmatmul.mubr.bf16.gmra.mrb[0].mxu0 %v3003
  %v5168 = vpop.f32.mrb[0].mxu0
  %v5169 = vadd.f32 %v4398, %v5168
  %v5170 = vpop.f32.mrb[0].mxu0
  %v5171 = vadd.f32 %v4400, %v5170
  %v5172 = vpop.f32.mrb[0].mxu0
  %v5173 = vadd.f32 %v4402, %v5172
  %v5174 = vpop.f32.mrb[0].mxu0
  %v5175 = vadd.f32 %v4404, %v5174
  %5176 = vmatprep.mubr.bf16.mxu0 0
  %5177 = vmatmul.mubr.bf16.gmra.mrb[0].mxu0 %v3006
  %v5178 = vpop.f32.mrb[0].mxu0
  %v5179 = vadd.f32 %v4408, %v5178
  %v5180 = vpop.f32.mrb[0].mxu0
  %v5181 = vadd.f32 %v4410, %v5180
  %v5182 = vpop.f32.mrb[0].mxu0
  %v5183 = vadd.f32 %v4412, %v5182
  %v5184 = vpop.f32.mrb[0].mxu0
  %v5185 = vadd.f32 %v4414, %v5184
  %5186 = vmatprep.mubr.bf16.mxu0 0
  %5187 = vmatmul.mubr.bf16.gmra.mrb[0].mxu0 %v3009
  %v5188 = vpop.f32.mrb[0].mxu0
  %v5189 = vadd.f32 %v4418, %v5188
  %v5190 = vpop.f32.mrb[0].mxu0
  %v5191 = vadd.f32 %v4420, %v5190
  %v5192 = vpop.f32.mrb[0].mxu0
  %v5193 = vadd.f32 %v4422, %v5192
  %v5194 = vpop.f32.mrb[0].mxu0
  %v5195 = vadd.f32 %v4424, %v5194
  %5196 = vmatprep.mubr.bf16.mxu0 0
  %5197 = vmatmul.mubr.bf16.gmra.mrb[0].mxu0 %v3012
  %v5198 = vpop.f32.mrb[0].mxu0
  %v5199 = vadd.f32 %v4428, %v5198
  %v5200 = vpop.f32.mrb[0].mxu0
  %v5201 = vadd.f32 %v4430, %v5200
  %v5202 = vpop.f32.mrb[0].mxu0
  %v5203 = vadd.f32 %v4432, %v5202
  %v5204 = vpop.f32.mrb[0].mxu0
  %v5205 = vadd.f32 %v4434, %v5204
  %5206 = vmatprep.mubr.bf16.mxu0 0
  %5207 = vmatmul.mubr.bf16.gmra.mrb[0].mxu0 %v3015
  %v5208 = vpop.f32.mrb[0].mxu0
  %v5209 = vadd.f32 %v4438, %v5208
  %v5210 = vpop.f32.mrb[0].mxu0
  %v5211 = vadd.f32 %v4440, %v5210
  %v5212 = vpop.f32.mrb[0].mxu0
  %v5213 = vadd.f32 %v4442, %v5212
  %v5214 = vpop.f32.mrb[0].mxu0
  %v5215 = vadd.f32 %v4444, %v5214
  %5216 = vmatprep.mubr.bf16.mxu0 0
  %5217 = vmatmul.mubr.bf16.gmra.mrb[0].mxu0 %v3018
  %v5218 = vpop.f32.mrb[0].mxu0
  %v5219 = vadd.f32 %v4448, %v5218
  %v5220 = vpop.f32.mrb[0].mxu0
  %v5221 = vadd.f32 %v4450, %v5220
  %v5222 = vpop.f32.mrb[0].mxu0
  %v5223 = vadd.f32 %v4452, %v5222
  %v5224 = vpop.f32.mrb[0].mxu0
  %v5225 = vadd.f32 %v4454, %v5224
  %5226 = vmatprep.mubr.bf16.mxu0 0
  %5227 = vmatmul.mubr.bf16.gmra.mrb[0].mxu0 %v3021
  %v5228 = vpop.f32.mrb[0].mxu0
  %v5229 = vadd.f32 %v4458, %v5228
  %v5230 = vpop.f32.mrb[0].mxu0
  %v5231 = vadd.f32 %v4460, %v5230
  %v5232 = vpop.f32.mrb[0].mxu0
  %v5233 = vadd.f32 %v4462, %v5232
  %v5234 = vpop.f32.mrb[0].mxu0
  %v5235 = vadd.f32 %v4464, %v5234
  %5236 = vmatprep.mubr.bf16.mxu0 0
  %5237 = vmatmul.mubr.bf16.gmra.mrb[0].mxu0 %v3024
  %v5238 = vpop.f32.mrb[0].mxu0
  %v5239 = vadd.f32 %v4468, %v5238
  %v5240 = vpop.f32.mrb[0].mxu0
  %v5241 = vadd.f32 %v4470, %v5240
  %v5242 = vpop.f32.mrb[0].mxu0
  %v5243 = vadd.f32 %v4472, %v5242
  %v5244 = vpop.f32.mrb[0].mxu0
  %v5245 = vadd.f32 %v4474, %v5244
  %5246 = vmatprep.mubr.bf16.mxu0 0
  %5247 = vmatmul.mubr.bf16.gmra.mrb[0].mxu0 %v3027
  %v5248 = vpop.f32.mrb[0].mxu0
  %v5249 = vadd.f32 %v4478, %v5248
  %v5250 = vpop.f32.mrb[0].mxu0
  %v5251 = vadd.f32 %v4480, %v5250
  %v5252 = vpop.f32.mrb[0].mxu0
  %v5253 = vadd.f32 %v4482, %v5252
  %v5254 = vpop.f32.mrb[0].mxu0
  %v5255 = vadd.f32 %v4484, %v5254
  %5256 = vmatprep.mubr.bf16.mxu0 0
  %5257 = vmatmul.mubr.bf16.gmra.mrb[0].mxu0 %v3030
  %v5258 = vpop.f32.mrb[0].mxu0
  %v5259 = vadd.f32 %v4488, %v5258
  %v5260 = vpop.f32.mrb[0].mxu0
  %v5261 = vadd.f32 %v4490, %v5260
  %v5262 = vpop.f32.mrb[0].mxu0
  %v5263 = vadd.f32 %v4492, %v5262
  %v5264 = vpop.f32.mrb[0].mxu0
  %v5265 = vadd.f32 %v4494, %v5264
  %5266 = vmatprep.mubr.bf16.mxu0 0
  %5267 = vmatmul.mubr.bf16.gmra.mrb[0].mxu0 %v3033
  %v5268 = vpop.f32.mrb[0].mxu0
  %v5269 = vadd.f32 %v4498, %v5268
  %v5270 = vpop.f32.mrb[0].mxu0
  %v5271 = vadd.f32 %v4500, %v5270
  %v5272 = vpop.f32.mrb[0].mxu0
  %v5273 = vadd.f32 %v4502, %v5272
  %v5274 = vpop.f32.mrb[0].mxu0
  %v5275 = vadd.f32 %v4504, %v5274
  %5276 = vmatprep.mubr.bf16.mxu0 0
  %5277 = vmatmul.mubr.bf16.gmra.mrb[0].mxu0 %v3036
  %v5278 = vpop.f32.mrb[0].mxu0
  %v5279 = vadd.f32 %v4508, %v5278
  %v5280 = vpop.f32.mrb[0].mxu0
  %v5281 = vadd.f32 %v4510, %v5280
  %v5282 = vpop.f32.mrb[0].mxu0
  %v5283 = vadd.f32 %v4512, %v5282
  %v5284 = vpop.f32.mrb[0].mxu0
  %v5285 = vadd.f32 %v4514, %v5284
  %5286 = vmatprep.mubr.bf16.mxu0 0
  %5287 = vmatmul.mubr.bf16.gmra.mrb[0].mxu0 %v3039
  %v5288 = vpop.f32.mrb[0].mxu0
  %v5289 = vadd.f32 %v4518, %v5288
  %v5290 = vpop.f32.mrb[0].mxu0
  %v5291 = vadd.f32 %v4520, %v5290
  %v5292 = vpop.f32.mrb[0].mxu0
  %v5293 = vadd.f32 %v4522, %v5292
  %v5294 = vpop.f32.mrb[0].mxu0
  %v5295 = vadd.f32 %v4524, %v5294
  %5296 = vmatprep.mubr.bf16.mxu0 0
  %5297 = vmatmul.mubr.bf16.gmra.mrb[0].mxu0 %v3042
  %v5298 = vpop.f32.mrb[0].mxu0
  %v5299 = vadd.f32 %v4528, %v5298
  %v5300 = vpop.f32.mrb[0].mxu0
  %v5301 = vadd.f32 %v4530, %v5300
  %v5302 = vpop.f32.mrb[0].mxu0
  %v5303 = vadd.f32 %v4532, %v5302
  %v5304 = vpop.f32.mrb[0].mxu0
  %v5305 = vadd.f32 %v4534, %v5304
  %5306 = vmatprep.mubr.bf16.mxu0 0
  %5307 = vmatmul.mubr.bf16.gmra.mrb[0].mxu0 %v3045
  %v5308 = vpop.f32.mrb[0].mxu0
  %v5309 = vadd.f32 %v4538, %v5308
  %v5310 = vpop.f32.mrb[0].mxu0
  %v5311 = vadd.f32 %v4540, %v5310
  %v5312 = vpop.f32.mrb[0].mxu0
  %v5313 = vadd.f32 %v4542, %v5312
  %v5314 = vpop.f32.mrb[0].mxu0
  %v5315 = vadd.f32 %v4544, %v5314
  %5316 = vmatprep.mubr.bf16.mxu0 0
  %5317 = vmatmul.mubr.bf16.gmra.mrb[0].mxu0 %v3048
  %v5318 = vpop.f32.mrb[0].mxu0
  %v5319 = vadd.f32 %v4548, %v5318
  %v5320 = vpop.f32.mrb[0].mxu0
  %v5321 = vadd.f32 %v4550, %v5320
  %v5322 = vpop.f32.mrb[0].mxu0
  %v5323 = vadd.f32 %v4552, %v5322
  %v5324 = vpop.f32.mrb[0].mxu0
  %v5325 = vadd.f32 %v4554, %v5324
  %5326 = vmatprep.mubr.bf16.mxu0 0
  %5327 = vmatmul.mubr.bf16.gmra.mrb[0].mxu0 %v3051
  %v5328 = vpop.f32.mrb[0].mxu0
  %v5329 = vadd.f32 %v4558, %v5328
  %v5330 = vpop.f32.mrb[0].mxu0
  %v5331 = vadd.f32 %v4560, %v5330
  %v5332 = vpop.f32.mrb[0].mxu0
  %v5333 = vadd.f32 %v4562, %v5332
  %v5334 = vpop.f32.mrb[0].mxu0
  %v5335 = vadd.f32 %v4564, %v5334
  %5336 = vmatprep.mubr.bf16.mxu0 0
  %5337 = vmatmul.mubr.bf16.gmra.mrb[0].mxu0 %v3054
  %v5338 = vpop.f32.mrb[0].mxu0
  %v5339 = vadd.f32 %v4568, %v5338
  %v5340 = vpop.f32.mrb[0].mxu0
  %v5341 = vadd.f32 %v4570, %v5340
  %v5342 = vpop.f32.mrb[0].mxu0
  %v5343 = vadd.f32 %v4572, %v5342
  %v5344 = vpop.f32.mrb[0].mxu0
  %v5345 = vadd.f32 %v4574, %v5344
  %5346 = vmatprep.mubr.bf16.mxu0 0
  %5347 = vmatmul.mubr.bf16.gmra.mrb[0].mxu0 %v3057
  %v5348 = vpop.f32.mrb[0].mxu0
  %v5349 = vadd.f32 %v4578, %v5348
  %v5350 = vpop.f32.mrb[0].mxu0
  %v5351 = vadd.f32 %v4580, %v5350
  %v5352 = vpop.f32.mrb[0].mxu0
  %v5353 = vadd.f32 %v4582, %v5352
  %v5354 = vpop.f32.mrb[0].mxu0
  %v5355 = vadd.f32 %v4584, %v5354
  %5356 = vmatprep.mubr.bf16.mxu0 0
  %5357 = vmatmul.mubr.bf16.gmra.mrb[0].mxu0 %v3060
  %v5358 = vpop.f32.mrb[0].mxu0
  %v5359 = vpop.f32.mrb[0].mxu0
  %v5360 = vadd.f32 %v4589, %v5359
  %v5361 = vpop.f32.mrb[0].mxu0
  %v5362 = vpop.f32.mrb[0].mxu0
  %v5363 = vadd.f32 %v4592, %v5362
  %5364 = vmatprep.mubr.bf16.mxu0 0
  %5365 = vmatmul.mubr.bf16.gmra.mrb[0].mxu0 %v3063
  %v5366 = vpop.f32.mrb[0].mxu0
  %v5367 = vpop.f32.mrb[0].mxu0
  %v5368 = vadd.f32 %v4597, %v5367
  %v5369 = vpop.f32.mrb[0].mxu0
  %v5370 = vpop.f32.mrb[0].mxu0
  %v5371 = vadd.f32 %v4600, %v5370
  %5372 = vmatprep.mubr.bf16.mxu0 0
  %5373 = vmatmul.mubr.bf16.gmra.mrb[0].mxu0 %v3066
  %v5374 = vpop.f32.mrb[0].mxu0
  %v5375 = vpop.f32.mrb[0].mxu0
  %v5376 = vadd.f32 %v4605, %v5375
  %v5377 = vpop.f32.mrb[0].mxu0
  %v5378 = vpop.f32.mrb[0].mxu0
  %v5379 = vadd.f32 %v4608, %v5378
  %5380 = vdwg.mxu0
  %v5417 = vunpack.c.l.b16 %v18
  %v5418 = vunpack.c.h.b16 %v18
  %v5419 = vunpack.c.l.b16 %v19
  %v5420 = vunpack.c.h.b16 %v19
  %v5421 = vunpack.c.l.b16 %v20
  %v5422 = vunpack.c.l.b16 %v21
  %v5423 = vunpack.c.h.b16 %v21
  %v5424 = vunpack.c.l.b16 %v22
  %v5425 = vunpack.c.h.b16 %v22
  %v5426 = vunpack.c.l.b16 %v23
  %v5427 = vunpack.c.l.b16 %v24
  %v5428 = vunpack.c.h.b16 %v24
  %v5429 = vunpack.c.l.b16 %v25
  %v5430 = vunpack.c.h.b16 %v25
  %v5431 = vunpack.c.l.b16 %v26
  %v5432 = vunpack.c.l.b16 %v27
  %v5433 = vunpack.c.h.b16 %v27
  %v5434 = vunpack.c.l.b16 %v28
  %v5435 = vunpack.c.h.b16 %v28
  %v5436 = vunpack.c.l.b16 %v29
  %v5437 = vunpack.c.l.b16 %v30
  %v5438 = vunpack.c.h.b16 %v30
  %v5439 = vunpack.c.l.b16 %v31
  %v5440 = vunpack.c.h.b16 %v31
  %v5441 = vunpack.c.l.b16 %v32
  %v5442 = vunpack.c.l.b16 %v33
  %v5443 = vunpack.c.h.b16 %v33
  %v5444 = vunpack.c.l.b16 %v34
  %v5445 = vunpack.c.h.b16 %v34
  %v5446 = vunpack.c.l.b16 %v35
  %v5447 = vunpack.c.l.b16 %v36
  %v5448 = vunpack.c.h.b16 %v36
  %v5449 = vunpack.c.l.b16 %v37
  %v5450 = vunpack.c.h.b16 %v37
  %v5451 = vunpack.c.l.b16 %v38
  %v5452 = vunpack.c.l.b16 %v39
  %v5453 = vunpack.c.h.b16 %v39
  %v5454 = vunpack.c.l.b16 %v40
  %v5455 = vunpack.c.h.b16 %v40
  %v5456 = vunpack.c.l.b16 %v41
  %v5457 = vunpack.c.l.b16 %v42
  %v5458 = vunpack.c.h.b16 %v42
  %v5459 = vunpack.c.l.b16 %v43
  %v5460 = vunpack.c.h.b16 %v43
  %v5461 = vunpack.c.l.b16 %v44
  %v5462 = vunpack.c.l.b16 %v45
  %v5463 = vunpack.c.h.b16 %v45
  %v5464 = vunpack.c.l.b16 %v46
  %v5465 = vunpack.c.h.b16 %v46
  %v5466 = vunpack.c.l.b16 %v47
  %v5467 = vunpack.c.l.b16 %v48
  %v5468 = vunpack.c.h.b16 %v48
  %v5469 = vunpack.c.l.b16 %v49
  %v5470 = vunpack.c.h.b16 %v49
  %v5471 = vunpack.c.l.b16 %v50
  %v5472 = vunpack.c.l.b16 %v51
  %v5473 = vunpack.c.h.b16 %v51
  %v5474 = vunpack.c.l.b16 %v52
  %v5475 = vunpack.c.h.b16 %v52
  %v5476 = vunpack.c.l.b16 %v53
  %v5477 = vpack.c.b16 %v5422, %v5417
  %v5478 = vpack.c.b16 %v5423, %v5418
  %v5479 = vpack.c.b16 %v5424, %v5419
  %v5480 = vpack.c.b16 %v5425, %v5420
  %v5481 = vpack.c.b16 %v5426, %v5421
  %v5482 = vpack.c.b16 %v5432, %v5427
  %v5483 = vpack.c.b16 %v5433, %v5428
  %v5484 = vpack.c.b16 %v5434, %v5429
  %v5485 = vpack.c.b16 %v5435, %v5430
  %v5486 = vpack.c.b16 %v5436, %v5431
  %v5487 = vpack.c.b16 %v5442, %v5437
  %v5488 = vpack.c.b16 %v5443, %v5438
  %v5489 = vpack.c.b16 %v5444, %v5439
  %v5490 = vpack.c.b16 %v5445, %v5440
  %v5491 = vpack.c.b16 %v5446, %v5441
  %v5492 = vpack.c.b16 %v5452, %v5447
  %v5493 = vpack.c.b16 %v5453, %v5448
  %v5494 = vpack.c.b16 %v5454, %v5449
  %v5495 = vpack.c.b16 %v5455, %v5450
  %v5496 = vpack.c.b16 %v5456, %v5451
  %v5497 = vpack.c.b16 %v5462, %v5457
  %v5498 = vpack.c.b16 %v5463, %v5458
  %v5499 = vpack.c.b16 %v5464, %v5459
  %v5500 = vpack.c.b16 %v5465, %v5460
  %v5501 = vpack.c.b16 %v5466, %v5461
  %v5502 = vpack.c.b16 %v5472, %v5467
  %v5503 = vpack.c.b16 %v5473, %v5468
  %v5504 = vpack.c.b16 %v5474, %v5469
  %v5505 = vpack.c.b16 %v5475, %v5470
  %v5506 = vpack.c.b16 %v5476, %v5471
  %v5597 = vunpack.c.l.b16 %v468
  %v5598 = vunpack.c.h.b16 %v468
  %v5599 = vunpack.c.l.b16 %v469
  %v5600 = vunpack.c.h.b16 %v469
  %v5601 = vunpack.c.l.b16 %v470
  %v5602 = vunpack.c.h.b16 %v470
  %v5603 = vunpack.c.l.b16 %v471
  %v5604 = vunpack.c.h.b16 %v471
  %v5605 = vunpack.c.l.b16 %v472
  %v5606 = vunpack.c.h.b16 %v472
  %v5607 = vunpack.c.l.b16 %v473
  %v5608 = vunpack.c.h.b16 %v473
  %v5609 = vunpack.c.l.b16 %v474
  %v5610 = vunpack.c.h.b16 %v474
  %v5611 = vunpack.c.l.b16 %v475
  %v5612 = vunpack.c.h.b16 %v475
  %v5613 = vunpack.c.l.b16 %v476
  %v5614 = vunpack.c.h.b16 %v476
  %v5615 = vunpack.c.l.b16 %v477
  %v5616 = vunpack.c.h.b16 %v477
  %v5617 = vunpack.c.l.b16 %v478
  %v5618 = vunpack.c.h.b16 %v478
  %v5619 = vunpack.c.l.b16 %v479
  %v5620 = vunpack.c.h.b16 %v479
  %v5621 = vunpack.c.l.b16 %v480
  %v5622 = vunpack.c.h.b16 %v480
  %v5623 = vunpack.c.l.b16 %v481
  %v5624 = vunpack.c.h.b16 %v481
  %v5625 = vunpack.c.l.b16 %v482
  %v5626 = vunpack.c.h.b16 %v482
  %v5627 = vunpack.c.l.b16 %v483
  %v5628 = vunpack.c.h.b16 %v483
  %v5629 = vunpack.c.l.b16 %v484
  %v5630 = vunpack.c.h.b16 %v484
  %v5631 = vunpack.c.l.b16 %v485
  %v5632 = vunpack.c.h.b16 %v485
  %v5633 = vunpack.c.l.b16 %v486
  %v5634 = vunpack.c.h.b16 %v486
  %v5635 = vunpack.c.l.b16 %v487
  %v5636 = vunpack.c.h.b16 %v487
  %v5637 = vunpack.c.l.b16 %v488
  %v5638 = vunpack.c.h.b16 %v488
  %v5639 = vunpack.c.l.b16 %v489
  %v5640 = vunpack.c.h.b16 %v489
  %v5641 = vunpack.c.l.b16 %v490
  %v5642 = vunpack.c.h.b16 %v490
  %v5643 = vunpack.c.l.b16 %v491
  %v5644 = vunpack.c.h.b16 %v491
  %v5645 = vunpack.c.l.b16 %v492
  %v5646 = vunpack.c.h.b16 %v492
  %v5647 = vunpack.c.l.b16 %v493
  %v5648 = vunpack.c.h.b16 %v493
  %v5649 = vunpack.c.l.b16 %v494
  %v5650 = vunpack.c.h.b16 %v494
  %v5651 = vunpack.c.l.b16 %v495
  %v5652 = vunpack.c.h.b16 %v495
  %v5653 = vunpack.c.l.b16 %v496
  %v5654 = vunpack.c.h.b16 %v496
  %v5655 = vunpack.c.l.b16 %v497
  %v5656 = vunpack.c.h.b16 %v497
  %v5657 = vunpack.c.l.b16 %v498
  %v5658 = vunpack.c.h.b16 %v498
  %v5659 = vunpack.c.l.b16 %v499
  %v5660 = vunpack.c.h.b16 %v499
  %v5661 = vunpack.c.l.b16 %v500
  %v5662 = vunpack.c.h.b16 %v500
  %v5663 = vunpack.c.l.b16 %v501
  %v5664 = vunpack.c.h.b16 %v501
  %v5665 = vunpack.c.l.b16 %v502
  %v5666 = vunpack.c.h.b16 %v502
  %v5667 = vunpack.c.l.b16 %v503
  %v5668 = vunpack.c.h.b16 %v503
  %v5669 = vunpack.c.l.b16 %v504
  %v5670 = vunpack.c.h.b16 %v504
  %v5671 = vunpack.c.l.b16 %v505
  %v5672 = vunpack.c.h.b16 %v505
  %v5673 = vunpack.c.l.b16 %v506
  %v5674 = vunpack.c.h.b16 %v506
  %v5675 = vunpack.c.l.b16 %v507
  %v5676 = vunpack.c.h.b16 %v507
  %v5677 = vunpack.c.l.b16 %v508
  %v5678 = vunpack.c.h.b16 %v508
  %v5679 = vunpack.c.l.b16 %v509
  %v5680 = vunpack.c.h.b16 %v509
  %v5681 = vunpack.c.l.b16 %v510
  %v5682 = vunpack.c.h.b16 %v510
  %v5683 = vunpack.c.l.b16 %v511
  %v5684 = vunpack.c.h.b16 %v511
  %v5685 = vunpack.c.l.b16 %v512
  %v5686 = vunpack.c.h.b16 %v512
  %v5687 = vunpack.c.l.b16 %v513
  %v5688 = vunpack.c.h.b16 %v513
  %v5689 = vunpack.c.l.b16 %v514
  %v5690 = vunpack.c.h.b16 %v514
  %v5691 = vunpack.c.l.b16 %v515
  %v5692 = vunpack.c.h.b16 %v515
  %v5693 = vunpack.c.l.b16 %v516
  %v5694 = vunpack.c.h.b16 %v516
  %v5695 = vunpack.c.l.b16 %v517
  %v5696 = vunpack.c.h.b16 %v517
  %v5697 = vunpack.c.l.b16 %v518
  %v5698 = vunpack.c.h.b16 %v518
  %v5699 = vunpack.c.l.b16 %v519
  %v5700 = vunpack.c.h.b16 %v519
  %v5701 = vunpack.c.l.b16 %v520
  %v5702 = vunpack.c.h.b16 %v520
  %v5703 = vunpack.c.l.b16 %v521
  %v5704 = vunpack.c.h.b16 %v521
  %v5705 = vunpack.c.l.b16 %v522
  %v5706 = vunpack.c.h.b16 %v522
  %v5707 = vunpack.c.l.b16 %v523
  %v5708 = vunpack.c.h.b16 %v523
  %v5709 = vunpack.c.l.b16 %v524
  %v5710 = vunpack.c.h.b16 %v524
  %v5711 = vunpack.c.l.b16 %v525
  %v5712 = vunpack.c.h.b16 %v525
  %v5713 = vunpack.c.l.b16 %v526
  %v5714 = vunpack.c.h.b16 %v526
  %v5715 = vunpack.c.l.b16 %v527
  %v5716 = vunpack.c.h.b16 %v527
  %v5717 = vunpack.c.l.b16 %v528
  %v5718 = vunpack.c.h.b16 %v528
  %v5719 = vunpack.c.l.b16 %v529
  %v5720 = vunpack.c.h.b16 %v529
  %v5721 = vunpack.c.l.b16 %v530
  %v5722 = vunpack.c.h.b16 %v530
  %v5723 = vunpack.c.l.b16 %v531
  %v5724 = vunpack.c.h.b16 %v531
  %v5725 = vunpack.c.l.b16 %v532
  %v5726 = vunpack.c.h.b16 %v532
  %v5727 = vunpack.c.l.b16 %v533
  %v5728 = vunpack.c.h.b16 %v533
  %v5729 = vpack.c.b16 %v5599, %v5597
  %v5730 = vpack.c.b16 %v5600, %v5598
  %v5731 = vpack.c.b16 %v5603, %v5601
  %v5732 = vpack.c.b16 %v5604, %v5602
  %v5733 = vpack.c.b16 %v5607, %v5605
  %v5734 = vpack.c.b16 %v5608, %v5606
  %v5735 = vpack.c.b16 %v5611, %v5609
  %v5736 = vpack.c.b16 %v5612, %v5610
  %v5737 = vpack.c.b16 %v5615, %v5613
  %v5738 = vpack.c.b16 %v5616, %v5614
  %v5739 = vpack.c.b16 %v5619, %v5617
  %v5740 = vpack.c.b16 %v5620, %v5618
  %v5741 = vpack.c.b16 %v5623, %v5621
  %v5742 = vpack.c.b16 %v5624, %v5622
  %v5743 = vpack.c.b16 %v5627, %v5625
  %v5744 = vpack.c.b16 %v5628, %v5626
  %v5745 = vpack.c.b16 %v5631, %v5629
  %v5746 = vpack.c.b16 %v5632, %v5630
  %v5747 = vpack.c.b16 %v5635, %v5633
  %v5748 = vpack.c.b16 %v5636, %v5634
  %v5749 = vpack.c.b16 %v5639, %v5637
  %v5750 = vpack.c.b16 %v5640, %v5638
  %v5751 = vpack.c.b16 %v5643, %v5641
  %v5752 = vpack.c.b16 %v5644, %v5642
  %v5753 = vpack.c.b16 %v5647, %v5645
  %v5754 = vpack.c.b16 %v5648, %v5646
  %v5755 = vpack.c.b16 %v5651, %v5649
  %v5756 = vpack.c.b16 %v5652, %v5650
  %v5757 = vpack.c.b16 %v5655, %v5653
  %v5758 = vpack.c.b16 %v5656, %v5654
  %v5759 = vpack.c.b16 %v5659, %v5657
  %v5760 = vpack.c.b16 %v5660, %v5658
  %v5761 = vpack.c.b16 %v5663, %v5661
  %v5762 = vpack.c.b16 %v5664, %v5662
  %v5763 = vpack.c.b16 %v5667, %v5665
  %v5764 = vpack.c.b16 %v5668, %v5666
  %v5765 = vpack.c.b16 %v5671, %v5669
  %v5766 = vpack.c.b16 %v5672, %v5670
  %v5767 = vpack.c.b16 %v5675, %v5673
  %v5768 = vpack.c.b16 %v5676, %v5674
  %v5769 = vpack.c.b16 %v5679, %v5677
  %v5770 = vpack.c.b16 %v5680, %v5678
  %v5771 = vpack.c.b16 %v5683, %v5681
  %v5772 = vpack.c.b16 %v5684, %v5682
  %v5773 = vpack.c.b16 %v5687, %v5685
  %v5774 = vpack.c.b16 %v5688, %v5686
  %v5775 = vpack.c.b16 %v5691, %v5689
  %v5776 = vpack.c.b16 %v5692, %v5690
  %v5777 = vpack.c.b16 %v5695, %v5693
  %v5778 = vpack.c.b16 %v5696, %v5694
  %v5779 = vpack.c.b16 %v5699, %v5697
  %v5780 = vpack.c.b16 %v5700, %v5698
  %v5781 = vpack.c.b16 %v5703, %v5701
  %v5782 = vpack.c.b16 %v5704, %v5702
  %v5783 = vpack.c.b16 %v5707, %v5705
  %v5784 = vpack.c.b16 %v5708, %v5706
  %v5785 = vpack.c.b16 %v5711, %v5709
  %v5786 = vpack.c.b16 %v5712, %v5710
  %v5787 = vpack.c.b16 %v5715, %v5713
  %v5788 = vpack.c.b16 %v5716, %v5714
  %v5789 = vpack.c.b16 %v5719, %v5717
  %v5790 = vpack.c.b16 %v5720, %v5718
  %v5791 = vpack.c.b16 %v5723, %v5721
  %v5792 = vpack.c.b16 %v5724, %v5722
  %v5793 = vpack.c.b16 %v5727, %v5725
  %v5794 = vpack.c.b16 %v5728, %v5726
  %v5862 = vsel %vm2842, %v5481, 0
  %v5865 = vsel %vm2842, %v5486, 0
  %v5868 = vsel %vm2842, %v5491, 0
  %v5871 = vsel %vm2842, %v5496, 0
  %v5874 = vsel %vm2842, %v5501, 0
  %v5877 = vsel %vm2842, %v5506, 0
  %5879 = vmatprep.subr.bf16.mxu0 %v5730
  %5880 = vmatpush1.bf16.msra.mxu0 %v5729
  %5881 = vmatprep.subr.bf16.mxu0 %v5732
  %5882 = vmatpush1.bf16.msra.mxu0 %v5731
  %5883 = vmatprep.subr.bf16.mxu0 %v5734
  %5884 = vmatpush1.bf16.msra.mxu0 %v5733
  %5885 = vmatprep.subr.bf16.mxu0 %v5736
  %5886 = vmatpush1.bf16.msra.mxu0 %v5735
  %5887 = vmatprep.subr.bf16.mxu0 %v5738
  %5888 = vmatpush1.bf16.msra.mxu0 %v5737
  %5889 = vmatprep.subr.bf16.mxu0 %v5740
  %5890 = vmatpush1.bf16.msra.mxu0 %v5739
  %5891 = vmatprep.subr.bf16.mxu0 %v5742
  %5892 = vmatpush1.bf16.msra.mxu0 %v5741
  %5893 = vmatprep.subr.bf16.mxu0 %v5744
  %5894 = vmatpush1.bf16.msra.mxu0 %v5743
  %5895 = vmatprep.subr.bf16.mxu0 %v5746
  %5896 = vmatpush1.bf16.msra.mxu0 %v5745
  %5897 = vmatprep.subr.bf16.mxu0 %v5748
  %5898 = vmatpush1.bf16.msra.mxu0 %v5747
  %5899 = vmatprep.subr.bf16.mxu0 %v5750
  %5900 = vmatpush1.bf16.msra.mxu0 %v5749
  %5901 = vmatprep.subr.bf16.mxu0 %v5752
  %5902 = vmatpush1.bf16.msra.mxu0 %v5751
  %5903 = vmatprep.subr.bf16.mxu0 %v5754
  %5904 = vmatpush1.bf16.msra.mxu0 %v5753
  %5905 = vmatprep.subr.bf16.mxu0 %v5756
  %5906 = vmatpush1.bf16.msra.mxu0 %v5755
  %5907 = vmatprep.subr.bf16.mxu0 %v5758
  %5908 = vmatpush1.bf16.msra.mxu0 %v5757
  %5909 = vmatprep.subr.bf16.mxu0 %v5760
  %5910 = vmatpush1.bf16.msra.mxu0 %v5759
  %5911 = vmatprep.mubr.bf16.mxu0 %v5478
  %5912 = vmatmul.mubr.bf16.gmra.mrb[0].mxu0 %v5477
  %v5913 = vpop.f32.mrb[0].mxu0
  %v5914 = vadd.f32 %v4645, %v5913
  %v5915 = vpop.f32.mrb[0].mxu0
  %v5916 = vpop.f32.mrb[0].mxu0
  %v5917 = vadd.f32 %v4648, %v5916
  %v5918 = vpop.f32.mrb[0].mxu0
  %5919 = vmatprep.mubr.bf16.mxu0 %v5483
  %5920 = vmatmul.mubr.bf16.gmra.mrb[0].mxu0 %v5482
  %v5921 = vpop.f32.mrb[0].mxu0
  %v5922 = vadd.f32 %v4653, %v5921
  %v5923 = vpop.f32.mrb[0].mxu0
  %v5924 = vpop.f32.mrb[0].mxu0
  %v5925 = vadd.f32 %v4656, %v5924
  %v5926 = vpop.f32.mrb[0].mxu0
  %5927 = vmatprep.mubr.bf16.mxu0 %v5488
  %5928 = vmatmul.mubr.bf16.gmra.mrb[0].mxu0 %v5487
  %v5929 = vpop.f32.mrb[0].mxu0
  %v5930 = vadd.f32 %v4661, %v5929
  %v5931 = vpop.f32.mrb[0].mxu0
  %v5932 = vpop.f32.mrb[0].mxu0
  %v5933 = vadd.f32 %v4664, %v5932
  %v5934 = vpop.f32.mrb[0].mxu0
  %5935 = vmatprep.mubr.bf16.mxu0 %v5493
  %5936 = vmatmul.mubr.bf16.gmra.mrb[0].mxu0 %v5492
  %v5937 = vpop.f32.mrb[0].mxu0
  %v5938 = vadd.f32 %v4669, %v5937
  %v5939 = vpop.f32.mrb[0].mxu0
  %v5940 = vadd.f32 %v4671, %v5939
  %v5941 = vpop.f32.mrb[0].mxu0
  %v5942 = vadd.f32 %v4673, %v5941
  %v5943 = vpop.f32.mrb[0].mxu0
  %v5944 = vadd.f32 %v4675, %v5943
  %5945 = vmatprep.mubr.bf16.mxu0 %v5498
  %5946 = vmatmul.mubr.bf16.gmra.mrb[0].mxu0 %v5497
  %v5947 = vpop.f32.mrb[0].mxu0
  %v5948 = vadd.f32 %v4679, %v5947
  %v5949 = vpop.f32.mrb[0].mxu0
  %v5950 = vadd.f32 %v4681, %v5949
  %v5951 = vpop.f32.mrb[0].mxu0
  %v5952 = vadd.f32 %v4683, %v5951
  %v5953 = vpop.f32.mrb[0].mxu0
  %v5954 = vadd.f32 %v4685, %v5953
  %5955 = vmatprep.mubr.bf16.mxu0 %v5503
  %5956 = vmatmul.mubr.bf16.gmra.mrb[0].mxu0 %v5502
  %v5957 = vpop.f32.mrb[0].mxu0
  %v5958 = vadd.f32 %v4689, %v5957
  %v5959 = vpop.f32.mrb[0].mxu0
  %v5960 = vadd.f32 %v4691, %v5959
  %v5961 = vpop.f32.mrb[0].mxu0
  %v5962 = vadd.f32 %v4693, %v5961
  %v5963 = vpop.f32.mrb[0].mxu0
  %v5964 = vadd.f32 %v4695, %v5963
  %5965 = vmatprep.mubr.bf16.mxu0 %v1838
  %5966 = vmatmul.mubr.bf16.gmra.mrb[0].mxu0 %v1837
  %v5967 = vpop.f32.mrb[0].mxu0
  %v5968 = vadd.f32 %v4699, %v5967
  %v5969 = vpop.f32.mrb[0].mxu0
  %v5970 = vadd.f32 %v4701, %v5969
  %v5971 = vpop.f32.mrb[0].mxu0
  %v5972 = vadd.f32 %v4703, %v5971
  %v5973 = vpop.f32.mrb[0].mxu0
  %v5974 = vadd.f32 %v4705, %v5973
  %5975 = vmatprep.mubr.bf16.mxu0 %v1843
  %5976 = vmatmul.mubr.bf16.gmra.mrb[0].mxu0 %v1842
  %v5977 = vpop.f32.mrb[0].mxu0
  %v5978 = vadd.f32 %v4709, %v5977
  %v5979 = vpop.f32.mrb[0].mxu0
  %v5980 = vadd.f32 %v4711, %v5979
  %v5981 = vpop.f32.mrb[0].mxu0
  %v5982 = vadd.f32 %v4713, %v5981
  %v5983 = vpop.f32.mrb[0].mxu0
  %v5984 = vadd.f32 %v4715, %v5983
  %5985 = vmatprep.mubr.bf16.mxu0 %v1848
  %5986 = vmatmul.mubr.bf16.gmra.mrb[0].mxu0 %v1847
  %v5987 = vpop.f32.mrb[0].mxu0
  %v5988 = vadd.f32 %v4719, %v5987
  %v5989 = vpop.f32.mrb[0].mxu0
  %v5990 = vadd.f32 %v4721, %v5989
  %v5991 = vpop.f32.mrb[0].mxu0
  %v5992 = vadd.f32 %v4723, %v5991
  %v5993 = vpop.f32.mrb[0].mxu0
  %v5994 = vadd.f32 %v4725, %v5993
  %5995 = vmatprep.mubr.bf16.mxu0 %v1853
  %5996 = vmatmul.mubr.bf16.gmra.mrb[0].mxu0 %v1852
  %v5997 = vpop.f32.mrb[0].mxu0
  %v5998 = vadd.f32 %v4729, %v5997
  %v5999 = vpop.f32.mrb[0].mxu0
  %v6000 = vadd.f32 %v4731, %v5999
  %v6001 = vpop.f32.mrb[0].mxu0
  %v6002 = vadd.f32 %v4733, %v6001
  %v6003 = vpop.f32.mrb[0].mxu0
  %v6004 = vadd.f32 %v4735, %v6003
  %6005 = vmatprep.mubr.bf16.mxu0 %v1858
  %6006 = vmatmul.mubr.bf16.gmra.mrb[0].mxu0 %v1857
  %v6007 = vpop.f32.mrb[0].mxu0
  %v6008 = vadd.f32 %v4739, %v6007
  %v6009 = vpop.f32.mrb[0].mxu0
  %v6010 = vadd.f32 %v4741, %v6009
  %v6011 = vpop.f32.mrb[0].mxu0
  %v6012 = vadd.f32 %v4743, %v6011
  %v6013 = vpop.f32.mrb[0].mxu0
  %v6014 = vadd.f32 %v4745, %v6013
  %6015 = vmatprep.mubr.bf16.mxu0 %v1863
  %6016 = vmatmul.mubr.bf16.gmra.mrb[0].mxu0 %v1862
  %v6017 = vpop.f32.mrb[0].mxu0
  %v6018 = vadd.f32 %v4749, %v6017
  %v6019 = vpop.f32.mrb[0].mxu0
  %v6020 = vadd.f32 %v4751, %v6019
  %v6021 = vpop.f32.mrb[0].mxu0
  %v6022 = vadd.f32 %v4753, %v6021
  %v6023 = vpop.f32.mrb[0].mxu0
  %v6024 = vadd.f32 %v4755, %v6023
  %6025 = vmatprep.mubr.bf16.mxu0 %v1868
  %6026 = vmatmul.mubr.bf16.gmra.mrb[0].mxu0 %v1867
  %v6027 = vpop.f32.mrb[0].mxu0
  %v6028 = vadd.f32 %v4759, %v6027
  %v6029 = vpop.f32.mrb[0].mxu0
  %v6030 = vadd.f32 %v4761, %v6029
  %v6031 = vpop.f32.mrb[0].mxu0
  %v6032 = vadd.f32 %v4763, %v6031
  %v6033 = vpop.f32.mrb[0].mxu0
  %v6034 = vadd.f32 %v4765, %v6033
  %6035 = vmatprep.mubr.bf16.mxu0 %v1873
  %6036 = vmatmul.mubr.bf16.gmra.mrb[0].mxu0 %v1872
  %v6037 = vpop.f32.mrb[0].mxu0
  %v6038 = vadd.f32 %v4769, %v6037
  %v6039 = vpop.f32.mrb[0].mxu0
  %v6040 = vadd.f32 %v4771, %v6039
  %v6041 = vpop.f32.mrb[0].mxu0
  %v6042 = vadd.f32 %v4773, %v6041
  %v6043 = vpop.f32.mrb[0].mxu0
  %v6044 = vadd.f32 %v4775, %v6043
  %6045 = vmatprep.mubr.bf16.mxu0 %v1878
  %6046 = vmatmul.mubr.bf16.gmra.mrb[0].mxu0 %v1877
  %v6047 = vpop.f32.mrb[0].mxu0
  %v6048 = vadd.f32 %v4779, %v6047
  %v6049 = vpop.f32.mrb[0].mxu0
  %v6050 = vadd.f32 %v4781, %v6049
  %v6051 = vpop.f32.mrb[0].mxu0
  %v6052 = vadd.f32 %v4783, %v6051
  %v6053 = vpop.f32.mrb[0].mxu0
  %v6054 = vadd.f32 %v4785, %v6053
  %6055 = vmatprep.mubr.bf16.mxu0 %v1883
  %6056 = vmatmul.mubr.bf16.gmra.mrb[0].mxu0 %v1882
  %v6057 = vpop.f32.mrb[0].mxu0
  %v6058 = vadd.f32 %v4789, %v6057
  %v6059 = vpop.f32.mrb[0].mxu0
  %v6060 = vadd.f32 %v4791, %v6059
  %v6061 = vpop.f32.mrb[0].mxu0
  %v6062 = vadd.f32 %v4793, %v6061
  %v6063 = vpop.f32.mrb[0].mxu0
  %v6064 = vadd.f32 %v4795, %v6063
  %6065 = vmatprep.mubr.bf16.mxu0 %v1888
  %6066 = vmatmul.mubr.bf16.gmra.mrb[0].mxu0 %v1887
  %v6067 = vpop.f32.mrb[0].mxu0
  %v6068 = vadd.f32 %v4799, %v6067
  %v6069 = vpop.f32.mrb[0].mxu0
  %v6070 = vadd.f32 %v4801, %v6069
  %v6071 = vpop.f32.mrb[0].mxu0
  %v6072 = vadd.f32 %v4803, %v6071
  %v6073 = vpop.f32.mrb[0].mxu0
  %v6074 = vadd.f32 %v4805, %v6073
  %6075 = vmatprep.mubr.bf16.mxu0 %v1893
  %6076 = vmatmul.mubr.bf16.gmra.mrb[0].mxu0 %v1892
  %v6077 = vpop.f32.mrb[0].mxu0
  %v6078 = vadd.f32 %v4809, %v6077
  %v6079 = vpop.f32.mrb[0].mxu0
  %v6080 = vadd.f32 %v4811, %v6079
  %v6081 = vpop.f32.mrb[0].mxu0
  %v6082 = vadd.f32 %v4813, %v6081
  %v6083 = vpop.f32.mrb[0].mxu0
  %v6084 = vadd.f32 %v4815, %v6083
  %6085 = vmatprep.mubr.bf16.mxu0 %v1898
  %6086 = vmatmul.mubr.bf16.gmra.mrb[0].mxu0 %v1897
  %v6087 = vpop.f32.mrb[0].mxu0
  %v6088 = vadd.f32 %v4819, %v6087
  %v6089 = vpop.f32.mrb[0].mxu0
  %v6090 = vadd.f32 %v4821, %v6089
  %v6091 = vpop.f32.mrb[0].mxu0
  %v6092 = vadd.f32 %v4823, %v6091
  %v6093 = vpop.f32.mrb[0].mxu0
  %v6094 = vadd.f32 %v4825, %v6093
  %6095 = vmatprep.mubr.bf16.mxu0 %v1903
  %6096 = vmatmul.mubr.bf16.gmra.mrb[0].mxu0 %v1902
  %v6097 = vpop.f32.mrb[0].mxu0
  %v6098 = vadd.f32 %v4829, %v6097
  %v6099 = vpop.f32.mrb[0].mxu0
  %v6100 = vadd.f32 %v4831, %v6099
  %v6101 = vpop.f32.mrb[0].mxu0
  %v6102 = vadd.f32 %v4833, %v6101
  %v6103 = vpop.f32.mrb[0].mxu0
  %v6104 = vadd.f32 %v4835, %v6103
  %6105 = vmatprep.mubr.bf16.mxu0 %v1908
  %6106 = vmatmul.mubr.bf16.gmra.mrb[0].mxu0 %v1907
  %v6107 = vpop.f32.mrb[0].mxu0
  %v6108 = vadd.f32 %v4839, %v6107
  %v6109 = vpop.f32.mrb[0].mxu0
  %v6110 = vadd.f32 %v4841, %v6109
  %v6111 = vpop.f32.mrb[0].mxu0
  %v6112 = vadd.f32 %v4843, %v6111
  %v6113 = vpop.f32.mrb[0].mxu0
  %v6114 = vadd.f32 %v4845, %v6113
  %6115 = vmatprep.mubr.bf16.mxu0 %v1913
  %6116 = vmatmul.mubr.bf16.gmra.mrb[0].mxu0 %v1912
  %v6117 = vpop.f32.mrb[0].mxu0
  %v6118 = vadd.f32 %v4849, %v6117
  %v6119 = vpop.f32.mrb[0].mxu0
  %v6120 = vadd.f32 %v4851, %v6119
  %v6121 = vpop.f32.mrb[0].mxu0
  %v6122 = vadd.f32 %v4853, %v6121
  %v6123 = vpop.f32.mrb[0].mxu0
  %v6124 = vadd.f32 %v4855, %v6123
  %6125 = vmatprep.mubr.bf16.mxu0 %v1918
  %6126 = vmatmul.mubr.bf16.gmra.mrb[0].mxu0 %v1917
  %v6127 = vpop.f32.mrb[0].mxu0
  %v6128 = vadd.f32 %v4859, %v6127
  %v6129 = vpop.f32.mrb[0].mxu0
  %v6130 = vadd.f32 %v4861, %v6129
  %v6131 = vpop.f32.mrb[0].mxu0
  %v6132 = vadd.f32 %v4863, %v6131
  %v6133 = vpop.f32.mrb[0].mxu0
  %v6134 = vadd.f32 %v4865, %v6133
  %6135 = vmatprep.mubr.bf16.mxu0 %v1923
  %6136 = vmatmul.mubr.bf16.gmra.mrb[0].mxu0 %v1922
  %v6137 = vpop.f32.mrb[0].mxu0
  %v6138 = vadd.f32 %v4869, %v6137
  %v6139 = vpop.f32.mrb[0].mxu0
  %v6140 = vadd.f32 %v4871, %v6139
  %v6141 = vpop.f32.mrb[0].mxu0
  %v6142 = vadd.f32 %v4873, %v6141
  %v6143 = vpop.f32.mrb[0].mxu0
  %v6144 = vadd.f32 %v4875, %v6143
  %6145 = vmatprep.mubr.bf16.mxu0 %v1928
  %6146 = vmatmul.mubr.bf16.gmra.mrb[0].mxu0 %v1927
  %v6147 = vpop.f32.mrb[0].mxu0
  %v6148 = vadd.f32 %v4879, %v6147
  %v6149 = vpop.f32.mrb[0].mxu0
  %v6150 = vadd.f32 %v4881, %v6149
  %v6151 = vpop.f32.mrb[0].mxu0
  %v6152 = vadd.f32 %v4883, %v6151
  %v6153 = vpop.f32.mrb[0].mxu0
  %v6154 = vadd.f32 %v4885, %v6153
  %6155 = vmatprep.mubr.bf16.mxu0 %v1933
  %6156 = vmatmul.mubr.bf16.gmra.mrb[0].mxu0 %v1932
  %v6157 = vpop.f32.mrb[0].mxu0
  %v6158 = vadd.f32 %v4889, %v6157
  %v6159 = vpop.f32.mrb[0].mxu0
  %v6160 = vadd.f32 %v4891, %v6159
  %v6161 = vpop.f32.mrb[0].mxu0
  %v6162 = vadd.f32 %v4893, %v6161
  %v6163 = vpop.f32.mrb[0].mxu0
  %v6164 = vadd.f32 %v4895, %v6163
  %6165 = vmatprep.mubr.bf16.mxu0 %v1938
  %6166 = vmatmul.mubr.bf16.gmra.mrb[0].mxu0 %v1937
  %v6167 = vpop.f32.mrb[0].mxu0
  %v6168 = vadd.f32 %v4899, %v6167
  %v6169 = vpop.f32.mrb[0].mxu0
  %v6170 = vadd.f32 %v4901, %v6169
  %v6171 = vpop.f32.mrb[0].mxu0
  %v6172 = vadd.f32 %v4903, %v6171
  %v6173 = vpop.f32.mrb[0].mxu0
  %v6174 = vadd.f32 %v4905, %v6173
  %6175 = vmatprep.mubr.bf16.mxu0 %v1943
  %6176 = vmatmul.mubr.bf16.gmra.mrb[0].mxu0 %v1942
  %v6177 = vpop.f32.mrb[0].mxu0
  %v6178 = vadd.f32 %v4909, %v6177
  %v6179 = vpop.f32.mrb[0].mxu0
  %v6180 = vadd.f32 %v4911, %v6179
  %v6181 = vpop.f32.mrb[0].mxu0
  %v6182 = vadd.f32 %v4913, %v6181
  %v6183 = vpop.f32.mrb[0].mxu0
  %v6184 = vadd.f32 %v4915, %v6183
  %6185 = vmatprep.mubr.bf16.mxu0 %v1948
  %6186 = vmatmul.mubr.bf16.gmra.mrb[0].mxu0 %v1947
  %v6187 = vpop.f32.mrb[0].mxu0
  %v6188 = vadd.f32 %v4919, %v6187
  %v6189 = vpop.f32.mrb[0].mxu0
  %v6190 = vadd.f32 %v4921, %v6189
  %v6191 = vpop.f32.mrb[0].mxu0
  %v6192 = vadd.f32 %v4923, %v6191
  %v6193 = vpop.f32.mrb[0].mxu0
  %v6194 = vadd.f32 %v4925, %v6193
  %6195 = vmatprep.mubr.bf16.mxu0 %v1953
  %6196 = vmatmul.mubr.bf16.gmra.mrb[0].mxu0 %v1952
  %v6197 = vpop.f32.mrb[0].mxu0
  %v6198 = vadd.f32 %v4929, %v6197
  %v6199 = vpop.f32.mrb[0].mxu0
  %v6200 = vadd.f32 %v4931, %v6199
  %v6201 = vpop.f32.mrb[0].mxu0
  %v6202 = vadd.f32 %v4933, %v6201
  %v6203 = vpop.f32.mrb[0].mxu0
  %v6204 = vadd.f32 %v4935, %v6203
  %6205 = vmatprep.mubr.bf16.mxu0 %v1958
  %6206 = vmatmul.mubr.bf16.gmra.mrb[0].mxu0 %v1957
  %v6207 = vpop.f32.mrb[0].mxu0
  %v6208 = vadd.f32 %v4939, %v6207
  %v6209 = vpop.f32.mrb[0].mxu0
  %v6210 = vadd.f32 %v4941, %v6209
  %v6211 = vpop.f32.mrb[0].mxu0
  %v6212 = vadd.f32 %v4943, %v6211
  %v6213 = vpop.f32.mrb[0].mxu0
  %v6214 = vadd.f32 %v4945, %v6213
  %6215 = vmatprep.mubr.bf16.mxu0 %v1963
  %6216 = vmatmul.mubr.bf16.gmra.mrb[0].mxu0 %v1962
  %v6217 = vpop.f32.mrb[0].mxu0
  %v6218 = vadd.f32 %v4949, %v6217
  %v6219 = vpop.f32.mrb[0].mxu0
  %v6220 = vadd.f32 %v4951, %v6219
  %v6221 = vpop.f32.mrb[0].mxu0
  %v6222 = vadd.f32 %v4953, %v6221
  %v6223 = vpop.f32.mrb[0].mxu0
  %v6224 = vadd.f32 %v4955, %v6223
  %6225 = vmatprep.mubr.bf16.mxu0 %v1968
  %6226 = vmatmul.mubr.bf16.gmra.mrb[0].mxu0 %v1967
  %v6227 = vpop.f32.mrb[0].mxu0
  %v6228 = vadd.f32 %v4959, %v6227
  %v6229 = vpop.f32.mrb[0].mxu0
  %v6230 = vadd.f32 %v4961, %v6229
  %v6231 = vpop.f32.mrb[0].mxu0
  %v6232 = vadd.f32 %v4963, %v6231
  %v6233 = vpop.f32.mrb[0].mxu0
  %v6234 = vadd.f32 %v4965, %v6233
  %6235 = vmatprep.mubr.bf16.mxu0 %v1973
  %6236 = vmatmul.mubr.bf16.gmra.mrb[0].mxu0 %v1972
  %v6237 = vpop.f32.mrb[0].mxu0
  %v6238 = vadd.f32 %v4969, %v6237
  %v6239 = vpop.f32.mrb[0].mxu0
  %v6240 = vadd.f32 %v4971, %v6239
  %v6241 = vpop.f32.mrb[0].mxu0
  %v6242 = vadd.f32 %v4973, %v6241
  %v6243 = vpop.f32.mrb[0].mxu0
  %v6244 = vadd.f32 %v4975, %v6243
  %6245 = vmatprep.mubr.bf16.mxu0 %v1978
  %6246 = vmatmul.mubr.bf16.gmra.mrb[0].mxu0 %v1977
  %v6247 = vpop.f32.mrb[0].mxu0
  %v6248 = vadd.f32 %v4979, %v6247
  %v6249 = vpop.f32.mrb[0].mxu0
  %v6250 = vadd.f32 %v4981, %v6249
  %v6251 = vpop.f32.mrb[0].mxu0
  %v6252 = vadd.f32 %v4983, %v6251
  %v6253 = vpop.f32.mrb[0].mxu0
  %v6254 = vadd.f32 %v4985, %v6253
  %6255 = vmatprep.mubr.bf16.mxu0 %v1983
  %6256 = vmatmul.mubr.bf16.gmra.mrb[0].mxu0 %v1982
  %v6257 = vpop.f32.mrb[0].mxu0
  %v6258 = vadd.f32 %v4989, %v6257
  %v6259 = vpop.f32.mrb[0].mxu0
  %v6260 = vadd.f32 %v4991, %v6259
  %v6261 = vpop.f32.mrb[0].mxu0
  %v6262 = vadd.f32 %v4993, %v6261
  %v6263 = vpop.f32.mrb[0].mxu0
  %v6264 = vadd.f32 %v4995, %v6263
  %6265 = vmatprep.mubr.bf16.mxu0 %v1988
  %6266 = vmatmul.mubr.bf16.gmra.mrb[0].mxu0 %v1987
  %v6267 = vpop.f32.mrb[0].mxu0
  %v6268 = vadd.f32 %v4999, %v6267
  %v6269 = vpop.f32.mrb[0].mxu0
  %v6270 = vadd.f32 %v5001, %v6269
  %v6271 = vpop.f32.mrb[0].mxu0
  %v6272 = vadd.f32 %v5003, %v6271
  %v6273 = vpop.f32.mrb[0].mxu0
  %v6274 = vadd.f32 %v5005, %v6273
  %6275 = vmatprep.mubr.bf16.mxu0 %v1993
  %6276 = vmatmul.mubr.bf16.gmra.mrb[0].mxu0 %v1992
  %v6277 = vpop.f32.mrb[0].mxu0
  %v6278 = vadd.f32 %v5009, %v6277
  %v6279 = vpop.f32.mrb[0].mxu0
  %v6280 = vadd.f32 %v5011, %v6279
  %v6281 = vpop.f32.mrb[0].mxu0
  %v6282 = vadd.f32 %v5013, %v6281
  %v6283 = vpop.f32.mrb[0].mxu0
  %v6284 = vadd.f32 %v5015, %v6283
  %6285 = vmatprep.mubr.bf16.mxu0 %v1998
  %6286 = vmatmul.mubr.bf16.gmra.mrb[0].mxu0 %v1997
  %v6287 = vpop.f32.mrb[0].mxu0
  %v6288 = vadd.f32 %v5019, %v6287
  %v6289 = vpop.f32.mrb[0].mxu0
  %v6290 = vadd.f32 %v5021, %v6289
  %v6291 = vpop.f32.mrb[0].mxu0
  %v6292 = vadd.f32 %v5023, %v6291
  %v6293 = vpop.f32.mrb[0].mxu0
  %v6294 = vadd.f32 %v5025, %v6293
  %6295 = vmatprep.mubr.bf16.mxu0 %v2003
  %6296 = vmatmul.mubr.bf16.gmra.mrb[0].mxu0 %v2002
  %v6297 = vpop.f32.mrb[0].mxu0
  %v6298 = vadd.f32 %v5029, %v6297
  %v6299 = vpop.f32.mrb[0].mxu0
  %v6300 = vadd.f32 %v5031, %v6299
  %v6301 = vpop.f32.mrb[0].mxu0
  %v6302 = vadd.f32 %v5033, %v6301
  %v6303 = vpop.f32.mrb[0].mxu0
  %v6304 = vadd.f32 %v5035, %v6303
  %6305 = vmatprep.mubr.bf16.mxu0 %v2008
  %6306 = vmatmul.mubr.bf16.gmra.mrb[0].mxu0 %v2007
  %v6307 = vpop.f32.mrb[0].mxu0
  %v6308 = vadd.f32 %v5039, %v6307
  %v6309 = vpop.f32.mrb[0].mxu0
  %v6310 = vadd.f32 %v5041, %v6309
  %v6311 = vpop.f32.mrb[0].mxu0
  %v6312 = vadd.f32 %v5043, %v6311
  %v6313 = vpop.f32.mrb[0].mxu0
  %v6314 = vadd.f32 %v5045, %v6313
  %6315 = vmatprep.mubr.bf16.mxu0 %v2013
  %6316 = vmatmul.mubr.bf16.gmra.mrb[0].mxu0 %v2012
  %v6317 = vpop.f32.mrb[0].mxu0
  %v6318 = vadd.f32 %v5049, %v6317
  %v6319 = vpop.f32.mrb[0].mxu0
  %v6320 = vadd.f32 %v5051, %v6319
  %v6321 = vpop.f32.mrb[0].mxu0
  %v6322 = vadd.f32 %v5053, %v6321
  %v6323 = vpop.f32.mrb[0].mxu0
  %v6324 = vadd.f32 %v5055, %v6323
  %6325 = vmatprep.mubr.bf16.mxu0 %v2018
  %6326 = vmatmul.mubr.bf16.gmra.mrb[0].mxu0 %v2017
  %v6327 = vpop.f32.mrb[0].mxu0
  %v6328 = vadd.f32 %v5059, %v6327
  %v6329 = vpop.f32.mrb[0].mxu0
  %v6330 = vadd.f32 %v5061, %v6329
  %v6331 = vpop.f32.mrb[0].mxu0
  %v6332 = vadd.f32 %v5063, %v6331
  %v6333 = vpop.f32.mrb[0].mxu0
  %v6334 = vadd.f32 %v5065, %v6333
  %6335 = vmatprep.mubr.bf16.mxu0 %v2023
  %6336 = vmatmul.mubr.bf16.gmra.mrb[0].mxu0 %v2022
  %v6337 = vpop.f32.mrb[0].mxu0
  %v6338 = vadd.f32 %v5069, %v6337
  %v6339 = vpop.f32.mrb[0].mxu0
  %v6340 = vadd.f32 %v5071, %v6339
  %v6341 = vpop.f32.mrb[0].mxu0
  %v6342 = vadd.f32 %v5073, %v6341
  %v6343 = vpop.f32.mrb[0].mxu0
  %v6344 = vadd.f32 %v5075, %v6343
  %6345 = vmatprep.mubr.bf16.mxu0 %v2028
  %6346 = vmatmul.mubr.bf16.gmra.mrb[0].mxu0 %v2027
  %v6347 = vpop.f32.mrb[0].mxu0
  %v6348 = vadd.f32 %v5079, %v6347
  %v6349 = vpop.f32.mrb[0].mxu0
  %v6350 = vadd.f32 %v5081, %v6349
  %v6351 = vpop.f32.mrb[0].mxu0
  %v6352 = vadd.f32 %v5083, %v6351
  %v6353 = vpop.f32.mrb[0].mxu0
  %v6354 = vadd.f32 %v5085, %v6353
  %6355 = vmatprep.mubr.bf16.mxu0 %v2033
  %6356 = vmatmul.mubr.bf16.gmra.mrb[0].mxu0 %v2032
  %v6357 = vpop.f32.mrb[0].mxu0
  %v6358 = vadd.f32 %v5089, %v6357
  %v6359 = vpop.f32.mrb[0].mxu0
  %v6360 = vadd.f32 %v5091, %v6359
  %v6361 = vpop.f32.mrb[0].mxu0
  %v6362 = vadd.f32 %v5093, %v6361
  %v6363 = vpop.f32.mrb[0].mxu0
  %v6364 = vadd.f32 %v5095, %v6363
  %6365 = vmatprep.mubr.bf16.mxu0 %v2038
  %6366 = vmatmul.mubr.bf16.gmra.mrb[0].mxu0 %v2037
  %v6367 = vpop.f32.mrb[0].mxu0
  %v6368 = vadd.f32 %v5099, %v6367
  %v6369 = vpop.f32.mrb[0].mxu0
  %v6370 = vadd.f32 %v5101, %v6369
  %v6371 = vpop.f32.mrb[0].mxu0
  %v6372 = vadd.f32 %v5103, %v6371
  %v6373 = vpop.f32.mrb[0].mxu0
  %v6374 = vadd.f32 %v5105, %v6373
  %6375 = vmatprep.mubr.bf16.mxu0 %v2043
  %6376 = vmatmul.mubr.bf16.gmra.mrb[0].mxu0 %v2042
  %v6377 = vpop.f32.mrb[0].mxu0
  %v6378 = vadd.f32 %v5109, %v6377
  %v6379 = vpop.f32.mrb[0].mxu0
  %v6380 = vadd.f32 %v5111, %v6379
  %v6381 = vpop.f32.mrb[0].mxu0
  %v6382 = vadd.f32 %v5113, %v6381
  %v6383 = vpop.f32.mrb[0].mxu0
  %v6384 = vadd.f32 %v5115, %v6383
  %6385 = vmatprep.mubr.bf16.mxu0 %v2048
  %6386 = vmatmul.mubr.bf16.gmra.mrb[0].mxu0 %v2047
  %v6387 = vpop.f32.mrb[0].mxu0
  %v6388 = vadd.f32 %v5119, %v6387
  %v6389 = vpop.f32.mrb[0].mxu0
  %v6390 = vadd.f32 %v5121, %v6389
  %v6391 = vpop.f32.mrb[0].mxu0
  %v6392 = vadd.f32 %v5123, %v6391
  %v6393 = vpop.f32.mrb[0].mxu0
  %v6394 = vadd.f32 %v5125, %v6393
  %6395 = vmatprep.mubr.bf16.mxu0 %v2053
  %6396 = vmatmul.mubr.bf16.gmra.mrb[0].mxu0 %v2052
  %v6397 = vpop.f32.mrb[0].mxu0
  %v6398 = vadd.f32 %v5129, %v6397
  %v6399 = vpop.f32.mrb[0].mxu0
  %v6400 = vadd.f32 %v5131, %v6399
  %v6401 = vpop.f32.mrb[0].mxu0
  %v6402 = vadd.f32 %v5133, %v6401
  %v6403 = vpop.f32.mrb[0].mxu0
  %v6404 = vadd.f32 %v5135, %v6403
  %6405 = vmatprep.mubr.bf16.mxu0 %v2058
  %6406 = vmatmul.mubr.bf16.gmra.mrb[0].mxu0 %v2057
  %v6407 = vpop.f32.mrb[0].mxu0
  %v6408 = vadd.f32 %v5139, %v6407
  %v6409 = vpop.f32.mrb[0].mxu0
  %v6410 = vadd.f32 %v5141, %v6409
  %v6411 = vpop.f32.mrb[0].mxu0
  %v6412 = vadd.f32 %v5143, %v6411
  %v6413 = vpop.f32.mrb[0].mxu0
  %v6414 = vadd.f32 %v5145, %v6413
  %6415 = vmatprep.mubr.bf16.mxu0 %v2063
  %6416 = vmatmul.mubr.bf16.gmra.mrb[0].mxu0 %v2062
  %v6417 = vpop.f32.mrb[0].mxu0
  %v6418 = vadd.f32 %v5149, %v6417
  %v6419 = vpop.f32.mrb[0].mxu0
  %v6420 = vadd.f32 %v5151, %v6419
  %v6421 = vpop.f32.mrb[0].mxu0
  %v6422 = vadd.f32 %v5153, %v6421
  %v6423 = vpop.f32.mrb[0].mxu0
  %v6424 = vadd.f32 %v5155, %v6423
  %6425 = vmatprep.mubr.bf16.mxu0 %v2068
  %6426 = vmatmul.mubr.bf16.gmra.mrb[0].mxu0 %v2067
  %v6427 = vpop.f32.mrb[0].mxu0
  %v6428 = vadd.f32 %v5159, %v6427
  %v6429 = vpop.f32.mrb[0].mxu0
  %v6430 = vadd.f32 %v5161, %v6429
  %v6431 = vpop.f32.mrb[0].mxu0
  %v6432 = vadd.f32 %v5163, %v6431
  %v6433 = vpop.f32.mrb[0].mxu0
  %v6434 = vadd.f32 %v5165, %v6433
  %6435 = vmatprep.mubr.bf16.mxu0 %v2073
  %6436 = vmatmul.mubr.bf16.gmra.mrb[0].mxu0 %v2072
  %v6437 = vpop.f32.mrb[0].mxu0
  %v6438 = vadd.f32 %v5169, %v6437
  %v6439 = vpop.f32.mrb[0].mxu0
  %v6440 = vadd.f32 %v5171, %v6439
  %v6441 = vpop.f32.mrb[0].mxu0
  %v6442 = vadd.f32 %v5173, %v6441
  %v6443 = vpop.f32.mrb[0].mxu0
  %v6444 = vadd.f32 %v5175, %v6443
  %6445 = vmatprep.mubr.bf16.mxu0 %v2078
  %6446 = vmatmul.mubr.bf16.gmra.mrb[0].mxu0 %v2077
  %v6447 = vpop.f32.mrb[0].mxu0
  %v6448 = vadd.f32 %v5179, %v6447
  %v6449 = vpop.f32.mrb[0].mxu0
  %v6450 = vadd.f32 %v5181, %v6449
  %v6451 = vpop.f32.mrb[0].mxu0
  %v6452 = vadd.f32 %v5183, %v6451
  %v6453 = vpop.f32.mrb[0].mxu0
  %v6454 = vadd.f32 %v5185, %v6453
  %6455 = vmatprep.mubr.bf16.mxu0 %v2083
  %6456 = vmatmul.mubr.bf16.gmra.mrb[0].mxu0 %v2082
  %v6457 = vpop.f32.mrb[0].mxu0
  %v6458 = vadd.f32 %v5189, %v6457
  %v6459 = vpop.f32.mrb[0].mxu0
  %v6460 = vadd.f32 %v5191, %v6459
  %v6461 = vpop.f32.mrb[0].mxu0
  %v6462 = vadd.f32 %v5193, %v6461
  %v6463 = vpop.f32.mrb[0].mxu0
  %v6464 = vadd.f32 %v5195, %v6463
  %6465 = vmatprep.mubr.bf16.mxu0 %v2088
  %6466 = vmatmul.mubr.bf16.gmra.mrb[0].mxu0 %v2087
  %v6467 = vpop.f32.mrb[0].mxu0
  %v6468 = vadd.f32 %v5199, %v6467
  %v6469 = vpop.f32.mrb[0].mxu0
  %v6470 = vadd.f32 %v5201, %v6469
  %v6471 = vpop.f32.mrb[0].mxu0
  %v6472 = vadd.f32 %v5203, %v6471
  %v6473 = vpop.f32.mrb[0].mxu0
  %v6474 = vadd.f32 %v5205, %v6473
  %6475 = vmatprep.mubr.bf16.mxu0 %v2093
  %6476 = vmatmul.mubr.bf16.gmra.mrb[0].mxu0 %v2092
  %v6477 = vpop.f32.mrb[0].mxu0
  %v6478 = vadd.f32 %v5209, %v6477
  %v6479 = vpop.f32.mrb[0].mxu0
  %v6480 = vadd.f32 %v5211, %v6479
  %v6481 = vpop.f32.mrb[0].mxu0
  %v6482 = vadd.f32 %v5213, %v6481
  %v6483 = vpop.f32.mrb[0].mxu0
  %v6484 = vadd.f32 %v5215, %v6483
  %6485 = vmatprep.mubr.bf16.mxu0 %v2098
  %6486 = vmatmul.mubr.bf16.gmra.mrb[0].mxu0 %v2097
  %v6487 = vpop.f32.mrb[0].mxu0
  %v6488 = vadd.f32 %v5219, %v6487
  %v6489 = vpop.f32.mrb[0].mxu0
  %v6490 = vadd.f32 %v5221, %v6489
  %v6491 = vpop.f32.mrb[0].mxu0
  %v6492 = vadd.f32 %v5223, %v6491
  %v6493 = vpop.f32.mrb[0].mxu0
  %v6494 = vadd.f32 %v5225, %v6493
  %6495 = vmatprep.mubr.bf16.mxu0 %v2103
  %6496 = vmatmul.mubr.bf16.gmra.mrb[0].mxu0 %v2102
  %v6497 = vpop.f32.mrb[0].mxu0
  %v6498 = vadd.f32 %v5229, %v6497
  %v6499 = vpop.f32.mrb[0].mxu0
  %v6500 = vadd.f32 %v5231, %v6499
  %v6501 = vpop.f32.mrb[0].mxu0
  %v6502 = vadd.f32 %v5233, %v6501
  %v6503 = vpop.f32.mrb[0].mxu0
  %v6504 = vadd.f32 %v5235, %v6503
  %6505 = vmatprep.mubr.bf16.mxu0 %v2108
  %6506 = vmatmul.mubr.bf16.gmra.mrb[0].mxu0 %v2107
  %v6507 = vpop.f32.mrb[0].mxu0
  %v6508 = vadd.f32 %v5239, %v6507
  %v6509 = vpop.f32.mrb[0].mxu0
  %v6510 = vadd.f32 %v5241, %v6509
  %v6511 = vpop.f32.mrb[0].mxu0
  %v6512 = vadd.f32 %v5243, %v6511
  %v6513 = vpop.f32.mrb[0].mxu0
  %v6514 = vadd.f32 %v5245, %v6513
  %6515 = vmatprep.mubr.bf16.mxu0 %v2113
  %6516 = vmatmul.mubr.bf16.gmra.mrb[0].mxu0 %v2112
  %v6517 = vpop.f32.mrb[0].mxu0
  %v6518 = vadd.f32 %v5249, %v6517
  %v6519 = vpop.f32.mrb[0].mxu0
  %v6520 = vadd.f32 %v5251, %v6519
  %v6521 = vpop.f32.mrb[0].mxu0
  %v6522 = vadd.f32 %v5253, %v6521
  %v6523 = vpop.f32.mrb[0].mxu0
  %v6524 = vadd.f32 %v5255, %v6523
  %6525 = vmatprep.mubr.bf16.mxu0 %v2118
  %6526 = vmatmul.mubr.bf16.gmra.mrb[0].mxu0 %v2117
  %v6527 = vpop.f32.mrb[0].mxu0
  %v6528 = vadd.f32 %v5259, %v6527
  %v6529 = vpop.f32.mrb[0].mxu0
  %v6530 = vadd.f32 %v5261, %v6529
  %v6531 = vpop.f32.mrb[0].mxu0
  %v6532 = vadd.f32 %v5263, %v6531
  %v6533 = vpop.f32.mrb[0].mxu0
  %v6534 = vadd.f32 %v5265, %v6533
  %6535 = vmatprep.mubr.bf16.mxu0 %v2123
  %6536 = vmatmul.mubr.bf16.gmra.mrb[0].mxu0 %v2122
  %v6537 = vpop.f32.mrb[0].mxu0
  %v6538 = vadd.f32 %v5269, %v6537
  %v6539 = vpop.f32.mrb[0].mxu0
  %v6540 = vadd.f32 %v5271, %v6539
  %v6541 = vpop.f32.mrb[0].mxu0
  %v6542 = vadd.f32 %v5273, %v6541
  %v6543 = vpop.f32.mrb[0].mxu0
  %v6544 = vadd.f32 %v5275, %v6543
  %6545 = vmatprep.mubr.bf16.mxu0 %v2128
  %6546 = vmatmul.mubr.bf16.gmra.mrb[0].mxu0 %v2127
  %v6547 = vpop.f32.mrb[0].mxu0
  %v6548 = vadd.f32 %v5279, %v6547
  %v6549 = vpop.f32.mrb[0].mxu0
  %v6550 = vadd.f32 %v5281, %v6549
  %v6551 = vpop.f32.mrb[0].mxu0
  %v6552 = vadd.f32 %v5283, %v6551
  %v6553 = vpop.f32.mrb[0].mxu0
  %v6554 = vadd.f32 %v5285, %v6553
  %6555 = vmatprep.mubr.bf16.mxu0 %v2133
  %6556 = vmatmul.mubr.bf16.gmra.mrb[0].mxu0 %v2132
  %v6557 = vpop.f32.mrb[0].mxu0
  %v6558 = vadd.f32 %v5289, %v6557
  %v6559 = vpop.f32.mrb[0].mxu0
  %v6560 = vadd.f32 %v5291, %v6559
  %v6561 = vpop.f32.mrb[0].mxu0
  %v6562 = vadd.f32 %v5293, %v6561
  %v6563 = vpop.f32.mrb[0].mxu0
  %v6564 = vadd.f32 %v5295, %v6563
  %6565 = vmatprep.mubr.bf16.mxu0 %v2138
  %6566 = vmatmul.mubr.bf16.gmra.mrb[0].mxu0 %v2137
  %v6567 = vpop.f32.mrb[0].mxu0
  %v6568 = vadd.f32 %v5299, %v6567
  %v6569 = vpop.f32.mrb[0].mxu0
  %v6570 = vadd.f32 %v5301, %v6569
  %v6571 = vpop.f32.mrb[0].mxu0
  %v6572 = vadd.f32 %v5303, %v6571
  %v6573 = vpop.f32.mrb[0].mxu0
  %v6574 = vadd.f32 %v5305, %v6573
  %6575 = vmatprep.mubr.bf16.mxu0 %v2143
  %6576 = vmatmul.mubr.bf16.gmra.mrb[0].mxu0 %v2142
  %v6577 = vpop.f32.mrb[0].mxu0
  %v6578 = vadd.f32 %v5309, %v6577
  %v6579 = vpop.f32.mrb[0].mxu0
  %v6580 = vadd.f32 %v5311, %v6579
  %v6581 = vpop.f32.mrb[0].mxu0
  %v6582 = vadd.f32 %v5313, %v6581
  %v6583 = vpop.f32.mrb[0].mxu0
  %v6584 = vadd.f32 %v5315, %v6583
  %6585 = vmatprep.mubr.bf16.mxu0 %v2148
  %6586 = vmatmul.mubr.bf16.gmra.mrb[0].mxu0 %v2147
  %v6587 = vpop.f32.mrb[0].mxu0
  %v6588 = vadd.f32 %v5319, %v6587
  %v6589 = vpop.f32.mrb[0].mxu0
  %v6590 = vadd.f32 %v5321, %v6589
  %v6591 = vpop.f32.mrb[0].mxu0
  %v6592 = vadd.f32 %v5323, %v6591
  %v6593 = vpop.f32.mrb[0].mxu0
  %v6594 = vadd.f32 %v5325, %v6593
  %6595 = vmatprep.mubr.bf16.mxu0 %v2153
  %6596 = vmatmul.mubr.bf16.gmra.mrb[0].mxu0 %v2152
  %v6597 = vpop.f32.mrb[0].mxu0
  %v6598 = vadd.f32 %v5329, %v6597
  %v6599 = vpop.f32.mrb[0].mxu0
  %v6600 = vadd.f32 %v5331, %v6599
  %v6601 = vpop.f32.mrb[0].mxu0
  %v6602 = vadd.f32 %v5333, %v6601
  %v6603 = vpop.f32.mrb[0].mxu0
  %v6604 = vadd.f32 %v5335, %v6603
  %6605 = vmatprep.mubr.bf16.mxu0 %v2158
  %6606 = vmatmul.mubr.bf16.gmra.mrb[0].mxu0 %v2157
  %v6607 = vpop.f32.mrb[0].mxu0
  %v6608 = vadd.f32 %v5339, %v6607
  %v6609 = vpop.f32.mrb[0].mxu0
  %v6610 = vadd.f32 %v5341, %v6609
  %v6611 = vpop.f32.mrb[0].mxu0
  %v6612 = vadd.f32 %v5343, %v6611
  %v6613 = vpop.f32.mrb[0].mxu0
  %v6614 = vadd.f32 %v5345, %v6613
  %6615 = vmatprep.mubr.bf16.mxu0 %v2163
  %6616 = vmatmul.mubr.bf16.gmra.mrb[0].mxu0 %v2162
  %v6617 = vpop.f32.mrb[0].mxu0
  %v6618 = vadd.f32 %v5349, %v6617
  %v6619 = vpop.f32.mrb[0].mxu0
  %v6620 = vadd.f32 %v5351, %v6619
  %v6621 = vpop.f32.mrb[0].mxu0
  %v6622 = vadd.f32 %v5353, %v6621
  %v6623 = vpop.f32.mrb[0].mxu0
  %v6624 = vadd.f32 %v5355, %v6623
  %6625 = vmatprep.mubr.bf16.mxu0 %v2168
  %6626 = vmatmul.mubr.bf16.gmra.mrb[0].mxu0 %v2167
  %v6627 = vpop.f32.mrb[0].mxu0
  %v6628 = vpop.f32.mrb[0].mxu0
  %v6629 = vadd.f32 %v5360, %v6628
  %v6630 = vpop.f32.mrb[0].mxu0
  %v6631 = vpop.f32.mrb[0].mxu0
  %v6632 = vadd.f32 %v5363, %v6631
  %6633 = vmatprep.mubr.bf16.mxu0 %v2173
  %6634 = vmatmul.mubr.bf16.gmra.mrb[0].mxu0 %v2172
  %v6635 = vpop.f32.mrb[0].mxu0
  %v6636 = vpop.f32.mrb[0].mxu0
  %v6637 = vadd.f32 %v5368, %v6636
  %v6638 = vpop.f32.mrb[0].mxu0
  %v6639 = vpop.f32.mrb[0].mxu0
  %v6640 = vadd.f32 %v5371, %v6639
  %6641 = vmatprep.mubr.bf16.mxu0 %v2178
  %6642 = vmatmul.mubr.bf16.gmra.mrb[0].mxu0 %v2177
  %v6643 = vpop.f32.mrb[0].mxu0
  %v6644 = vpop.f32.mrb[0].mxu0
  %v6645 = vadd.f32 %v5376, %v6644
  %v6646 = vpop.f32.mrb[0].mxu0
  %v6647 = vpop.f32.mrb[0].mxu0
  %v6648 = vadd.f32 %v5379, %v6647
  %6649 = vdwg.mxu0
  %6650 = vmatprep.subr.bf16.mxu0 %v5762
  %6651 = vmatpush1.bf16.msra.mxu0 %v5761
  %6652 = vmatprep.subr.bf16.mxu0 %v5764
  %6653 = vmatpush1.bf16.msra.mxu0 %v5763
  %6654 = vmatprep.subr.bf16.mxu0 %v5766
  %6655 = vmatpush1.bf16.msra.mxu0 %v5765
  %6656 = vmatprep.subr.bf16.mxu0 %v5768
  %6657 = vmatpush1.bf16.msra.mxu0 %v5767
  %6658 = vmatprep.subr.bf16.mxu0 %v5770
  %6659 = vmatpush1.bf16.msra.mxu0 %v5769
  %6660 = vmatprep.subr.bf16.mxu0 %v5772
  %6661 = vmatpush1.bf16.msra.mxu0 %v5771
  %6662 = vmatprep.subr.bf16.mxu0 %v5774
  %6663 = vmatpush1.bf16.msra.mxu0 %v5773
  %6664 = vmatprep.subr.bf16.mxu0 %v5776
  %6665 = vmatpush1.bf16.msra.mxu0 %v5775
  %6666 = vmatprep.subr.bf16.mxu0 %v5778
  %6667 = vmatpush1.bf16.msra.mxu0 %v5777
  %6668 = vmatprep.subr.bf16.mxu0 %v5780
  %6669 = vmatpush1.bf16.msra.mxu0 %v5779
  %6670 = vmatprep.subr.bf16.mxu0 %v5782
  %6671 = vmatpush1.bf16.msra.mxu0 %v5781
  %6672 = vmatprep.subr.bf16.mxu0 %v5784
  %6673 = vmatpush1.bf16.msra.mxu0 %v5783
  %6674 = vmatprep.subr.bf16.mxu0 %v5786
  %6675 = vmatpush1.bf16.msra.mxu0 %v5785
  %6676 = vmatprep.subr.bf16.mxu0 %v5788
  %6677 = vmatpush1.bf16.msra.mxu0 %v5787
  %6678 = vmatprep.subr.bf16.mxu0 %v5790
  %6679 = vmatpush1.bf16.msra.mxu0 %v5789
  %6680 = vmatprep.subr.bf16.mxu0 %v5792
  %6681 = vmatpush1.bf16.msra.mxu0 %v5791
  %6682 = vmatprep.mubr.bf16.mxu0 %v5480
  %6683 = vmatmul.mubr.bf16.gmra.mrb[0].mxu0 %v5479
  %v6684 = vpop.f32.mrb[0].mxu0
  %v6685 = vadd.f32 %v5914, %v6684
  %v6686 = vpop.f32.mrb[0].mxu0
  %v6687 = vpop.f32.mrb[0].mxu0
  %v6688 = vadd.f32 %v5917, %v6687
  %v6689 = vpop.f32.mrb[0].mxu0
  %6690 = vmatprep.mubr.bf16.mxu0 %v5485
  %6691 = vmatmul.mubr.bf16.gmra.mrb[0].mxu0 %v5484
  %v6692 = vpop.f32.mrb[0].mxu0
  %v6693 = vadd.f32 %v5922, %v6692
  %v6694 = vpop.f32.mrb[0].mxu0
  %v6695 = vpop.f32.mrb[0].mxu0
  %v6696 = vadd.f32 %v5925, %v6695
  %v6697 = vpop.f32.mrb[0].mxu0
  %6698 = vmatprep.mubr.bf16.mxu0 %v5490
  %6699 = vmatmul.mubr.bf16.gmra.mrb[0].mxu0 %v5489
  %v6700 = vpop.f32.mrb[0].mxu0
  %v6701 = vadd.f32 %v5930, %v6700
  %v6702 = vpop.f32.mrb[0].mxu0
  %v6703 = vpop.f32.mrb[0].mxu0
  %v6704 = vadd.f32 %v5933, %v6703
  %v6705 = vpop.f32.mrb[0].mxu0
  %6706 = vmatprep.mubr.bf16.mxu0 %v5495
  %6707 = vmatmul.mubr.bf16.gmra.mrb[0].mxu0 %v5494
  %v6708 = vpop.f32.mrb[0].mxu0
  %v6709 = vadd.f32 %v5938, %v6708
  %v6710 = vpop.f32.mrb[0].mxu0
  %v6711 = vadd.f32 %v5940, %v6710
  %v6712 = vpop.f32.mrb[0].mxu0
  %v6713 = vadd.f32 %v5942, %v6712
  %v6714 = vpop.f32.mrb[0].mxu0
  %v6715 = vadd.f32 %v5944, %v6714
  %6716 = vmatprep.mubr.bf16.mxu0 %v5500
  %6717 = vmatmul.mubr.bf16.gmra.mrb[0].mxu0 %v5499
  %v6718 = vpop.f32.mrb[0].mxu0
  %v6719 = vadd.f32 %v5948, %v6718
  %v6720 = vpop.f32.mrb[0].mxu0
  %v6721 = vadd.f32 %v5950, %v6720
  %v6722 = vpop.f32.mrb[0].mxu0
  %v6723 = vadd.f32 %v5952, %v6722
  %v6724 = vpop.f32.mrb[0].mxu0
  %v6725 = vadd.f32 %v5954, %v6724
  %6726 = vmatprep.mubr.bf16.mxu0 %v5505
  %6727 = vmatmul.mubr.bf16.gmra.mrb[0].mxu0 %v5504
  %v6728 = vpop.f32.mrb[0].mxu0
  %v6729 = vadd.f32 %v5958, %v6728
  %v6730 = vpop.f32.mrb[0].mxu0
  %v6731 = vadd.f32 %v5960, %v6730
  %v6732 = vpop.f32.mrb[0].mxu0
  %v6733 = vadd.f32 %v5962, %v6732
  %v6734 = vpop.f32.mrb[0].mxu0
  %v6735 = vadd.f32 %v5964, %v6734
  %6736 = vmatprep.mubr.bf16.mxu0 %v1840
  %6737 = vmatmul.mubr.bf16.gmra.mrb[0].mxu0 %v1839
  %v6738 = vpop.f32.mrb[0].mxu0
  %v6739 = vadd.f32 %v5968, %v6738
  %v6740 = vpop.f32.mrb[0].mxu0
  %v6741 = vadd.f32 %v5970, %v6740
  %v6742 = vpop.f32.mrb[0].mxu0
  %v6743 = vadd.f32 %v5972, %v6742
  %v6744 = vpop.f32.mrb[0].mxu0
  %v6745 = vadd.f32 %v5974, %v6744
  %6746 = vmatprep.mubr.bf16.mxu0 %v1845
  %6747 = vmatmul.mubr.bf16.gmra.mrb[0].mxu0 %v1844
  %v6748 = vpop.f32.mrb[0].mxu0
  %v6749 = vadd.f32 %v5978, %v6748
  %v6750 = vpop.f32.mrb[0].mxu0
  %v6751 = vadd.f32 %v5980, %v6750
  %v6752 = vpop.f32.mrb[0].mxu0
  %v6753 = vadd.f32 %v5982, %v6752
  %v6754 = vpop.f32.mrb[0].mxu0
  %v6755 = vadd.f32 %v5984, %v6754
  %6756 = vmatprep.mubr.bf16.mxu0 %v1850
  %6757 = vmatmul.mubr.bf16.gmra.mrb[0].mxu0 %v1849
  %v6758 = vpop.f32.mrb[0].mxu0
  %v6759 = vadd.f32 %v5988, %v6758
  %v6760 = vpop.f32.mrb[0].mxu0
  %v6761 = vadd.f32 %v5990, %v6760
  %v6762 = vpop.f32.mrb[0].mxu0
  %v6763 = vadd.f32 %v5992, %v6762
  %v6764 = vpop.f32.mrb[0].mxu0
  %v6765 = vadd.f32 %v5994, %v6764
  %6766 = vmatprep.mubr.bf16.mxu0 %v1855
  %6767 = vmatmul.mubr.bf16.gmra.mrb[0].mxu0 %v1854
  %v6768 = vpop.f32.mrb[0].mxu0
  %v6769 = vadd.f32 %v5998, %v6768
  %v6770 = vpop.f32.mrb[0].mxu0
  %v6771 = vadd.f32 %v6000, %v6770
  %v6772 = vpop.f32.mrb[0].mxu0
  %v6773 = vadd.f32 %v6002, %v6772
  %v6774 = vpop.f32.mrb[0].mxu0
  %v6775 = vadd.f32 %v6004, %v6774
  %6776 = vmatprep.mubr.bf16.mxu0 %v1860
  %6777 = vmatmul.mubr.bf16.gmra.mrb[0].mxu0 %v1859
  %v6778 = vpop.f32.mrb[0].mxu0
  %v6779 = vadd.f32 %v6008, %v6778
  %v6780 = vpop.f32.mrb[0].mxu0
  %v6781 = vadd.f32 %v6010, %v6780
  %v6782 = vpop.f32.mrb[0].mxu0
  %v6783 = vadd.f32 %v6012, %v6782
  %v6784 = vpop.f32.mrb[0].mxu0
  %v6785 = vadd.f32 %v6014, %v6784
  %6786 = vmatprep.mubr.bf16.mxu0 %v1865
  %6787 = vmatmul.mubr.bf16.gmra.mrb[0].mxu0 %v1864
  %v6788 = vpop.f32.mrb[0].mxu0
  %v6789 = vadd.f32 %v6018, %v6788
  %v6790 = vpop.f32.mrb[0].mxu0
  %v6791 = vadd.f32 %v6020, %v6790
  %v6792 = vpop.f32.mrb[0].mxu0
  %v6793 = vadd.f32 %v6022, %v6792
  %v6794 = vpop.f32.mrb[0].mxu0
  %v6795 = vadd.f32 %v6024, %v6794
  %6796 = vmatprep.mubr.bf16.mxu0 %v1870
  %6797 = vmatmul.mubr.bf16.gmra.mrb[0].mxu0 %v1869
  %v6798 = vpop.f32.mrb[0].mxu0
  %v6799 = vadd.f32 %v6028, %v6798
  %v6800 = vpop.f32.mrb[0].mxu0
  %v6801 = vadd.f32 %v6030, %v6800
  %v6802 = vpop.f32.mrb[0].mxu0
  %v6803 = vadd.f32 %v6032, %v6802
  %v6804 = vpop.f32.mrb[0].mxu0
  %v6805 = vadd.f32 %v6034, %v6804
  %6806 = vmatprep.mubr.bf16.mxu0 %v1875
  %6807 = vmatmul.mubr.bf16.gmra.mrb[0].mxu0 %v1874
  %v6808 = vpop.f32.mrb[0].mxu0
  %v6809 = vadd.f32 %v6038, %v6808
  %v6810 = vpop.f32.mrb[0].mxu0
  %v6811 = vadd.f32 %v6040, %v6810
  %v6812 = vpop.f32.mrb[0].mxu0
  %v6813 = vadd.f32 %v6042, %v6812
  %v6814 = vpop.f32.mrb[0].mxu0
  %v6815 = vadd.f32 %v6044, %v6814
  %6816 = vmatprep.mubr.bf16.mxu0 %v1880
  %6817 = vmatmul.mubr.bf16.gmra.mrb[0].mxu0 %v1879
  %v6818 = vpop.f32.mrb[0].mxu0
  %v6819 = vadd.f32 %v6048, %v6818
  %v6820 = vpop.f32.mrb[0].mxu0
  %v6821 = vadd.f32 %v6050, %v6820
  %v6822 = vpop.f32.mrb[0].mxu0
  %v6823 = vadd.f32 %v6052, %v6822
  %v6824 = vpop.f32.mrb[0].mxu0
  %v6825 = vadd.f32 %v6054, %v6824
  %6826 = vmatprep.mubr.bf16.mxu0 %v1885
  %6827 = vmatmul.mubr.bf16.gmra.mrb[0].mxu0 %v1884
  %v6828 = vpop.f32.mrb[0].mxu0
  %v6829 = vadd.f32 %v6058, %v6828
  %v6830 = vpop.f32.mrb[0].mxu0
  %v6831 = vadd.f32 %v6060, %v6830
  %v6832 = vpop.f32.mrb[0].mxu0
  %v6833 = vadd.f32 %v6062, %v6832
  %v6834 = vpop.f32.mrb[0].mxu0
  %v6835 = vadd.f32 %v6064, %v6834
  %6836 = vmatprep.mubr.bf16.mxu0 %v1890
  %6837 = vmatmul.mubr.bf16.gmra.mrb[0].mxu0 %v1889
  %v6838 = vpop.f32.mrb[0].mxu0
  %v6839 = vadd.f32 %v6068, %v6838
  %v6840 = vpop.f32.mrb[0].mxu0
  %v6841 = vadd.f32 %v6070, %v6840
  %v6842 = vpop.f32.mrb[0].mxu0
  %v6843 = vadd.f32 %v6072, %v6842
  %v6844 = vpop.f32.mrb[0].mxu0
  %v6845 = vadd.f32 %v6074, %v6844
  %6846 = vmatprep.mubr.bf16.mxu0 %v1895
  %6847 = vmatmul.mubr.bf16.gmra.mrb[0].mxu0 %v1894
  %v6848 = vpop.f32.mrb[0].mxu0
  %v6849 = vadd.f32 %v6078, %v6848
  %v6850 = vpop.f32.mrb[0].mxu0
  %v6851 = vadd.f32 %v6080, %v6850
  %v6852 = vpop.f32.mrb[0].mxu0
  %v6853 = vadd.f32 %v6082, %v6852
  %v6854 = vpop.f32.mrb[0].mxu0
  %v6855 = vadd.f32 %v6084, %v6854
  %6856 = vmatprep.mubr.bf16.mxu0 %v1900
  %6857 = vmatmul.mubr.bf16.gmra.mrb[0].mxu0 %v1899
  %v6858 = vpop.f32.mrb[0].mxu0
  %v6859 = vadd.f32 %v6088, %v6858
  %v6860 = vpop.f32.mrb[0].mxu0
  %v6861 = vadd.f32 %v6090, %v6860
  %v6862 = vpop.f32.mrb[0].mxu0
  %v6863 = vadd.f32 %v6092, %v6862
  %v6864 = vpop.f32.mrb[0].mxu0
  %v6865 = vadd.f32 %v6094, %v6864
  %6866 = vmatprep.mubr.bf16.mxu0 %v1905
  %6867 = vmatmul.mubr.bf16.gmra.mrb[0].mxu0 %v1904
  %v6868 = vpop.f32.mrb[0].mxu0
  %v6869 = vadd.f32 %v6098, %v6868
  %v6870 = vpop.f32.mrb[0].mxu0
  %v6871 = vadd.f32 %v6100, %v6870
  %v6872 = vpop.f32.mrb[0].mxu0
  %v6873 = vadd.f32 %v6102, %v6872
  %v6874 = vpop.f32.mrb[0].mxu0
  %v6875 = vadd.f32 %v6104, %v6874
  %6876 = vmatprep.mubr.bf16.mxu0 %v1910
  %6877 = vmatmul.mubr.bf16.gmra.mrb[0].mxu0 %v1909
  %v6878 = vpop.f32.mrb[0].mxu0
  %v6879 = vadd.f32 %v6108, %v6878
  %v6880 = vpop.f32.mrb[0].mxu0
  %v6881 = vadd.f32 %v6110, %v6880
  %v6882 = vpop.f32.mrb[0].mxu0
  %v6883 = vadd.f32 %v6112, %v6882
  %v6884 = vpop.f32.mrb[0].mxu0
  %v6885 = vadd.f32 %v6114, %v6884
  %6886 = vmatprep.mubr.bf16.mxu0 %v1915
  %6887 = vmatmul.mubr.bf16.gmra.mrb[0].mxu0 %v1914
  %v6888 = vpop.f32.mrb[0].mxu0
  %v6889 = vadd.f32 %v6118, %v6888
  %v6890 = vpop.f32.mrb[0].mxu0
  %v6891 = vadd.f32 %v6120, %v6890
  %v6892 = vpop.f32.mrb[0].mxu0
  %v6893 = vadd.f32 %v6122, %v6892
  %v6894 = vpop.f32.mrb[0].mxu0
  %v6895 = vadd.f32 %v6124, %v6894
  %6896 = vmatprep.mubr.bf16.mxu0 %v1920
  %6897 = vmatmul.mubr.bf16.gmra.mrb[0].mxu0 %v1919
  %v6898 = vpop.f32.mrb[0].mxu0
  %v6899 = vadd.f32 %v6128, %v6898
  %v6900 = vpop.f32.mrb[0].mxu0
  %v6901 = vadd.f32 %v6130, %v6900
  %v6902 = vpop.f32.mrb[0].mxu0
  %v6903 = vadd.f32 %v6132, %v6902
  %v6904 = vpop.f32.mrb[0].mxu0
  %v6905 = vadd.f32 %v6134, %v6904
  %6906 = vmatprep.mubr.bf16.mxu0 %v1925
  %6907 = vmatmul.mubr.bf16.gmra.mrb[0].mxu0 %v1924
  %v6908 = vpop.f32.mrb[0].mxu0
  %v6909 = vadd.f32 %v6138, %v6908
  %v6910 = vpop.f32.mrb[0].mxu0
  %v6911 = vadd.f32 %v6140, %v6910
  %v6912 = vpop.f32.mrb[0].mxu0
  %v6913 = vadd.f32 %v6142, %v6912
  %v6914 = vpop.f32.mrb[0].mxu0
  %v6915 = vadd.f32 %v6144, %v6914
  %6916 = vmatprep.mubr.bf16.mxu0 %v1930
  %6917 = vmatmul.mubr.bf16.gmra.mrb[0].mxu0 %v1929
  %v6918 = vpop.f32.mrb[0].mxu0
  %v6919 = vadd.f32 %v6148, %v6918
  %v6920 = vpop.f32.mrb[0].mxu0
  %v6921 = vadd.f32 %v6150, %v6920
  %v6922 = vpop.f32.mrb[0].mxu0
  %v6923 = vadd.f32 %v6152, %v6922
  %v6924 = vpop.f32.mrb[0].mxu0
  %v6925 = vadd.f32 %v6154, %v6924
  %6926 = vmatprep.mubr.bf16.mxu0 %v1935
  %6927 = vmatmul.mubr.bf16.gmra.mrb[0].mxu0 %v1934
  %v6928 = vpop.f32.mrb[0].mxu0
  %v6929 = vadd.f32 %v6158, %v6928
  %v6930 = vpop.f32.mrb[0].mxu0
  %v6931 = vadd.f32 %v6160, %v6930
  %v6932 = vpop.f32.mrb[0].mxu0
  %v6933 = vadd.f32 %v6162, %v6932
  %v6934 = vpop.f32.mrb[0].mxu0
  %v6935 = vadd.f32 %v6164, %v6934
  %6936 = vmatprep.mubr.bf16.mxu0 %v1940
  %6937 = vmatmul.mubr.bf16.gmra.mrb[0].mxu0 %v1939
  %v6938 = vpop.f32.mrb[0].mxu0
  %v6939 = vadd.f32 %v6168, %v6938
  %v6940 = vpop.f32.mrb[0].mxu0
  %v6941 = vadd.f32 %v6170, %v6940
  %v6942 = vpop.f32.mrb[0].mxu0
  %v6943 = vadd.f32 %v6172, %v6942
  %v6944 = vpop.f32.mrb[0].mxu0
  %v6945 = vadd.f32 %v6174, %v6944
  %6946 = vmatprep.mubr.bf16.mxu0 %v1945
  %6947 = vmatmul.mubr.bf16.gmra.mrb[0].mxu0 %v1944
  %v6948 = vpop.f32.mrb[0].mxu0
  %v6949 = vadd.f32 %v6178, %v6948
  %v6950 = vpop.f32.mrb[0].mxu0
  %v6951 = vadd.f32 %v6180, %v6950
  %v6952 = vpop.f32.mrb[0].mxu0
  %v6953 = vadd.f32 %v6182, %v6952
  %v6954 = vpop.f32.mrb[0].mxu0
  %v6955 = vadd.f32 %v6184, %v6954
  %6956 = vmatprep.mubr.bf16.mxu0 %v1950
  %6957 = vmatmul.mubr.bf16.gmra.mrb[0].mxu0 %v1949
  %v6958 = vpop.f32.mrb[0].mxu0
  %v6959 = vadd.f32 %v6188, %v6958
  %v6960 = vpop.f32.mrb[0].mxu0
  %v6961 = vadd.f32 %v6190, %v6960
  %v6962 = vpop.f32.mrb[0].mxu0
  %v6963 = vadd.f32 %v6192, %v6962
  %v6964 = vpop.f32.mrb[0].mxu0
  %v6965 = vadd.f32 %v6194, %v6964
  %6966 = vmatprep.mubr.bf16.mxu0 %v1955
  %6967 = vmatmul.mubr.bf16.gmra.mrb[0].mxu0 %v1954
  %v6968 = vpop.f32.mrb[0].mxu0
  %v6969 = vadd.f32 %v6198, %v6968
  %v6970 = vpop.f32.mrb[0].mxu0
  %v6971 = vadd.f32 %v6200, %v6970
  %v6972 = vpop.f32.mrb[0].mxu0
  %v6973 = vadd.f32 %v6202, %v6972
  %v6974 = vpop.f32.mrb[0].mxu0
  %v6975 = vadd.f32 %v6204, %v6974
  %6976 = vmatprep.mubr.bf16.mxu0 %v1960
  %6977 = vmatmul.mubr.bf16.gmra.mrb[0].mxu0 %v1959
  %v6978 = vpop.f32.mrb[0].mxu0
  %v6979 = vadd.f32 %v6208, %v6978
  %v6980 = vpop.f32.mrb[0].mxu0
  %v6981 = vadd.f32 %v6210, %v6980
  %v6982 = vpop.f32.mrb[0].mxu0
  %v6983 = vadd.f32 %v6212, %v6982
  %v6984 = vpop.f32.mrb[0].mxu0
  %v6985 = vadd.f32 %v6214, %v6984
  %6986 = vmatprep.mubr.bf16.mxu0 %v1965
  %6987 = vmatmul.mubr.bf16.gmra.mrb[0].mxu0 %v1964
  %v6988 = vpop.f32.mrb[0].mxu0
  %v6989 = vadd.f32 %v6218, %v6988
  %v6990 = vpop.f32.mrb[0].mxu0
  %v6991 = vadd.f32 %v6220, %v6990
  %v6992 = vpop.f32.mrb[0].mxu0
  %v6993 = vadd.f32 %v6222, %v6992
  %v6994 = vpop.f32.mrb[0].mxu0
  %v6995 = vadd.f32 %v6224, %v6994
  %6996 = vmatprep.mubr.bf16.mxu0 %v1970
  %6997 = vmatmul.mubr.bf16.gmra.mrb[0].mxu0 %v1969
  %v6998 = vpop.f32.mrb[0].mxu0
  %v6999 = vadd.f32 %v6228, %v6998
  %v7000 = vpop.f32.mrb[0].mxu0
  %v7001 = vadd.f32 %v6230, %v7000
  %v7002 = vpop.f32.mrb[0].mxu0
  %v7003 = vadd.f32 %v6232, %v7002
  %v7004 = vpop.f32.mrb[0].mxu0
  %v7005 = vadd.f32 %v6234, %v7004
  %7006 = vmatprep.mubr.bf16.mxu0 %v1975
  %7007 = vmatmul.mubr.bf16.gmra.mrb[0].mxu0 %v1974
  %v7008 = vpop.f32.mrb[0].mxu0
  %v7009 = vadd.f32 %v6238, %v7008
  %v7010 = vpop.f32.mrb[0].mxu0
  %v7011 = vadd.f32 %v6240, %v7010
  %v7012 = vpop.f32.mrb[0].mxu0
  %v7013 = vadd.f32 %v6242, %v7012
  %v7014 = vpop.f32.mrb[0].mxu0
  %v7015 = vadd.f32 %v6244, %v7014
  %7016 = vmatprep.mubr.bf16.mxu0 %v1980
  %7017 = vmatmul.mubr.bf16.gmra.mrb[0].mxu0 %v1979
  %v7018 = vpop.f32.mrb[0].mxu0
  %v7019 = vadd.f32 %v6248, %v7018
  %v7020 = vpop.f32.mrb[0].mxu0
  %v7021 = vadd.f32 %v6250, %v7020
  %v7022 = vpop.f32.mrb[0].mxu0
  %v7023 = vadd.f32 %v6252, %v7022
  %v7024 = vpop.f32.mrb[0].mxu0
  %v7025 = vadd.f32 %v6254, %v7024
  %7026 = vmatprep.mubr.bf16.mxu0 %v1985
  %7027 = vmatmul.mubr.bf16.gmra.mrb[0].mxu0 %v1984
  %v7028 = vpop.f32.mrb[0].mxu0
  %v7029 = vadd.f32 %v6258, %v7028
  %v7030 = vpop.f32.mrb[0].mxu0
  %v7031 = vadd.f32 %v6260, %v7030
  %v7032 = vpop.f32.mrb[0].mxu0
  %v7033 = vadd.f32 %v6262, %v7032
  %v7034 = vpop.f32.mrb[0].mxu0
  %v7035 = vadd.f32 %v6264, %v7034
  %7036 = vmatprep.mubr.bf16.mxu0 %v1990
  %7037 = vmatmul.mubr.bf16.gmra.mrb[0].mxu0 %v1989
  %v7038 = vpop.f32.mrb[0].mxu0
  %v7039 = vadd.f32 %v6268, %v7038
  %v7040 = vpop.f32.mrb[0].mxu0
  %v7041 = vadd.f32 %v6270, %v7040
  %v7042 = vpop.f32.mrb[0].mxu0
  %v7043 = vadd.f32 %v6272, %v7042
  %v7044 = vpop.f32.mrb[0].mxu0
  %v7045 = vadd.f32 %v6274, %v7044
  %7046 = vmatprep.mubr.bf16.mxu0 %v1995
  %7047 = vmatmul.mubr.bf16.gmra.mrb[0].mxu0 %v1994
  %v7048 = vpop.f32.mrb[0].mxu0
  %v7049 = vadd.f32 %v6278, %v7048
  %v7050 = vpop.f32.mrb[0].mxu0
  %v7051 = vadd.f32 %v6280, %v7050
  %v7052 = vpop.f32.mrb[0].mxu0
  %v7053 = vadd.f32 %v6282, %v7052
  %v7054 = vpop.f32.mrb[0].mxu0
  %v7055 = vadd.f32 %v6284, %v7054
  %7056 = vmatprep.mubr.bf16.mxu0 %v2000
  %7057 = vmatmul.mubr.bf16.gmra.mrb[0].mxu0 %v1999
  %v7058 = vpop.f32.mrb[0].mxu0
  %v7059 = vadd.f32 %v6288, %v7058
  %v7060 = vpop.f32.mrb[0].mxu0
  %v7061 = vadd.f32 %v6290, %v7060
  %v7062 = vpop.f32.mrb[0].mxu0
  %v7063 = vadd.f32 %v6292, %v7062
  %v7064 = vpop.f32.mrb[0].mxu0
  %v7065 = vadd.f32 %v6294, %v7064
  %7066 = vmatprep.mubr.bf16.mxu0 %v2005
  %7067 = vmatmul.mubr.bf16.gmra.mrb[0].mxu0 %v2004
  %v7068 = vpop.f32.mrb[0].mxu0
  %v7069 = vadd.f32 %v6298, %v7068
  %v7070 = vpop.f32.mrb[0].mxu0
  %v7071 = vadd.f32 %v6300, %v7070
  %v7072 = vpop.f32.mrb[0].mxu0
  %v7073 = vadd.f32 %v6302, %v7072
  %v7074 = vpop.f32.mrb[0].mxu0
  %v7075 = vadd.f32 %v6304, %v7074
  %7076 = vmatprep.mubr.bf16.mxu0 %v2010
  %7077 = vmatmul.mubr.bf16.gmra.mrb[0].mxu0 %v2009
  %v7078 = vpop.f32.mrb[0].mxu0
  %v7079 = vadd.f32 %v6308, %v7078
  %v7080 = vpop.f32.mrb[0].mxu0
  %v7081 = vadd.f32 %v6310, %v7080
  %v7082 = vpop.f32.mrb[0].mxu0
  %v7083 = vadd.f32 %v6312, %v7082
  %v7084 = vpop.f32.mrb[0].mxu0
  %v7085 = vadd.f32 %v6314, %v7084
  %7086 = vmatprep.mubr.bf16.mxu0 %v2015
  %7087 = vmatmul.mubr.bf16.gmra.mrb[0].mxu0 %v2014
  %v7088 = vpop.f32.mrb[0].mxu0
  %v7089 = vadd.f32 %v6318, %v7088
  %v7090 = vpop.f32.mrb[0].mxu0
  %v7091 = vadd.f32 %v6320, %v7090
  %v7092 = vpop.f32.mrb[0].mxu0
  %v7093 = vadd.f32 %v6322, %v7092
  %v7094 = vpop.f32.mrb[0].mxu0
  %v7095 = vadd.f32 %v6324, %v7094
  %7096 = vmatprep.mubr.bf16.mxu0 %v2020
  %7097 = vmatmul.mubr.bf16.gmra.mrb[0].mxu0 %v2019
  %v7098 = vpop.f32.mrb[0].mxu0
  %v7099 = vadd.f32 %v6328, %v7098
  %v7100 = vpop.f32.mrb[0].mxu0
  %v7101 = vadd.f32 %v6330, %v7100
  %v7102 = vpop.f32.mrb[0].mxu0
  %v7103 = vadd.f32 %v6332, %v7102
  %v7104 = vpop.f32.mrb[0].mxu0
  %v7105 = vadd.f32 %v6334, %v7104
  %7106 = vmatprep.mubr.bf16.mxu0 %v2025
  %7107 = vmatmul.mubr.bf16.gmra.mrb[0].mxu0 %v2024
  %v7108 = vpop.f32.mrb[0].mxu0
  %v7109 = vadd.f32 %v6338, %v7108
  %v7110 = vpop.f32.mrb[0].mxu0
  %v7111 = vadd.f32 %v6340, %v7110
  %v7112 = vpop.f32.mrb[0].mxu0
  %v7113 = vadd.f32 %v6342, %v7112
  %v7114 = vpop.f32.mrb[0].mxu0
  %v7115 = vadd.f32 %v6344, %v7114
  %7116 = vmatprep.mubr.bf16.mxu0 %v2030
  %7117 = vmatmul.mubr.bf16.gmra.mrb[0].mxu0 %v2029
  %v7118 = vpop.f32.mrb[0].mxu0
  %v7119 = vadd.f32 %v6348, %v7118
  %v7120 = vpop.f32.mrb[0].mxu0
  %v7121 = vadd.f32 %v6350, %v7120
  %v7122 = vpop.f32.mrb[0].mxu0
  %v7123 = vadd.f32 %v6352, %v7122
  %v7124 = vpop.f32.mrb[0].mxu0
  %v7125 = vadd.f32 %v6354, %v7124
  %7126 = vmatprep.mubr.bf16.mxu0 %v2035
  %7127 = vmatmul.mubr.bf16.gmra.mrb[0].mxu0 %v2034
  %v7128 = vpop.f32.mrb[0].mxu0
  %v7129 = vadd.f32 %v6358, %v7128
  %v7130 = vpop.f32.mrb[0].mxu0
  %v7131 = vadd.f32 %v6360, %v7130
  %v7132 = vpop.f32.mrb[0].mxu0
  %v7133 = vadd.f32 %v6362, %v7132
  %v7134 = vpop.f32.mrb[0].mxu0
  %v7135 = vadd.f32 %v6364, %v7134
  %7136 = vmatprep.mubr.bf16.mxu0 %v2040
  %7137 = vmatmul.mubr.bf16.gmra.mrb[0].mxu0 %v2039
  %v7138 = vpop.f32.mrb[0].mxu0
  %v7139 = vadd.f32 %v6368, %v7138
  %v7140 = vpop.f32.mrb[0].mxu0
  %v7141 = vadd.f32 %v6370, %v7140
  %v7142 = vpop.f32.mrb[0].mxu0
  %v7143 = vadd.f32 %v6372, %v7142
  %v7144 = vpop.f32.mrb[0].mxu0
  %v7145 = vadd.f32 %v6374, %v7144
  %7146 = vmatprep.mubr.bf16.mxu0 %v2045
  %7147 = vmatmul.mubr.bf16.gmra.mrb[0].mxu0 %v2044
  %v7148 = vpop.f32.mrb[0].mxu0
  %v7149 = vadd.f32 %v6378, %v7148
  %v7150 = vpop.f32.mrb[0].mxu0
  %v7151 = vadd.f32 %v6380, %v7150
  %v7152 = vpop.f32.mrb[0].mxu0
  %v7153 = vadd.f32 %v6382, %v7152
  %v7154 = vpop.f32.mrb[0].mxu0
  %v7155 = vadd.f32 %v6384, %v7154
  %7156 = vmatprep.mubr.bf16.mxu0 %v2050
  %7157 = vmatmul.mubr.bf16.gmra.mrb[0].mxu0 %v2049
  %v7158 = vpop.f32.mrb[0].mxu0
  %v7159 = vadd.f32 %v6388, %v7158
  %v7160 = vpop.f32.mrb[0].mxu0
  %v7161 = vadd.f32 %v6390, %v7160
  %v7162 = vpop.f32.mrb[0].mxu0
  %v7163 = vadd.f32 %v6392, %v7162
  %v7164 = vpop.f32.mrb[0].mxu0
  %v7165 = vadd.f32 %v6394, %v7164
  %7166 = vmatprep.mubr.bf16.mxu0 %v2055
  %7167 = vmatmul.mubr.bf16.gmra.mrb[0].mxu0 %v2054
  %v7168 = vpop.f32.mrb[0].mxu0
  %v7169 = vadd.f32 %v6398, %v7168
  %v7170 = vpop.f32.mrb[0].mxu0
  %v7171 = vadd.f32 %v6400, %v7170
  %v7172 = vpop.f32.mrb[0].mxu0
  %v7173 = vadd.f32 %v6402, %v7172
  %v7174 = vpop.f32.mrb[0].mxu0
  %v7175 = vadd.f32 %v6404, %v7174
  %7176 = vmatprep.mubr.bf16.mxu0 %v2060
  %7177 = vmatmul.mubr.bf16.gmra.mrb[0].mxu0 %v2059
  %v7178 = vpop.f32.mrb[0].mxu0
  %v7179 = vadd.f32 %v6408, %v7178
  %v7180 = vpop.f32.mrb[0].mxu0
  %v7181 = vadd.f32 %v6410, %v7180
  %v7182 = vpop.f32.mrb[0].mxu0
  %v7183 = vadd.f32 %v6412, %v7182
  %v7184 = vpop.f32.mrb[0].mxu0
  %v7185 = vadd.f32 %v6414, %v7184
  %7186 = vmatprep.mubr.bf16.mxu0 %v2065
  %7187 = vmatmul.mubr.bf16.gmra.mrb[0].mxu0 %v2064
  %v7188 = vpop.f32.mrb[0].mxu0
  %v7189 = vadd.f32 %v6418, %v7188
  %v7190 = vpop.f32.mrb[0].mxu0
  %v7191 = vadd.f32 %v6420, %v7190
  %v7192 = vpop.f32.mrb[0].mxu0
  %v7193 = vadd.f32 %v6422, %v7192
  %v7194 = vpop.f32.mrb[0].mxu0
  %v7195 = vadd.f32 %v6424, %v7194
  %7196 = vmatprep.mubr.bf16.mxu0 %v2070
  %7197 = vmatmul.mubr.bf16.gmra.mrb[0].mxu0 %v2069
  %v7198 = vpop.f32.mrb[0].mxu0
  %v7199 = vadd.f32 %v6428, %v7198
  %v7200 = vpop.f32.mrb[0].mxu0
  %v7201 = vadd.f32 %v6430, %v7200
  %v7202 = vpop.f32.mrb[0].mxu0
  %v7203 = vadd.f32 %v6432, %v7202
  %v7204 = vpop.f32.mrb[0].mxu0
  %v7205 = vadd.f32 %v6434, %v7204
  %7206 = vmatprep.mubr.bf16.mxu0 %v2075
  %7207 = vmatmul.mubr.bf16.gmra.mrb[0].mxu0 %v2074
  %v7208 = vpop.f32.mrb[0].mxu0
  %v7209 = vadd.f32 %v6438, %v7208
  %v7210 = vpop.f32.mrb[0].mxu0
  %v7211 = vadd.f32 %v6440, %v7210
  %v7212 = vpop.f32.mrb[0].mxu0
  %v7213 = vadd.f32 %v6442, %v7212
  %v7214 = vpop.f32.mrb[0].mxu0
  %v7215 = vadd.f32 %v6444, %v7214
  %7216 = vmatprep.mubr.bf16.mxu0 %v2080
  %7217 = vmatmul.mubr.bf16.gmra.mrb[0].mxu0 %v2079
  %v7218 = vpop.f32.mrb[0].mxu0
  %v7219 = vadd.f32 %v6448, %v7218
  %v7220 = vpop.f32.mrb[0].mxu0
  %v7221 = vadd.f32 %v6450, %v7220
  %v7222 = vpop.f32.mrb[0].mxu0
  %v7223 = vadd.f32 %v6452, %v7222
  %v7224 = vpop.f32.mrb[0].mxu0
  %v7225 = vadd.f32 %v6454, %v7224
  %7226 = vmatprep.mubr.bf16.mxu0 %v2085
  %7227 = vmatmul.mubr.bf16.gmra.mrb[0].mxu0 %v2084
  %v7228 = vpop.f32.mrb[0].mxu0
  %v7229 = vadd.f32 %v6458, %v7228
  %v7230 = vpop.f32.mrb[0].mxu0
  %v7231 = vadd.f32 %v6460, %v7230
  %v7232 = vpop.f32.mrb[0].mxu0
  %v7233 = vadd.f32 %v6462, %v7232
  %v7234 = vpop.f32.mrb[0].mxu0
  %v7235 = vadd.f32 %v6464, %v7234
  %7236 = vmatprep.mubr.bf16.mxu0 %v2090
  %7237 = vmatmul.mubr.bf16.gmra.mrb[0].mxu0 %v2089
  %v7238 = vpop.f32.mrb[0].mxu0
  %v7239 = vadd.f32 %v6468, %v7238
  %v7240 = vpop.f32.mrb[0].mxu0
  %v7241 = vadd.f32 %v6470, %v7240
  %v7242 = vpop.f32.mrb[0].mxu0
  %v7243 = vadd.f32 %v6472, %v7242
  %v7244 = vpop.f32.mrb[0].mxu0
  %v7245 = vadd.f32 %v6474, %v7244
  %7246 = vmatprep.mubr.bf16.mxu0 %v2095
  %7247 = vmatmul.mubr.bf16.gmra.mrb[0].mxu0 %v2094
  %v7248 = vpop.f32.mrb[0].mxu0
  %v7249 = vadd.f32 %v6478, %v7248
  %v7250 = vpop.f32.mrb[0].mxu0
  %v7251 = vadd.f32 %v6480, %v7250
  %v7252 = vpop.f32.mrb[0].mxu0
  %v7253 = vadd.f32 %v6482, %v7252
  %v7254 = vpop.f32.mrb[0].mxu0
  %v7255 = vadd.f32 %v6484, %v7254
  %7256 = vmatprep.mubr.bf16.mxu0 %v2100
  %7257 = vmatmul.mubr.bf16.gmra.mrb[0].mxu0 %v2099
  %v7258 = vpop.f32.mrb[0].mxu0
  %v7259 = vadd.f32 %v6488, %v7258
  %v7260 = vpop.f32.mrb[0].mxu0
  %v7261 = vadd.f32 %v6490, %v7260
  %v7262 = vpop.f32.mrb[0].mxu0
  %v7263 = vadd.f32 %v6492, %v7262
  %v7264 = vpop.f32.mrb[0].mxu0
  %v7265 = vadd.f32 %v6494, %v7264
  %7266 = vmatprep.mubr.bf16.mxu0 %v2105
  %7267 = vmatmul.mubr.bf16.gmra.mrb[0].mxu0 %v2104
  %v7268 = vpop.f32.mrb[0].mxu0
  %v7269 = vadd.f32 %v6498, %v7268
  %v7270 = vpop.f32.mrb[0].mxu0
  %v7271 = vadd.f32 %v6500, %v7270
  %v7272 = vpop.f32.mrb[0].mxu0
  %v7273 = vadd.f32 %v6502, %v7272
  %v7274 = vpop.f32.mrb[0].mxu0
  %v7275 = vadd.f32 %v6504, %v7274
  %7276 = vmatprep.mubr.bf16.mxu0 %v2110
  %7277 = vmatmul.mubr.bf16.gmra.mrb[0].mxu0 %v2109
  %v7278 = vpop.f32.mrb[0].mxu0
  %v7279 = vadd.f32 %v6508, %v7278
  %v7280 = vpop.f32.mrb[0].mxu0
  %v7281 = vadd.f32 %v6510, %v7280
  %v7282 = vpop.f32.mrb[0].mxu0
  %v7283 = vadd.f32 %v6512, %v7282
  %v7284 = vpop.f32.mrb[0].mxu0
  %v7285 = vadd.f32 %v6514, %v7284
  %7286 = vmatprep.mubr.bf16.mxu0 %v2115
  %7287 = vmatmul.mubr.bf16.gmra.mrb[0].mxu0 %v2114
  %v7288 = vpop.f32.mrb[0].mxu0
  %v7289 = vadd.f32 %v6518, %v7288
  %v7290 = vpop.f32.mrb[0].mxu0
  %v7291 = vadd.f32 %v6520, %v7290
  %v7292 = vpop.f32.mrb[0].mxu0
  %v7293 = vadd.f32 %v6522, %v7292
  %v7294 = vpop.f32.mrb[0].mxu0
  %v7295 = vadd.f32 %v6524, %v7294
  %7296 = vmatprep.mubr.bf16.mxu0 %v2120
  %7297 = vmatmul.mubr.bf16.gmra.mrb[0].mxu0 %v2119
  %v7298 = vpop.f32.mrb[0].mxu0
  %v7299 = vadd.f32 %v6528, %v7298
  %v7300 = vpop.f32.mrb[0].mxu0
  %v7301 = vadd.f32 %v6530, %v7300
  %v7302 = vpop.f32.mrb[0].mxu0
  %v7303 = vadd.f32 %v6532, %v7302
  %v7304 = vpop.f32.mrb[0].mxu0
  %v7305 = vadd.f32 %v6534, %v7304
  %7306 = vmatprep.mubr.bf16.mxu0 %v2125
  %7307 = vmatmul.mubr.bf16.gmra.mrb[0].mxu0 %v2124
  %v7308 = vpop.f32.mrb[0].mxu0
  %v7309 = vadd.f32 %v6538, %v7308
  %v7310 = vpop.f32.mrb[0].mxu0
  %v7311 = vadd.f32 %v6540, %v7310
  %v7312 = vpop.f32.mrb[0].mxu0
  %v7313 = vadd.f32 %v6542, %v7312
  %v7314 = vpop.f32.mrb[0].mxu0
  %v7315 = vadd.f32 %v6544, %v7314
  %7316 = vmatprep.mubr.bf16.mxu0 %v2130
  %7317 = vmatmul.mubr.bf16.gmra.mrb[0].mxu0 %v2129
  %v7318 = vpop.f32.mrb[0].mxu0
  %v7319 = vadd.f32 %v6548, %v7318
  %v7320 = vpop.f32.mrb[0].mxu0
  %v7321 = vadd.f32 %v6550, %v7320
  %v7322 = vpop.f32.mrb[0].mxu0
  %v7323 = vadd.f32 %v6552, %v7322
  %v7324 = vpop.f32.mrb[0].mxu0
  %v7325 = vadd.f32 %v6554, %v7324
  %7326 = vmatprep.mubr.bf16.mxu0 %v2135
  %7327 = vmatmul.mubr.bf16.gmra.mrb[0].mxu0 %v2134
  %v7328 = vpop.f32.mrb[0].mxu0
  %v7329 = vadd.f32 %v6558, %v7328
  %v7330 = vpop.f32.mrb[0].mxu0
  %v7331 = vadd.f32 %v6560, %v7330
  %v7332 = vpop.f32.mrb[0].mxu0
  %v7333 = vadd.f32 %v6562, %v7332
  %v7334 = vpop.f32.mrb[0].mxu0
  %v7335 = vadd.f32 %v6564, %v7334
  %7336 = vmatprep.mubr.bf16.mxu0 %v2140
  %7337 = vmatmul.mubr.bf16.gmra.mrb[0].mxu0 %v2139
  %v7338 = vpop.f32.mrb[0].mxu0
  %v7339 = vadd.f32 %v6568, %v7338
  %v7340 = vpop.f32.mrb[0].mxu0
  %v7341 = vadd.f32 %v6570, %v7340
  %v7342 = vpop.f32.mrb[0].mxu0
  %v7343 = vadd.f32 %v6572, %v7342
  %v7344 = vpop.f32.mrb[0].mxu0
  %v7345 = vadd.f32 %v6574, %v7344
  %7346 = vmatprep.mubr.bf16.mxu0 %v2145
  %7347 = vmatmul.mubr.bf16.gmra.mrb[0].mxu0 %v2144
  %v7348 = vpop.f32.mrb[0].mxu0
  %v7349 = vadd.f32 %v6578, %v7348
  %v7350 = vpop.f32.mrb[0].mxu0
  %v7351 = vadd.f32 %v6580, %v7350
  %v7352 = vpop.f32.mrb[0].mxu0
  %v7353 = vadd.f32 %v6582, %v7352
  %v7354 = vpop.f32.mrb[0].mxu0
  %v7355 = vadd.f32 %v6584, %v7354
  %7356 = vmatprep.mubr.bf16.mxu0 %v2150
  %7357 = vmatmul.mubr.bf16.gmra.mrb[0].mxu0 %v2149
  %v7358 = vpop.f32.mrb[0].mxu0
  %v7359 = vadd.f32 %v6588, %v7358
  %v7360 = vpop.f32.mrb[0].mxu0
  %v7361 = vadd.f32 %v6590, %v7360
  %v7362 = vpop.f32.mrb[0].mxu0
  %v7363 = vadd.f32 %v6592, %v7362
  %v7364 = vpop.f32.mrb[0].mxu0
  %v7365 = vadd.f32 %v6594, %v7364
  %7366 = vmatprep.mubr.bf16.mxu0 %v2155
  %7367 = vmatmul.mubr.bf16.gmra.mrb[0].mxu0 %v2154
  %v7368 = vpop.f32.mrb[0].mxu0
  %v7369 = vadd.f32 %v6598, %v7368
  %v7370 = vpop.f32.mrb[0].mxu0
  %v7371 = vadd.f32 %v6600, %v7370
  %v7372 = vpop.f32.mrb[0].mxu0
  %v7373 = vadd.f32 %v6602, %v7372
  %v7374 = vpop.f32.mrb[0].mxu0
  %v7375 = vadd.f32 %v6604, %v7374
  %7376 = vmatprep.mubr.bf16.mxu0 %v2160
  %7377 = vmatmul.mubr.bf16.gmra.mrb[0].mxu0 %v2159
  %v7378 = vpop.f32.mrb[0].mxu0
  %v7379 = vadd.f32 %v6608, %v7378
  %v7380 = vpop.f32.mrb[0].mxu0
  %v7381 = vadd.f32 %v6610, %v7380
  %v7382 = vpop.f32.mrb[0].mxu0
  %v7383 = vadd.f32 %v6612, %v7382
  %v7384 = vpop.f32.mrb[0].mxu0
  %v7385 = vadd.f32 %v6614, %v7384
  %7386 = vmatprep.mubr.bf16.mxu0 %v2165
  %7387 = vmatmul.mubr.bf16.gmra.mrb[0].mxu0 %v2164
  %v7388 = vpop.f32.mrb[0].mxu0
  %v7389 = vadd.f32 %v6618, %v7388
  %v7390 = vpop.f32.mrb[0].mxu0
  %v7391 = vadd.f32 %v6620, %v7390
  %v7392 = vpop.f32.mrb[0].mxu0
  %v7393 = vadd.f32 %v6622, %v7392
  %v7394 = vpop.f32.mrb[0].mxu0
  %v7395 = vadd.f32 %v6624, %v7394
  %7396 = vmatprep.mubr.bf16.mxu0 %v2170
  %7397 = vmatmul.mubr.bf16.gmra.mrb[0].mxu0 %v2169
  %v7398 = vpop.f32.mrb[0].mxu0
  %v7399 = vpop.f32.mrb[0].mxu0
  %v7400 = vadd.f32 %v6629, %v7399
  %v7401 = vpop.f32.mrb[0].mxu0
  %v7402 = vpop.f32.mrb[0].mxu0
  %v7403 = vadd.f32 %v6632, %v7402
  %7404 = vmatprep.mubr.bf16.mxu0 %v2175
  %7405 = vmatmul.mubr.bf16.gmra.mrb[0].mxu0 %v2174
  %v7406 = vpop.f32.mrb[0].mxu0
  %v7407 = vpop.f32.mrb[0].mxu0
  %v7408 = vadd.f32 %v6637, %v7407
  %v7409 = vpop.f32.mrb[0].mxu0
  %v7410 = vpop.f32.mrb[0].mxu0
  %v7411 = vadd.f32 %v6640, %v7410
  %7412 = vmatprep.mubr.bf16.mxu0 %v2180
  %7413 = vmatmul.mubr.bf16.gmra.mrb[0].mxu0 %v2179
  %v7414 = vpop.f32.mrb[0].mxu0
  %v7415 = vpop.f32.mrb[0].mxu0
  %v7416 = vadd.f32 %v6645, %v7415
  %v7417 = vpop.f32.mrb[0].mxu0
  %v7418 = vpop.f32.mrb[0].mxu0
  %v7419 = vadd.f32 %v6648, %v7418
  %7420 = vdwg.mxu0
  %7421 = vmatprep.subr.bf16.mxu0 %v5794
  %7422 = vmatpush1.bf16.msra.mxu0 %v5793
  %7423 = vmatprep.subr.bf16.mxu0 0
  %7424 = vmatpush1.bf16.msra.mxu0 0
  %7425 = vmatprep.subr.bf16.mxu0 0
  %7426 = vmatpush1.bf16.msra.mxu0 0
  %7427 = vmatprep.subr.bf16.mxu0 0
  %7428 = vmatpush1.bf16.msra.mxu0 0
  %7429 = vmatprep.subr.bf16.mxu0 0
  %7430 = vmatpush1.bf16.msra.mxu0 0
  %7431 = vmatprep.subr.bf16.mxu0 0
  %7432 = vmatpush1.bf16.msra.mxu0 0
  %7433 = vmatprep.subr.bf16.mxu0 0
  %7434 = vmatpush1.bf16.msra.mxu0 0
  %7435 = vmatprep.subr.bf16.mxu0 0
  %7436 = vmatpush1.bf16.msra.mxu0 0
  %7437 = vmatprep.subr.bf16.mxu0 0
  %7438 = vmatpush1.bf16.msra.mxu0 0
  %7439 = vmatprep.subr.bf16.mxu0 0
  %7440 = vmatpush1.bf16.msra.mxu0 0
  %7441 = vmatprep.subr.bf16.mxu0 0
  %7442 = vmatpush1.bf16.msra.mxu0 0
  %7443 = vmatprep.subr.bf16.mxu0 0
  %7444 = vmatpush1.bf16.msra.mxu0 0
  %7445 = vmatprep.subr.bf16.mxu0 0
  %7446 = vmatpush1.bf16.msra.mxu0 0
  %7447 = vmatprep.subr.bf16.mxu0 0
  %7448 = vmatpush1.bf16.msra.mxu0 0
  %7449 = vmatprep.subr.bf16.mxu0 0
  %7450 = vmatpush1.bf16.msra.mxu0 0
  %7451 = vmatprep.subr.bf16.mxu0 0
  %7452 = vmatpush1.bf16.msra.mxu0 0
  %7453 = vmatprep.mubr.bf16.mxu0 0
  %7454 = vmatmul.mubr.bf16.gmra.mrb[0].mxu0 %v5862
  %v7455 = vpop.f32.mrb[0].mxu0
  %v7456 = vadd.f32 %v6685, %v7455
  %v7457 = vpop.f32.mrb[0].mxu0
  %v7458 = vpop.f32.mrb[0].mxu0
  %v7459 = vadd.f32 %v6688, %v7458
  %v7460 = vpop.f32.mrb[0].mxu0
  %7461 = vmatprep.mubr.bf16.mxu0 0
  %7462 = vmatmul.mubr.bf16.gmra.mrb[0].mxu0 %v5865
  %v7463 = vpop.f32.mrb[0].mxu0
  %v7464 = vadd.f32 %v6693, %v7463
  %v7465 = vpop.f32.mrb[0].mxu0
  %v7466 = vpop.f32.mrb[0].mxu0
  %v7467 = vadd.f32 %v6696, %v7466
  %v7468 = vpop.f32.mrb[0].mxu0
  %7469 = vmatprep.mubr.bf16.mxu0 0
  %7470 = vmatmul.mubr.bf16.gmra.mrb[0].mxu0 %v5868
  %v7471 = vpop.f32.mrb[0].mxu0
  %v7472 = vadd.f32 %v6701, %v7471
  %v7473 = vpop.f32.mrb[0].mxu0
  %v7474 = vpop.f32.mrb[0].mxu0
  %v7475 = vadd.f32 %v6704, %v7474
  %v7476 = vpop.f32.mrb[0].mxu0
  %7477 = vmatprep.mubr.bf16.mxu0 0
  %7478 = vmatmul.mubr.bf16.gmra.mrb[0].mxu0 %v5871
  %v7479 = vpop.f32.mrb[0].mxu0
  %v7480 = vadd.f32 %v6709, %v7479
  %v7481 = vpop.f32.mrb[0].mxu0
  %v7482 = vadd.f32 %v6711, %v7481
  %v7483 = vpop.f32.mrb[0].mxu0
  %v7484 = vadd.f32 %v6713, %v7483
  %v7485 = vpop.f32.mrb[0].mxu0
  %v7486 = vadd.f32 %v6715, %v7485
  %7487 = vmatprep.mubr.bf16.mxu0 0
  %7488 = vmatmul.mubr.bf16.gmra.mrb[0].mxu0 %v5874
  %v7489 = vpop.f32.mrb[0].mxu0
  %v7490 = vadd.f32 %v6719, %v7489
  %v7491 = vpop.f32.mrb[0].mxu0
  %v7492 = vadd.f32 %v6721, %v7491
  %v7493 = vpop.f32.mrb[0].mxu0
  %v7494 = vadd.f32 %v6723, %v7493
  %v7495 = vpop.f32.mrb[0].mxu0
  %v7496 = vadd.f32 %v6725, %v7495
  %7497 = vmatprep.mubr.bf16.mxu0 0
  %7498 = vmatmul.mubr.bf16.gmra.mrb[0].mxu0 %v5877
  %v7499 = vpop.f32.mrb[0].mxu0
  %v7500 = vadd.f32 %v6729, %v7499
  %v7501 = vpop.f32.mrb[0].mxu0
  %v7502 = vadd.f32 %v6731, %v7501
  %v7503 = vpop.f32.mrb[0].mxu0
  %v7504 = vadd.f32 %v6733, %v7503
  %v7505 = vpop.f32.mrb[0].mxu0
  %v7506 = vadd.f32 %v6735, %v7505
  %7507 = vmatprep.mubr.bf16.mxu0 0
  %7508 = vmatmul.mubr.bf16.gmra.mrb[0].mxu0 %v2844
  %v7509 = vpop.f32.mrb[0].mxu0
  %v7510 = vadd.f32 %v6739, %v7509
  %v7511 = vpop.f32.mrb[0].mxu0
  %v7512 = vadd.f32 %v6741, %v7511
  %v7513 = vpop.f32.mrb[0].mxu0
  %v7514 = vadd.f32 %v6743, %v7513
  %v7515 = vpop.f32.mrb[0].mxu0
  %v7516 = vadd.f32 %v6745, %v7515
  %7517 = vmatprep.mubr.bf16.mxu0 0
  %7518 = vmatmul.mubr.bf16.gmra.mrb[0].mxu0 %v2847
  %v7519 = vpop.f32.mrb[0].mxu0
  %v7520 = vadd.f32 %v6749, %v7519
  %v7521 = vpop.f32.mrb[0].mxu0
  %v7522 = vadd.f32 %v6751, %v7521
  %v7523 = vpop.f32.mrb[0].mxu0
  %v7524 = vadd.f32 %v6753, %v7523
  %v7525 = vpop.f32.mrb[0].mxu0
  %v7526 = vadd.f32 %v6755, %v7525
  %7527 = vmatprep.mubr.bf16.mxu0 0
  %7528 = vmatmul.mubr.bf16.gmra.mrb[0].mxu0 %v2850
  %v7529 = vpop.f32.mrb[0].mxu0
  %v7530 = vadd.f32 %v6759, %v7529
  %v7531 = vpop.f32.mrb[0].mxu0
  %v7532 = vadd.f32 %v6761, %v7531
  %v7533 = vpop.f32.mrb[0].mxu0
  %v7534 = vadd.f32 %v6763, %v7533
  %v7535 = vpop.f32.mrb[0].mxu0
  %v7536 = vadd.f32 %v6765, %v7535
  %7537 = vmatprep.mubr.bf16.mxu0 0
  %7538 = vmatmul.mubr.bf16.gmra.mrb[0].mxu0 %v2853
  %v7539 = vpop.f32.mrb[0].mxu0
  %v7540 = vadd.f32 %v6769, %v7539
  %v7541 = vpop.f32.mrb[0].mxu0
  %v7542 = vadd.f32 %v6771, %v7541
  %v7543 = vpop.f32.mrb[0].mxu0
  %v7544 = vadd.f32 %v6773, %v7543
  %v7545 = vpop.f32.mrb[0].mxu0
  %v7546 = vadd.f32 %v6775, %v7545
  %7547 = vmatprep.mubr.bf16.mxu0 0
  %7548 = vmatmul.mubr.bf16.gmra.mrb[0].mxu0 %v2856
  %v7549 = vpop.f32.mrb[0].mxu0
  %v7550 = vadd.f32 %v6779, %v7549
  %v7551 = vpop.f32.mrb[0].mxu0
  %v7552 = vadd.f32 %v6781, %v7551
  %v7553 = vpop.f32.mrb[0].mxu0
  %v7554 = vadd.f32 %v6783, %v7553
  %v7555 = vpop.f32.mrb[0].mxu0
  %v7556 = vadd.f32 %v6785, %v7555
  %7557 = vmatprep.mubr.bf16.mxu0 0
  %7558 = vmatmul.mubr.bf16.gmra.mrb[0].mxu0 %v2859
  %v7559 = vpop.f32.mrb[0].mxu0
  %v7560 = vadd.f32 %v6789, %v7559
  %v7561 = vpop.f32.mrb[0].mxu0
  %v7562 = vadd.f32 %v6791, %v7561
  %v7563 = vpop.f32.mrb[0].mxu0
  %v7564 = vadd.f32 %v6793, %v7563
  %v7565 = vpop.f32.mrb[0].mxu0
  %v7566 = vadd.f32 %v6795, %v7565
  %7567 = vmatprep.mubr.bf16.mxu0 0
  %7568 = vmatmul.mubr.bf16.gmra.mrb[0].mxu0 %v2862
  %v7569 = vpop.f32.mrb[0].mxu0
  %v7570 = vadd.f32 %v6799, %v7569
  %v7571 = vpop.f32.mrb[0].mxu0
  %v7572 = vadd.f32 %v6801, %v7571
  %v7573 = vpop.f32.mrb[0].mxu0
  %v7574 = vadd.f32 %v6803, %v7573
  %v7575 = vpop.f32.mrb[0].mxu0
  %v7576 = vadd.f32 %v6805, %v7575
  %7577 = vmatprep.mubr.bf16.mxu0 0
  %7578 = vmatmul.mubr.bf16.gmra.mrb[0].mxu0 %v2865
  %v7579 = vpop.f32.mrb[0].mxu0
  %v7580 = vadd.f32 %v6809, %v7579
  %v7581 = vpop.f32.mrb[0].mxu0
  %v7582 = vadd.f32 %v6811, %v7581
  %v7583 = vpop.f32.mrb[0].mxu0
  %v7584 = vadd.f32 %v6813, %v7583
  %v7585 = vpop.f32.mrb[0].mxu0
  %v7586 = vadd.f32 %v6815, %v7585
  %7587 = vmatprep.mubr.bf16.mxu0 0
  %7588 = vmatmul.mubr.bf16.gmra.mrb[0].mxu0 %v2868
  %v7589 = vpop.f32.mrb[0].mxu0
  %v7590 = vadd.f32 %v6819, %v7589
  %v7591 = vpop.f32.mrb[0].mxu0
  %v7592 = vadd.f32 %v6821, %v7591
  %v7593 = vpop.f32.mrb[0].mxu0
  %v7594 = vadd.f32 %v6823, %v7593
  %v7595 = vpop.f32.mrb[0].mxu0
  %v7596 = vadd.f32 %v6825, %v7595
  %7597 = vmatprep.mubr.bf16.mxu0 0
  %7598 = vmatmul.mubr.bf16.gmra.mrb[0].mxu0 %v2871
  %v7599 = vpop.f32.mrb[0].mxu0
  %v7600 = vadd.f32 %v6829, %v7599
  %v7601 = vpop.f32.mrb[0].mxu0
  %v7602 = vadd.f32 %v6831, %v7601
  %v7603 = vpop.f32.mrb[0].mxu0
  %v7604 = vadd.f32 %v6833, %v7603
  %v7605 = vpop.f32.mrb[0].mxu0
  %v7606 = vadd.f32 %v6835, %v7605
  %7607 = vmatprep.mubr.bf16.mxu0 0
  %7608 = vmatmul.mubr.bf16.gmra.mrb[0].mxu0 %v2874
  %v7609 = vpop.f32.mrb[0].mxu0
  %v7610 = vadd.f32 %v6839, %v7609
  %v7611 = vpop.f32.mrb[0].mxu0
  %v7612 = vadd.f32 %v6841, %v7611
  %v7613 = vpop.f32.mrb[0].mxu0
  %v7614 = vadd.f32 %v6843, %v7613
  %v7615 = vpop.f32.mrb[0].mxu0
  %v7616 = vadd.f32 %v6845, %v7615
  %7617 = vmatprep.mubr.bf16.mxu0 0
  %7618 = vmatmul.mubr.bf16.gmra.mrb[0].mxu0 %v2877
  %v7619 = vpop.f32.mrb[0].mxu0
  %v7620 = vadd.f32 %v6849, %v7619
  %v7621 = vpop.f32.mrb[0].mxu0
  %v7622 = vadd.f32 %v6851, %v7621
  %v7623 = vpop.f32.mrb[0].mxu0
  %v7624 = vadd.f32 %v6853, %v7623
  %v7625 = vpop.f32.mrb[0].mxu0
  %v7626 = vadd.f32 %v6855, %v7625
  %7627 = vmatprep.mubr.bf16.mxu0 0
  %7628 = vmatmul.mubr.bf16.gmra.mrb[0].mxu0 %v2880
  %v7629 = vpop.f32.mrb[0].mxu0
  %v7630 = vadd.f32 %v6859, %v7629
  %v7631 = vpop.f32.mrb[0].mxu0
  %v7632 = vadd.f32 %v6861, %v7631
  %v7633 = vpop.f32.mrb[0].mxu0
  %v7634 = vadd.f32 %v6863, %v7633
  %v7635 = vpop.f32.mrb[0].mxu0
  %v7636 = vadd.f32 %v6865, %v7635
  %7637 = vmatprep.mubr.bf16.mxu0 0
  %7638 = vmatmul.mubr.bf16.gmra.mrb[0].mxu0 %v2883
  %v7639 = vpop.f32.mrb[0].mxu0
  %v7640 = vadd.f32 %v6869, %v7639
  %v7641 = vpop.f32.mrb[0].mxu0
  %v7642 = vadd.f32 %v6871, %v7641
  %v7643 = vpop.f32.mrb[0].mxu0
  %v7644 = vadd.f32 %v6873, %v7643
  %v7645 = vpop.f32.mrb[0].mxu0
  %v7646 = vadd.f32 %v6875, %v7645
  %7647 = vmatprep.mubr.bf16.mxu0 0
  %7648 = vmatmul.mubr.bf16.gmra.mrb[0].mxu0 %v2886
  %v7649 = vpop.f32.mrb[0].mxu0
  %v7650 = vadd.f32 %v6879, %v7649
  %v7651 = vpop.f32.mrb[0].mxu0
  %v7652 = vadd.f32 %v6881, %v7651
  %v7653 = vpop.f32.mrb[0].mxu0
  %v7654 = vadd.f32 %v6883, %v7653
  %v7655 = vpop.f32.mrb[0].mxu0
  %v7656 = vadd.f32 %v6885, %v7655
  %7657 = vmatprep.mubr.bf16.mxu0 0
  %7658 = vmatmul.mubr.bf16.gmra.mrb[0].mxu0 %v2889
  %v7659 = vpop.f32.mrb[0].mxu0
  %v7660 = vadd.f32 %v6889, %v7659
  %v7661 = vpop.f32.mrb[0].mxu0
  %v7662 = vadd.f32 %v6891, %v7661
  %v7663 = vpop.f32.mrb[0].mxu0
  %v7664 = vadd.f32 %v6893, %v7663
  %v7665 = vpop.f32.mrb[0].mxu0
  %v7666 = vadd.f32 %v6895, %v7665
  %7667 = vmatprep.mubr.bf16.mxu0 0
  %7668 = vmatmul.mubr.bf16.gmra.mrb[0].mxu0 %v2892
  %v7669 = vpop.f32.mrb[0].mxu0
  %v7670 = vadd.f32 %v6899, %v7669
  %v7671 = vpop.f32.mrb[0].mxu0
  %v7672 = vadd.f32 %v6901, %v7671
  %v7673 = vpop.f32.mrb[0].mxu0
  %v7674 = vadd.f32 %v6903, %v7673
  %v7675 = vpop.f32.mrb[0].mxu0
  %v7676 = vadd.f32 %v6905, %v7675
  %7677 = vmatprep.mubr.bf16.mxu0 0
  %7678 = vmatmul.mubr.bf16.gmra.mrb[0].mxu0 %v2895
  %v7679 = vpop.f32.mrb[0].mxu0
  %v7680 = vadd.f32 %v6909, %v7679
  %v7681 = vpop.f32.mrb[0].mxu0
  %v7682 = vadd.f32 %v6911, %v7681
  %v7683 = vpop.f32.mrb[0].mxu0
  %v7684 = vadd.f32 %v6913, %v7683
  %v7685 = vpop.f32.mrb[0].mxu0
  %v7686 = vadd.f32 %v6915, %v7685
  %7687 = vmatprep.mubr.bf16.mxu0 0
  %7688 = vmatmul.mubr.bf16.gmra.mrb[0].mxu0 %v2898
  %v7689 = vpop.f32.mrb[0].mxu0
  %v7690 = vadd.f32 %v6919, %v7689
  %v7691 = vpop.f32.mrb[0].mxu0
  %v7692 = vadd.f32 %v6921, %v7691
  %v7693 = vpop.f32.mrb[0].mxu0
  %v7694 = vadd.f32 %v6923, %v7693
  %v7695 = vpop.f32.mrb[0].mxu0
  %v7696 = vadd.f32 %v6925, %v7695
  %7697 = vmatprep.mubr.bf16.mxu0 0
  %7698 = vmatmul.mubr.bf16.gmra.mrb[0].mxu0 %v2901
  %v7699 = vpop.f32.mrb[0].mxu0
  %v7700 = vadd.f32 %v6929, %v7699
  %v7701 = vpop.f32.mrb[0].mxu0
  %v7702 = vadd.f32 %v6931, %v7701
  %v7703 = vpop.f32.mrb[0].mxu0
  %v7704 = vadd.f32 %v6933, %v7703
  %v7705 = vpop.f32.mrb[0].mxu0
  %v7706 = vadd.f32 %v6935, %v7705
  %7707 = vmatprep.mubr.bf16.mxu0 0
  %7708 = vmatmul.mubr.bf16.gmra.mrb[0].mxu0 %v2904
  %v7709 = vpop.f32.mrb[0].mxu0
  %v7710 = vadd.f32 %v6939, %v7709
  %v7711 = vpop.f32.mrb[0].mxu0
  %v7712 = vadd.f32 %v6941, %v7711
  %v7713 = vpop.f32.mrb[0].mxu0
  %v7714 = vadd.f32 %v6943, %v7713
  %v7715 = vpop.f32.mrb[0].mxu0
  %v7716 = vadd.f32 %v6945, %v7715
  %7717 = vmatprep.mubr.bf16.mxu0 0
  %7718 = vmatmul.mubr.bf16.gmra.mrb[0].mxu0 %v2907
  %v7719 = vpop.f32.mrb[0].mxu0
  %v7720 = vadd.f32 %v6949, %v7719
  %v7721 = vpop.f32.mrb[0].mxu0
  %v7722 = vadd.f32 %v6951, %v7721
  %v7723 = vpop.f32.mrb[0].mxu0
  %v7724 = vadd.f32 %v6953, %v7723
  %v7725 = vpop.f32.mrb[0].mxu0
  %v7726 = vadd.f32 %v6955, %v7725
  %7727 = vmatprep.mubr.bf16.mxu0 0
  %7728 = vmatmul.mubr.bf16.gmra.mrb[0].mxu0 %v2910
  %v7729 = vpop.f32.mrb[0].mxu0
  %v7730 = vadd.f32 %v6959, %v7729
  %v7731 = vpop.f32.mrb[0].mxu0
  %v7732 = vadd.f32 %v6961, %v7731
  %v7733 = vpop.f32.mrb[0].mxu0
  %v7734 = vadd.f32 %v6963, %v7733
  %v7735 = vpop.f32.mrb[0].mxu0
  %v7736 = vadd.f32 %v6965, %v7735
  %7737 = vmatprep.mubr.bf16.mxu0 0
  %7738 = vmatmul.mubr.bf16.gmra.mrb[0].mxu0 %v2913
  %v7739 = vpop.f32.mrb[0].mxu0
  %v7740 = vadd.f32 %v6969, %v7739
  %v7741 = vpop.f32.mrb[0].mxu0
  %v7742 = vadd.f32 %v6971, %v7741
  %v7743 = vpop.f32.mrb[0].mxu0
  %v7744 = vadd.f32 %v6973, %v7743
  %v7745 = vpop.f32.mrb[0].mxu0
  %v7746 = vadd.f32 %v6975, %v7745
  %7747 = vmatprep.mubr.bf16.mxu0 0
  %7748 = vmatmul.mubr.bf16.gmra.mrb[0].mxu0 %v2916
  %v7749 = vpop.f32.mrb[0].mxu0
  %v7750 = vadd.f32 %v6979, %v7749
  %v7751 = vpop.f32.mrb[0].mxu0
  %v7752 = vadd.f32 %v6981, %v7751
  %v7753 = vpop.f32.mrb[0].mxu0
  %v7754 = vadd.f32 %v6983, %v7753
  %v7755 = vpop.f32.mrb[0].mxu0
  %v7756 = vadd.f32 %v6985, %v7755
  %7757 = vmatprep.mubr.bf16.mxu0 0
  %7758 = vmatmul.mubr.bf16.gmra.mrb[0].mxu0 %v2919
  %v7759 = vpop.f32.mrb[0].mxu0
  %v7760 = vadd.f32 %v6989, %v7759
  %v7761 = vpop.f32.mrb[0].mxu0
  %v7762 = vadd.f32 %v6991, %v7761
  %v7763 = vpop.f32.mrb[0].mxu0
  %v7764 = vadd.f32 %v6993, %v7763
  %v7765 = vpop.f32.mrb[0].mxu0
  %v7766 = vadd.f32 %v6995, %v7765
  %7767 = vmatprep.mubr.bf16.mxu0 0
  %7768 = vmatmul.mubr.bf16.gmra.mrb[0].mxu0 %v2922
  %v7769 = vpop.f32.mrb[0].mxu0
  %v7770 = vadd.f32 %v6999, %v7769
  %v7771 = vpop.f32.mrb[0].mxu0
  %v7772 = vadd.f32 %v7001, %v7771
  %v7773 = vpop.f32.mrb[0].mxu0
  %v7774 = vadd.f32 %v7003, %v7773
  %v7775 = vpop.f32.mrb[0].mxu0
  %v7776 = vadd.f32 %v7005, %v7775
  %7777 = vmatprep.mubr.bf16.mxu0 0
  %7778 = vmatmul.mubr.bf16.gmra.mrb[0].mxu0 %v2925
  %v7779 = vpop.f32.mrb[0].mxu0
  %v7780 = vadd.f32 %v7009, %v7779
  %v7781 = vpop.f32.mrb[0].mxu0
  %v7782 = vadd.f32 %v7011, %v7781
  %v7783 = vpop.f32.mrb[0].mxu0
  %v7784 = vadd.f32 %v7013, %v7783
  %v7785 = vpop.f32.mrb[0].mxu0
  %v7786 = vadd.f32 %v7015, %v7785
  %7787 = vmatprep.mubr.bf16.mxu0 0
  %7788 = vmatmul.mubr.bf16.gmra.mrb[0].mxu0 %v2928
  %v7789 = vpop.f32.mrb[0].mxu0
  %v7790 = vadd.f32 %v7019, %v7789
  %v7791 = vpop.f32.mrb[0].mxu0
  %v7792 = vadd.f32 %v7021, %v7791
  %v7793 = vpop.f32.mrb[0].mxu0
  %v7794 = vadd.f32 %v7023, %v7793
  %v7795 = vpop.f32.mrb[0].mxu0
  %v7796 = vadd.f32 %v7025, %v7795
  %7797 = vmatprep.mubr.bf16.mxu0 0
  %7798 = vmatmul.mubr.bf16.gmra.mrb[0].mxu0 %v2931
  %v7799 = vpop.f32.mrb[0].mxu0
  %v7800 = vadd.f32 %v7029, %v7799
  %v7801 = vpop.f32.mrb[0].mxu0
  %v7802 = vadd.f32 %v7031, %v7801
  %v7803 = vpop.f32.mrb[0].mxu0
  %v7804 = vadd.f32 %v7033, %v7803
  %v7805 = vpop.f32.mrb[0].mxu0
  %v7806 = vadd.f32 %v7035, %v7805
  %7807 = vmatprep.mubr.bf16.mxu0 0
  %7808 = vmatmul.mubr.bf16.gmra.mrb[0].mxu0 %v2934
  %v7809 = vpop.f32.mrb[0].mxu0
  %v7810 = vadd.f32 %v7039, %v7809
  %v7811 = vpop.f32.mrb[0].mxu0
  %v7812 = vadd.f32 %v7041, %v7811
  %v7813 = vpop.f32.mrb[0].mxu0
  %v7814 = vadd.f32 %v7043, %v7813
  %v7815 = vpop.f32.mrb[0].mxu0
  %v7816 = vadd.f32 %v7045, %v7815
  %7817 = vmatprep.mubr.bf16.mxu0 0
  %7818 = vmatmul.mubr.bf16.gmra.mrb[0].mxu0 %v2937
  %v7819 = vpop.f32.mrb[0].mxu0
  %v7820 = vadd.f32 %v7049, %v7819
  %v7821 = vpop.f32.mrb[0].mxu0
  %v7822 = vadd.f32 %v7051, %v7821
  %v7823 = vpop.f32.mrb[0].mxu0
  %v7824 = vadd.f32 %v7053, %v7823
  %v7825 = vpop.f32.mrb[0].mxu0
  %v7826 = vadd.f32 %v7055, %v7825
  %7827 = vmatprep.mubr.bf16.mxu0 0
  %7828 = vmatmul.mubr.bf16.gmra.mrb[0].mxu0 %v2940
  %v7829 = vpop.f32.mrb[0].mxu0
  %v7830 = vadd.f32 %v7059, %v7829
  %v7831 = vpop.f32.mrb[0].mxu0
  %v7832 = vadd.f32 %v7061, %v7831
  %v7833 = vpop.f32.mrb[0].mxu0
  %v7834 = vadd.f32 %v7063, %v7833
  %v7835 = vpop.f32.mrb[0].mxu0
  %v7836 = vadd.f32 %v7065, %v7835
  %7837 = vmatprep.mubr.bf16.mxu0 0
  %7838 = vmatmul.mubr.bf16.gmra.mrb[0].mxu0 %v2943
  %v7839 = vpop.f32.mrb[0].mxu0
  %v7840 = vadd.f32 %v7069, %v7839
  %v7841 = vpop.f32.mrb[0].mxu0
  %v7842 = vadd.f32 %v7071, %v7841
  %v7843 = vpop.f32.mrb[0].mxu0
  %v7844 = vadd.f32 %v7073, %v7843
  %v7845 = vpop.f32.mrb[0].mxu0
  %v7846 = vadd.f32 %v7075, %v7845
  %7847 = vmatprep.mubr.bf16.mxu0 0
  %7848 = vmatmul.mubr.bf16.gmra.mrb[0].mxu0 %v2946
  %v7849 = vpop.f32.mrb[0].mxu0
  %v7850 = vadd.f32 %v7079, %v7849
  %v7851 = vpop.f32.mrb[0].mxu0
  %v7852 = vadd.f32 %v7081, %v7851
  %v7853 = vpop.f32.mrb[0].mxu0
  %v7854 = vadd.f32 %v7083, %v7853
  %v7855 = vpop.f32.mrb[0].mxu0
  %v7856 = vadd.f32 %v7085, %v7855
  %7857 = vmatprep.mubr.bf16.mxu0 0
  %7858 = vmatmul.mubr.bf16.gmra.mrb[0].mxu0 %v2949
  %v7859 = vpop.f32.mrb[0].mxu0
  %v7860 = vadd.f32 %v7089, %v7859
  %v7861 = vpop.f32.mrb[0].mxu0
  %v7862 = vadd.f32 %v7091, %v7861
  %v7863 = vpop.f32.mrb[0].mxu0
  %v7864 = vadd.f32 %v7093, %v7863
  %v7865 = vpop.f32.mrb[0].mxu0
  %v7866 = vadd.f32 %v7095, %v7865
  %7867 = vmatprep.mubr.bf16.mxu0 0
  %7868 = vmatmul.mubr.bf16.gmra.mrb[0].mxu0 %v2952
  %v7869 = vpop.f32.mrb[0].mxu0
  %v7870 = vadd.f32 %v7099, %v7869
  %v7871 = vpop.f32.mrb[0].mxu0
  %v7872 = vadd.f32 %v7101, %v7871
  %v7873 = vpop.f32.mrb[0].mxu0
  %v7874 = vadd.f32 %v7103, %v7873
  %v7875 = vpop.f32.mrb[0].mxu0
  %v7876 = vadd.f32 %v7105, %v7875
  %7877 = vmatprep.mubr.bf16.mxu0 0
  %7878 = vmatmul.mubr.bf16.gmra.mrb[0].mxu0 %v2955
  %v7879 = vpop.f32.mrb[0].mxu0
  %v7880 = vadd.f32 %v7109, %v7879
  %v7881 = vpop.f32.mrb[0].mxu0
  %v7882 = vadd.f32 %v7111, %v7881
  %v7883 = vpop.f32.mrb[0].mxu0
  %v7884 = vadd.f32 %v7113, %v7883
  %v7885 = vpop.f32.mrb[0].mxu0
  %v7886 = vadd.f32 %v7115, %v7885
  %7887 = vmatprep.mubr.bf16.mxu0 0
  %7888 = vmatmul.mubr.bf16.gmra.mrb[0].mxu0 %v2958
  %v7889 = vpop.f32.mrb[0].mxu0
  %v7890 = vadd.f32 %v7119, %v7889
  %v7891 = vpop.f32.mrb[0].mxu0
  %v7892 = vadd.f32 %v7121, %v7891
  %v7893 = vpop.f32.mrb[0].mxu0
  %v7894 = vadd.f32 %v7123, %v7893
  %v7895 = vpop.f32.mrb[0].mxu0
  %v7896 = vadd.f32 %v7125, %v7895
  %7897 = vmatprep.mubr.bf16.mxu0 0
  %7898 = vmatmul.mubr.bf16.gmra.mrb[0].mxu0 %v2961
  %v7899 = vpop.f32.mrb[0].mxu0
  %v7900 = vadd.f32 %v7129, %v7899
  %v7901 = vpop.f32.mrb[0].mxu0
  %v7902 = vadd.f32 %v7131, %v7901
  %v7903 = vpop.f32.mrb[0].mxu0
  %v7904 = vadd.f32 %v7133, %v7903
  %v7905 = vpop.f32.mrb[0].mxu0
  %v7906 = vadd.f32 %v7135, %v7905
  %7907 = vmatprep.mubr.bf16.mxu0 0
  %7908 = vmatmul.mubr.bf16.gmra.mrb[0].mxu0 %v2964
  %v7909 = vpop.f32.mrb[0].mxu0
  %v7910 = vadd.f32 %v7139, %v7909
  %v7911 = vpop.f32.mrb[0].mxu0
  %v7912 = vadd.f32 %v7141, %v7911
  %v7913 = vpop.f32.mrb[0].mxu0
  %v7914 = vadd.f32 %v7143, %v7913
  %v7915 = vpop.f32.mrb[0].mxu0
  %v7916 = vadd.f32 %v7145, %v7915
  %7917 = vmatprep.mubr.bf16.mxu0 0
  %7918 = vmatmul.mubr.bf16.gmra.mrb[0].mxu0 %v2967
  %v7919 = vpop.f32.mrb[0].mxu0
  %v7920 = vadd.f32 %v7149, %v7919
  %v7921 = vpop.f32.mrb[0].mxu0
  %v7922 = vadd.f32 %v7151, %v7921
  %v7923 = vpop.f32.mrb[0].mxu0
  %v7924 = vadd.f32 %v7153, %v7923
  %v7925 = vpop.f32.mrb[0].mxu0
  %v7926 = vadd.f32 %v7155, %v7925
  %7927 = vmatprep.mubr.bf16.mxu0 0
  %7928 = vmatmul.mubr.bf16.gmra.mrb[0].mxu0 %v2970
  %v7929 = vpop.f32.mrb[0].mxu0
  %v7930 = vadd.f32 %v7159, %v7929
  %v7931 = vpop.f32.mrb[0].mxu0
  %v7932 = vadd.f32 %v7161, %v7931
  %v7933 = vpop.f32.mrb[0].mxu0
  %v7934 = vadd.f32 %v7163, %v7933
  %v7935 = vpop.f32.mrb[0].mxu0
  %v7936 = vadd.f32 %v7165, %v7935
  %7937 = vmatprep.mubr.bf16.mxu0 0
  %7938 = vmatmul.mubr.bf16.gmra.mrb[0].mxu0 %v2973
  %v7939 = vpop.f32.mrb[0].mxu0
  %v7940 = vadd.f32 %v7169, %v7939
  %v7941 = vpop.f32.mrb[0].mxu0
  %v7942 = vadd.f32 %v7171, %v7941
  %v7943 = vpop.f32.mrb[0].mxu0
  %v7944 = vadd.f32 %v7173, %v7943
  %v7945 = vpop.f32.mrb[0].mxu0
  %v7946 = vadd.f32 %v7175, %v7945
  %7947 = vmatprep.mubr.bf16.mxu0 0
  %7948 = vmatmul.mubr.bf16.gmra.mrb[0].mxu0 %v2976
  %v7949 = vpop.f32.mrb[0].mxu0
  %v7950 = vadd.f32 %v7179, %v7949
  %v7951 = vpop.f32.mrb[0].mxu0
  %v7952 = vadd.f32 %v7181, %v7951
  %v7953 = vpop.f32.mrb[0].mxu0
  %v7954 = vadd.f32 %v7183, %v7953
  %v7955 = vpop.f32.mrb[0].mxu0
  %v7956 = vadd.f32 %v7185, %v7955
  %7957 = vmatprep.mubr.bf16.mxu0 0
  %7958 = vmatmul.mubr.bf16.gmra.mrb[0].mxu0 %v2979
  %v7959 = vpop.f32.mrb[0].mxu0
  %v7960 = vadd.f32 %v7189, %v7959
  %v7961 = vpop.f32.mrb[0].mxu0
  %v7962 = vadd.f32 %v7191, %v7961
  %v7963 = vpop.f32.mrb[0].mxu0
  %v7964 = vadd.f32 %v7193, %v7963
  %v7965 = vpop.f32.mrb[0].mxu0
  %v7966 = vadd.f32 %v7195, %v7965
  %7967 = vmatprep.mubr.bf16.mxu0 0
  %7968 = vmatmul.mubr.bf16.gmra.mrb[0].mxu0 %v2982
  %v7969 = vpop.f32.mrb[0].mxu0
  %v7970 = vadd.f32 %v7199, %v7969
  %v7971 = vpop.f32.mrb[0].mxu0
  %v7972 = vadd.f32 %v7201, %v7971
  %v7973 = vpop.f32.mrb[0].mxu0
  %v7974 = vadd.f32 %v7203, %v7973
  %v7975 = vpop.f32.mrb[0].mxu0
  %v7976 = vadd.f32 %v7205, %v7975
  %7977 = vmatprep.mubr.bf16.mxu0 0
  %7978 = vmatmul.mubr.bf16.gmra.mrb[0].mxu0 %v2985
  %v7979 = vpop.f32.mrb[0].mxu0
  %v7980 = vadd.f32 %v7209, %v7979
  %v7981 = vpop.f32.mrb[0].mxu0
  %v7982 = vadd.f32 %v7211, %v7981
  %v7983 = vpop.f32.mrb[0].mxu0
  %v7984 = vadd.f32 %v7213, %v7983
  %v7985 = vpop.f32.mrb[0].mxu0
  %v7986 = vadd.f32 %v7215, %v7985
  %7987 = vmatprep.mubr.bf16.mxu0 0
  %7988 = vmatmul.mubr.bf16.gmra.mrb[0].mxu0 %v2988
  %v7989 = vpop.f32.mrb[0].mxu0
  %v7990 = vadd.f32 %v7219, %v7989
  %v7991 = vpop.f32.mrb[0].mxu0
  %v7992 = vadd.f32 %v7221, %v7991
  %v7993 = vpop.f32.mrb[0].mxu0
  %v7994 = vadd.f32 %v7223, %v7993
  %v7995 = vpop.f32.mrb[0].mxu0
  %v7996 = vadd.f32 %v7225, %v7995
  %7997 = vmatprep.mubr.bf16.mxu0 0
  %7998 = vmatmul.mubr.bf16.gmra.mrb[0].mxu0 %v2991
  %v7999 = vpop.f32.mrb[0].mxu0
  %v8000 = vadd.f32 %v7229, %v7999
  %v8001 = vpop.f32.mrb[0].mxu0
  %v8002 = vadd.f32 %v7231, %v8001
  %v8003 = vpop.f32.mrb[0].mxu0
  %v8004 = vadd.f32 %v7233, %v8003
  %v8005 = vpop.f32.mrb[0].mxu0
  %v8006 = vadd.f32 %v7235, %v8005
  %8007 = vmatprep.mubr.bf16.mxu0 0
  %8008 = vmatmul.mubr.bf16.gmra.mrb[0].mxu0 %v2994
  %v8009 = vpop.f32.mrb[0].mxu0
  %v8010 = vadd.f32 %v7239, %v8009
  %v8011 = vpop.f32.mrb[0].mxu0
  %v8012 = vadd.f32 %v7241, %v8011
  %v8013 = vpop.f32.mrb[0].mxu0
  %v8014 = vadd.f32 %v7243, %v8013
  %v8015 = vpop.f32.mrb[0].mxu0
  %v8016 = vadd.f32 %v7245, %v8015
  %8017 = vmatprep.mubr.bf16.mxu0 0
  %8018 = vmatmul.mubr.bf16.gmra.mrb[0].mxu0 %v2997
  %v8019 = vpop.f32.mrb[0].mxu0
  %v8020 = vadd.f32 %v7249, %v8019
  %v8021 = vpop.f32.mrb[0].mxu0
  %v8022 = vadd.f32 %v7251, %v8021
  %v8023 = vpop.f32.mrb[0].mxu0
  %v8024 = vadd.f32 %v7253, %v8023
  %v8025 = vpop.f32.mrb[0].mxu0
  %v8026 = vadd.f32 %v7255, %v8025
  %8027 = vmatprep.mubr.bf16.mxu0 0
  %8028 = vmatmul.mubr.bf16.gmra.mrb[0].mxu0 %v3000
  %v8029 = vpop.f32.mrb[0].mxu0
  %v8030 = vadd.f32 %v7259, %v8029
  %v8031 = vpop.f32.mrb[0].mxu0
  %v8032 = vadd.f32 %v7261, %v8031
  %v8033 = vpop.f32.mrb[0].mxu0
  %v8034 = vadd.f32 %v7263, %v8033
  %v8035 = vpop.f32.mrb[0].mxu0
  %v8036 = vadd.f32 %v7265, %v8035
  %8037 = vmatprep.mubr.bf16.mxu0 0
  %8038 = vmatmul.mubr.bf16.gmra.mrb[0].mxu0 %v3003
  %v8039 = vpop.f32.mrb[0].mxu0
  %v8040 = vadd.f32 %v7269, %v8039
  %v8041 = vpop.f32.mrb[0].mxu0
  %v8042 = vadd.f32 %v7271, %v8041
  %v8043 = vpop.f32.mrb[0].mxu0
  %v8044 = vadd.f32 %v7273, %v8043
  %v8045 = vpop.f32.mrb[0].mxu0
  %v8046 = vadd.f32 %v7275, %v8045
  %8047 = vmatprep.mubr.bf16.mxu0 0
  %8048 = vmatmul.mubr.bf16.gmra.mrb[0].mxu0 %v3006
  %v8049 = vpop.f32.mrb[0].mxu0
  %v8050 = vadd.f32 %v7279, %v8049
  %v8051 = vpop.f32.mrb[0].mxu0
  %v8052 = vadd.f32 %v7281, %v8051
  %v8053 = vpop.f32.mrb[0].mxu0
  %v8054 = vadd.f32 %v7283, %v8053
  %v8055 = vpop.f32.mrb[0].mxu0
  %v8056 = vadd.f32 %v7285, %v8055
  %8057 = vmatprep.mubr.bf16.mxu0 0
  %8058 = vmatmul.mubr.bf16.gmra.mrb[0].mxu0 %v3009
  %v8059 = vpop.f32.mrb[0].mxu0
  %v8060 = vadd.f32 %v7289, %v8059
  %v8061 = vpop.f32.mrb[0].mxu0
  %v8062 = vadd.f32 %v7291, %v8061
  %v8063 = vpop.f32.mrb[0].mxu0
  %v8064 = vadd.f32 %v7293, %v8063
  %v8065 = vpop.f32.mrb[0].mxu0
  %v8066 = vadd.f32 %v7295, %v8065
  %8067 = vmatprep.mubr.bf16.mxu0 0
  %8068 = vmatmul.mubr.bf16.gmra.mrb[0].mxu0 %v3012
  %v8069 = vpop.f32.mrb[0].mxu0
  %v8070 = vadd.f32 %v7299, %v8069
  %v8071 = vpop.f32.mrb[0].mxu0
  %v8072 = vadd.f32 %v7301, %v8071
  %v8073 = vpop.f32.mrb[0].mxu0
  %v8074 = vadd.f32 %v7303, %v8073
  %v8075 = vpop.f32.mrb[0].mxu0
  %v8076 = vadd.f32 %v7305, %v8075
  %8077 = vmatprep.mubr.bf16.mxu0 0
  %8078 = vmatmul.mubr.bf16.gmra.mrb[0].mxu0 %v3015
  %v8079 = vpop.f32.mrb[0].mxu0
  %v8080 = vadd.f32 %v7309, %v8079
  %v8081 = vpop.f32.mrb[0].mxu0
  %v8082 = vadd.f32 %v7311, %v8081
  %v8083 = vpop.f32.mrb[0].mxu0
  %v8084 = vadd.f32 %v7313, %v8083
  %v8085 = vpop.f32.mrb[0].mxu0
  %v8086 = vadd.f32 %v7315, %v8085
  %8087 = vmatprep.mubr.bf16.mxu0 0
  %8088 = vmatmul.mubr.bf16.gmra.mrb[0].mxu0 %v3018
  %v8089 = vpop.f32.mrb[0].mxu0
  %v8090 = vadd.f32 %v7319, %v8089
  %v8091 = vpop.f32.mrb[0].mxu0
  %v8092 = vadd.f32 %v7321, %v8091
  %v8093 = vpop.f32.mrb[0].mxu0
  %v8094 = vadd.f32 %v7323, %v8093
  %v8095 = vpop.f32.mrb[0].mxu0
  %v8096 = vadd.f32 %v7325, %v8095
  %8097 = vmatprep.mubr.bf16.mxu0 0
  %8098 = vmatmul.mubr.bf16.gmra.mrb[0].mxu0 %v3021
  %v8099 = vpop.f32.mrb[0].mxu0
  %v8100 = vadd.f32 %v7329, %v8099
  %v8101 = vpop.f32.mrb[0].mxu0
  %v8102 = vadd.f32 %v7331, %v8101
  %v8103 = vpop.f32.mrb[0].mxu0
  %v8104 = vadd.f32 %v7333, %v8103
  %v8105 = vpop.f32.mrb[0].mxu0
  %v8106 = vadd.f32 %v7335, %v8105
  %8107 = vmatprep.mubr.bf16.mxu0 0
  %8108 = vmatmul.mubr.bf16.gmra.mrb[0].mxu0 %v3024
  %v8109 = vpop.f32.mrb[0].mxu0
  %v8110 = vadd.f32 %v7339, %v8109
  %v8111 = vpop.f32.mrb[0].mxu0
  %v8112 = vadd.f32 %v7341, %v8111
  %v8113 = vpop.f32.mrb[0].mxu0
  %v8114 = vadd.f32 %v7343, %v8113
  %v8115 = vpop.f32.mrb[0].mxu0
  %v8116 = vadd.f32 %v7345, %v8115
  %8117 = vmatprep.mubr.bf16.mxu0 0
  %8118 = vmatmul.mubr.bf16.gmra.mrb[0].mxu0 %v3027
  %v8119 = vpop.f32.mrb[0].mxu0
  %v8120 = vadd.f32 %v7349, %v8119
  %v8121 = vpop.f32.mrb[0].mxu0
  %v8122 = vadd.f32 %v7351, %v8121
  %v8123 = vpop.f32.mrb[0].mxu0
  %v8124 = vadd.f32 %v7353, %v8123
  %v8125 = vpop.f32.mrb[0].mxu0
  %v8126 = vadd.f32 %v7355, %v8125
  %8127 = vmatprep.mubr.bf16.mxu0 0
  %8128 = vmatmul.mubr.bf16.gmra.mrb[0].mxu0 %v3030
  %v8129 = vpop.f32.mrb[0].mxu0
  %v8130 = vadd.f32 %v7359, %v8129
  %v8131 = vpop.f32.mrb[0].mxu0
  %v8132 = vadd.f32 %v7361, %v8131
  %v8133 = vpop.f32.mrb[0].mxu0
  %v8134 = vadd.f32 %v7363, %v8133
  %v8135 = vpop.f32.mrb[0].mxu0
  %v8136 = vadd.f32 %v7365, %v8135
  %8137 = vmatprep.mubr.bf16.mxu0 0
  %8138 = vmatmul.mubr.bf16.gmra.mrb[0].mxu0 %v3033
  %v8139 = vpop.f32.mrb[0].mxu0
  %v8140 = vadd.f32 %v7369, %v8139
  %v8141 = vpop.f32.mrb[0].mxu0
  %v8142 = vadd.f32 %v7371, %v8141
  %v8143 = vpop.f32.mrb[0].mxu0
  %v8144 = vadd.f32 %v7373, %v8143
  %v8145 = vpop.f32.mrb[0].mxu0
  %v8146 = vadd.f32 %v7375, %v8145
  %8147 = vmatprep.mubr.bf16.mxu0 0
  %8148 = vmatmul.mubr.bf16.gmra.mrb[0].mxu0 %v3036
  %v8149 = vpop.f32.mrb[0].mxu0
  %v8150 = vadd.f32 %v7379, %v8149
  %v8151 = vpop.f32.mrb[0].mxu0
  %v8152 = vadd.f32 %v7381, %v8151
  %v8153 = vpop.f32.mrb[0].mxu0
  %v8154 = vadd.f32 %v7383, %v8153
  %v8155 = vpop.f32.mrb[0].mxu0
  %v8156 = vadd.f32 %v7385, %v8155
  %8157 = vmatprep.mubr.bf16.mxu0 0
  %8158 = vmatmul.mubr.bf16.gmra.mrb[0].mxu0 %v3039
  %v8159 = vpop.f32.mrb[0].mxu0
  %v8160 = vadd.f32 %v7389, %v8159
  %v8161 = vpop.f32.mrb[0].mxu0
  %v8162 = vadd.f32 %v7391, %v8161
  %v8163 = vpop.f32.mrb[0].mxu0
  %v8164 = vadd.f32 %v7393, %v8163
  %v8165 = vpop.f32.mrb[0].mxu0
  %v8166 = vadd.f32 %v7395, %v8165
  %8167 = vmatprep.mubr.bf16.mxu0 0
  %8168 = vmatmul.mubr.bf16.gmra.mrb[0].mxu0 %v3042
  %v8169 = vpop.f32.mrb[0].mxu0
  %v8170 = vpop.f32.mrb[0].mxu0
  %v8171 = vadd.f32 %v7400, %v8170
  %v8172 = vpop.f32.mrb[0].mxu0
  %v8173 = vpop.f32.mrb[0].mxu0
  %v8174 = vadd.f32 %v7403, %v8173
  %8175 = vmatprep.mubr.bf16.mxu0 0
  %8176 = vmatmul.mubr.bf16.gmra.mrb[0].mxu0 %v3045
  %v8177 = vpop.f32.mrb[0].mxu0
  %v8178 = vpop.f32.mrb[0].mxu0
  %v8179 = vadd.f32 %v7408, %v8178
  %v8180 = vpop.f32.mrb[0].mxu0
  %v8181 = vpop.f32.mrb[0].mxu0
  %v8182 = vadd.f32 %v7411, %v8181
  %8183 = vmatprep.mubr.bf16.mxu0 0
  %8184 = vmatmul.mubr.bf16.gmra.mrb[0].mxu0 %v3048
  %v8185 = vpop.f32.mrb[0].mxu0
  %v8186 = vpop.f32.mrb[0].mxu0
  %v8187 = vadd.f32 %v7416, %v8186
  %v8188 = vpop.f32.mrb[0].mxu0
  %v8189 = vpop.f32.mrb[0].mxu0
  %v8190 = vadd.f32 %v7419, %v8189
  %8191 = vdwg.mxu0
  %v8192 = vadd.f32 %v7456, %v7482
  %v8193 = vadd.f32 %v7459, %v7486
  %v8194 = vadd.f32 %v7464, %v7492
  %v8195 = vadd.f32 %v7467, %v7496
  %v8196 = vadd.f32 %v7472, %v7502
  %v8197 = vadd.f32 %v7475, %v7506
  %v8198 = vadd.f32 %v7480, %v7512
  %v8199 = vadd.f32 %v7484, %v7516
  %v8200 = vadd.f32 %v7490, %v7522
  %v8201 = vadd.f32 %v7494, %v7526
  %v8202 = vadd.f32 %v7500, %v7532
  %v8203 = vadd.f32 %v7504, %v7536
  %v8204 = vadd.f32 %v7510, %v7542
  %v8205 = vadd.f32 %v7514, %v7546
  %v8206 = vadd.f32 %v7520, %v7552
  %v8207 = vadd.f32 %v7524, %v7556
  %v8208 = vadd.f32 %v7530, %v7562
  %v8209 = vadd.f32 %v7534, %v7566
  %v8210 = vadd.f32 %v7540, %v7572
  %v8211 = vadd.f32 %v7544, %v7576
  %v8212 = vadd.f32 %v7550, %v7582
  %v8213 = vadd.f32 %v7554, %v7586
  %v8214 = vadd.f32 %v7560, %v7592
  %v8215 = vadd.f32 %v7564, %v7596
  %v8216 = vadd.f32 %v7570, %v7602
  %v8217 = vadd.f32 %v7574, %v7606
  %v8218 = vadd.f32 %v7580, %v7612
  %v8219 = vadd.f32 %v7584, %v7616
  %v8220 = vadd.f32 %v7590, %v7622
  %v8221 = vadd.f32 %v7594, %v7626
  %v8222 = vadd.f32 %v7600, %v7632
  %v8223 = vadd.f32 %v7604, %v7636
  %v8224 = vadd.f32 %v7610, %v7642
  %v8225 = vadd.f32 %v7614, %v7646
  %v8226 = vadd.f32 %v7620, %v7652
  %v8227 = vadd.f32 %v7624, %v7656
  %v8228 = vadd.f32 %v7630, %v7662
  %v8229 = vadd.f32 %v7634, %v7666
  %v8230 = vadd.f32 %v7640, %v7672
  %v8231 = vadd.f32 %v7644, %v7676
  %v8232 = vadd.f32 %v7650, %v7682
  %v8233 = vadd.f32 %v7654, %v7686
  %v8234 = vadd.f32 %v7660, %v7692
  %v8235 = vadd.f32 %v7664, %v7696
  %v8236 = vadd.f32 %v7670, %v7702
  %v8237 = vadd.f32 %v7674, %v7706
  %v8238 = vadd.f32 %v7680, %v7712
  %v8239 = vadd.f32 %v7684, %v7716
  %v8240 = vadd.f32 %v7690, %v7722
  %v8241 = vadd.f32 %v7694, %v7726
  %v8242 = vadd.f32 %v7700, %v7732
  %v8243 = vadd.f32 %v7704, %v7736
  %v8244 = vadd.f32 %v7710, %v7742
  %v8245 = vadd.f32 %v7714, %v7746
  %v8246 = vadd.f32 %v7720, %v7752
  %v8247 = vadd.f32 %v7724, %v7756
  %v8248 = vadd.f32 %v7730, %v7762
  %v8249 = vadd.f32 %v7734, %v7766
  %v8250 = vadd.f32 %v7740, %v7772
  %v8251 = vadd.f32 %v7744, %v7776
  %v8252 = vadd.f32 %v7750, %v7782
  %v8253 = vadd.f32 %v7754, %v7786
  %v8254 = vadd.f32 %v7760, %v7792
  %v8255 = vadd.f32 %v7764, %v7796
  %v8256 = vadd.f32 %v7770, %v7802
  %v8257 = vadd.f32 %v7774, %v7806
  %v8258 = vadd.f32 %v7780, %v7812
  %v8259 = vadd.f32 %v7784, %v7816
  %v8260 = vadd.f32 %v7790, %v7822
  %v8261 = vadd.f32 %v7794, %v7826
  %v8262 = vadd.f32 %v7800, %v7832
  %v8263 = vadd.f32 %v7804, %v7836
  %v8264 = vadd.f32 %v7810, %v7842
  %v8265 = vadd.f32 %v7814, %v7846
  %v8266 = vadd.f32 %v7820, %v7852
  %v8267 = vadd.f32 %v7824, %v7856
  %v8268 = vadd.f32 %v7830, %v7862
  %v8269 = vadd.f32 %v7834, %v7866
  %v8270 = vadd.f32 %v7840, %v7872
  %v8271 = vadd.f32 %v7844, %v7876
  %v8272 = vadd.f32 %v7850, %v7882
  %v8273 = vadd.f32 %v7854, %v7886
  %v8274 = vadd.f32 %v7860, %v7892
  %v8275 = vadd.f32 %v7864, %v7896
  %v8276 = vadd.f32 %v7870, %v7902
  %v8277 = vadd.f32 %v7874, %v7906
  %v8278 = vadd.f32 %v7880, %v7912
  %v8279 = vadd.f32 %v7884, %v7916
  %v8280 = vadd.f32 %v7890, %v7922
  %v8281 = vadd.f32 %v7894, %v7926
  %v8282 = vadd.f32 %v7900, %v7932
  %v8283 = vadd.f32 %v7904, %v7936
  %v8284 = vadd.f32 %v7910, %v7942
  %v8285 = vadd.f32 %v7914, %v7946
  %v8286 = vadd.f32 %v7920, %v7952
  %v8287 = vadd.f32 %v7924, %v7956
  %v8288 = vadd.f32 %v7930, %v7962
  %v8289 = vadd.f32 %v7934, %v7966
  %v8290 = vadd.f32 %v7940, %v7972
  %v8291 = vadd.f32 %v7944, %v7976
  %v8292 = vadd.f32 %v7950, %v7982
  %v8293 = vadd.f32 %v7954, %v7986
  %v8294 = vadd.f32 %v7960, %v7992
  %v8295 = vadd.f32 %v7964, %v7996
  %v8296 = vadd.f32 %v7970, %v8002
  %v8297 = vadd.f32 %v7974, %v8006
  %v8298 = vadd.f32 %v7980, %v8012
  %v8299 = vadd.f32 %v7984, %v8016
  %v8300 = vadd.f32 %v7990, %v8022
  %v8301 = vadd.f32 %v7994, %v8026
  %v8302 = vadd.f32 %v8000, %v8032
  %v8303 = vadd.f32 %v8004, %v8036
  %v8304 = vadd.f32 %v8010, %v8042
  %v8305 = vadd.f32 %v8014, %v8046
  %v8306 = vadd.f32 %v8020, %v8052
  %v8307 = vadd.f32 %v8024, %v8056
  %v8308 = vadd.f32 %v8030, %v8062
  %v8309 = vadd.f32 %v8034, %v8066
  %v8310 = vadd.f32 %v8040, %v8072
  %v8311 = vadd.f32 %v8044, %v8076
  %v8312 = vadd.f32 %v8050, %v8082
  %v8313 = vadd.f32 %v8054, %v8086
  %v8314 = vadd.f32 %v8060, %v8092
  %v8315 = vadd.f32 %v8064, %v8096
  %v8316 = vadd.f32 %v8070, %v8102
  %v8317 = vadd.f32 %v8074, %v8106
  %v8318 = vadd.f32 %v8080, %v8112
  %v8319 = vadd.f32 %v8084, %v8116
  %v8320 = vadd.f32 %v8090, %v8122
  %v8321 = vadd.f32 %v8094, %v8126
  %v8322 = vadd.f32 %v8100, %v8132
  %v8323 = vadd.f32 %v8104, %v8136
  %v8324 = vadd.f32 %v8110, %v8142
  %v8325 = vadd.f32 %v8114, %v8146
  %v8326 = vadd.f32 %v8120, %v8152
  %v8327 = vadd.f32 %v8124, %v8156
  %v8328 = vadd.f32 %v8130, %v8162
  %v8329 = vadd.f32 %v8134, %v8166
  %v8330 = vadd.f32 %v8140, %v8171
  %v8331 = vadd.f32 %v8144, %v8174
  %v8332 = vadd.f32 %v8150, %v8179
  %v8333 = vadd.f32 %v8154, %v8182
  %v8334 = vadd.f32 %v8160, %v8187
  %v8335 = vadd.f32 %v8164, %v8190
  %v8336 = vlaneseq
  %v8337 = vshrl.u32 %v8336, 7
  %v8338 = vadd.s32 %v8337, 8
  %v8339 = vadd.s32 %v8337, 16
  %v8340 = vadd.s32 %v8337, 24
  %v8341 = vadd.s32 %v8337, 32
  %v8342 = vadd.s32 %v8337, 40
  %v8343 = vadd.s32 %v8337, 48
  %v8344 = vadd.s32 %v8337, 56
  %v8345 = vadd.s32 %v8337, 64
  %v8346 = vadd.s32 %v8337, 72
  %v8347 = vadd.s32 %v8337, 80
  %v8348 = vadd.s32 %v8337, 88
  %v8349 = vadd.s32 %v8337, 96
  %v8350 = vadd.s32 %v8337, 104
  %v8351 = vadd.s32 %v8337, 112
  %v8352 = vadd.s32 %v8337, 120
  %v8353 = vadd.s32 %v8337, 128
  %v8354 = vadd.s32 %v8337, 136
  %v8355 = vadd.s32 %v8337, 144
  %v8356 = vadd.s32 %v8337, 152
  %v8357 = vadd.s32 %v8337, 160
  %v8358 = vadd.s32 %v8337, 168
  %v8359 = vadd.s32 %v8337, 176
  %v8360 = vadd.s32 %v8337, 184
  %v8361 = vadd.s32 %v8337, 192
  %v8362 = vadd.s32 %v8337, 200
  %v8363 = vadd.s32 %v8337, 208
  %v8364 = vadd.s32 %v8337, 216
  %v8365 = vadd.s32 %v8337, 224
  %v8366 = vadd.s32 %v8337, 232
  %v8367 = vadd.s32 %v8337, 240
  %v8368 = vadd.s32 %v8337, 248
  %v8369 = vadd.s32 %v8337, 256
  %v8370 = vadd.s32 %v8337, 264
  %v8371 = vadd.s32 %v8337, 272
  %v8372 = vadd.s32 %v8337, 280
  %v8373 = vadd.s32 %v8337, 288
  %v8374 = vadd.s32 %v8337, 296
  %v8375 = vadd.s32 %v8337, 304
  %v8376 = vadd.s32 %v8337, 312
  %v8377 = vadd.s32 %v8337, 320
  %v8378 = vadd.s32 %v8337, 328
  %v8379 = vadd.s32 %v8337, 336
  %v8380 = vadd.s32 %v8337, 344
  %v8381 = vadd.s32 %v8337, 352
  %v8382 = vadd.s32 %v8337, 360
  %v8383 = vadd.s32 %v8337, 368
  %v8384 = vadd.s32 %v8337, 376
  %v8385 = vadd.s32 %v8337, 384
  %v8386 = vadd.s32 %v8337, 392
  %v8387 = vadd.s32 %v8337, 400
  %v8388 = vadd.s32 %v8337, 408
  %v8389 = vadd.s32 %v8337, 416
  %v8390 = vadd.s32 %v8337, 424
  %v8391 = vadd.s32 %v8337, 432
  %v8392 = vadd.s32 %v8337, 440
  %v8393 = vadd.s32 %v8337, 448
  %v8394 = vadd.s32 %v8337, 456
  %v8395 = vadd.s32 %v8337, 464
  %v8396 = vadd.s32 %v8337, 472
  %v8397 = vadd.s32 %v8337, 480
  %v8398 = vadd.s32 %v8337, 488
  %v8399 = vadd.s32 %v8337, 496
  %v8400 = vadd.s32 %v8337, 504
  %v8401 = vadd.s32 %v8337, 512
  %v8402 = vadd.s32 %v8337, 520
  %v8403 = vadd.s32 %v8337, 528
  %v8404 = vadd.s32 %v8337, 536
  %v8405 = vadd.s32 %v8337, 544
  %v8406 = vadd.s32 %v8337, 552
  %v8407 = vadd.s32 %v8337, 560
  %v8408 = vadd.s32 %v8337, 568
  %v8409 = vadd.s32 %v8337, 576
  %v8410 = vadd.s32 %v8337, 584
  %v8411 = vadd.s32 %v8337, 592
  %v8412 = vadd.s32 %v8337, 600
  %v8413 = vadd.s32 %v8337, 608
  %v8414 = vadd.s32 %v8337, 616
  %v8415 = vadd.s32 %v8337, 624
  %v8416 = vadd.s32 %v8337, 632
  %v8417 = vadd.s32 %v8337, 640
  %v8418 = vadd.s32 %v8337, 648
  %v8419 = vadd.s32 %v8337, 656
  %v8420 = vadd.s32 %v8337, 664
  %v8421 = vadd.s32 %v8337, 672
  %v8422 = vadd.s32 %v8337, 680
  %v8423 = vadd.s32 %v8337, 688
  %v8424 = vadd.s32 %v8337, 696
  %v8425 = vadd.s32 %v8337, 704
  %v8426 = vadd.s32 %v8337, 712
  %v8427 = vadd.s32 %v8337, 720
  %v8428 = vadd.s32 %v8337, 728
  %v8429 = vadd.s32 %v8337, 736
  %v8430 = vadd.s32 %v8337, 744
  %v8431 = vadd.s32 %v8337, 752
  %v8432 = vadd.s32 %v8337, 760
  %v8433 = vadd.s32 %v8337, 768
  %v8434 = vadd.s32 %v8337, 776
  %v8435 = vadd.s32 %v8337, 784
  %v8436 = vadd.s32 %v8337, 792
  %v8437 = vadd.s32 %v8337, 800
  %v8438 = vadd.s32 %v8337, 808
  %v8439 = vadd.s32 %v8337, 816
  %v8440 = vadd.s32 %v8337, 824
  %v8441 = vadd.s32 %v8337, 832
  %v8442 = vadd.s32 %v8337, 840
  %v8443 = vadd.s32 %v8337, 848
  %v8444 = vadd.s32 %v8337, 856
  %v8445 = vadd.s32 %v8337, 864
  %v8446 = vadd.s32 %v8337, 872
  %v8447 = vadd.s32 %v8337, 880
  %v8448 = vadd.s32 %v8337, 888
  %v8449 = vadd.s32 %v8337, 896
  %v8450 = vadd.s32 %v8337, 904
  %v8451 = vadd.s32 %v8337, 912
  %v8452 = vadd.s32 %v8337, 920
  %v8453 = vadd.s32 %v8337, 928
  %v8454 = vadd.s32 %v8337, 936
  %v8455 = vadd.s32 %v8337, 944
  %v8456 = vadd.s32 %v8337, 952
  %v8457 = vadd.s32 %v8337, 960
  %v8458 = vadd.s32 %v8337, 968
  %v8459 = vadd.s32 %v8337, 976
  %v8460 = vadd.s32 %v8337, 984
  %v8461 = vadd.s32 %v8337, 992
  %v8462 = vadd.s32 %v8337, 1000
  %v8463 = vadd.s32 %v8337, 1008
  %v8464 = vadd.s32 %v8337, 1016
  %v8465 = vadd.s32 %v8337, 1024
  %v8466 = vadd.s32 %v8337, 1032
  %v8467 = vadd.s32 %v8337, 1040
  %v8468 = vadd.s32 %v8337, 1048
  %v8469 = vadd.s32 %v8337, 1056
  %v8470 = vadd.s32 %v8337, 1064
  %v8471 = vadd.s32 %v8337, 1072
  %v8472 = vadd.s32 %v8337, 1080
  %v8473 = vadd.s32 %v8337, 1088
  %v8474 = vadd.s32 %v8337, 1096
  %v8475 = vadd.s32 %v8337, 1104
  %v8476 = vadd.s32 %v8337, 1112
  %v8477 = vadd.s32 %v8337, 1120
  %v8478 = vadd.s32 %v8337, 1128
  %v8479 = vadd.s32 %v8337, 1136
  %v8480 = vadd.s32 %v8337, 1144
  %vm8481 = vcmp.lt.s32.totalorder %v8337, 0
  %v8482 = vsub.s32 0, %v8337
  %v8483 = vsel %vm8481, %v8482, %v8337
  %v8484 = vmul.u32.u64.compose %v8483, 2863311531
  %v8485 = vextract.low.u32 %v8484
  %v8486 = vextract.high.u32 %v8484
  %v8487 = vshrl.u32 %v8486, 5
  %v8488 = vmul.u32 %v8487, 48
  %v8489 = vsub.s32 %v8483, %v8488
  %v8490 = vsub.s32 0, %v8489
  %v8491 = vsel %vm8481, %v8490, %v8489
  %vm8492 = vcmp.lt.s32.totalorder %v8338, 0
  %v8493 = vsub.s32 0, %v8338
  %v8494 = vsel %vm8492, %v8493, %v8338
  %v8495 = vmul.u32.u64.compose %v8494, 2863311531
  %v8496 = vextract.low.u32 %v8495
  %v8497 = vextract.high.u32 %v8495
  %v8498 = vshrl.u32 %v8497, 5
  %v8499 = vmul.u32 %v8498, 48
  %v8500 = vsub.s32 %v8494, %v8499
  %v8501 = vsub.s32 0, %v8500
  %v8502 = vsel %vm8492, %v8501, %v8500
  %vm8503 = vcmp.lt.s32.totalorder %v8339, 0
  %v8504 = vsub.s32 0, %v8339
  %v8505 = vsel %vm8503, %v8504, %v8339
  %v8506 = vmul.u32.u64.compose %v8505, 2863311531
  %v8507 = vextract.low.u32 %v8506
  %v8508 = vextract.high.u32 %v8506
  %v8509 = vshrl.u32 %v8508, 5
  %v8510 = vmul.u32 %v8509, 48
  %v8511 = vsub.s32 %v8505, %v8510
  %v8512 = vsub.s32 0, %v8511
  %v8513 = vsel %vm8503, %v8512, %v8511
  %vm8514 = vcmp.lt.s32.totalorder %v8340, 0
  %v8515 = vsub.s32 0, %v8340
  %v8516 = vsel %vm8514, %v8515, %v8340
  %v8517 = vmul.u32.u64.compose %v8516, 2863311531
  %v8518 = vextract.low.u32 %v8517
  %v8519 = vextract.high.u32 %v8517
  %v8520 = vshrl.u32 %v8519, 5
  %v8521 = vmul.u32 %v8520, 48
  %v8522 = vsub.s32 %v8516, %v8521
  %v8523 = vsub.s32 0, %v8522
  %v8524 = vsel %vm8514, %v8523, %v8522
  %vm8525 = vcmp.lt.s32.totalorder %v8341, 0
  %v8526 = vsub.s32 0, %v8341
  %v8527 = vsel %vm8525, %v8526, %v8341
  %v8528 = vmul.u32.u64.compose %v8527, 2863311531
  %v8529 = vextract.low.u32 %v8528
  %v8530 = vextract.high.u32 %v8528
  %v8531 = vshrl.u32 %v8530, 5
  %v8532 = vmul.u32 %v8531, 48
  %v8533 = vsub.s32 %v8527, %v8532
  %v8534 = vsub.s32 0, %v8533
  %v8535 = vsel %vm8525, %v8534, %v8533
  %vm8536 = vcmp.lt.s32.totalorder %v8342, 0
  %v8537 = vsub.s32 0, %v8342
  %v8538 = vsel %vm8536, %v8537, %v8342
  %v8539 = vmul.u32.u64.compose %v8538, 2863311531
  %v8540 = vextract.low.u32 %v8539
  %v8541 = vextract.high.u32 %v8539
  %v8542 = vshrl.u32 %v8541, 5
  %v8543 = vmul.u32 %v8542, 48
  %v8544 = vsub.s32 %v8538, %v8543
  %v8545 = vsub.s32 0, %v8544
  %v8546 = vsel %vm8536, %v8545, %v8544
  %vm8547 = vcmp.lt.s32.totalorder %v8343, 0
  %v8548 = vsub.s32 0, %v8343
  %v8549 = vsel %vm8547, %v8548, %v8343
  %v8550 = vmul.u32.u64.compose %v8549, 2863311531
  %v8551 = vextract.low.u32 %v8550
  %v8552 = vextract.high.u32 %v8550
  %v8553 = vshrl.u32 %v8552, 5
  %v8554 = vmul.u32 %v8553, 48
  %v8555 = vsub.s32 %v8549, %v8554
  %v8556 = vsub.s32 0, %v8555
  %v8557 = vsel %vm8547, %v8556, %v8555
  %vm8558 = vcmp.lt.s32.totalorder %v8344, 0
  %v8559 = vsub.s32 0, %v8344
  %v8560 = vsel %vm8558, %v8559, %v8344
  %v8561 = vmul.u32.u64.compose %v8560, 2863311531
  %v8562 = vextract.low.u32 %v8561
  %v8563 = vextract.high.u32 %v8561
  %v8564 = vshrl.u32 %v8563, 5
  %v8565 = vmul.u32 %v8564, 48
  %v8566 = vsub.s32 %v8560, %v8565
  %v8567 = vsub.s32 0, %v8566
  %v8568 = vsel %vm8558, %v8567, %v8566
  %vm8569 = vcmp.lt.s32.totalorder %v8345, 0
  %v8570 = vsub.s32 0, %v8345
  %v8571 = vsel %vm8569, %v8570, %v8345
  %v8572 = vmul.u32.u64.compose %v8571, 2863311531
  %v8573 = vextract.low.u32 %v8572
  %v8574 = vextract.high.u32 %v8572
  %v8575 = vshrl.u32 %v8574, 5
  %v8576 = vmul.u32 %v8575, 48
  %v8577 = vsub.s32 %v8571, %v8576
  %v8578 = vsub.s32 0, %v8577
  %v8579 = vsel %vm8569, %v8578, %v8577
  %vm8580 = vcmp.lt.s32.totalorder %v8346, 0
  %v8581 = vsub.s32 0, %v8346
  %v8582 = vsel %vm8580, %v8581, %v8346
  %v8583 = vmul.u32.u64.compose %v8582, 2863311531
  %v8584 = vextract.low.u32 %v8583
  %v8585 = vextract.high.u32 %v8583
  %v8586 = vshrl.u32 %v8585, 5
  %v8587 = vmul.u32 %v8586, 48
  %v8588 = vsub.s32 %v8582, %v8587
  %v8589 = vsub.s32 0, %v8588
  %v8590 = vsel %vm8580, %v8589, %v8588
  %vm8591 = vcmp.lt.s32.totalorder %v8347, 0
  %v8592 = vsub.s32 0, %v8347
  %v8593 = vsel %vm8591, %v8592, %v8347
  %v8594 = vmul.u32.u64.compose %v8593, 2863311531
  %v8595 = vextract.low.u32 %v8594
  %v8596 = vextract.high.u32 %v8594
  %v8597 = vshrl.u32 %v8596, 5
  %v8598 = vmul.u32 %v8597, 48
  %v8599 = vsub.s32 %v8593, %v8598
  %v8600 = vsub.s32 0, %v8599
  %v8601 = vsel %vm8591, %v8600, %v8599
  %vm8602 = vcmp.lt.s32.totalorder %v8348, 0
  %v8603 = vsub.s32 0, %v8348
  %v8604 = vsel %vm8602, %v8603, %v8348
  %v8605 = vmul.u32.u64.compose %v8604, 2863311531
  %v8606 = vextract.low.u32 %v8605
  %v8607 = vextract.high.u32 %v8605
  %v8608 = vshrl.u32 %v8607, 5
  %v8609 = vmul.u32 %v8608, 48
  %v8610 = vsub.s32 %v8604, %v8609
  %v8611 = vsub.s32 0, %v8610
  %v8612 = vsel %vm8602, %v8611, %v8610
  %vm8613 = vcmp.lt.s32.totalorder %v8349, 0
  %v8614 = vsub.s32 0, %v8349
  %v8615 = vsel %vm8613, %v8614, %v8349
  %v8616 = vmul.u32.u64.compose %v8615, 2863311531
  %v8617 = vextract.low.u32 %v8616
  %v8618 = vextract.high.u32 %v8616
  %v8619 = vshrl.u32 %v8618, 5
  %v8620 = vmul.u32 %v8619, 48
  %v8621 = vsub.s32 %v8615, %v8620
  %v8622 = vsub.s32 0, %v8621
  %v8623 = vsel %vm8613, %v8622, %v8621
  %vm8624 = vcmp.lt.s32.totalorder %v8350, 0
  %v8625 = vsub.s32 0, %v8350
  %v8626 = vsel %vm8624, %v8625, %v8350
  %v8627 = vmul.u32.u64.compose %v8626, 2863311531
  %v8628 = vextract.low.u32 %v8627
  %v8629 = vextract.high.u32 %v8627
  %v8630 = vshrl.u32 %v8629, 5
  %v8631 = vmul.u32 %v8630, 48
  %v8632 = vsub.s32 %v8626, %v8631
  %v8633 = vsub.s32 0, %v8632
  %v8634 = vsel %vm8624, %v8633, %v8632
  %vm8635 = vcmp.lt.s32.totalorder %v8351, 0
  %v8636 = vsub.s32 0, %v8351
  %v8637 = vsel %vm8635, %v8636, %v8351
  %v8638 = vmul.u32.u64.compose %v8637, 2863311531
  %v8639 = vextract.low.u32 %v8638
  %v8640 = vextract.high.u32 %v8638
  %v8641 = vshrl.u32 %v8640, 5
  %v8642 = vmul.u32 %v8641, 48
  %v8643 = vsub.s32 %v8637, %v8642
  %v8644 = vsub.s32 0, %v8643
  %v8645 = vsel %vm8635, %v8644, %v8643
  %vm8646 = vcmp.lt.s32.totalorder %v8352, 0
  %v8647 = vsub.s32 0, %v8352
  %v8648 = vsel %vm8646, %v8647, %v8352
  %v8649 = vmul.u32.u64.compose %v8648, 2863311531
  %v8650 = vextract.low.u32 %v8649
  %v8651 = vextract.high.u32 %v8649
  %v8652 = vshrl.u32 %v8651, 5
  %v8653 = vmul.u32 %v8652, 48
  %v8654 = vsub.s32 %v8648, %v8653
  %v8655 = vsub.s32 0, %v8654
  %v8656 = vsel %vm8646, %v8655, %v8654
  %vm8657 = vcmp.lt.s32.totalorder %v8353, 0
  %v8658 = vsub.s32 0, %v8353
  %v8659 = vsel %vm8657, %v8658, %v8353
  %v8660 = vmul.u32.u64.compose %v8659, 2863311531
  %v8661 = vextract.low.u32 %v8660
  %v8662 = vextract.high.u32 %v8660
  %v8663 = vshrl.u32 %v8662, 5
  %v8664 = vmul.u32 %v8663, 48
  %v8665 = vsub.s32 %v8659, %v8664
  %v8666 = vsub.s32 0, %v8665
  %v8667 = vsel %vm8657, %v8666, %v8665
  %vm8668 = vcmp.lt.s32.totalorder %v8354, 0
  %v8669 = vsub.s32 0, %v8354
  %v8670 = vsel %vm8668, %v8669, %v8354
  %v8671 = vmul.u32.u64.compose %v8670, 2863311531
  %v8672 = vextract.low.u32 %v8671
  %v8673 = vextract.high.u32 %v8671
  %v8674 = vshrl.u32 %v8673, 5
  %v8675 = vmul.u32 %v8674, 48
  %v8676 = vsub.s32 %v8670, %v8675
  %v8677 = vsub.s32 0, %v8676
  %v8678 = vsel %vm8668, %v8677, %v8676
  %vm8679 = vcmp.lt.s32.totalorder %v8355, 0
  %v8680 = vsub.s32 0, %v8355
  %v8681 = vsel %vm8679, %v8680, %v8355
  %v8682 = vmul.u32.u64.compose %v8681, 2863311531
  %v8683 = vextract.low.u32 %v8682
  %v8684 = vextract.high.u32 %v8682
  %v8685 = vshrl.u32 %v8684, 5
  %v8686 = vmul.u32 %v8685, 48
  %v8687 = vsub.s32 %v8681, %v8686
  %v8688 = vsub.s32 0, %v8687
  %v8689 = vsel %vm8679, %v8688, %v8687
  %vm8690 = vcmp.lt.s32.totalorder %v8356, 0
  %v8691 = vsub.s32 0, %v8356
  %v8692 = vsel %vm8690, %v8691, %v8356
  %v8693 = vmul.u32.u64.compose %v8692, 2863311531
  %v8694 = vextract.low.u32 %v8693
  %v8695 = vextract.high.u32 %v8693
  %v8696 = vshrl.u32 %v8695, 5
  %v8697 = vmul.u32 %v8696, 48
  %v8698 = vsub.s32 %v8692, %v8697
  %v8699 = vsub.s32 0, %v8698
  %v8700 = vsel %vm8690, %v8699, %v8698
  %vm8701 = vcmp.lt.s32.totalorder %v8357, 0
  %v8702 = vsub.s32 0, %v8357
  %v8703 = vsel %vm8701, %v8702, %v8357
  %v8704 = vmul.u32.u64.compose %v8703, 2863311531
  %v8705 = vextract.low.u32 %v8704
  %v8706 = vextract.high.u32 %v8704
  %v8707 = vshrl.u32 %v8706, 5
  %v8708 = vmul.u32 %v8707, 48
  %v8709 = vsub.s32 %v8703, %v8708
  %v8710 = vsub.s32 0, %v8709
  %v8711 = vsel %vm8701, %v8710, %v8709
  %vm8712 = vcmp.lt.s32.totalorder %v8358, 0
  %v8713 = vsub.s32 0, %v8358
  %v8714 = vsel %vm8712, %v8713, %v8358
  %v8715 = vmul.u32.u64.compose %v8714, 2863311531
  %v8716 = vextract.low.u32 %v8715
  %v8717 = vextract.high.u32 %v8715
  %v8718 = vshrl.u32 %v8717, 5
  %v8719 = vmul.u32 %v8718, 48
  %v8720 = vsub.s32 %v8714, %v8719
  %v8721 = vsub.s32 0, %v8720
  %v8722 = vsel %vm8712, %v8721, %v8720
  %vm8723 = vcmp.lt.s32.totalorder %v8359, 0
  %v8724 = vsub.s32 0, %v8359
  %v8725 = vsel %vm8723, %v8724, %v8359
  %v8726 = vmul.u32.u64.compose %v8725, 2863311531
  %v8727 = vextract.low.u32 %v8726
  %v8728 = vextract.high.u32 %v8726
  %v8729 = vshrl.u32 %v8728, 5
  %v8730 = vmul.u32 %v8729, 48
  %v8731 = vsub.s32 %v8725, %v8730
  %v8732 = vsub.s32 0, %v8731
  %v8733 = vsel %vm8723, %v8732, %v8731
  %vm8734 = vcmp.lt.s32.totalorder %v8360, 0
  %v8735 = vsub.s32 0, %v8360
  %v8736 = vsel %vm8734, %v8735, %v8360
  %v8737 = vmul.u32.u64.compose %v8736, 2863311531
  %v8738 = vextract.low.u32 %v8737
  %v8739 = vextract.high.u32 %v8737
  %v8740 = vshrl.u32 %v8739, 5
  %v8741 = vmul.u32 %v8740, 48
  %v8742 = vsub.s32 %v8736, %v8741
  %v8743 = vsub.s32 0, %v8742
  %v8744 = vsel %vm8734, %v8743, %v8742
  %vm8745 = vcmp.lt.s32.totalorder %v8361, 0
  %v8746 = vsub.s32 0, %v8361
  %v8747 = vsel %vm8745, %v8746, %v8361
  %v8748 = vmul.u32.u64.compose %v8747, 2863311531
  %v8749 = vextract.low.u32 %v8748
  %v8750 = vextract.high.u32 %v8748
  %v8751 = vshrl.u32 %v8750, 5
  %v8752 = vmul.u32 %v8751, 48
  %v8753 = vsub.s32 %v8747, %v8752
  %v8754 = vsub.s32 0, %v8753
  %v8755 = vsel %vm8745, %v8754, %v8753
  %vm8756 = vcmp.lt.s32.totalorder %v8362, 0
  %v8757 = vsub.s32 0, %v8362
  %v8758 = vsel %vm8756, %v8757, %v8362
  %v8759 = vmul.u32.u64.compose %v8758, 2863311531
  %v8760 = vextract.low.u32 %v8759
  %v8761 = vextract.high.u32 %v8759
  %v8762 = vshrl.u32 %v8761, 5
  %v8763 = vmul.u32 %v8762, 48
  %v8764 = vsub.s32 %v8758, %v8763
  %v8765 = vsub.s32 0, %v8764
  %v8766 = vsel %vm8756, %v8765, %v8764
  %vm8767 = vcmp.lt.s32.totalorder %v8363, 0
  %v8768 = vsub.s32 0, %v8363
  %v8769 = vsel %vm8767, %v8768, %v8363
  %v8770 = vmul.u32.u64.compose %v8769, 2863311531
  %v8771 = vextract.low.u32 %v8770
  %v8772 = vextract.high.u32 %v8770
  %v8773 = vshrl.u32 %v8772, 5
  %v8774 = vmul.u32 %v8773, 48
  %v8775 = vsub.s32 %v8769, %v8774
  %v8776 = vsub.s32 0, %v8775
  %v8777 = vsel %vm8767, %v8776, %v8775
  %vm8778 = vcmp.lt.s32.totalorder %v8364, 0
  %v8779 = vsub.s32 0, %v8364
  %v8780 = vsel %vm8778, %v8779, %v8364
  %v8781 = vmul.u32.u64.compose %v8780, 2863311531
  %v8782 = vextract.low.u32 %v8781
  %v8783 = vextract.high.u32 %v8781
  %v8784 = vshrl.u32 %v8783, 5
  %v8785 = vmul.u32 %v8784, 48
  %v8786 = vsub.s32 %v8780, %v8785
  %v8787 = vsub.s32 0, %v8786
  %v8788 = vsel %vm8778, %v8787, %v8786
  %vm8789 = vcmp.lt.s32.totalorder %v8365, 0
  %v8790 = vsub.s32 0, %v8365
  %v8791 = vsel %vm8789, %v8790, %v8365
  %v8792 = vmul.u32.u64.compose %v8791, 2863311531
  %v8793 = vextract.low.u32 %v8792
  %v8794 = vextract.high.u32 %v8792
  %v8795 = vshrl.u32 %v8794, 5
  %v8796 = vmul.u32 %v8795, 48
  %v8797 = vsub.s32 %v8791, %v8796
  %v8798 = vsub.s32 0, %v8797
  %v8799 = vsel %vm8789, %v8798, %v8797
  %vm8800 = vcmp.lt.s32.totalorder %v8366, 0
  %v8801 = vsub.s32 0, %v8366
  %v8802 = vsel %vm8800, %v8801, %v8366
  %v8803 = vmul.u32.u64.compose %v8802, 2863311531
  %v8804 = vextract.low.u32 %v8803
  %v8805 = vextract.high.u32 %v8803
  %v8806 = vshrl.u32 %v8805, 5
  %v8807 = vmul.u32 %v8806, 48
  %v8808 = vsub.s32 %v8802, %v8807
  %v8809 = vsub.s32 0, %v8808
  %v8810 = vsel %vm8800, %v8809, %v8808
  %vm8811 = vcmp.lt.s32.totalorder %v8367, 0
  %v8812 = vsub.s32 0, %v8367
  %v8813 = vsel %vm8811, %v8812, %v8367
  %v8814 = vmul.u32.u64.compose %v8813, 2863311531
  %v8815 = vextract.low.u32 %v8814
  %v8816 = vextract.high.u32 %v8814
  %v8817 = vshrl.u32 %v8816, 5
  %v8818 = vmul.u32 %v8817, 48
  %v8819 = vsub.s32 %v8813, %v8818
  %v8820 = vsub.s32 0, %v8819
  %v8821 = vsel %vm8811, %v8820, %v8819
  %vm8822 = vcmp.lt.s32.totalorder %v8368, 0
  %v8823 = vsub.s32 0, %v8368
  %v8824 = vsel %vm8822, %v8823, %v8368
  %v8825 = vmul.u32.u64.compose %v8824, 2863311531
  %v8826 = vextract.low.u32 %v8825
  %v8827 = vextract.high.u32 %v8825
  %v8828 = vshrl.u32 %v8827, 5
  %v8829 = vmul.u32 %v8828, 48
  %v8830 = vsub.s32 %v8824, %v8829
  %v8831 = vsub.s32 0, %v8830
  %v8832 = vsel %vm8822, %v8831, %v8830
  %vm8833 = vcmp.lt.s32.totalorder %v8369, 0
  %v8834 = vsub.s32 0, %v8369
  %v8835 = vsel %vm8833, %v8834, %v8369
  %v8836 = vmul.u32.u64.compose %v8835, 2863311531
  %v8837 = vextract.low.u32 %v8836
  %v8838 = vextract.high.u32 %v8836
  %v8839 = vshrl.u32 %v8838, 5
  %v8840 = vmul.u32 %v8839, 48
  %v8841 = vsub.s32 %v8835, %v8840
  %v8842 = vsub.s32 0, %v8841
  %v8843 = vsel %vm8833, %v8842, %v8841
  %vm8844 = vcmp.lt.s32.totalorder %v8370, 0
  %v8845 = vsub.s32 0, %v8370
  %v8846 = vsel %vm8844, %v8845, %v8370
  %v8847 = vmul.u32.u64.compose %v8846, 2863311531
  %v8848 = vextract.low.u32 %v8847
  %v8849 = vextract.high.u32 %v8847
  %v8850 = vshrl.u32 %v8849, 5
  %v8851 = vmul.u32 %v8850, 48
  %v8852 = vsub.s32 %v8846, %v8851
  %v8853 = vsub.s32 0, %v8852
  %v8854 = vsel %vm8844, %v8853, %v8852
  %vm8855 = vcmp.lt.s32.totalorder %v8371, 0
  %v8856 = vsub.s32 0, %v8371
  %v8857 = vsel %vm8855, %v8856, %v8371
  %v8858 = vmul.u32.u64.compose %v8857, 2863311531
  %v8859 = vextract.low.u32 %v8858
  %v8860 = vextract.high.u32 %v8858
  %v8861 = vshrl.u32 %v8860, 5
  %v8862 = vmul.u32 %v8861, 48
  %v8863 = vsub.s32 %v8857, %v8862
  %v8864 = vsub.s32 0, %v8863
  %v8865 = vsel %vm8855, %v8864, %v8863
  %vm8866 = vcmp.lt.s32.totalorder %v8372, 0
  %v8867 = vsub.s32 0, %v8372
  %v8868 = vsel %vm8866, %v8867, %v8372
  %v8869 = vmul.u32.u64.compose %v8868, 2863311531
  %v8870 = vextract.low.u32 %v8869
  %v8871 = vextract.high.u32 %v8869
  %v8872 = vshrl.u32 %v8871, 5
  %v8873 = vmul.u32 %v8872, 48
  %v8874 = vsub.s32 %v8868, %v8873
  %v8875 = vsub.s32 0, %v8874
  %v8876 = vsel %vm8866, %v8875, %v8874
  %vm8877 = vcmp.lt.s32.totalorder %v8373, 0
  %v8878 = vsub.s32 0, %v8373
  %v8879 = vsel %vm8877, %v8878, %v8373
  %v8880 = vmul.u32.u64.compose %v8879, 2863311531
  %v8881 = vextract.low.u32 %v8880
  %v8882 = vextract.high.u32 %v8880
  %v8883 = vshrl.u32 %v8882, 5
  %v8884 = vmul.u32 %v8883, 48
  %v8885 = vsub.s32 %v8879, %v8884
  %v8886 = vsub.s32 0, %v8885
  %v8887 = vsel %vm8877, %v8886, %v8885
  %vm8888 = vcmp.lt.s32.totalorder %v8374, 0
  %v8889 = vsub.s32 0, %v8374
  %v8890 = vsel %vm8888, %v8889, %v8374
  %v8891 = vmul.u32.u64.compose %v8890, 2863311531
  %v8892 = vextract.low.u32 %v8891
  %v8893 = vextract.high.u32 %v8891
  %v8894 = vshrl.u32 %v8893, 5
  %v8895 = vmul.u32 %v8894, 48
  %v8896 = vsub.s32 %v8890, %v8895
  %v8897 = vsub.s32 0, %v8896
  %v8898 = vsel %vm8888, %v8897, %v8896
  %vm8899 = vcmp.lt.s32.totalorder %v8375, 0
  %v8900 = vsub.s32 0, %v8375
  %v8901 = vsel %vm8899, %v8900, %v8375
  %v8902 = vmul.u32.u64.compose %v8901, 2863311531
  %v8903 = vextract.low.u32 %v8902
  %v8904 = vextract.high.u32 %v8902
  %v8905 = vshrl.u32 %v8904, 5
  %v8906 = vmul.u32 %v8905, 48
  %v8907 = vsub.s32 %v8901, %v8906
  %v8908 = vsub.s32 0, %v8907
  %v8909 = vsel %vm8899, %v8908, %v8907
  %vm8910 = vcmp.lt.s32.totalorder %v8376, 0
  %v8911 = vsub.s32 0, %v8376
  %v8912 = vsel %vm8910, %v8911, %v8376
  %v8913 = vmul.u32.u64.compose %v8912, 2863311531
  %v8914 = vextract.low.u32 %v8913
  %v8915 = vextract.high.u32 %v8913
  %v8916 = vshrl.u32 %v8915, 5
  %v8917 = vmul.u32 %v8916, 48
  %v8918 = vsub.s32 %v8912, %v8917
  %v8919 = vsub.s32 0, %v8918
  %v8920 = vsel %vm8910, %v8919, %v8918
  %vm8921 = vcmp.lt.s32.totalorder %v8377, 0
  %v8922 = vsub.s32 0, %v8377
  %v8923 = vsel %vm8921, %v8922, %v8377
  %v8924 = vmul.u32.u64.compose %v8923, 2863311531
  %v8925 = vextract.low.u32 %v8924
  %v8926 = vextract.high.u32 %v8924
  %v8927 = vshrl.u32 %v8926, 5
  %v8928 = vmul.u32 %v8927, 48
  %v8929 = vsub.s32 %v8923, %v8928
  %v8930 = vsub.s32 0, %v8929
  %v8931 = vsel %vm8921, %v8930, %v8929
  %vm8932 = vcmp.lt.s32.totalorder %v8378, 0
  %v8933 = vsub.s32 0, %v8378
  %v8934 = vsel %vm8932, %v8933, %v8378
  %v8935 = vmul.u32.u64.compose %v8934, 2863311531
  %v8936 = vextract.low.u32 %v8935
  %v8937 = vextract.high.u32 %v8935
  %v8938 = vshrl.u32 %v8937, 5
  %v8939 = vmul.u32 %v8938, 48
  %v8940 = vsub.s32 %v8934, %v8939
  %v8941 = vsub.s32 0, %v8940
  %v8942 = vsel %vm8932, %v8941, %v8940
  %vm8943 = vcmp.lt.s32.totalorder %v8379, 0
  %v8944 = vsub.s32 0, %v8379
  %v8945 = vsel %vm8943, %v8944, %v8379
  %v8946 = vmul.u32.u64.compose %v8945, 2863311531
  %v8947 = vextract.low.u32 %v8946
  %v8948 = vextract.high.u32 %v8946
  %v8949 = vshrl.u32 %v8948, 5
  %v8950 = vmul.u32 %v8949, 48
  %v8951 = vsub.s32 %v8945, %v8950
  %v8952 = vsub.s32 0, %v8951
  %v8953 = vsel %vm8943, %v8952, %v8951
  %vm8954 = vcmp.lt.s32.totalorder %v8380, 0
  %v8955 = vsub.s32 0, %v8380
  %v8956 = vsel %vm8954, %v8955, %v8380
  %v8957 = vmul.u32.u64.compose %v8956, 2863311531
  %v8958 = vextract.low.u32 %v8957
  %v8959 = vextract.high.u32 %v8957
  %v8960 = vshrl.u32 %v8959, 5
  %v8961 = vmul.u32 %v8960, 48
  %v8962 = vsub.s32 %v8956, %v8961
  %v8963 = vsub.s32 0, %v8962
  %v8964 = vsel %vm8954, %v8963, %v8962
  %vm8965 = vcmp.lt.s32.totalorder %v8381, 0
  %v8966 = vsub.s32 0, %v8381
  %v8967 = vsel %vm8965, %v8966, %v8381
  %v8968 = vmul.u32.u64.compose %v8967, 2863311531
  %v8969 = vextract.low.u32 %v8968
  %v8970 = vextract.high.u32 %v8968
  %v8971 = vshrl.u32 %v8970, 5
  %v8972 = vmul.u32 %v8971, 48
  %v8973 = vsub.s32 %v8967, %v8972
  %v8974 = vsub.s32 0, %v8973
  %v8975 = vsel %vm8965, %v8974, %v8973
  %vm8976 = vcmp.lt.s32.totalorder %v8382, 0
  %v8977 = vsub.s32 0, %v8382
  %v8978 = vsel %vm8976, %v8977, %v8382
  %v8979 = vmul.u32.u64.compose %v8978, 2863311531
  %v8980 = vextract.low.u32 %v8979
  %v8981 = vextract.high.u32 %v8979
  %v8982 = vshrl.u32 %v8981, 5
  %v8983 = vmul.u32 %v8982, 48
  %v8984 = vsub.s32 %v8978, %v8983
  %v8985 = vsub.s32 0, %v8984
  %v8986 = vsel %vm8976, %v8985, %v8984
  %vm8987 = vcmp.lt.s32.totalorder %v8383, 0
  %v8988 = vsub.s32 0, %v8383
  %v8989 = vsel %vm8987, %v8988, %v8383
  %v8990 = vmul.u32.u64.compose %v8989, 2863311531
  %v8991 = vextract.low.u32 %v8990
  %v8992 = vextract.high.u32 %v8990
  %v8993 = vshrl.u32 %v8992, 5
  %v8994 = vmul.u32 %v8993, 48
  %v8995 = vsub.s32 %v8989, %v8994
  %v8996 = vsub.s32 0, %v8995
  %v8997 = vsel %vm8987, %v8996, %v8995
  %vm8998 = vcmp.lt.s32.totalorder %v8384, 0
  %v8999 = vsub.s32 0, %v8384
  %v9000 = vsel %vm8998, %v8999, %v8384
  %v9001 = vmul.u32.u64.compose %v9000, 2863311531
  %v9002 = vextract.low.u32 %v9001
  %v9003 = vextract.high.u32 %v9001
  %v9004 = vshrl.u32 %v9003, 5
  %v9005 = vmul.u32 %v9004, 48
  %v9006 = vsub.s32 %v9000, %v9005
  %v9007 = vsub.s32 0, %v9006
  %v9008 = vsel %vm8998, %v9007, %v9006
  %vm9009 = vcmp.lt.s32.totalorder %v8385, 0
  %v9010 = vsub.s32 0, %v8385
  %v9011 = vsel %vm9009, %v9010, %v8385
  %v9012 = vmul.u32.u64.compose %v9011, 2863311531
  %v9013 = vextract.low.u32 %v9012
  %v9014 = vextract.high.u32 %v9012
  %v9015 = vshrl.u32 %v9014, 5
  %v9016 = vmul.u32 %v9015, 48
  %v9017 = vsub.s32 %v9011, %v9016
  %v9018 = vsub.s32 0, %v9017
  %v9019 = vsel %vm9009, %v9018, %v9017
  %vm9020 = vcmp.lt.s32.totalorder %v8386, 0
  %v9021 = vsub.s32 0, %v8386
  %v9022 = vsel %vm9020, %v9021, %v8386
  %v9023 = vmul.u32.u64.compose %v9022, 2863311531
  %v9024 = vextract.low.u32 %v9023
  %v9025 = vextract.high.u32 %v9023
  %v9026 = vshrl.u32 %v9025, 5
  %v9027 = vmul.u32 %v9026, 48
  %v9028 = vsub.s32 %v9022, %v9027
  %v9029 = vsub.s32 0, %v9028
  %v9030 = vsel %vm9020, %v9029, %v9028
  %vm9031 = vcmp.lt.s32.totalorder %v8387, 0
  %v9032 = vsub.s32 0, %v8387
  %v9033 = vsel %vm9031, %v9032, %v8387
  %v9034 = vmul.u32.u64.compose %v9033, 2863311531
  %v9035 = vextract.low.u32 %v9034
  %v9036 = vextract.high.u32 %v9034
  %v9037 = vshrl.u32 %v9036, 5
  %v9038 = vmul.u32 %v9037, 48
  %v9039 = vsub.s32 %v9033, %v9038
  %v9040 = vsub.s32 0, %v9039
  %v9041 = vsel %vm9031, %v9040, %v9039
  %vm9042 = vcmp.lt.s32.totalorder %v8388, 0
  %v9043 = vsub.s32 0, %v8388
  %v9044 = vsel %vm9042, %v9043, %v8388
  %v9045 = vmul.u32.u64.compose %v9044, 2863311531
  %v9046 = vextract.low.u32 %v9045
  %v9047 = vextract.high.u32 %v9045
  %v9048 = vshrl.u32 %v9047, 5
  %v9049 = vmul.u32 %v9048, 48
  %v9050 = vsub.s32 %v9044, %v9049
  %v9051 = vsub.s32 0, %v9050
  %v9052 = vsel %vm9042, %v9051, %v9050
  %vm9053 = vcmp.lt.s32.totalorder %v8389, 0
  %v9054 = vsub.s32 0, %v8389
  %v9055 = vsel %vm9053, %v9054, %v8389
  %v9056 = vmul.u32.u64.compose %v9055, 2863311531
  %v9057 = vextract.low.u32 %v9056
  %v9058 = vextract.high.u32 %v9056
  %v9059 = vshrl.u32 %v9058, 5
  %v9060 = vmul.u32 %v9059, 48
  %v9061 = vsub.s32 %v9055, %v9060
  %v9062 = vsub.s32 0, %v9061
  %v9063 = vsel %vm9053, %v9062, %v9061
  %vm9064 = vcmp.lt.s32.totalorder %v8390, 0
  %v9065 = vsub.s32 0, %v8390
  %v9066 = vsel %vm9064, %v9065, %v8390
  %v9067 = vmul.u32.u64.compose %v9066, 2863311531
  %v9068 = vextract.low.u32 %v9067
  %v9069 = vextract.high.u32 %v9067
  %v9070 = vshrl.u32 %v9069, 5
  %v9071 = vmul.u32 %v9070, 48
  %v9072 = vsub.s32 %v9066, %v9071
  %v9073 = vsub.s32 0, %v9072
  %v9074 = vsel %vm9064, %v9073, %v9072
  %vm9075 = vcmp.lt.s32.totalorder %v8391, 0
  %v9076 = vsub.s32 0, %v8391
  %v9077 = vsel %vm9075, %v9076, %v8391
  %v9078 = vmul.u32.u64.compose %v9077, 2863311531
  %v9079 = vextract.low.u32 %v9078
  %v9080 = vextract.high.u32 %v9078
  %v9081 = vshrl.u32 %v9080, 5
  %v9082 = vmul.u32 %v9081, 48
  %v9083 = vsub.s32 %v9077, %v9082
  %v9084 = vsub.s32 0, %v9083
  %v9085 = vsel %vm9075, %v9084, %v9083
  %vm9086 = vcmp.lt.s32.totalorder %v8392, 0
  %v9087 = vsub.s32 0, %v8392
  %v9088 = vsel %vm9086, %v9087, %v8392
  %v9089 = vmul.u32.u64.compose %v9088, 2863311531
  %v9090 = vextract.low.u32 %v9089
  %v9091 = vextract.high.u32 %v9089
  %v9092 = vshrl.u32 %v9091, 5
  %v9093 = vmul.u32 %v9092, 48
  %v9094 = vsub.s32 %v9088, %v9093
  %v9095 = vsub.s32 0, %v9094
  %v9096 = vsel %vm9086, %v9095, %v9094
  %vm9097 = vcmp.lt.s32.totalorder %v8393, 0
  %v9098 = vsub.s32 0, %v8393
  %v9099 = vsel %vm9097, %v9098, %v8393
  %v9100 = vmul.u32.u64.compose %v9099, 2863311531
  %v9101 = vextract.low.u32 %v9100
  %v9102 = vextract.high.u32 %v9100
  %v9103 = vshrl.u32 %v9102, 5
  %v9104 = vmul.u32 %v9103, 48
  %v9105 = vsub.s32 %v9099, %v9104
  %v9106 = vsub.s32 0, %v9105
  %v9107 = vsel %vm9097, %v9106, %v9105
  %vm9108 = vcmp.lt.s32.totalorder %v8394, 0
  %v9109 = vsub.s32 0, %v8394
  %v9110 = vsel %vm9108, %v9109, %v8394
  %v9111 = vmul.u32.u64.compose %v9110, 2863311531
  %v9112 = vextract.low.u32 %v9111
  %v9113 = vextract.high.u32 %v9111
  %v9114 = vshrl.u32 %v9113, 5
  %v9115 = vmul.u32 %v9114, 48
  %v9116 = vsub.s32 %v9110, %v9115
  %v9117 = vsub.s32 0, %v9116
  %v9118 = vsel %vm9108, %v9117, %v9116
  %vm9119 = vcmp.lt.s32.totalorder %v8395, 0
  %v9120 = vsub.s32 0, %v8395
  %v9121 = vsel %vm9119, %v9120, %v8395
  %v9122 = vmul.u32.u64.compose %v9121, 2863311531
  %v9123 = vextract.low.u32 %v9122
  %v9124 = vextract.high.u32 %v9122
  %v9125 = vshrl.u32 %v9124, 5
  %v9126 = vmul.u32 %v9125, 48
  %v9127 = vsub.s32 %v9121, %v9126
  %v9128 = vsub.s32 0, %v9127
  %v9129 = vsel %vm9119, %v9128, %v9127
  %vm9130 = vcmp.lt.s32.totalorder %v8396, 0
  %v9131 = vsub.s32 0, %v8396
  %v9132 = vsel %vm9130, %v9131, %v8396
  %v9133 = vmul.u32.u64.compose %v9132, 2863311531
  %v9134 = vextract.low.u32 %v9133
  %v9135 = vextract.high.u32 %v9133
  %v9136 = vshrl.u32 %v9135, 5
  %v9137 = vmul.u32 %v9136, 48
  %v9138 = vsub.s32 %v9132, %v9137
  %v9139 = vsub.s32 0, %v9138
  %v9140 = vsel %vm9130, %v9139, %v9138
  %vm9141 = vcmp.lt.s32.totalorder %v8397, 0
  %v9142 = vsub.s32 0, %v8397
  %v9143 = vsel %vm9141, %v9142, %v8397
  %v9144 = vmul.u32.u64.compose %v9143, 2863311531
  %v9145 = vextract.low.u32 %v9144
  %v9146 = vextract.high.u32 %v9144
  %v9147 = vshrl.u32 %v9146, 5
  %v9148 = vmul.u32 %v9147, 48
  %v9149 = vsub.s32 %v9143, %v9148
  %v9150 = vsub.s32 0, %v9149
  %v9151 = vsel %vm9141, %v9150, %v9149
  %vm9152 = vcmp.lt.s32.totalorder %v8398, 0
  %v9153 = vsub.s32 0, %v8398
  %v9154 = vsel %vm9152, %v9153, %v8398
  %v9155 = vmul.u32.u64.compose %v9154, 2863311531
  %v9156 = vextract.low.u32 %v9155
  %v9157 = vextract.high.u32 %v9155
  %v9158 = vshrl.u32 %v9157, 5
  %v9159 = vmul.u32 %v9158, 48
  %v9160 = vsub.s32 %v9154, %v9159
  %v9161 = vsub.s32 0, %v9160
  %v9162 = vsel %vm9152, %v9161, %v9160
  %vm9163 = vcmp.lt.s32.totalorder %v8399, 0
  %v9164 = vsub.s32 0, %v8399
  %v9165 = vsel %vm9163, %v9164, %v8399
  %v9166 = vmul.u32.u64.compose %v9165, 2863311531
  %v9167 = vextract.low.u32 %v9166
  %v9168 = vextract.high.u32 %v9166
  %v9169 = vshrl.u32 %v9168, 5
  %v9170 = vmul.u32 %v9169, 48
  %v9171 = vsub.s32 %v9165, %v9170
  %v9172 = vsub.s32 0, %v9171
  %v9173 = vsel %vm9163, %v9172, %v9171
  %vm9174 = vcmp.lt.s32.totalorder %v8400, 0
  %v9175 = vsub.s32 0, %v8400
  %v9176 = vsel %vm9174, %v9175, %v8400
  %v9177 = vmul.u32.u64.compose %v9176, 2863311531
  %v9178 = vextract.low.u32 %v9177
  %v9179 = vextract.high.u32 %v9177
  %v9180 = vshrl.u32 %v9179, 5
  %v9181 = vmul.u32 %v9180, 48
  %v9182 = vsub.s32 %v9176, %v9181
  %v9183 = vsub.s32 0, %v9182
  %v9184 = vsel %vm9174, %v9183, %v9182
  %vm9185 = vcmp.lt.s32.totalorder %v8401, 0
  %v9186 = vsub.s32 0, %v8401
  %v9187 = vsel %vm9185, %v9186, %v8401
  %v9188 = vmul.u32.u64.compose %v9187, 2863311531
  %v9189 = vextract.low.u32 %v9188
  %v9190 = vextract.high.u32 %v9188
  %v9191 = vshrl.u32 %v9190, 5
  %v9192 = vmul.u32 %v9191, 48
  %v9193 = vsub.s32 %v9187, %v9192
  %v9194 = vsub.s32 0, %v9193
  %v9195 = vsel %vm9185, %v9194, %v9193
  %vm9196 = vcmp.lt.s32.totalorder %v8402, 0
  %v9197 = vsub.s32 0, %v8402
  %v9198 = vsel %vm9196, %v9197, %v8402
  %v9199 = vmul.u32.u64.compose %v9198, 2863311531
  %v9200 = vextract.low.u32 %v9199
  %v9201 = vextract.high.u32 %v9199
  %v9202 = vshrl.u32 %v9201, 5
  %v9203 = vmul.u32 %v9202, 48
  %v9204 = vsub.s32 %v9198, %v9203
  %v9205 = vsub.s32 0, %v9204
  %v9206 = vsel %vm9196, %v9205, %v9204
  %vm9207 = vcmp.lt.s32.totalorder %v8403, 0
  %v9208 = vsub.s32 0, %v8403
  %v9209 = vsel %vm9207, %v9208, %v8403
  %v9210 = vmul.u32.u64.compose %v9209, 2863311531
  %v9211 = vextract.low.u32 %v9210
  %v9212 = vextract.high.u32 %v9210
  %v9213 = vshrl.u32 %v9212, 5
  %v9214 = vmul.u32 %v9213, 48
  %v9215 = vsub.s32 %v9209, %v9214
  %v9216 = vsub.s32 0, %v9215
  %v9217 = vsel %vm9207, %v9216, %v9215
  %vm9218 = vcmp.lt.s32.totalorder %v8404, 0
  %v9219 = vsub.s32 0, %v8404
  %v9220 = vsel %vm9218, %v9219, %v8404
  %v9221 = vmul.u32.u64.compose %v9220, 2863311531
  %v9222 = vextract.low.u32 %v9221
  %v9223 = vextract.high.u32 %v9221
  %v9224 = vshrl.u32 %v9223, 5
  %v9225 = vmul.u32 %v9224, 48
  %v9226 = vsub.s32 %v9220, %v9225
  %v9227 = vsub.s32 0, %v9226
  %v9228 = vsel %vm9218, %v9227, %v9226
  %vm9229 = vcmp.lt.s32.totalorder %v8405, 0
  %v9230 = vsub.s32 0, %v8405
  %v9231 = vsel %vm9229, %v9230, %v8405
  %v9232 = vmul.u32.u64.compose %v9231, 2863311531
  %v9233 = vextract.low.u32 %v9232
  %v9234 = vextract.high.u32 %v9232
  %v9235 = vshrl.u32 %v9234, 5
  %v9236 = vmul.u32 %v9235, 48
  %v9237 = vsub.s32 %v9231, %v9236
  %v9238 = vsub.s32 0, %v9237
  %v9239 = vsel %vm9229, %v9238, %v9237
  %vm9240 = vcmp.lt.s32.totalorder %v8406, 0
  %v9241 = vsub.s32 0, %v8406
  %v9242 = vsel %vm9240, %v9241, %v8406
  %v9243 = vmul.u32.u64.compose %v9242, 2863311531
  %v9244 = vextract.low.u32 %v9243
  %v9245 = vextract.high.u32 %v9243
  %v9246 = vshrl.u32 %v9245, 5
  %v9247 = vmul.u32 %v9246, 48
  %v9248 = vsub.s32 %v9242, %v9247
  %v9249 = vsub.s32 0, %v9248
  %v9250 = vsel %vm9240, %v9249, %v9248
  %vm9251 = vcmp.lt.s32.totalorder %v8407, 0
  %v9252 = vsub.s32 0, %v8407
  %v9253 = vsel %vm9251, %v9252, %v8407
  %v9254 = vmul.u32.u64.compose %v9253, 2863311531
  %v9255 = vextract.low.u32 %v9254
  %v9256 = vextract.high.u32 %v9254
  %v9257 = vshrl.u32 %v9256, 5
  %v9258 = vmul.u32 %v9257, 48
  %v9259 = vsub.s32 %v9253, %v9258
  %v9260 = vsub.s32 0, %v9259
  %v9261 = vsel %vm9251, %v9260, %v9259
  %vm9262 = vcmp.lt.s32.totalorder %v8408, 0
  %v9263 = vsub.s32 0, %v8408
  %v9264 = vsel %vm9262, %v9263, %v8408
  %v9265 = vmul.u32.u64.compose %v9264, 2863311531
  %v9266 = vextract.low.u32 %v9265
  %v9267 = vextract.high.u32 %v9265
  %v9268 = vshrl.u32 %v9267, 5
  %v9269 = vmul.u32 %v9268, 48
  %v9270 = vsub.s32 %v9264, %v9269
  %v9271 = vsub.s32 0, %v9270
  %v9272 = vsel %vm9262, %v9271, %v9270
  %vm9273 = vcmp.lt.s32.totalorder %v8409, 0
  %v9274 = vsub.s32 0, %v8409
  %v9275 = vsel %vm9273, %v9274, %v8409
  %v9276 = vmul.u32.u64.compose %v9275, 2863311531
  %v9277 = vextract.low.u32 %v9276
  %v9278 = vextract.high.u32 %v9276
  %v9279 = vshrl.u32 %v9278, 5
  %v9280 = vmul.u32 %v9279, 48
  %v9281 = vsub.s32 %v9275, %v9280
  %v9282 = vsub.s32 0, %v9281
  %v9283 = vsel %vm9273, %v9282, %v9281
  %vm9284 = vcmp.lt.s32.totalorder %v8410, 0
  %v9285 = vsub.s32 0, %v8410
  %v9286 = vsel %vm9284, %v9285, %v8410
  %v9287 = vmul.u32.u64.compose %v9286, 2863311531
  %v9288 = vextract.low.u32 %v9287
  %v9289 = vextract.high.u32 %v9287
  %v9290 = vshrl.u32 %v9289, 5
  %v9291 = vmul.u32 %v9290, 48
  %v9292 = vsub.s32 %v9286, %v9291
  %v9293 = vsub.s32 0, %v9292
  %v9294 = vsel %vm9284, %v9293, %v9292
  %vm9295 = vcmp.lt.s32.totalorder %v8411, 0
  %v9296 = vsub.s32 0, %v8411
  %v9297 = vsel %vm9295, %v9296, %v8411
  %v9298 = vmul.u32.u64.compose %v9297, 2863311531
  %v9299 = vextract.low.u32 %v9298
  %v9300 = vextract.high.u32 %v9298
  %v9301 = vshrl.u32 %v9300, 5
  %v9302 = vmul.u32 %v9301, 48
  %v9303 = vsub.s32 %v9297, %v9302
  %v9304 = vsub.s32 0, %v9303
  %v9305 = vsel %vm9295, %v9304, %v9303
  %vm9306 = vcmp.lt.s32.totalorder %v8412, 0
  %v9307 = vsub.s32 0, %v8412
  %v9308 = vsel %vm9306, %v9307, %v8412
  %v9309 = vmul.u32.u64.compose %v9308, 2863311531
  %v9310 = vextract.low.u32 %v9309
  %v9311 = vextract.high.u32 %v9309
  %v9312 = vshrl.u32 %v9311, 5
  %v9313 = vmul.u32 %v9312, 48
  %v9314 = vsub.s32 %v9308, %v9313
  %v9315 = vsub.s32 0, %v9314
  %v9316 = vsel %vm9306, %v9315, %v9314
  %vm9317 = vcmp.lt.s32.totalorder %v8413, 0
  %v9318 = vsub.s32 0, %v8413
  %v9319 = vsel %vm9317, %v9318, %v8413
  %v9320 = vmul.u32.u64.compose %v9319, 2863311531
  %v9321 = vextract.low.u32 %v9320
  %v9322 = vextract.high.u32 %v9320
  %v9323 = vshrl.u32 %v9322, 5
  %v9324 = vmul.u32 %v9323, 48
  %v9325 = vsub.s32 %v9319, %v9324
  %v9326 = vsub.s32 0, %v9325
  %v9327 = vsel %vm9317, %v9326, %v9325
  %vm9328 = vcmp.lt.s32.totalorder %v8414, 0
  %v9329 = vsub.s32 0, %v8414
  %v9330 = vsel %vm9328, %v9329, %v8414
  %v9331 = vmul.u32.u64.compose %v9330, 2863311531
  %v9332 = vextract.low.u32 %v9331
  %v9333 = vextract.high.u32 %v9331
  %v9334 = vshrl.u32 %v9333, 5
  %v9335 = vmul.u32 %v9334, 48
  %v9336 = vsub.s32 %v9330, %v9335
  %v9337 = vsub.s32 0, %v9336
  %v9338 = vsel %vm9328, %v9337, %v9336
  %vm9339 = vcmp.lt.s32.totalorder %v8415, 0
  %v9340 = vsub.s32 0, %v8415
  %v9341 = vsel %vm9339, %v9340, %v8415
  %v9342 = vmul.u32.u64.compose %v9341, 2863311531
  %v9343 = vextract.low.u32 %v9342
  %v9344 = vextract.high.u32 %v9342
  %v9345 = vshrl.u32 %v9344, 5
  %v9346 = vmul.u32 %v9345, 48
  %v9347 = vsub.s32 %v9341, %v9346
  %v9348 = vsub.s32 0, %v9347
  %v9349 = vsel %vm9339, %v9348, %v9347
  %vm9350 = vcmp.lt.s32.totalorder %v8416, 0
  %v9351 = vsub.s32 0, %v8416
  %v9352 = vsel %vm9350, %v9351, %v8416
  %v9353 = vmul.u32.u64.compose %v9352, 2863311531
  %v9354 = vextract.low.u32 %v9353
  %v9355 = vextract.high.u32 %v9353
  %v9356 = vshrl.u32 %v9355, 5
  %v9357 = vmul.u32 %v9356, 48
  %v9358 = vsub.s32 %v9352, %v9357
  %v9359 = vsub.s32 0, %v9358
  %v9360 = vsel %vm9350, %v9359, %v9358
  %vm9361 = vcmp.lt.s32.totalorder %v8417, 0
  %v9362 = vsub.s32 0, %v8417
  %v9363 = vsel %vm9361, %v9362, %v8417
  %v9364 = vmul.u32.u64.compose %v9363, 2863311531
  %v9365 = vextract.low.u32 %v9364
  %v9366 = vextract.high.u32 %v9364
  %v9367 = vshrl.u32 %v9366, 5
  %v9368 = vmul.u32 %v9367, 48
  %v9369 = vsub.s32 %v9363, %v9368
  %v9370 = vsub.s32 0, %v9369
  %v9371 = vsel %vm9361, %v9370, %v9369
  %vm9372 = vcmp.lt.s32.totalorder %v8418, 0
  %v9373 = vsub.s32 0, %v8418
  %v9374 = vsel %vm9372, %v9373, %v8418
  %v9375 = vmul.u32.u64.compose %v9374, 2863311531
  %v9376 = vextract.low.u32 %v9375
  %v9377 = vextract.high.u32 %v9375
  %v9378 = vshrl.u32 %v9377, 5
  %v9379 = vmul.u32 %v9378, 48
  %v9380 = vsub.s32 %v9374, %v9379
  %v9381 = vsub.s32 0, %v9380
  %v9382 = vsel %vm9372, %v9381, %v9380
  %vm9383 = vcmp.lt.s32.totalorder %v8419, 0
  %v9384 = vsub.s32 0, %v8419
  %v9385 = vsel %vm9383, %v9384, %v8419
  %v9386 = vmul.u32.u64.compose %v9385, 2863311531
  %v9387 = vextract.low.u32 %v9386
  %v9388 = vextract.high.u32 %v9386
  %v9389 = vshrl.u32 %v9388, 5
  %v9390 = vmul.u32 %v9389, 48
  %v9391 = vsub.s32 %v9385, %v9390
  %v9392 = vsub.s32 0, %v9391
  %v9393 = vsel %vm9383, %v9392, %v9391
  %vm9394 = vcmp.lt.s32.totalorder %v8420, 0
  %v9395 = vsub.s32 0, %v8420
  %v9396 = vsel %vm9394, %v9395, %v8420
  %v9397 = vmul.u32.u64.compose %v9396, 2863311531
  %v9398 = vextract.low.u32 %v9397
  %v9399 = vextract.high.u32 %v9397
  %v9400 = vshrl.u32 %v9399, 5
  %v9401 = vmul.u32 %v9400, 48
  %v9402 = vsub.s32 %v9396, %v9401
  %v9403 = vsub.s32 0, %v9402
  %v9404 = vsel %vm9394, %v9403, %v9402
  %vm9405 = vcmp.lt.s32.totalorder %v8421, 0
  %v9406 = vsub.s32 0, %v8421
  %v9407 = vsel %vm9405, %v9406, %v8421
  %v9408 = vmul.u32.u64.compose %v9407, 2863311531
  %v9409 = vextract.low.u32 %v9408
  %v9410 = vextract.high.u32 %v9408
  %v9411 = vshrl.u32 %v9410, 5
  %v9412 = vmul.u32 %v9411, 48
  %v9413 = vsub.s32 %v9407, %v9412
  %v9414 = vsub.s32 0, %v9413
  %v9415 = vsel %vm9405, %v9414, %v9413
  %vm9416 = vcmp.lt.s32.totalorder %v8422, 0
  %v9417 = vsub.s32 0, %v8422
  %v9418 = vsel %vm9416, %v9417, %v8422
  %v9419 = vmul.u32.u64.compose %v9418, 2863311531
  %v9420 = vextract.low.u32 %v9419
  %v9421 = vextract.high.u32 %v9419
  %v9422 = vshrl.u32 %v9421, 5
  %v9423 = vmul.u32 %v9422, 48
  %v9424 = vsub.s32 %v9418, %v9423
  %v9425 = vsub.s32 0, %v9424
  %v9426 = vsel %vm9416, %v9425, %v9424
  %vm9427 = vcmp.lt.s32.totalorder %v8423, 0
  %v9428 = vsub.s32 0, %v8423
  %v9429 = vsel %vm9427, %v9428, %v8423
  %v9430 = vmul.u32.u64.compose %v9429, 2863311531
  %v9431 = vextract.low.u32 %v9430
  %v9432 = vextract.high.u32 %v9430
  %v9433 = vshrl.u32 %v9432, 5
  %v9434 = vmul.u32 %v9433, 48
  %v9435 = vsub.s32 %v9429, %v9434
  %v9436 = vsub.s32 0, %v9435
  %v9437 = vsel %vm9427, %v9436, %v9435
  %vm9438 = vcmp.lt.s32.totalorder %v8424, 0
  %v9439 = vsub.s32 0, %v8424
  %v9440 = vsel %vm9438, %v9439, %v8424
  %v9441 = vmul.u32.u64.compose %v9440, 2863311531
  %v9442 = vextract.low.u32 %v9441
  %v9443 = vextract.high.u32 %v9441
  %v9444 = vshrl.u32 %v9443, 5
  %v9445 = vmul.u32 %v9444, 48
  %v9446 = vsub.s32 %v9440, %v9445
  %v9447 = vsub.s32 0, %v9446
  %v9448 = vsel %vm9438, %v9447, %v9446
  %vm9449 = vcmp.lt.s32.totalorder %v8425, 0
  %v9450 = vsub.s32 0, %v8425
  %v9451 = vsel %vm9449, %v9450, %v8425
  %v9452 = vmul.u32.u64.compose %v9451, 2863311531
  %v9453 = vextract.low.u32 %v9452
  %v9454 = vextract.high.u32 %v9452
  %v9455 = vshrl.u32 %v9454, 5
  %v9456 = vmul.u32 %v9455, 48
  %v9457 = vsub.s32 %v9451, %v9456
  %v9458 = vsub.s32 0, %v9457
  %v9459 = vsel %vm9449, %v9458, %v9457
  %vm9460 = vcmp.lt.s32.totalorder %v8426, 0
  %v9461 = vsub.s32 0, %v8426
  %v9462 = vsel %vm9460, %v9461, %v8426
  %v9463 = vmul.u32.u64.compose %v9462, 2863311531
  %v9464 = vextract.low.u32 %v9463
  %v9465 = vextract.high.u32 %v9463
  %v9466 = vshrl.u32 %v9465, 5
  %v9467 = vmul.u32 %v9466, 48
  %v9468 = vsub.s32 %v9462, %v9467
  %v9469 = vsub.s32 0, %v9468
  %v9470 = vsel %vm9460, %v9469, %v9468
  %vm9471 = vcmp.lt.s32.totalorder %v8427, 0
  %v9472 = vsub.s32 0, %v8427
  %v9473 = vsel %vm9471, %v9472, %v8427
  %v9474 = vmul.u32.u64.compose %v9473, 2863311531
  %v9475 = vextract.low.u32 %v9474
  %v9476 = vextract.high.u32 %v9474
  %v9477 = vshrl.u32 %v9476, 5
  %v9478 = vmul.u32 %v9477, 48
  %v9479 = vsub.s32 %v9473, %v9478
  %v9480 = vsub.s32 0, %v9479
  %v9481 = vsel %vm9471, %v9480, %v9479
  %vm9482 = vcmp.lt.s32.totalorder %v8428, 0
  %v9483 = vsub.s32 0, %v8428
  %v9484 = vsel %vm9482, %v9483, %v8428
  %v9485 = vmul.u32.u64.compose %v9484, 2863311531
  %v9486 = vextract.low.u32 %v9485
  %v9487 = vextract.high.u32 %v9485
  %v9488 = vshrl.u32 %v9487, 5
  %v9489 = vmul.u32 %v9488, 48
  %v9490 = vsub.s32 %v9484, %v9489
  %v9491 = vsub.s32 0, %v9490
  %v9492 = vsel %vm9482, %v9491, %v9490
  %vm9493 = vcmp.lt.s32.totalorder %v8429, 0
  %v9494 = vsub.s32 0, %v8429
  %v9495 = vsel %vm9493, %v9494, %v8429
  %v9496 = vmul.u32.u64.compose %v9495, 2863311531
  %v9497 = vextract.low.u32 %v9496
  %v9498 = vextract.high.u32 %v9496
  %v9499 = vshrl.u32 %v9498, 5
  %v9500 = vmul.u32 %v9499, 48
  %v9501 = vsub.s32 %v9495, %v9500
  %v9502 = vsub.s32 0, %v9501
  %v9503 = vsel %vm9493, %v9502, %v9501
  %vm9504 = vcmp.lt.s32.totalorder %v8430, 0
  %v9505 = vsub.s32 0, %v8430
  %v9506 = vsel %vm9504, %v9505, %v8430
  %v9507 = vmul.u32.u64.compose %v9506, 2863311531
  %v9508 = vextract.low.u32 %v9507
  %v9509 = vextract.high.u32 %v9507
  %v9510 = vshrl.u32 %v9509, 5
  %v9511 = vmul.u32 %v9510, 48
  %v9512 = vsub.s32 %v9506, %v9511
  %v9513 = vsub.s32 0, %v9512
  %v9514 = vsel %vm9504, %v9513, %v9512
  %vm9515 = vcmp.lt.s32.totalorder %v8431, 0
  %v9516 = vsub.s32 0, %v8431
  %v9517 = vsel %vm9515, %v9516, %v8431
  %v9518 = vmul.u32.u64.compose %v9517, 2863311531
  %v9519 = vextract.low.u32 %v9518
  %v9520 = vextract.high.u32 %v9518
  %v9521 = vshrl.u32 %v9520, 5
  %v9522 = vmul.u32 %v9521, 48
  %v9523 = vsub.s32 %v9517, %v9522
  %v9524 = vsub.s32 0, %v9523
  %v9525 = vsel %vm9515, %v9524, %v9523
  %vm9526 = vcmp.lt.s32.totalorder %v8432, 0
  %v9527 = vsub.s32 0, %v8432
  %v9528 = vsel %vm9526, %v9527, %v8432
  %v9529 = vmul.u32.u64.compose %v9528, 2863311531
  %v9530 = vextract.low.u32 %v9529
  %v9531 = vextract.high.u32 %v9529
  %v9532 = vshrl.u32 %v9531, 5
  %v9533 = vmul.u32 %v9532, 48
  %v9534 = vsub.s32 %v9528, %v9533
  %v9535 = vsub.s32 0, %v9534
  %v9536 = vsel %vm9526, %v9535, %v9534
  %vm9537 = vcmp.lt.s32.totalorder %v8433, 0
  %v9538 = vsub.s32 0, %v8433
  %v9539 = vsel %vm9537, %v9538, %v8433
  %v9540 = vmul.u32.u64.compose %v9539, 2863311531
  %v9541 = vextract.low.u32 %v9540
  %v9542 = vextract.high.u32 %v9540
  %v9543 = vshrl.u32 %v9542, 5
  %v9544 = vmul.u32 %v9543, 48
  %v9545 = vsub.s32 %v9539, %v9544
  %v9546 = vsub.s32 0, %v9545
  %v9547 = vsel %vm9537, %v9546, %v9545
  %vm9548 = vcmp.lt.s32.totalorder %v8434, 0
  %v9549 = vsub.s32 0, %v8434
  %v9550 = vsel %vm9548, %v9549, %v8434
  %v9551 = vmul.u32.u64.compose %v9550, 2863311531
  %v9552 = vextract.low.u32 %v9551
  %v9553 = vextract.high.u32 %v9551
  %v9554 = vshrl.u32 %v9553, 5
  %v9555 = vmul.u32 %v9554, 48
  %v9556 = vsub.s32 %v9550, %v9555
  %v9557 = vsub.s32 0, %v9556
  %v9558 = vsel %vm9548, %v9557, %v9556
  %vm9559 = vcmp.lt.s32.totalorder %v8435, 0
  %v9560 = vsub.s32 0, %v8435
  %v9561 = vsel %vm9559, %v9560, %v8435
  %v9562 = vmul.u32.u64.compose %v9561, 2863311531
  %v9563 = vextract.low.u32 %v9562
  %v9564 = vextract.high.u32 %v9562
  %v9565 = vshrl.u32 %v9564, 5
  %v9566 = vmul.u32 %v9565, 48
  %v9567 = vsub.s32 %v9561, %v9566
  %v9568 = vsub.s32 0, %v9567
  %v9569 = vsel %vm9559, %v9568, %v9567
  %vm9570 = vcmp.lt.s32.totalorder %v8436, 0
  %v9571 = vsub.s32 0, %v8436
  %v9572 = vsel %vm9570, %v9571, %v8436
  %v9573 = vmul.u32.u64.compose %v9572, 2863311531
  %v9574 = vextract.low.u32 %v9573
  %v9575 = vextract.high.u32 %v9573
  %v9576 = vshrl.u32 %v9575, 5
  %v9577 = vmul.u32 %v9576, 48
  %v9578 = vsub.s32 %v9572, %v9577
  %v9579 = vsub.s32 0, %v9578
  %v9580 = vsel %vm9570, %v9579, %v9578
  %vm9581 = vcmp.lt.s32.totalorder %v8437, 0
  %v9582 = vsub.s32 0, %v8437
  %v9583 = vsel %vm9581, %v9582, %v8437
  %v9584 = vmul.u32.u64.compose %v9583, 2863311531
  %v9585 = vextract.low.u32 %v9584
  %v9586 = vextract.high.u32 %v9584
  %v9587 = vshrl.u32 %v9586, 5
  %v9588 = vmul.u32 %v9587, 48
  %v9589 = vsub.s32 %v9583, %v9588
  %v9590 = vsub.s32 0, %v9589
  %v9591 = vsel %vm9581, %v9590, %v9589
  %vm9592 = vcmp.lt.s32.totalorder %v8438, 0
  %v9593 = vsub.s32 0, %v8438
  %v9594 = vsel %vm9592, %v9593, %v8438
  %v9595 = vmul.u32.u64.compose %v9594, 2863311531
  %v9596 = vextract.low.u32 %v9595
  %v9597 = vextract.high.u32 %v9595
  %v9598 = vshrl.u32 %v9597, 5
  %v9599 = vmul.u32 %v9598, 48
  %v9600 = vsub.s32 %v9594, %v9599
  %v9601 = vsub.s32 0, %v9600
  %v9602 = vsel %vm9592, %v9601, %v9600
  %vm9603 = vcmp.lt.s32.totalorder %v8439, 0
  %v9604 = vsub.s32 0, %v8439
  %v9605 = vsel %vm9603, %v9604, %v8439
  %v9606 = vmul.u32.u64.compose %v9605, 2863311531
  %v9607 = vextract.low.u32 %v9606
  %v9608 = vextract.high.u32 %v9606
  %v9609 = vshrl.u32 %v9608, 5
  %v9610 = vmul.u32 %v9609, 48
  %v9611 = vsub.s32 %v9605, %v9610
  %v9612 = vsub.s32 0, %v9611
  %v9613 = vsel %vm9603, %v9612, %v9611
  %vm9614 = vcmp.lt.s32.totalorder %v8440, 0
  %v9615 = vsub.s32 0, %v8440
  %v9616 = vsel %vm9614, %v9615, %v8440
  %v9617 = vmul.u32.u64.compose %v9616, 2863311531
  %v9618 = vextract.low.u32 %v9617
  %v9619 = vextract.high.u32 %v9617
  %v9620 = vshrl.u32 %v9619, 5
  %v9621 = vmul.u32 %v9620, 48
  %v9622 = vsub.s32 %v9616, %v9621
  %v9623 = vsub.s32 0, %v9622
  %v9624 = vsel %vm9614, %v9623, %v9622
  %vm9625 = vcmp.lt.s32.totalorder %v8441, 0
  %v9626 = vsub.s32 0, %v8441
  %v9627 = vsel %vm9625, %v9626, %v8441
  %v9628 = vmul.u32.u64.compose %v9627, 2863311531
  %v9629 = vextract.low.u32 %v9628
  %v9630 = vextract.high.u32 %v9628
  %v9631 = vshrl.u32 %v9630, 5
  %v9632 = vmul.u32 %v9631, 48
  %v9633 = vsub.s32 %v9627, %v9632
  %v9634 = vsub.s32 0, %v9633
  %v9635 = vsel %vm9625, %v9634, %v9633
  %vm9636 = vcmp.lt.s32.totalorder %v8442, 0
  %v9637 = vsub.s32 0, %v8442
  %v9638 = vsel %vm9636, %v9637, %v8442
  %v9639 = vmul.u32.u64.compose %v9638, 2863311531
  %v9640 = vextract.low.u32 %v9639
  %v9641 = vextract.high.u32 %v9639
  %v9642 = vshrl.u32 %v9641, 5
  %v9643 = vmul.u32 %v9642, 48
  %v9644 = vsub.s32 %v9638, %v9643
  %v9645 = vsub.s32 0, %v9644
  %v9646 = vsel %vm9636, %v9645, %v9644
  %vm9647 = vcmp.lt.s32.totalorder %v8443, 0
  %v9648 = vsub.s32 0, %v8443
  %v9649 = vsel %vm9647, %v9648, %v8443
  %v9650 = vmul.u32.u64.compose %v9649, 2863311531
  %v9651 = vextract.low.u32 %v9650
  %v9652 = vextract.high.u32 %v9650
  %v9653 = vshrl.u32 %v9652, 5
  %v9654 = vmul.u32 %v9653, 48
  %v9655 = vsub.s32 %v9649, %v9654
  %v9656 = vsub.s32 0, %v9655
  %v9657 = vsel %vm9647, %v9656, %v9655
  %vm9658 = vcmp.lt.s32.totalorder %v8444, 0
  %v9659 = vsub.s32 0, %v8444
  %v9660 = vsel %vm9658, %v9659, %v8444
  %v9661 = vmul.u32.u64.compose %v9660, 2863311531
  %v9662 = vextract.low.u32 %v9661
  %v9663 = vextract.high.u32 %v9661
  %v9664 = vshrl.u32 %v9663, 5
  %v9665 = vmul.u32 %v9664, 48
  %v9666 = vsub.s32 %v9660, %v9665
  %v9667 = vsub.s32 0, %v9666
  %v9668 = vsel %vm9658, %v9667, %v9666
  %vm9669 = vcmp.lt.s32.totalorder %v8445, 0
  %v9670 = vsub.s32 0, %v8445
  %v9671 = vsel %vm9669, %v9670, %v8445
  %v9672 = vmul.u32.u64.compose %v9671, 2863311531
  %v9673 = vextract.low.u32 %v9672
  %v9674 = vextract.high.u32 %v9672
  %v9675 = vshrl.u32 %v9674, 5
  %v9676 = vmul.u32 %v9675, 48
  %v9677 = vsub.s32 %v9671, %v9676
  %v9678 = vsub.s32 0, %v9677
  %v9679 = vsel %vm9669, %v9678, %v9677
  %vm9680 = vcmp.lt.s32.totalorder %v8446, 0
  %v9681 = vsub.s32 0, %v8446
  %v9682 = vsel %vm9680, %v9681, %v8446
  %v9683 = vmul.u32.u64.compose %v9682, 2863311531
  %v9684 = vextract.low.u32 %v9683
  %v9685 = vextract.high.u32 %v9683
  %v9686 = vshrl.u32 %v9685, 5
  %v9687 = vmul.u32 %v9686, 48
  %v9688 = vsub.s32 %v9682, %v9687
  %v9689 = vsub.s32 0, %v9688
  %v9690 = vsel %vm9680, %v9689, %v9688
  %vm9691 = vcmp.lt.s32.totalorder %v8447, 0
  %v9692 = vsub.s32 0, %v8447
  %v9693 = vsel %vm9691, %v9692, %v8447
  %v9694 = vmul.u32.u64.compose %v9693, 2863311531
  %v9695 = vextract.low.u32 %v9694
  %v9696 = vextract.high.u32 %v9694
  %v9697 = vshrl.u32 %v9696, 5
  %v9698 = vmul.u32 %v9697, 48
  %v9699 = vsub.s32 %v9693, %v9698
  %v9700 = vsub.s32 0, %v9699
  %v9701 = vsel %vm9691, %v9700, %v9699
  %vm9702 = vcmp.lt.s32.totalorder %v8448, 0
  %v9703 = vsub.s32 0, %v8448
  %v9704 = vsel %vm9702, %v9703, %v8448
  %v9705 = vmul.u32.u64.compose %v9704, 2863311531
  %v9706 = vextract.low.u32 %v9705
  %v9707 = vextract.high.u32 %v9705
  %v9708 = vshrl.u32 %v9707, 5
  %v9709 = vmul.u32 %v9708, 48
  %v9710 = vsub.s32 %v9704, %v9709
  %v9711 = vsub.s32 0, %v9710
  %v9712 = vsel %vm9702, %v9711, %v9710
  %vm9713 = vcmp.lt.s32.totalorder %v8449, 0
  %v9714 = vsub.s32 0, %v8449
  %v9715 = vsel %vm9713, %v9714, %v8449
  %v9716 = vmul.u32.u64.compose %v9715, 2863311531
  %v9717 = vextract.low.u32 %v9716
  %v9718 = vextract.high.u32 %v9716
  %v9719 = vshrl.u32 %v9718, 5
  %v9720 = vmul.u32 %v9719, 48
  %v9721 = vsub.s32 %v9715, %v9720
  %v9722 = vsub.s32 0, %v9721
  %v9723 = vsel %vm9713, %v9722, %v9721
  %vm9724 = vcmp.lt.s32.totalorder %v8450, 0
  %v9725 = vsub.s32 0, %v8450
  %v9726 = vsel %vm9724, %v9725, %v8450
  %v9727 = vmul.u32.u64.compose %v9726, 2863311531
  %v9728 = vextract.low.u32 %v9727
  %v9729 = vextract.high.u32 %v9727
  %v9730 = vshrl.u32 %v9729, 5
  %v9731 = vmul.u32 %v9730, 48
  %v9732 = vsub.s32 %v9726, %v9731
  %v9733 = vsub.s32 0, %v9732
  %v9734 = vsel %vm9724, %v9733, %v9732
  %vm9735 = vcmp.lt.s32.totalorder %v8451, 0
  %v9736 = vsub.s32 0, %v8451
  %v9737 = vsel %vm9735, %v9736, %v8451
  %v9738 = vmul.u32.u64.compose %v9737, 2863311531
  %v9739 = vextract.low.u32 %v9738
  %v9740 = vextract.high.u32 %v9738
  %v9741 = vshrl.u32 %v9740, 5
  %v9742 = vmul.u32 %v9741, 48
  %v9743 = vsub.s32 %v9737, %v9742
  %v9744 = vsub.s32 0, %v9743
  %v9745 = vsel %vm9735, %v9744, %v9743
  %vm9746 = vcmp.lt.s32.totalorder %v8452, 0
  %v9747 = vsub.s32 0, %v8452
  %v9748 = vsel %vm9746, %v9747, %v8452
  %v9749 = vmul.u32.u64.compose %v9748, 2863311531
  %v9750 = vextract.low.u32 %v9749
  %v9751 = vextract.high.u32 %v9749
  %v9752 = vshrl.u32 %v9751, 5
  %v9753 = vmul.u32 %v9752, 48
  %v9754 = vsub.s32 %v9748, %v9753
  %v9755 = vsub.s32 0, %v9754
  %v9756 = vsel %vm9746, %v9755, %v9754
  %vm9757 = vcmp.lt.s32.totalorder %v8453, 0
  %v9758 = vsub.s32 0, %v8453
  %v9759 = vsel %vm9757, %v9758, %v8453
  %v9760 = vmul.u32.u64.compose %v9759, 2863311531
  %v9761 = vextract.low.u32 %v9760
  %v9762 = vextract.high.u32 %v9760
  %v9763 = vshrl.u32 %v9762, 5
  %v9764 = vmul.u32 %v9763, 48
  %v9765 = vsub.s32 %v9759, %v9764
  %v9766 = vsub.s32 0, %v9765
  %v9767 = vsel %vm9757, %v9766, %v9765
  %vm9768 = vcmp.lt.s32.totalorder %v8454, 0
  %v9769 = vsub.s32 0, %v8454
  %v9770 = vsel %vm9768, %v9769, %v8454
  %v9771 = vmul.u32.u64.compose %v9770, 2863311531
  %v9772 = vextract.low.u32 %v9771
  %v9773 = vextract.high.u32 %v9771
  %v9774 = vshrl.u32 %v9773, 5
  %v9775 = vmul.u32 %v9774, 48
  %v9776 = vsub.s32 %v9770, %v9775
  %v9777 = vsub.s32 0, %v9776
  %v9778 = vsel %vm9768, %v9777, %v9776
  %vm9779 = vcmp.lt.s32.totalorder %v8455, 0
  %v9780 = vsub.s32 0, %v8455
  %v9781 = vsel %vm9779, %v9780, %v8455
  %v9782 = vmul.u32.u64.compose %v9781, 2863311531
  %v9783 = vextract.low.u32 %v9782
  %v9784 = vextract.high.u32 %v9782
  %v9785 = vshrl.u32 %v9784, 5
  %v9786 = vmul.u32 %v9785, 48
  %v9787 = vsub.s32 %v9781, %v9786
  %v9788 = vsub.s32 0, %v9787
  %v9789 = vsel %vm9779, %v9788, %v9787
  %vm9790 = vcmp.lt.s32.totalorder %v8456, 0
  %v9791 = vsub.s32 0, %v8456
  %v9792 = vsel %vm9790, %v9791, %v8456
  %v9793 = vmul.u32.u64.compose %v9792, 2863311531
  %v9794 = vextract.low.u32 %v9793
  %v9795 = vextract.high.u32 %v9793
  %v9796 = vshrl.u32 %v9795, 5
  %v9797 = vmul.u32 %v9796, 48
  %v9798 = vsub.s32 %v9792, %v9797
  %v9799 = vsub.s32 0, %v9798
  %v9800 = vsel %vm9790, %v9799, %v9798
  %vm9801 = vcmp.lt.s32.totalorder %v8457, 0
  %v9802 = vsub.s32 0, %v8457
  %v9803 = vsel %vm9801, %v9802, %v8457
  %v9804 = vmul.u32.u64.compose %v9803, 2863311531
  %v9805 = vextract.low.u32 %v9804
  %v9806 = vextract.high.u32 %v9804
  %v9807 = vshrl.u32 %v9806, 5
  %v9808 = vmul.u32 %v9807, 48
  %v9809 = vsub.s32 %v9803, %v9808
  %v9810 = vsub.s32 0, %v9809
  %v9811 = vsel %vm9801, %v9810, %v9809
  %vm9812 = vcmp.lt.s32.totalorder %v8458, 0
  %v9813 = vsub.s32 0, %v8458
  %v9814 = vsel %vm9812, %v9813, %v8458
  %v9815 = vmul.u32.u64.compose %v9814, 2863311531
  %v9816 = vextract.low.u32 %v9815
  %v9817 = vextract.high.u32 %v9815
  %v9818 = vshrl.u32 %v9817, 5
  %v9819 = vmul.u32 %v9818, 48
  %v9820 = vsub.s32 %v9814, %v9819
  %v9821 = vsub.s32 0, %v9820
  %v9822 = vsel %vm9812, %v9821, %v9820
  %vm9823 = vcmp.lt.s32.totalorder %v8459, 0
  %v9824 = vsub.s32 0, %v8459
  %v9825 = vsel %vm9823, %v9824, %v8459
  %v9826 = vmul.u32.u64.compose %v9825, 2863311531
  %v9827 = vextract.low.u32 %v9826
  %v9828 = vextract.high.u32 %v9826
  %v9829 = vshrl.u32 %v9828, 5
  %v9830 = vmul.u32 %v9829, 48
  %v9831 = vsub.s32 %v9825, %v9830
  %v9832 = vsub.s32 0, %v9831
  %v9833 = vsel %vm9823, %v9832, %v9831
  %vm9834 = vcmp.lt.s32.totalorder %v8460, 0
  %v9835 = vsub.s32 0, %v8460
  %v9836 = vsel %vm9834, %v9835, %v8460
  %v9837 = vmul.u32.u64.compose %v9836, 2863311531
  %v9838 = vextract.low.u32 %v9837
  %v9839 = vextract.high.u32 %v9837
  %v9840 = vshrl.u32 %v9839, 5
  %v9841 = vmul.u32 %v9840, 48
  %v9842 = vsub.s32 %v9836, %v9841
  %v9843 = vsub.s32 0, %v9842
  %v9844 = vsel %vm9834, %v9843, %v9842
  %vm9845 = vcmp.lt.s32.totalorder %v8461, 0
  %v9846 = vsub.s32 0, %v8461
  %v9847 = vsel %vm9845, %v9846, %v8461
  %v9848 = vmul.u32.u64.compose %v9847, 2863311531
  %v9849 = vextract.low.u32 %v9848
  %v9850 = vextract.high.u32 %v9848
  %v9851 = vshrl.u32 %v9850, 5
  %v9852 = vmul.u32 %v9851, 48
  %v9853 = vsub.s32 %v9847, %v9852
  %v9854 = vsub.s32 0, %v9853
  %v9855 = vsel %vm9845, %v9854, %v9853
  %vm9856 = vcmp.lt.s32.totalorder %v8462, 0
  %v9857 = vsub.s32 0, %v8462
  %v9858 = vsel %vm9856, %v9857, %v8462
  %v9859 = vmul.u32.u64.compose %v9858, 2863311531
  %v9860 = vextract.low.u32 %v9859
  %v9861 = vextract.high.u32 %v9859
  %v9862 = vshrl.u32 %v9861, 5
  %v9863 = vmul.u32 %v9862, 48
  %v9864 = vsub.s32 %v9858, %v9863
  %v9865 = vsub.s32 0, %v9864
  %v9866 = vsel %vm9856, %v9865, %v9864
  %vm9867 = vcmp.lt.s32.totalorder %v8463, 0
  %v9868 = vsub.s32 0, %v8463
  %v9869 = vsel %vm9867, %v9868, %v8463
  %v9870 = vmul.u32.u64.compose %v9869, 2863311531
  %v9871 = vextract.low.u32 %v9870
  %v9872 = vextract.high.u32 %v9870
  %v9873 = vshrl.u32 %v9872, 5
  %v9874 = vmul.u32 %v9873, 48
  %v9875 = vsub.s32 %v9869, %v9874
  %v9876 = vsub.s32 0, %v9875
  %v9877 = vsel %vm9867, %v9876, %v9875
  %vm9878 = vcmp.lt.s32.totalorder %v8464, 0
  %v9879 = vsub.s32 0, %v8464
  %v9880 = vsel %vm9878, %v9879, %v8464
  %v9881 = vmul.u32.u64.compose %v9880, 2863311531
  %v9882 = vextract.low.u32 %v9881
  %v9883 = vextract.high.u32 %v9881
  %v9884 = vshrl.u32 %v9883, 5
  %v9885 = vmul.u32 %v9884, 48
  %v9886 = vsub.s32 %v9880, %v9885
  %v9887 = vsub.s32 0, %v9886
  %v9888 = vsel %vm9878, %v9887, %v9886
  %vm9889 = vcmp.lt.s32.totalorder %v8465, 0
  %v9890 = vsub.s32 0, %v8465
  %v9891 = vsel %vm9889, %v9890, %v8465
  %v9892 = vmul.u32.u64.compose %v9891, 2863311531
  %v9893 = vextract.low.u32 %v9892
  %v9894 = vextract.high.u32 %v9892
  %v9895 = vshrl.u32 %v9894, 5
  %v9896 = vmul.u32 %v9895, 48
  %v9897 = vsub.s32 %v9891, %v9896
  %v9898 = vsub.s32 0, %v9897
  %v9899 = vsel %vm9889, %v9898, %v9897
  %vm9900 = vcmp.lt.s32.totalorder %v8466, 0
  %v9901 = vsub.s32 0, %v8466
  %v9902 = vsel %vm9900, %v9901, %v8466
  %v9903 = vmul.u32.u64.compose %v9902, 2863311531
  %v9904 = vextract.low.u32 %v9903
  %v9905 = vextract.high.u32 %v9903
  %v9906 = vshrl.u32 %v9905, 5
  %v9907 = vmul.u32 %v9906, 48
  %v9908 = vsub.s32 %v9902, %v9907
  %v9909 = vsub.s32 0, %v9908
  %v9910 = vsel %vm9900, %v9909, %v9908
  %vm9911 = vcmp.lt.s32.totalorder %v8467, 0
  %v9912 = vsub.s32 0, %v8467
  %v9913 = vsel %vm9911, %v9912, %v8467
  %v9914 = vmul.u32.u64.compose %v9913, 2863311531
  %v9915 = vextract.low.u32 %v9914
  %v9916 = vextract.high.u32 %v9914
  %v9917 = vshrl.u32 %v9916, 5
  %v9918 = vmul.u32 %v9917, 48
  %v9919 = vsub.s32 %v9913, %v9918
  %v9920 = vsub.s32 0, %v9919
  %v9921 = vsel %vm9911, %v9920, %v9919
  %vm9922 = vcmp.lt.s32.totalorder %v8468, 0
  %v9923 = vsub.s32 0, %v8468
  %v9924 = vsel %vm9922, %v9923, %v8468
  %v9925 = vmul.u32.u64.compose %v9924, 2863311531
  %v9926 = vextract.low.u32 %v9925
  %v9927 = vextract.high.u32 %v9925
  %v9928 = vshrl.u32 %v9927, 5
  %v9929 = vmul.u32 %v9928, 48
  %v9930 = vsub.s32 %v9924, %v9929
  %v9931 = vsub.s32 0, %v9930
  %v9932 = vsel %vm9922, %v9931, %v9930
  %vm9933 = vcmp.lt.s32.totalorder %v8469, 0
  %v9934 = vsub.s32 0, %v8469
  %v9935 = vsel %vm9933, %v9934, %v8469
  %v9936 = vmul.u32.u64.compose %v9935, 2863311531
  %v9937 = vextract.low.u32 %v9936
  %v9938 = vextract.high.u32 %v9936
  %v9939 = vshrl.u32 %v9938, 5
  %v9940 = vmul.u32 %v9939, 48
  %v9941 = vsub.s32 %v9935, %v9940
  %v9942 = vsub.s32 0, %v9941
  %v9943 = vsel %vm9933, %v9942, %v9941
  %vm9944 = vcmp.lt.s32.totalorder %v8470, 0
  %v9945 = vsub.s32 0, %v8470
  %v9946 = vsel %vm9944, %v9945, %v8470
  %v9947 = vmul.u32.u64.compose %v9946, 2863311531
  %v9948 = vextract.low.u32 %v9947
  %v9949 = vextract.high.u32 %v9947
  %v9950 = vshrl.u32 %v9949, 5
  %v9951 = vmul.u32 %v9950, 48
  %v9952 = vsub.s32 %v9946, %v9951
  %v9953 = vsub.s32 0, %v9952
  %v9954 = vsel %vm9944, %v9953, %v9952
  %vm9955 = vcmp.lt.s32.totalorder %v8471, 0
  %v9956 = vsub.s32 0, %v8471
  %v9957 = vsel %vm9955, %v9956, %v8471
  %v9958 = vmul.u32.u64.compose %v9957, 2863311531
  %v9959 = vextract.low.u32 %v9958
  %v9960 = vextract.high.u32 %v9958
  %v9961 = vshrl.u32 %v9960, 5
  %v9962 = vmul.u32 %v9961, 48
  %v9963 = vsub.s32 %v9957, %v9962
  %v9964 = vsub.s32 0, %v9963
  %v9965 = vsel %vm9955, %v9964, %v9963
  %vm9966 = vcmp.lt.s32.totalorder %v8472, 0
  %v9967 = vsub.s32 0, %v8472
  %v9968 = vsel %vm9966, %v9967, %v8472
  %v9969 = vmul.u32.u64.compose %v9968, 2863311531
  %v9970 = vextract.low.u32 %v9969
  %v9971 = vextract.high.u32 %v9969
  %v9972 = vshrl.u32 %v9971, 5
  %v9973 = vmul.u32 %v9972, 48
  %v9974 = vsub.s32 %v9968, %v9973
  %v9975 = vsub.s32 0, %v9974
  %v9976 = vsel %vm9966, %v9975, %v9974
  %vm9977 = vcmp.lt.s32.totalorder %v8473, 0
  %v9978 = vsub.s32 0, %v8473
  %v9979 = vsel %vm9977, %v9978, %v8473
  %v9980 = vmul.u32.u64.compose %v9979, 2863311531
  %v9981 = vextract.low.u32 %v9980
  %v9982 = vextract.high.u32 %v9980
  %v9983 = vshrl.u32 %v9982, 5
  %v9984 = vmul.u32 %v9983, 48
  %v9985 = vsub.s32 %v9979, %v9984
  %v9986 = vsub.s32 0, %v9985
  %v9987 = vsel %vm9977, %v9986, %v9985
  %vm9988 = vcmp.lt.s32.totalorder %v8474, 0
  %v9989 = vsub.s32 0, %v8474
  %v9990 = vsel %vm9988, %v9989, %v8474
  %v9991 = vmul.u32.u64.compose %v9990, 2863311531
  %v9992 = vextract.low.u32 %v9991
  %v9993 = vextract.high.u32 %v9991
  %v9994 = vshrl.u32 %v9993, 5
  %v9995 = vmul.u32 %v9994, 48
  %v9996 = vsub.s32 %v9990, %v9995
  %v9997 = vsub.s32 0, %v9996
  %v9998 = vsel %vm9988, %v9997, %v9996
  %vm9999 = vcmp.lt.s32.totalorder %v8475, 0
  %v10000 = vsub.s32 0, %v8475
  %v10001 = vsel %vm9999, %v10000, %v8475
  %v10002 = vmul.u32.u64.compose %v10001, 2863311531
  %v10003 = vextract.low.u32 %v10002
  %v10004 = vextract.high.u32 %v10002
  %v10005 = vshrl.u32 %v10004, 5
  %v10006 = vmul.u32 %v10005, 48
  %v10007 = vsub.s32 %v10001, %v10006
  %v10008 = vsub.s32 0, %v10007
  %v10009 = vsel %vm9999, %v10008, %v10007
  %vm10010 = vcmp.lt.s32.totalorder %v8476, 0
  %v10011 = vsub.s32 0, %v8476
  %v10012 = vsel %vm10010, %v10011, %v8476
  %v10013 = vmul.u32.u64.compose %v10012, 2863311531
  %v10014 = vextract.low.u32 %v10013
  %v10015 = vextract.high.u32 %v10013
  %v10016 = vshrl.u32 %v10015, 5
  %v10017 = vmul.u32 %v10016, 48
  %v10018 = vsub.s32 %v10012, %v10017
  %v10019 = vsub.s32 0, %v10018
  %v10020 = vsel %vm10010, %v10019, %v10018
  %vm10021 = vcmp.lt.s32.totalorder %v8477, 0
  %v10022 = vsub.s32 0, %v8477
  %v10023 = vsel %vm10021, %v10022, %v8477
  %v10024 = vmul.u32.u64.compose %v10023, 2863311531
  %v10025 = vextract.low.u32 %v10024
  %v10026 = vextract.high.u32 %v10024
  %v10027 = vshrl.u32 %v10026, 5
  %v10028 = vmul.u32 %v10027, 48
  %v10029 = vsub.s32 %v10023, %v10028
  %v10030 = vsub.s32 0, %v10029
  %v10031 = vsel %vm10021, %v10030, %v10029
  %vm10032 = vcmp.lt.s32.totalorder %v8478, 0
  %v10033 = vsub.s32 0, %v8478
  %v10034 = vsel %vm10032, %v10033, %v8478
  %v10035 = vmul.u32.u64.compose %v10034, 2863311531
  %v10036 = vextract.low.u32 %v10035
  %v10037 = vextract.high.u32 %v10035
  %v10038 = vshrl.u32 %v10037, 5
  %v10039 = vmul.u32 %v10038, 48
  %v10040 = vsub.s32 %v10034, %v10039
  %v10041 = vsub.s32 0, %v10040
  %v10042 = vsel %vm10032, %v10041, %v10040
  %vm10043 = vcmp.lt.s32.totalorder %v8479, 0
  %v10044 = vsub.s32 0, %v8479
  %v10045 = vsel %vm10043, %v10044, %v8479
  %v10046 = vmul.u32.u64.compose %v10045, 2863311531
  %v10047 = vextract.low.u32 %v10046
  %v10048 = vextract.high.u32 %v10046
  %v10049 = vshrl.u32 %v10048, 5
  %v10050 = vmul.u32 %v10049, 48
  %v10051 = vsub.s32 %v10045, %v10050
  %v10052 = vsub.s32 0, %v10051
  %v10053 = vsel %vm10043, %v10052, %v10051
  %vm10054 = vcmp.lt.s32.totalorder %v8480, 0
  %v10055 = vsub.s32 0, %v8480
  %v10056 = vsel %vm10054, %v10055, %v8480
  %v10057 = vmul.u32.u64.compose %v10056, 2863311531
  %v10058 = vextract.low.u32 %v10057
  %v10059 = vextract.high.u32 %v10057
  %v10060 = vshrl.u32 %v10059, 5
  %v10061 = vmul.u32 %v10060, 48
  %v10062 = vsub.s32 %v10056, %v10061
  %v10063 = vsub.s32 0, %v10062
  %v10064 = vsel %vm10054, %v10063, %v10062
  %vm10065 = vcmp.ne.s32.totalorder %v8491, 0
  %vm10066 = vcmp.ne.s32.totalorder %v8502, 0
  %vm10067 = vcmp.ne.s32.totalorder %v8513, 0
  %vm10068 = vcmp.ne.s32.totalorder %v8524, 0
  %vm10069 = vcmp.ne.s32.totalorder %v8535, 0
  %vm10070 = vcmp.ne.s32.totalorder %v8546, 0
  %vm10071 = vcmp.ne.s32.totalorder %v8557, 0
  %vm10072 = vcmp.ne.s32.totalorder %v8568, 0
  %vm10073 = vcmp.ne.s32.totalorder %v8579, 0
  %vm10074 = vcmp.ne.s32.totalorder %v8590, 0
  %vm10075 = vcmp.ne.s32.totalorder %v8601, 0
  %vm10076 = vcmp.ne.s32.totalorder %v8612, 0
  %vm10077 = vcmp.ne.s32.totalorder %v8623, 0
  %vm10078 = vcmp.ne.s32.totalorder %v8634, 0
  %vm10079 = vcmp.ne.s32.totalorder %v8645, 0
  %vm10080 = vcmp.ne.s32.totalorder %v8656, 0
  %vm10081 = vcmp.ne.s32.totalorder %v8667, 0
  %vm10082 = vcmp.ne.s32.totalorder %v8678, 0
  %vm10083 = vcmp.ne.s32.totalorder %v8689, 0
  %vm10084 = vcmp.ne.s32.totalorder %v8700, 0
  %vm10085 = vcmp.ne.s32.totalorder %v8711, 0
  %vm10086 = vcmp.ne.s32.totalorder %v8722, 0
  %vm10087 = vcmp.ne.s32.totalorder %v8733, 0
  %vm10088 = vcmp.ne.s32.totalorder %v8744, 0
  %vm10089 = vcmp.ne.s32.totalorder %v8755, 0
  %vm10090 = vcmp.ne.s32.totalorder %v8766, 0
  %vm10091 = vcmp.ne.s32.totalorder %v8777, 0
  %vm10092 = vcmp.ne.s32.totalorder %v8788, 0
  %vm10093 = vcmp.ne.s32.totalorder %v8799, 0
  %vm10094 = vcmp.ne.s32.totalorder %v8810, 0
  %vm10095 = vcmp.ne.s32.totalorder %v8821, 0
  %vm10096 = vcmp.ne.s32.totalorder %v8832, 0
  %vm10097 = vcmp.ne.s32.totalorder %v8843, 0
  %vm10098 = vcmp.ne.s32.totalorder %v8854, 0
  %vm10099 = vcmp.ne.s32.totalorder %v8865, 0
  %vm10100 = vcmp.ne.s32.totalorder %v8876, 0
  %vm10101 = vcmp.ne.s32.totalorder %v8887, 0
  %vm10102 = vcmp.ne.s32.totalorder %v8898, 0
  %vm10103 = vcmp.ne.s32.totalorder %v8909, 0
  %vm10104 = vcmp.ne.s32.totalorder %v8920, 0
  %vm10105 = vcmp.ne.s32.totalorder %v8931, 0
  %vm10106 = vcmp.ne.s32.totalorder %v8942, 0
  %vm10107 = vcmp.ne.s32.totalorder %v8953, 0
  %vm10108 = vcmp.ne.s32.totalorder %v8964, 0
  %vm10109 = vcmp.ne.s32.totalorder %v8975, 0
  %vm10110 = vcmp.ne.s32.totalorder %v8986, 0
  %vm10111 = vcmp.ne.s32.totalorder %v8997, 0
  %vm10112 = vcmp.ne.s32.totalorder %v9008, 0
  %vm10113 = vcmp.ne.s32.totalorder %v9019, 0
  %vm10114 = vcmp.ne.s32.totalorder %v9030, 0
  %vm10115 = vcmp.ne.s32.totalorder %v9041, 0
  %vm10116 = vcmp.ne.s32.totalorder %v9052, 0
  %vm10117 = vcmp.ne.s32.totalorder %v9063, 0
  %vm10118 = vcmp.ne.s32.totalorder %v9074, 0
  %vm10119 = vcmp.ne.s32.totalorder %v9085, 0
  %vm10120 = vcmp.ne.s32.totalorder %v9096, 0
  %vm10121 = vcmp.ne.s32.totalorder %v9107, 0
  %vm10122 = vcmp.ne.s32.totalorder %v9118, 0
  %vm10123 = vcmp.ne.s32.totalorder %v9129, 0
  %vm10124 = vcmp.ne.s32.totalorder %v9140, 0
  %vm10125 = vcmp.ne.s32.totalorder %v9151, 0
  %vm10126 = vcmp.ne.s32.totalorder %v9162, 0
  %vm10127 = vcmp.ne.s32.totalorder %v9173, 0
  %vm10128 = vcmp.ne.s32.totalorder %v9184, 0
  %vm10129 = vcmp.ne.s32.totalorder %v9195, 0
  %vm10130 = vcmp.ne.s32.totalorder %v9206, 0
  %vm10131 = vcmp.ne.s32.totalorder %v9217, 0
  %vm10132 = vcmp.ne.s32.totalorder %v9228, 0
  %vm10133 = vcmp.ne.s32.totalorder %v9239, 0
  %vm10134 = vcmp.ne.s32.totalorder %v9250, 0
  %vm10135 = vcmp.ne.s32.totalorder %v9261, 0
  %vm10136 = vcmp.ne.s32.totalorder %v9272, 0
  %vm10137 = vcmp.ne.s32.totalorder %v9283, 0
  %vm10138 = vcmp.ne.s32.totalorder %v9294, 0
  %vm10139 = vcmp.ne.s32.totalorder %v9305, 0
  %vm10140 = vcmp.ne.s32.totalorder %v9316, 0
  %vm10141 = vcmp.ne.s32.totalorder %v9327, 0
  %vm10142 = vcmp.ne.s32.totalorder %v9338, 0
  %vm10143 = vcmp.ne.s32.totalorder %v9349, 0
  %vm10144 = vcmp.ne.s32.totalorder %v9360, 0
  %vm10145 = vcmp.ne.s32.totalorder %v9371, 0
  %vm10146 = vcmp.ne.s32.totalorder %v9382, 0
  %vm10147 = vcmp.ne.s32.totalorder %v9393, 0
  %vm10148 = vcmp.ne.s32.totalorder %v9404, 0
  %vm10149 = vcmp.ne.s32.totalorder %v9415, 0
  %vm10150 = vcmp.ne.s32.totalorder %v9426, 0
  %vm10151 = vcmp.ne.s32.totalorder %v9437, 0
  %vm10152 = vcmp.ne.s32.totalorder %v9448, 0
  %vm10153 = vcmp.ne.s32.totalorder %v9459, 0
  %vm10154 = vcmp.ne.s32.totalorder %v9470, 0
  %vm10155 = vcmp.ne.s32.totalorder %v9481, 0
  %vm10156 = vcmp.ne.s32.totalorder %v9492, 0
  %vm10157 = vcmp.ne.s32.totalorder %v9503, 0
  %vm10158 = vcmp.ne.s32.totalorder %v9514, 0
  %vm10159 = vcmp.ne.s32.totalorder %v9525, 0
  %vm10160 = vcmp.ne.s32.totalorder %v9536, 0
  %vm10161 = vcmp.ne.s32.totalorder %v9547, 0
  %vm10162 = vcmp.ne.s32.totalorder %v9558, 0
  %vm10163 = vcmp.ne.s32.totalorder %v9569, 0
  %vm10164 = vcmp.ne.s32.totalorder %v9580, 0
  %vm10165 = vcmp.ne.s32.totalorder %v9591, 0
  %vm10166 = vcmp.ne.s32.totalorder %v9602, 0
  %vm10167 = vcmp.ne.s32.totalorder %v9613, 0
  %vm10168 = vcmp.ne.s32.totalorder %v9624, 0
  %vm10169 = vcmp.ne.s32.totalorder %v9635, 0
  %vm10170 = vcmp.ne.s32.totalorder %v9646, 0
  %vm10171 = vcmp.ne.s32.totalorder %v9657, 0
  %vm10172 = vcmp.ne.s32.totalorder %v9668, 0
  %vm10173 = vcmp.ne.s32.totalorder %v9679, 0
  %vm10174 = vcmp.ne.s32.totalorder %v9690, 0
  %vm10175 = vcmp.ne.s32.totalorder %v9701, 0
  %vm10176 = vcmp.ne.s32.totalorder %v9712, 0
  %vm10177 = vcmp.ne.s32.totalorder %v9723, 0
  %vm10178 = vcmp.ne.s32.totalorder %v9734, 0
  %vm10179 = vcmp.ne.s32.totalorder %v9745, 0
  %vm10180 = vcmp.ne.s32.totalorder %v9756, 0
  %vm10181 = vcmp.ne.s32.totalorder %v9767, 0
  %vm10182 = vcmp.ne.s32.totalorder %v9778, 0
  %vm10183 = vcmp.ne.s32.totalorder %v9789, 0
  %vm10184 = vcmp.ne.s32.totalorder %v9800, 0
  %vm10185 = vcmp.ne.s32.totalorder %v9811, 0
  %vm10186 = vcmp.ne.s32.totalorder %v9822, 0
  %vm10187 = vcmp.ne.s32.totalorder %v9833, 0
  %vm10188 = vcmp.ne.s32.totalorder %v9844, 0
  %vm10189 = vcmp.ne.s32.totalorder %v9855, 0
  %vm10190 = vcmp.ne.s32.totalorder %v9866, 0
  %vm10191 = vcmp.ne.s32.totalorder %v9877, 0
  %vm10192 = vcmp.ne.s32.totalorder %v9888, 0
  %vm10193 = vcmp.ne.s32.totalorder %v9899, 0
  %vm10194 = vcmp.ne.s32.totalorder %v9910, 0
  %vm10195 = vcmp.ne.s32.totalorder %v9921, 0
  %vm10196 = vcmp.ne.s32.totalorder %v9932, 0
  %vm10197 = vcmp.ne.s32.totalorder %v9943, 0
  %vm10198 = vcmp.ne.s32.totalorder %v9954, 0
  %vm10199 = vcmp.ne.s32.totalorder %v9965, 0
  %vm10200 = vcmp.ne.s32.totalorder %v9976, 0
  %vm10201 = vcmp.ne.s32.totalorder %v9987, 0
  %vm10202 = vcmp.ne.s32.totalorder %v9998, 0
  %vm10203 = vcmp.ne.s32.totalorder %v10009, 0
  %vm10204 = vcmp.ne.s32.totalorder %v10020, 0
  %vm10205 = vcmp.ne.s32.totalorder %v10031, 0
  %vm10206 = vcmp.ne.s32.totalorder %v10042, 0
  %vm10207 = vcmp.ne.s32.totalorder %v10053, 0
  %vm10208 = vcmp.ne.s32.totalorder %v10064, 0
  %vm10209 = vcmp.lt.s32.totalorder %v8491, 0
  %vm10210 = vcmp.lt.s32.totalorder %v8502, 0
  %vm10211 = vcmp.lt.s32.totalorder %v8513, 0
  %vm10212 = vcmp.lt.s32.totalorder %v8524, 0
  %vm10213 = vcmp.lt.s32.totalorder %v8535, 0
  %vm10214 = vcmp.lt.s32.totalorder %v8546, 0
  %vm10215 = vcmp.lt.s32.totalorder %v8557, 0
  %vm10216 = vcmp.lt.s32.totalorder %v8568, 0
  %vm10217 = vcmp.lt.s32.totalorder %v8579, 0
  %vm10218 = vcmp.lt.s32.totalorder %v8590, 0
  %vm10219 = vcmp.lt.s32.totalorder %v8601, 0
  %vm10220 = vcmp.lt.s32.totalorder %v8612, 0
  %vm10221 = vcmp.lt.s32.totalorder %v8623, 0
  %vm10222 = vcmp.lt.s32.totalorder %v8634, 0
  %vm10223 = vcmp.lt.s32.totalorder %v8645, 0
  %vm10224 = vcmp.lt.s32.totalorder %v8656, 0
  %vm10225 = vcmp.lt.s32.totalorder %v8667, 0
  %vm10226 = vcmp.lt.s32.totalorder %v8678, 0
  %vm10227 = vcmp.lt.s32.totalorder %v8689, 0
  %vm10228 = vcmp.lt.s32.totalorder %v8700, 0
  %vm10229 = vcmp.lt.s32.totalorder %v8711, 0
  %vm10230 = vcmp.lt.s32.totalorder %v8722, 0
  %vm10231 = vcmp.lt.s32.totalorder %v8733, 0
  %vm10232 = vcmp.lt.s32.totalorder %v8744, 0
  %vm10233 = vcmp.lt.s32.totalorder %v8755, 0
  %vm10234 = vcmp.lt.s32.totalorder %v8766, 0
  %vm10235 = vcmp.lt.s32.totalorder %v8777, 0
  %vm10236 = vcmp.lt.s32.totalorder %v8788, 0
  %vm10237 = vcmp.lt.s32.totalorder %v8799, 0
  %vm10238 = vcmp.lt.s32.totalorder %v8810, 0
  %vm10239 = vcmp.lt.s32.totalorder %v8821, 0
  %vm10240 = vcmp.lt.s32.totalorder %v8832, 0
  %vm10241 = vcmp.lt.s32.totalorder %v8843, 0
  %vm10242 = vcmp.lt.s32.totalorder %v8854, 0
  %vm10243 = vcmp.lt.s32.totalorder %v8865, 0
  %vm10244 = vcmp.lt.s32.totalorder %v8876, 0
  %vm10245 = vcmp.lt.s32.totalorder %v8887, 0
  %vm10246 = vcmp.lt.s32.totalorder %v8898, 0
  %vm10247 = vcmp.lt.s32.totalorder %v8909, 0
  %vm10248 = vcmp.lt.s32.totalorder %v8920, 0
  %vm10249 = vcmp.lt.s32.totalorder %v8931, 0
  %vm10250 = vcmp.lt.s32.totalorder %v8942, 0
  %vm10251 = vcmp.lt.s32.totalorder %v8953, 0
  %vm10252 = vcmp.lt.s32.totalorder %v8964, 0
  %vm10253 = vcmp.lt.s32.totalorder %v8975, 0
  %vm10254 = vcmp.lt.s32.totalorder %v8986, 0
  %vm10255 = vcmp.lt.s32.totalorder %v8997, 0
  %vm10256 = vcmp.lt.s32.totalorder %v9008, 0
  %vm10257 = vcmp.lt.s32.totalorder %v9019, 0
  %vm10258 = vcmp.lt.s32.totalorder %v9030, 0
  %vm10259 = vcmp.lt.s32.totalorder %v9041, 0
  %vm10260 = vcmp.lt.s32.totalorder %v9052, 0
  %vm10261 = vcmp.lt.s32.totalorder %v9063, 0
  %vm10262 = vcmp.lt.s32.totalorder %v9074, 0
  %vm10263 = vcmp.lt.s32.totalorder %v9085, 0
  %vm10264 = vcmp.lt.s32.totalorder %v9096, 0
  %vm10265 = vcmp.lt.s32.totalorder %v9107, 0
  %vm10266 = vcmp.lt.s32.totalorder %v9118, 0
  %vm10267 = vcmp.lt.s32.totalorder %v9129, 0
  %vm10268 = vcmp.lt.s32.totalorder %v9140, 0
  %vm10269 = vcmp.lt.s32.totalorder %v9151, 0
  %vm10270 = vcmp.lt.s32.totalorder %v9162, 0
  %vm10271 = vcmp.lt.s32.totalorder %v9173, 0
  %vm10272 = vcmp.lt.s32.totalorder %v9184, 0
  %vm10273 = vcmp.lt.s32.totalorder %v9195, 0
  %vm10274 = vcmp.lt.s32.totalorder %v9206, 0
  %vm10275 = vcmp.lt.s32.totalorder %v9217, 0
  %vm10276 = vcmp.lt.s32.totalorder %v9228, 0
  %vm10277 = vcmp.lt.s32.totalorder %v9239, 0
  %vm10278 = vcmp.lt.s32.totalorder %v9250, 0
  %vm10279 = vcmp.lt.s32.totalorder %v9261, 0
  %vm10280 = vcmp.lt.s32.totalorder %v9272, 0
  %vm10281 = vcmp.lt.s32.totalorder %v9283, 0
  %vm10282 = vcmp.lt.s32.totalorder %v9294, 0
  %vm10283 = vcmp.lt.s32.totalorder %v9305, 0
  %vm10284 = vcmp.lt.s32.totalorder %v9316, 0
  %vm10285 = vcmp.lt.s32.totalorder %v9327, 0
  %vm10286 = vcmp.lt.s32.totalorder %v9338, 0
  %vm10287 = vcmp.lt.s32.totalorder %v9349, 0
  %vm10288 = vcmp.lt.s32.totalorder %v9360, 0
  %vm10289 = vcmp.lt.s32.totalorder %v9371, 0
  %vm10290 = vcmp.lt.s32.totalorder %v9382, 0
  %vm10291 = vcmp.lt.s32.totalorder %v9393, 0
  %vm10292 = vcmp.lt.s32.totalorder %v9404, 0
  %vm10293 = vcmp.lt.s32.totalorder %v9415, 0
  %vm10294 = vcmp.lt.s32.totalorder %v9426, 0
  %vm10295 = vcmp.lt.s32.totalorder %v9437, 0
  %vm10296 = vcmp.lt.s32.totalorder %v9448, 0
  %vm10297 = vcmp.lt.s32.totalorder %v9459, 0
  %vm10298 = vcmp.lt.s32.totalorder %v9470, 0
  %vm10299 = vcmp.lt.s32.totalorder %v9481, 0
  %vm10300 = vcmp.lt.s32.totalorder %v9492, 0
  %vm10301 = vcmp.lt.s32.totalorder %v9503, 0
  %vm10302 = vcmp.lt.s32.totalorder %v9514, 0
  %vm10303 = vcmp.lt.s32.totalorder %v9525, 0
  %vm10304 = vcmp.lt.s32.totalorder %v9536, 0
  %vm10305 = vcmp.lt.s32.totalorder %v9547, 0
  %vm10306 = vcmp.lt.s32.totalorder %v9558, 0
  %vm10307 = vcmp.lt.s32.totalorder %v9569, 0
  %vm10308 = vcmp.lt.s32.totalorder %v9580, 0
  %vm10309 = vcmp.lt.s32.totalorder %v9591, 0
  %vm10310 = vcmp.lt.s32.totalorder %v9602, 0
  %vm10311 = vcmp.lt.s32.totalorder %v9613, 0
  %vm10312 = vcmp.lt.s32.totalorder %v9624, 0
  %vm10313 = vcmp.lt.s32.totalorder %v9635, 0
  %vm10314 = vcmp.lt.s32.totalorder %v9646, 0
  %vm10315 = vcmp.lt.s32.totalorder %v9657, 0
  %vm10316 = vcmp.lt.s32.totalorder %v9668, 0
  %vm10317 = vcmp.lt.s32.totalorder %v9679, 0
  %vm10318 = vcmp.lt.s32.totalorder %v9690, 0
  %vm10319 = vcmp.lt.s32.totalorder %v9701, 0
  %vm10320 = vcmp.lt.s32.totalorder %v9712, 0
  %vm10321 = vcmp.lt.s32.totalorder %v9723, 0
  %vm10322 = vcmp.lt.s32.totalorder %v9734, 0
  %vm10323 = vcmp.lt.s32.totalorder %v9745, 0
  %vm10324 = vcmp.lt.s32.totalorder %v9756, 0
  %vm10325 = vcmp.lt.s32.totalorder %v9767, 0
  %vm10326 = vcmp.lt.s32.totalorder %v9778, 0
  %vm10327 = vcmp.lt.s32.totalorder %v9789, 0
  %vm10328 = vcmp.lt.s32.totalorder %v9800, 0
  %vm10329 = vcmp.lt.s32.totalorder %v9811, 0
  %vm10330 = vcmp.lt.s32.totalorder %v9822, 0
  %vm10331 = vcmp.lt.s32.totalorder %v9833, 0
  %vm10332 = vcmp.lt.s32.totalorder %v9844, 0
  %vm10333 = vcmp.lt.s32.totalorder %v9855, 0
  %vm10334 = vcmp.lt.s32.totalorder %v9866, 0
  %vm10335 = vcmp.lt.s32.totalorder %v9877, 0
  %vm10336 = vcmp.lt.s32.totalorder %v9888, 0
  %vm10337 = vcmp.lt.s32.totalorder %v9899, 0
  %vm10338 = vcmp.lt.s32.totalorder %v9910, 0
  %vm10339 = vcmp.lt.s32.totalorder %v9921, 0
  %vm10340 = vcmp.lt.s32.totalorder %v9932, 0
  %vm10341 = vcmp.lt.s32.totalorder %v9943, 0
  %vm10342 = vcmp.lt.s32.totalorder %v9954, 0
  %vm10343 = vcmp.lt.s32.totalorder %v9965, 0
  %vm10344 = vcmp.lt.s32.totalorder %v9976, 0
  %vm10345 = vcmp.lt.s32.totalorder %v9987, 0
  %vm10346 = vcmp.lt.s32.totalorder %v9998, 0
  %vm10347 = vcmp.lt.s32.totalorder %v10009, 0
  %vm10348 = vcmp.lt.s32.totalorder %v10020, 0
  %vm10349 = vcmp.lt.s32.totalorder %v10031, 0
  %vm10350 = vcmp.lt.s32.totalorder %v10042, 0
  %vm10351 = vcmp.lt.s32.totalorder %v10053, 0
  %vm10352 = vcmp.lt.s32.totalorder %v10064, 0
  %vm10353 = vmand %vm10209, %vm10065
  %vm10354 = vmand %vm10210, %vm10066
  %vm10355 = vmand %vm10211, %vm10067
  %vm10356 = vmand %vm10212, %vm10068
  %vm10357 = vmand %vm10213, %vm10069
  %vm10358 = vmand %vm10214, %vm10070
  %vm10359 = vmand %vm10215, %vm10071
  %vm10360 = vmand %vm10216, %vm10072
  %vm10361 = vmand %vm10217, %vm10073
  %vm10362 = vmand %vm10218, %vm10074
  %vm10363 = vmand %vm10219, %vm10075
  %vm10364 = vmand %vm10220, %vm10076
  %vm10365 = vmand %vm10221, %vm10077
  %vm10366 = vmand %vm10222, %vm10078
  %vm10367 = vmand %vm10223, %vm10079
  %vm10368 = vmand %vm10224, %vm10080
  %vm10369 = vmand %vm10225, %vm10081
  %vm10370 = vmand %vm10226, %vm10082
  %vm10371 = vmand %vm10227, %vm10083
  %vm10372 = vmand %vm10228, %vm10084
  %vm10373 = vmand %vm10229, %vm10085
  %vm10374 = vmand %vm10230, %vm10086
  %vm10375 = vmand %vm10231, %vm10087
  %vm10376 = vmand %vm10232, %vm10088
  %vm10377 = vmand %vm10233, %vm10089
  %vm10378 = vmand %vm10234, %vm10090
  %vm10379 = vmand %vm10235, %vm10091
  %vm10380 = vmand %vm10236, %vm10092
  %vm10381 = vmand %vm10237, %vm10093
  %vm10382 = vmand %vm10238, %vm10094
  %vm10383 = vmand %vm10239, %vm10095
  %vm10384 = vmand %vm10240, %vm10096
  %vm10385 = vmand %vm10241, %vm10097
  %vm10386 = vmand %vm10242, %vm10098
  %vm10387 = vmand %vm10243, %vm10099
  %vm10388 = vmand %vm10244, %vm10100
  %vm10389 = vmand %vm10245, %vm10101
  %vm10390 = vmand %vm10246, %vm10102
  %vm10391 = vmand %vm10247, %vm10103
  %vm10392 = vmand %vm10248, %vm10104
  %vm10393 = vmand %vm10249, %vm10105
  %vm10394 = vmand %vm10250, %vm10106
  %vm10395 = vmand %vm10251, %vm10107
  %vm10396 = vmand %vm10252, %vm10108
  %vm10397 = vmand %vm10253, %vm10109
  %vm10398 = vmand %vm10254, %vm10110
  %vm10399 = vmand %vm10255, %vm10111
  %vm10400 = vmand %vm10256, %vm10112
  %vm10401 = vmand %vm10257, %vm10113
  %vm10402 = vmand %vm10258, %vm10114
  %vm10403 = vmand %vm10259, %vm10115
  %vm10404 = vmand %vm10260, %vm10116
  %vm10405 = vmand %vm10261, %vm10117
  %vm10406 = vmand %vm10262, %vm10118
  %vm10407 = vmand %vm10263, %vm10119
  %vm10408 = vmand %vm10264, %vm10120
  %vm10409 = vmand %vm10265, %vm10121
  %vm10410 = vmand %vm10266, %vm10122
  %vm10411 = vmand %vm10267, %vm10123
  %vm10412 = vmand %vm10268, %vm10124
  %vm10413 = vmand %vm10269, %vm10125
  %vm10414 = vmand %vm10270, %vm10126
  %vm10415 = vmand %vm10271, %vm10127
  %vm10416 = vmand %vm10272, %vm10128
  %vm10417 = vmand %vm10273, %vm10129
  %vm10418 = vmand %vm10274, %vm10130
  %vm10419 = vmand %vm10275, %vm10131
  %vm10420 = vmand %vm10276, %vm10132
  %vm10421 = vmand %vm10277, %vm10133
  %vm10422 = vmand %vm10278, %vm10134
  %vm10423 = vmand %vm10279, %vm10135
  %vm10424 = vmand %vm10280, %vm10136
  %vm10425 = vmand %vm10281, %vm10137
  %vm10426 = vmand %vm10282, %vm10138
  %vm10427 = vmand %vm10283, %vm10139
  %vm10428 = vmand %vm10284, %vm10140
  %vm10429 = vmand %vm10285, %vm10141
  %vm10430 = vmand %vm10286, %vm10142
  %vm10431 = vmand %vm10287, %vm10143
  %vm10432 = vmand %vm10288, %vm10144
  %vm10433 = vmand %vm10289, %vm10145
  %vm10434 = vmand %vm10290, %vm10146
  %vm10435 = vmand %vm10291, %vm10147
  %vm10436 = vmand %vm10292, %vm10148
  %vm10437 = vmand %vm10293, %vm10149
  %vm10438 = vmand %vm10294, %vm10150
  %vm10439 = vmand %vm10295, %vm10151
  %vm10440 = vmand %vm10296, %vm10152
  %vm10441 = vmand %vm10297, %vm10153
  %vm10442 = vmand %vm10298, %vm10154
  %vm10443 = vmand %vm10299, %vm10155
  %vm10444 = vmand %vm10300, %vm10156
  %vm10445 = vmand %vm10301, %vm10157
  %vm10446 = vmand %vm10302, %vm10158
  %vm10447 = vmand %vm10303, %vm10159
  %vm10448 = vmand %vm10304, %vm10160
  %vm10449 = vmand %vm10305, %vm10161
  %vm10450 = vmand %vm10306, %vm10162
  %vm10451 = vmand %vm10307, %vm10163
  %vm10452 = vmand %vm10308, %vm10164
  %vm10453 = vmand %vm10309, %vm10165
  %vm10454 = vmand %vm10310, %vm10166
  %vm10455 = vmand %vm10311, %vm10167
  %vm10456 = vmand %vm10312, %vm10168
  %vm10457 = vmand %vm10313, %vm10169
  %vm10458 = vmand %vm10314, %vm10170
  %vm10459 = vmand %vm10315, %vm10171
  %vm10460 = vmand %vm10316, %vm10172
  %vm10461 = vmand %vm10317, %vm10173
  %vm10462 = vmand %vm10318, %vm10174
  %vm10463 = vmand %vm10319, %vm10175
  %vm10464 = vmand %vm10320, %vm10176
  %vm10465 = vmand %vm10321, %vm10177
  %vm10466 = vmand %vm10322, %vm10178
  %vm10467 = vmand %vm10323, %vm10179
  %vm10468 = vmand %vm10324, %vm10180
  %vm10469 = vmand %vm10325, %vm10181
  %vm10470 = vmand %vm10326, %vm10182
  %vm10471 = vmand %vm10327, %vm10183
  %vm10472 = vmand %vm10328, %vm10184
  %vm10473 = vmand %vm10329, %vm10185
  %vm10474 = vmand %vm10330, %vm10186
  %vm10475 = vmand %vm10331, %vm10187
  %vm10476 = vmand %vm10332, %vm10188
  %vm10477 = vmand %vm10333, %vm10189
  %vm10478 = vmand %vm10334, %vm10190
  %vm10479 = vmand %vm10335, %vm10191
  %vm10480 = vmand %vm10336, %vm10192
  %vm10481 = vmand %vm10337, %vm10193
  %vm10482 = vmand %vm10338, %vm10194
  %vm10483 = vmand %vm10339, %vm10195
  %vm10484 = vmand %vm10340, %vm10196
  %vm10485 = vmand %vm10341, %vm10197
  %vm10486 = vmand %vm10342, %vm10198
  %vm10487 = vmand %vm10343, %vm10199
  %vm10488 = vmand %vm10344, %vm10200
  %vm10489 = vmand %vm10345, %vm10201
  %vm10490 = vmand %vm10346, %vm10202
  %vm10491 = vmand %vm10347, %vm10203
  %vm10492 = vmand %vm10348, %vm10204
  %vm10493 = vmand %vm10349, %vm10205
  %vm10494 = vmand %vm10350, %vm10206
  %vm10495 = vmand %vm10351, %vm10207
  %vm10496 = vmand %vm10352, %vm10208
  %v10497 = vadd.s32 %v8491, 48
  %v10498 = vadd.s32 %v8502, 48
  %v10499 = vadd.s32 %v8513, 48
  %v10500 = vadd.s32 %v8524, 48
  %v10501 = vadd.s32 %v8535, 48
  %v10502 = vadd.s32 %v8546, 48
  %v10503 = vadd.s32 %v8557, 48
  %v10504 = vadd.s32 %v8568, 48
  %v10505 = vadd.s32 %v8579, 48
  %v10506 = vadd.s32 %v8590, 48
  %v10507 = vadd.s32 %v8601, 48
  %v10508 = vadd.s32 %v8612, 48
  %v10509 = vadd.s32 %v8623, 48
  %v10510 = vadd.s32 %v8634, 48
  %v10511 = vadd.s32 %v8645, 48
  %v10512 = vadd.s32 %v8656, 48
  %v10513 = vadd.s32 %v8667, 48
  %v10514 = vadd.s32 %v8678, 48
  %v10515 = vadd.s32 %v8689, 48
  %v10516 = vadd.s32 %v8700, 48
  %v10517 = vadd.s32 %v8711, 48
  %v10518 = vadd.s32 %v8722, 48
  %v10519 = vadd.s32 %v8733, 48
  %v10520 = vadd.s32 %v8744, 48
  %v10521 = vadd.s32 %v8755, 48
  %v10522 = vadd.s32 %v8766, 48
  %v10523 = vadd.s32 %v8777, 48
  %v10524 = vadd.s32 %v8788, 48
  %v10525 = vadd.s32 %v8799, 48
  %v10526 = vadd.s32 %v8810, 48
  %v10527 = vadd.s32 %v8821, 48
  %v10528 = vadd.s32 %v8832, 48
  %v10529 = vadd.s32 %v8843, 48
  %v10530 = vadd.s32 %v8854, 48
  %v10531 = vadd.s32 %v8865, 48
  %v10532 = vadd.s32 %v8876, 48
  %v10533 = vadd.s32 %v8887, 48
  %v10534 = vadd.s32 %v8898, 48
  %v10535 = vadd.s32 %v8909, 48
  %v10536 = vadd.s32 %v8920, 48
  %v10537 = vadd.s32 %v8931, 48
  %v10538 = vadd.s32 %v8942, 48
  %v10539 = vadd.s32 %v8953, 48
  %v10540 = vadd.s32 %v8964, 48
  %v10541 = vadd.s32 %v8975, 48
  %v10542 = vadd.s32 %v8986, 48
  %v10543 = vadd.s32 %v8997, 48
  %v10544 = vadd.s32 %v9008, 48
  %v10545 = vadd.s32 %v9019, 48
  %v10546 = vadd.s32 %v9030, 48
  %v10547 = vadd.s32 %v9041, 48
  %v10548 = vadd.s32 %v9052, 48
  %v10549 = vadd.s32 %v9063, 48
  %v10550 = vadd.s32 %v9074, 48
  %v10551 = vadd.s32 %v9085, 48
  %v10552 = vadd.s32 %v9096, 48
  %v10553 = vadd.s32 %v9107, 48
  %v10554 = vadd.s32 %v9118, 48
  %v10555 = vadd.s32 %v9129, 48
  %v10556 = vadd.s32 %v9140, 48
  %v10557 = vadd.s32 %v9151, 48
  %v10558 = vadd.s32 %v9162, 48
  %v10559 = vadd.s32 %v9173, 48
  %v10560 = vadd.s32 %v9184, 48
  %v10561 = vadd.s32 %v9195, 48
  %v10562 = vadd.s32 %v9206, 48
  %v10563 = vadd.s32 %v9217, 48
  %v10564 = vadd.s32 %v9228, 48
  %v10565 = vadd.s32 %v9239, 48
  %v10566 = vadd.s32 %v9250, 48
  %v10567 = vadd.s32 %v9261, 48
  %v10568 = vadd.s32 %v9272, 48
  %v10569 = vadd.s32 %v9283, 48
  %v10570 = vadd.s32 %v9294, 48
  %v10571 = vadd.s32 %v9305, 48
  %v10572 = vadd.s32 %v9316, 48
  %v10573 = vadd.s32 %v9327, 48
  %v10574 = vadd.s32 %v9338, 48
  %v10575 = vadd.s32 %v9349, 48
  %v10576 = vadd.s32 %v9360, 48
  %v10577 = vadd.s32 %v9371, 48
  %v10578 = vadd.s32 %v9382, 48
  %v10579 = vadd.s32 %v9393, 48
  %v10580 = vadd.s32 %v9404, 48
  %v10581 = vadd.s32 %v9415, 48
  %v10582 = vadd.s32 %v9426, 48
  %v10583 = vadd.s32 %v9437, 48
  %v10584 = vadd.s32 %v9448, 48
  %v10585 = vadd.s32 %v9459, 48
  %v10586 = vadd.s32 %v9470, 48
  %v10587 = vadd.s32 %v9481, 48
  %v10588 = vadd.s32 %v9492, 48
  %v10589 = vadd.s32 %v9503, 48
  %v10590 = vadd.s32 %v9514, 48
  %v10591 = vadd.s32 %v9525, 48
  %v10592 = vadd.s32 %v9536, 48
  %v10593 = vadd.s32 %v9547, 48
  %v10594 = vadd.s32 %v9558, 48
  %v10595 = vadd.s32 %v9569, 48
  %v10596 = vadd.s32 %v9580, 48
  %v10597 = vadd.s32 %v9591, 48
  %v10598 = vadd.s32 %v9602, 48
  %v10599 = vadd.s32 %v9613, 48
  %v10600 = vadd.s32 %v9624, 48
  %v10601 = vadd.s32 %v9635, 48
  %v10602 = vadd.s32 %v9646, 48
  %v10603 = vadd.s32 %v9657, 48
  %v10604 = vadd.s32 %v9668, 48
  %v10605 = vadd.s32 %v9679, 48
  %v10606 = vadd.s32 %v9690, 48
  %v10607 = vadd.s32 %v9701, 48
  %v10608 = vadd.s32 %v9712, 48
  %v10609 = vadd.s32 %v9723, 48
  %v10610 = vadd.s32 %v9734, 48
  %v10611 = vadd.s32 %v9745, 48
  %v10612 = vadd.s32 %v9756, 48
  %v10613 = vadd.s32 %v9767, 48
  %v10614 = vadd.s32 %v9778, 48
  %v10615 = vadd.s32 %v9789, 48
  %v10616 = vadd.s32 %v9800, 48
  %v10617 = vadd.s32 %v9811, 48
  %v10618 = vadd.s32 %v9822, 48
  %v10619 = vadd.s32 %v9833, 48
  %v10620 = vadd.s32 %v9844, 48
  %v10621 = vadd.s32 %v9855, 48
  %v10622 = vadd.s32 %v9866, 48
  %v10623 = vadd.s32 %v9877, 48
  %v10624 = vadd.s32 %v9888, 48
  %v10625 = vadd.s32 %v9899, 48
  %v10626 = vadd.s32 %v9910, 48
  %v10627 = vadd.s32 %v9921, 48
  %v10628 = vadd.s32 %v9932, 48
  %v10629 = vadd.s32 %v9943, 48
  %v10630 = vadd.s32 %v9954, 48
  %v10631 = vadd.s32 %v9965, 48
  %v10632 = vadd.s32 %v9976, 48
  %v10633 = vadd.s32 %v9987, 48
  %v10634 = vadd.s32 %v9998, 48
  %v10635 = vadd.s32 %v10009, 48
  %v10636 = vadd.s32 %v10020, 48
  %v10637 = vadd.s32 %v10031, 48
  %v10638 = vadd.s32 %v10042, 48
  %v10639 = vadd.s32 %v10053, 48
  %v10640 = vadd.s32 %v10064, 48
  %v10641 = vsel %vm10353, %v10497, %v8491
  %v10642 = vsel %vm10354, %v10498, %v8502
  %v10643 = vsel %vm10355, %v10499, %v8513
  %v10644 = vsel %vm10356, %v10500, %v8524
  %v10645 = vsel %vm10357, %v10501, %v8535
  %v10646 = vsel %vm10358, %v10502, %v8546
  %v10647 = vsel %vm10359, %v10503, %v8557
  %v10648 = vsel %vm10360, %v10504, %v8568
  %v10649 = vsel %vm10361, %v10505, %v8579
  %v10650 = vsel %vm10362, %v10506, %v8590
  %v10651 = vsel %vm10363, %v10507, %v8601
  %v10652 = vsel %vm10364, %v10508, %v8612
  %v10653 = vsel %vm10365, %v10509, %v8623
  %v10654 = vsel %vm10366, %v10510, %v8634
  %v10655 = vsel %vm10367, %v10511, %v8645
  %v10656 = vsel %vm10368, %v10512, %v8656
  %v10657 = vsel %vm10369, %v10513, %v8667
  %v10658 = vsel %vm10370, %v10514, %v8678
  %v10659 = vsel %vm10371, %v10515, %v8689
  %v10660 = vsel %vm10372, %v10516, %v8700
  %v10661 = vsel %vm10373, %v10517, %v8711
  %v10662 = vsel %vm10374, %v10518, %v8722
  %v10663 = vsel %vm10375, %v10519, %v8733
  %v10664 = vsel %vm10376, %v10520, %v8744
  %v10665 = vsel %vm10377, %v10521, %v8755
  %v10666 = vsel %vm10378, %v10522, %v8766
  %v10667 = vsel %vm10379, %v10523, %v8777
  %v10668 = vsel %vm10380, %v10524, %v8788
  %v10669 = vsel %vm10381, %v10525, %v8799
  %v10670 = vsel %vm10382, %v10526, %v8810
  %v10671 = vsel %vm10383, %v10527, %v8821
  %v10672 = vsel %vm10384, %v10528, %v8832
  %v10673 = vsel %vm10385, %v10529, %v8843
  %v10674 = vsel %vm10386, %v10530, %v8854
  %v10675 = vsel %vm10387, %v10531, %v8865
  %v10676 = vsel %vm10388, %v10532, %v8876
  %v10677 = vsel %vm10389, %v10533, %v8887
  %v10678 = vsel %vm10390, %v10534, %v8898
  %v10679 = vsel %vm10391, %v10535, %v8909
  %v10680 = vsel %vm10392, %v10536, %v8920
  %v10681 = vsel %vm10393, %v10537, %v8931
  %v10682 = vsel %vm10394, %v10538, %v8942
  %v10683 = vsel %vm10395, %v10539, %v8953
  %v10684 = vsel %vm10396, %v10540, %v8964
  %v10685 = vsel %vm10397, %v10541, %v8975
  %v10686 = vsel %vm10398, %v10542, %v8986
  %v10687 = vsel %vm10399, %v10543, %v8997
  %v10688 = vsel %vm10400, %v10544, %v9008
  %v10689 = vsel %vm10401, %v10545, %v9019
  %v10690 = vsel %vm10402, %v10546, %v9030
  %v10691 = vsel %vm10403, %v10547, %v9041
  %v10692 = vsel %vm10404, %v10548, %v9052
  %v10693 = vsel %vm10405, %v10549, %v9063
  %v10694 = vsel %vm10406, %v10550, %v9074
  %v10695 = vsel %vm10407, %v10551, %v9085
  %v10696 = vsel %vm10408, %v10552, %v9096
  %v10697 = vsel %vm10409, %v10553, %v9107
  %v10698 = vsel %vm10410, %v10554, %v9118
  %v10699 = vsel %vm10411, %v10555, %v9129
  %v10700 = vsel %vm10412, %v10556, %v9140
  %v10701 = vsel %vm10413, %v10557, %v9151
  %v10702 = vsel %vm10414, %v10558, %v9162
  %v10703 = vsel %vm10415, %v10559, %v9173
  %v10704 = vsel %vm10416, %v10560, %v9184
  %v10705 = vsel %vm10417, %v10561, %v9195
  %v10706 = vsel %vm10418, %v10562, %v9206
  %v10707 = vsel %vm10419, %v10563, %v9217
  %v10708 = vsel %vm10420, %v10564, %v9228
  %v10709 = vsel %vm10421, %v10565, %v9239
  %v10710 = vsel %vm10422, %v10566, %v9250
  %v10711 = vsel %vm10423, %v10567, %v9261
  %v10712 = vsel %vm10424, %v10568, %v9272
  %v10713 = vsel %vm10425, %v10569, %v9283
  %v10714 = vsel %vm10426, %v10570, %v9294
  %v10715 = vsel %vm10427, %v10571, %v9305
  %v10716 = vsel %vm10428, %v10572, %v9316
  %v10717 = vsel %vm10429, %v10573, %v9327
  %v10718 = vsel %vm10430, %v10574, %v9338
  %v10719 = vsel %vm10431, %v10575, %v9349
  %v10720 = vsel %vm10432, %v10576, %v9360
  %v10721 = vsel %vm10433, %v10577, %v9371
  %v10722 = vsel %vm10434, %v10578, %v9382
  %v10723 = vsel %vm10435, %v10579, %v9393
  %v10724 = vsel %vm10436, %v10580, %v9404
  %v10725 = vsel %vm10437, %v10581, %v9415
  %v10726 = vsel %vm10438, %v10582, %v9426
  %v10727 = vsel %vm10439, %v10583, %v9437
  %v10728 = vsel %vm10440, %v10584, %v9448
  %v10729 = vsel %vm10441, %v10585, %v9459
  %v10730 = vsel %vm10442, %v10586, %v9470
  %v10731 = vsel %vm10443, %v10587, %v9481
  %v10732 = vsel %vm10444, %v10588, %v9492
  %v10733 = vsel %vm10445, %v10589, %v9503
  %v10734 = vsel %vm10446, %v10590, %v9514
  %v10735 = vsel %vm10447, %v10591, %v9525
  %v10736 = vsel %vm10448, %v10592, %v9536
  %v10737 = vsel %vm10449, %v10593, %v9547
  %v10738 = vsel %vm10450, %v10594, %v9558
  %v10739 = vsel %vm10451, %v10595, %v9569
  %v10740 = vsel %vm10452, %v10596, %v9580
  %v10741 = vsel %vm10453, %v10597, %v9591
  %v10742 = vsel %vm10454, %v10598, %v9602
  %v10743 = vsel %vm10455, %v10599, %v9613
  %v10744 = vsel %vm10456, %v10600, %v9624
  %v10745 = vsel %vm10457, %v10601, %v9635
  %v10746 = vsel %vm10458, %v10602, %v9646
  %v10747 = vsel %vm10459, %v10603, %v9657
  %v10748 = vsel %vm10460, %v10604, %v9668
  %v10749 = vsel %vm10461, %v10605, %v9679
  %v10750 = vsel %vm10462, %v10606, %v9690
  %v10751 = vsel %vm10463, %v10607, %v9701
  %v10752 = vsel %vm10464, %v10608, %v9712
  %v10753 = vsel %vm10465, %v10609, %v9723
  %v10754 = vsel %vm10466, %v10610, %v9734
  %v10755 = vsel %vm10467, %v10611, %v9745
  %v10756 = vsel %vm10468, %v10612, %v9756
  %v10757 = vsel %vm10469, %v10613, %v9767
  %v10758 = vsel %vm10470, %v10614, %v9778
  %v10759 = vsel %vm10471, %v10615, %v9789
  %v10760 = vsel %vm10472, %v10616, %v9800
  %v10761 = vsel %vm10473, %v10617, %v9811
  %v10762 = vsel %vm10474, %v10618, %v9822
  %v10763 = vsel %vm10475, %v10619, %v9833
  %v10764 = vsel %vm10476, %v10620, %v9844
  %v10765 = vsel %vm10477, %v10621, %v9855
  %v10766 = vsel %vm10478, %v10622, %v9866
  %v10767 = vsel %vm10479, %v10623, %v9877
  %v10768 = vsel %vm10480, %v10624, %v9888
  %v10769 = vsel %vm10481, %v10625, %v9899
  %v10770 = vsel %vm10482, %v10626, %v9910
  %v10771 = vsel %vm10483, %v10627, %v9921
  %v10772 = vsel %vm10484, %v10628, %v9932
  %v10773 = vsel %vm10485, %v10629, %v9943
  %v10774 = vsel %vm10486, %v10630, %v9954
  %v10775 = vsel %vm10487, %v10631, %v9965
  %v10776 = vsel %vm10488, %v10632, %v9976
  %v10777 = vsel %vm10489, %v10633, %v9987
  %v10778 = vsel %vm10490, %v10634, %v9998
  %v10779 = vsel %vm10491, %v10635, %v10009
  %v10780 = vsel %vm10492, %v10636, %v10020
  %v10781 = vsel %vm10493, %v10637, %v10031
  %v10782 = vsel %vm10494, %v10638, %v10042
  %v10783 = vsel %vm10495, %v10639, %v10053
  %v10784 = vsel %vm10496, %v10640, %v10064
  %vm10785 = vcmp.lt.s32.totalorder %v10641, 44
  %vm10786 = vcmp.lt.s32.totalorder %v10642, 44
  %vm10787 = vcmp.lt.s32.totalorder %v10643, 44
  %vm10788 = vcmp.lt.s32.totalorder %v10644, 44
  %vm10789 = vcmp.lt.s32.totalorder %v10645, 44
  %vm10790 = vcmp.lt.s32.totalorder %v10646, 44
  %vm10791 = vcmp.lt.s32.totalorder %v10647, 44
  %vm10792 = vcmp.lt.s32.totalorder %v10648, 44
  %vm10793 = vcmp.lt.s32.totalorder %v10649, 44
  %vm10794 = vcmp.lt.s32.totalorder %v10650, 44
  %vm10795 = vcmp.lt.s32.totalorder %v10651, 44
  %vm10796 = vcmp.lt.s32.totalorder %v10652, 44
  %vm10797 = vcmp.lt.s32.totalorder %v10653, 44
  %vm10798 = vcmp.lt.s32.totalorder %v10654, 44
  %vm10799 = vcmp.lt.s32.totalorder %v10655, 44
  %vm10800 = vcmp.lt.s32.totalorder %v10656, 44
  %vm10801 = vcmp.lt.s32.totalorder %v10657, 44
  %vm10802 = vcmp.lt.s32.totalorder %v10658, 44
  %vm10803 = vcmp.lt.s32.totalorder %v10659, 44
  %vm10804 = vcmp.lt.s32.totalorder %v10660, 44
  %vm10805 = vcmp.lt.s32.totalorder %v10661, 44
  %vm10806 = vcmp.lt.s32.totalorder %v10662, 44
  %vm10807 = vcmp.lt.s32.totalorder %v10663, 44
  %vm10808 = vcmp.lt.s32.totalorder %v10664, 44
  %vm10809 = vcmp.lt.s32.totalorder %v10665, 44
  %vm10810 = vcmp.lt.s32.totalorder %v10666, 44
  %vm10811 = vcmp.lt.s32.totalorder %v10667, 44
  %vm10812 = vcmp.lt.s32.totalorder %v10668, 44
  %vm10813 = vcmp.lt.s32.totalorder %v10669, 44
  %vm10814 = vcmp.lt.s32.totalorder %v10670, 44
  %vm10815 = vcmp.lt.s32.totalorder %v10671, 44
  %vm10816 = vcmp.lt.s32.totalorder %v10672, 44
  %vm10817 = vcmp.lt.s32.totalorder %v10673, 44
  %vm10818 = vcmp.lt.s32.totalorder %v10674, 44
  %vm10819 = vcmp.lt.s32.totalorder %v10675, 44
  %vm10820 = vcmp.lt.s32.totalorder %v10676, 44
  %vm10821 = vcmp.lt.s32.totalorder %v10677, 44
  %vm10822 = vcmp.lt.s32.totalorder %v10678, 44
  %vm10823 = vcmp.lt.s32.totalorder %v10679, 44
  %vm10824 = vcmp.lt.s32.totalorder %v10680, 44
  %vm10825 = vcmp.lt.s32.totalorder %v10681, 44
  %vm10826 = vcmp.lt.s32.totalorder %v10682, 44
  %vm10827 = vcmp.lt.s32.totalorder %v10683, 44
  %vm10828 = vcmp.lt.s32.totalorder %v10684, 44
  %vm10829 = vcmp.lt.s32.totalorder %v10685, 44
  %vm10830 = vcmp.lt.s32.totalorder %v10686, 44
  %vm10831 = vcmp.lt.s32.totalorder %v10687, 44
  %vm10832 = vcmp.lt.s32.totalorder %v10688, 44
  %vm10833 = vcmp.lt.s32.totalorder %v10689, 44
  %vm10834 = vcmp.lt.s32.totalorder %v10690, 44
  %vm10835 = vcmp.lt.s32.totalorder %v10691, 44
  %vm10836 = vcmp.lt.s32.totalorder %v10692, 44
  %vm10837 = vcmp.lt.s32.totalorder %v10693, 44
  %vm10838 = vcmp.lt.s32.totalorder %v10694, 44
  %vm10839 = vcmp.lt.s32.totalorder %v10695, 44
  %vm10840 = vcmp.lt.s32.totalorder %v10696, 44
  %vm10841 = vcmp.lt.s32.totalorder %v10697, 44
  %vm10842 = vcmp.lt.s32.totalorder %v10698, 44
  %vm10843 = vcmp.lt.s32.totalorder %v10699, 44
  %vm10844 = vcmp.lt.s32.totalorder %v10700, 44
  %vm10845 = vcmp.lt.s32.totalorder %v10701, 44
  %vm10846 = vcmp.lt.s32.totalorder %v10702, 44
  %vm10847 = vcmp.lt.s32.totalorder %v10703, 44
  %vm10848 = vcmp.lt.s32.totalorder %v10704, 44
  %vm10849 = vcmp.lt.s32.totalorder %v10705, 44
  %vm10850 = vcmp.lt.s32.totalorder %v10706, 44
  %vm10851 = vcmp.lt.s32.totalorder %v10707, 44
  %vm10852 = vcmp.lt.s32.totalorder %v10708, 44
  %vm10853 = vcmp.lt.s32.totalorder %v10709, 44
  %vm10854 = vcmp.lt.s32.totalorder %v10710, 44
  %vm10855 = vcmp.lt.s32.totalorder %v10711, 44
  %vm10856 = vcmp.lt.s32.totalorder %v10712, 44
  %vm10857 = vcmp.lt.s32.totalorder %v10713, 44
  %vm10858 = vcmp.lt.s32.totalorder %v10714, 44
  %vm10859 = vcmp.lt.s32.totalorder %v10715, 44
  %vm10860 = vcmp.lt.s32.totalorder %v10716, 44
  %vm10861 = vcmp.lt.s32.totalorder %v10717, 44
  %vm10862 = vcmp.lt.s32.totalorder %v10718, 44
  %vm10863 = vcmp.lt.s32.totalorder %v10719, 44
  %vm10864 = vcmp.lt.s32.totalorder %v10720, 44
  %vm10865 = vcmp.lt.s32.totalorder %v10721, 44
  %vm10866 = vcmp.lt.s32.totalorder %v10722, 44
  %vm10867 = vcmp.lt.s32.totalorder %v10723, 44
  %vm10868 = vcmp.lt.s32.totalorder %v10724, 44
  %vm10869 = vcmp.lt.s32.totalorder %v10725, 44
  %vm10870 = vcmp.lt.s32.totalorder %v10726, 44
  %vm10871 = vcmp.lt.s32.totalorder %v10727, 44
  %vm10872 = vcmp.lt.s32.totalorder %v10728, 44
  %vm10873 = vcmp.lt.s32.totalorder %v10729, 44
  %vm10874 = vcmp.lt.s32.totalorder %v10730, 44
  %vm10875 = vcmp.lt.s32.totalorder %v10731, 44
  %vm10876 = vcmp.lt.s32.totalorder %v10732, 44
  %vm10877 = vcmp.lt.s32.totalorder %v10733, 44
  %vm10878 = vcmp.lt.s32.totalorder %v10734, 44
  %vm10879 = vcmp.lt.s32.totalorder %v10735, 44
  %vm10880 = vcmp.lt.s32.totalorder %v10736, 44
  %vm10881 = vcmp.lt.s32.totalorder %v10737, 44
  %vm10882 = vcmp.lt.s32.totalorder %v10738, 44
  %vm10883 = vcmp.lt.s32.totalorder %v10739, 44
  %vm10884 = vcmp.lt.s32.totalorder %v10740, 44
  %vm10885 = vcmp.lt.s32.totalorder %v10741, 44
  %vm10886 = vcmp.lt.s32.totalorder %v10742, 44
  %vm10887 = vcmp.lt.s32.totalorder %v10743, 44
  %vm10888 = vcmp.lt.s32.totalorder %v10744, 44
  %vm10889 = vcmp.lt.s32.totalorder %v10745, 44
  %vm10890 = vcmp.lt.s32.totalorder %v10746, 44
  %vm10891 = vcmp.lt.s32.totalorder %v10747, 44
  %vm10892 = vcmp.lt.s32.totalorder %v10748, 44
  %vm10893 = vcmp.lt.s32.totalorder %v10749, 44
  %vm10894 = vcmp.lt.s32.totalorder %v10750, 44
  %vm10895 = vcmp.lt.s32.totalorder %v10751, 44
  %vm10896 = vcmp.lt.s32.totalorder %v10752, 44
  %vm10897 = vcmp.lt.s32.totalorder %v10753, 44
  %vm10898 = vcmp.lt.s32.totalorder %v10754, 44
  %vm10899 = vcmp.lt.s32.totalorder %v10755, 44
  %vm10900 = vcmp.lt.s32.totalorder %v10756, 44
  %vm10901 = vcmp.lt.s32.totalorder %v10757, 44
  %vm10902 = vcmp.lt.s32.totalorder %v10758, 44
  %vm10903 = vcmp.lt.s32.totalorder %v10759, 44
  %vm10904 = vcmp.lt.s32.totalorder %v10760, 44
  %vm10905 = vcmp.lt.s32.totalorder %v10761, 44
  %vm10906 = vcmp.lt.s32.totalorder %v10762, 44
  %vm10907 = vcmp.lt.s32.totalorder %v10763, 44
  %vm10908 = vcmp.lt.s32.totalorder %v10764, 44
  %vm10909 = vcmp.lt.s32.totalorder %v10765, 44
  %vm10910 = vcmp.lt.s32.totalorder %v10766, 44
  %vm10911 = vcmp.lt.s32.totalorder %v10767, 44
  %vm10912 = vcmp.lt.s32.totalorder %v10768, 44
  %vm10913 = vcmp.lt.s32.totalorder %v10769, 44
  %vm10914 = vcmp.lt.s32.totalorder %v10770, 44
  %vm10915 = vcmp.lt.s32.totalorder %v10771, 44
  %vm10916 = vcmp.lt.s32.totalorder %v10772, 44
  %vm10917 = vcmp.lt.s32.totalorder %v10773, 44
  %vm10918 = vcmp.lt.s32.totalorder %v10774, 44
  %vm10919 = vcmp.lt.s32.totalorder %v10775, 44
  %vm10920 = vcmp.lt.s32.totalorder %v10776, 44
  %vm10921 = vcmp.lt.s32.totalorder %v10777, 44
  %vm10922 = vcmp.lt.s32.totalorder %v10778, 44
  %vm10923 = vcmp.lt.s32.totalorder %v10779, 44
  %vm10924 = vcmp.lt.s32.totalorder %v10780, 44
  %vm10925 = vcmp.lt.s32.totalorder %v10781, 44
  %vm10926 = vcmp.lt.s32.totalorder %v10782, 44
  %vm10927 = vcmp.lt.s32.totalorder %v10783, 44
  %vm10928 = vcmp.lt.s32.totalorder %v10784, 44
  %v10929 = vsel %vm10785, %v8192, 0.0
  %v10930 = vsel %vm10786, %v8193, 0.0
  %v10931 = vsel %vm10787, %v8194, 0.0
  %v10932 = vsel %vm10788, %v8195, 0.0
  %v10933 = vsel %vm10789, %v8196, 0.0
  %v10934 = vsel %vm10790, %v8197, 0.0
  %v10935 = vsel %vm10791, %v8198, 0.0
  %v10936 = vsel %vm10792, %v8199, 0.0
  %v10937 = vsel %vm10793, %v8200, 0.0
  %v10938 = vsel %vm10794, %v8201, 0.0
  %v10939 = vsel %vm10795, %v8202, 0.0
  %v10940 = vsel %vm10796, %v8203, 0.0
  %v10941 = vsel %vm10797, %v8204, 0.0
  %v10942 = vsel %vm10798, %v8205, 0.0
  %v10943 = vsel %vm10799, %v8206, 0.0
  %v10944 = vsel %vm10800, %v8207, 0.0
  %v10945 = vsel %vm10801, %v8208, 0.0
  %v10946 = vsel %vm10802, %v8209, 0.0
  %v10947 = vsel %vm10803, %v8210, 0.0
  %v10948 = vsel %vm10804, %v8211, 0.0
  %v10949 = vsel %vm10805, %v8212, 0.0
  %v10950 = vsel %vm10806, %v8213, 0.0
  %v10951 = vsel %vm10807, %v8214, 0.0
  %v10952 = vsel %vm10808, %v8215, 0.0
  %v10953 = vsel %vm10809, %v8216, 0.0
  %v10954 = vsel %vm10810, %v8217, 0.0
  %v10955 = vsel %vm10811, %v8218, 0.0
  %v10956 = vsel %vm10812, %v8219, 0.0
  %v10957 = vsel %vm10813, %v8220, 0.0
  %v10958 = vsel %vm10814, %v8221, 0.0
  %v10959 = vsel %vm10815, %v8222, 0.0
  %v10960 = vsel %vm10816, %v8223, 0.0
  %v10961 = vsel %vm10817, %v8224, 0.0
  %v10962 = vsel %vm10818, %v8225, 0.0
  %v10963 = vsel %vm10819, %v8226, 0.0
  %v10964 = vsel %vm10820, %v8227, 0.0
  %v10965 = vsel %vm10821, %v8228, 0.0
  %v10966 = vsel %vm10822, %v8229, 0.0
  %v10967 = vsel %vm10823, %v8230, 0.0
  %v10968 = vsel %vm10824, %v8231, 0.0
  %v10969 = vsel %vm10825, %v8232, 0.0
  %v10970 = vsel %vm10826, %v8233, 0.0
  %v10971 = vsel %vm10827, %v8234, 0.0
  %v10972 = vsel %vm10828, %v8235, 0.0
  %v10973 = vsel %vm10829, %v8236, 0.0
  %v10974 = vsel %vm10830, %v8237, 0.0
  %v10975 = vsel %vm10831, %v8238, 0.0
  %v10976 = vsel %vm10832, %v8239, 0.0
  %v10977 = vsel %vm10833, %v8240, 0.0
  %v10978 = vsel %vm10834, %v8241, 0.0
  %v10979 = vsel %vm10835, %v8242, 0.0
  %v10980 = vsel %vm10836, %v8243, 0.0
  %v10981 = vsel %vm10837, %v8244, 0.0
  %v10982 = vsel %vm10838, %v8245, 0.0
  %v10983 = vsel %vm10839, %v8246, 0.0
  %v10984 = vsel %vm10840, %v8247, 0.0
  %v10985 = vsel %vm10841, %v8248, 0.0
  %v10986 = vsel %vm10842, %v8249, 0.0
  %v10987 = vsel %vm10843, %v8250, 0.0
  %v10988 = vsel %vm10844, %v8251, 0.0
  %v10989 = vsel %vm10845, %v8252, 0.0
  %v10990 = vsel %vm10846, %v8253, 0.0
  %v10991 = vsel %vm10847, %v8254, 0.0
  %v10992 = vsel %vm10848, %v8255, 0.0
  %v10993 = vsel %vm10849, %v8256, 0.0
  %v10994 = vsel %vm10850, %v8257, 0.0
  %v10995 = vsel %vm10851, %v8258, 0.0
  %v10996 = vsel %vm10852, %v8259, 0.0
  %v10997 = vsel %vm10853, %v8260, 0.0
  %v10998 = vsel %vm10854, %v8261, 0.0
  %v10999 = vsel %vm10855, %v8262, 0.0
  %v11000 = vsel %vm10856, %v8263, 0.0
  %v11001 = vsel %vm10857, %v8264, 0.0
  %v11002 = vsel %vm10858, %v8265, 0.0
  %v11003 = vsel %vm10859, %v8266, 0.0
  %v11004 = vsel %vm10860, %v8267, 0.0
  %v11005 = vsel %vm10861, %v8268, 0.0
  %v11006 = vsel %vm10862, %v8269, 0.0
  %v11007 = vsel %vm10863, %v8270, 0.0
  %v11008 = vsel %vm10864, %v8271, 0.0
  %v11009 = vsel %vm10865, %v8272, 0.0
  %v11010 = vsel %vm10866, %v8273, 0.0
  %v11011 = vsel %vm10867, %v8274, 0.0
  %v11012 = vsel %vm10868, %v8275, 0.0
  %v11013 = vsel %vm10869, %v8276, 0.0
  %v11014 = vsel %vm10870, %v8277, 0.0
  %v11015 = vsel %vm10871, %v8278, 0.0
  %v11016 = vsel %vm10872, %v8279, 0.0
  %v11017 = vsel %vm10873, %v8280, 0.0
  %v11018 = vsel %vm10874, %v8281, 0.0
  %v11019 = vsel %vm10875, %v8282, 0.0
  %v11020 = vsel %vm10876, %v8283, 0.0
  %v11021 = vsel %vm10877, %v8284, 0.0
  %v11022 = vsel %vm10878, %v8285, 0.0
  %v11023 = vsel %vm10879, %v8286, 0.0
  %v11024 = vsel %vm10880, %v8287, 0.0
  %v11025 = vsel %vm10881, %v8288, 0.0
  %v11026 = vsel %vm10882, %v8289, 0.0
  %v11027 = vsel %vm10883, %v8290, 0.0
  %v11028 = vsel %vm10884, %v8291, 0.0
  %v11029 = vsel %vm10885, %v8292, 0.0
  %v11030 = vsel %vm10886, %v8293, 0.0
  %v11031 = vsel %vm10887, %v8294, 0.0
  %v11032 = vsel %vm10888, %v8295, 0.0
  %v11033 = vsel %vm10889, %v8296, 0.0
  %v11034 = vsel %vm10890, %v8297, 0.0
  %v11035 = vsel %vm10891, %v8298, 0.0
  %v11036 = vsel %vm10892, %v8299, 0.0
  %v11037 = vsel %vm10893, %v8300, 0.0
  %v11038 = vsel %vm10894, %v8301, 0.0
  %v11039 = vsel %vm10895, %v8302, 0.0
  %v11040 = vsel %vm10896, %v8303, 0.0
  %v11041 = vsel %vm10897, %v8304, 0.0
  %v11042 = vsel %vm10898, %v8305, 0.0
  %v11043 = vsel %vm10899, %v8306, 0.0
  %v11044 = vsel %vm10900, %v8307, 0.0
  %v11045 = vsel %vm10901, %v8308, 0.0
  %v11046 = vsel %vm10902, %v8309, 0.0
  %v11047 = vsel %vm10903, %v8310, 0.0
  %v11048 = vsel %vm10904, %v8311, 0.0
  %v11049 = vsel %vm10905, %v8312, 0.0
  %v11050 = vsel %vm10906, %v8313, 0.0
  %v11051 = vsel %vm10907, %v8314, 0.0
  %v11052 = vsel %vm10908, %v8315, 0.0
  %v11053 = vsel %vm10909, %v8316, 0.0
  %v11054 = vsel %vm10910, %v8317, 0.0
  %v11055 = vsel %vm10911, %v8318, 0.0
  %v11056 = vsel %vm10912, %v8319, 0.0
  %v11057 = vsel %vm10913, %v8320, 0.0
  %v11058 = vsel %vm10914, %v8321, 0.0
  %v11059 = vsel %vm10915, %v8322, 0.0
  %v11060 = vsel %vm10916, %v8323, 0.0
  %v11061 = vsel %vm10917, %v8324, 0.0
  %v11062 = vsel %vm10918, %v8325, 0.0
  %v11063 = vsel %vm10919, %v8326, 0.0
  %v11064 = vsel %vm10920, %v8327, 0.0
  %v11065 = vsel %vm10921, %v8328, 0.0
  %v11066 = vsel %vm10922, %v8329, 0.0
  %v11067 = vsel %vm10923, %v8330, 0.0
  %v11068 = vsel %vm10924, %v8331, 0.0
  %v11069 = vsel %vm10925, %v8332, 0.0
  %v11070 = vsel %vm10926, %v8333, 0.0
  %v11071 = vsel %vm10927, %v8334, 0.0
  %v11072 = vsel %vm10928, %v8335, 0.0
  %v11073 = vadd.f32 %v10929, %v10930
  %v11074 = vadd.f32 %v11073, %v10931
  %v11075 = vadd.f32 %v11074, %v10932
  %v11076 = vadd.f32 %v11075, %v10933
  %v11077 = vadd.f32 %v11076, %v10934
  %v11078 = vadd.f32 %v11077, %v10935
  %v11079 = vadd.f32 %v11078, %v10936
  %v11080 = vadd.f32 %v11079, %v10937
  %v11081 = vadd.f32 %v11080, %v10938
  %v11082 = vadd.f32 %v11081, %v10939
  %v11083 = vadd.f32 %v11082, %v10940
  %v11084 = vadd.f32 %v11083, %v10941
  %v11085 = vadd.f32 %v11084, %v10942
  %v11086 = vadd.f32 %v11085, %v10943
  %v11087 = vadd.f32 %v11086, %v10944
  %v11088 = vadd.f32 %v11087, %v10945
  %v11089 = vadd.f32 %v11088, %v10946
  %v11090 = vadd.f32 %v11089, %v10947
  %v11091 = vadd.f32 %v11090, %v10948
  %v11092 = vadd.f32 %v11091, %v10949
  %v11093 = vadd.f32 %v11092, %v10950
  %v11094 = vadd.f32 %v11093, %v10951
  %v11095 = vadd.f32 %v11094, %v10952
  %v11096 = vadd.f32 %v11095, %v10953
  %v11097 = vadd.f32 %v11096, %v10954
  %v11098 = vadd.f32 %v11097, %v10955
  %v11099 = vadd.f32 %v11098, %v10956
  %v11100 = vadd.f32 %v11099, %v10957
  %v11101 = vadd.f32 %v11100, %v10958
  %v11102 = vadd.f32 %v11101, %v10959
  %v11103 = vadd.f32 %v11102, %v10960
  %v11104 = vadd.f32 %v11103, %v10961
  %v11105 = vadd.f32 %v11104, %v10962
  %v11106 = vadd.f32 %v11105, %v10963
  %v11107 = vadd.f32 %v11106, %v10964
  %v11108 = vadd.f32 %v11107, %v10965
  %v11109 = vadd.f32 %v11108, %v10966
  %v11110 = vadd.f32 %v11109, %v10967
  %v11111 = vadd.f32 %v11110, %v10968
  %v11112 = vadd.f32 %v11111, %v10969
  %v11113 = vadd.f32 %v11112, %v10970
  %v11114 = vadd.f32 %v11113, %v10971
  %v11115 = vadd.f32 %v11114, %v10972
  %v11116 = vadd.f32 %v11115, %v10973
  %v11117 = vadd.f32 %v11116, %v10974
  %v11118 = vadd.f32 %v11117, %v10975
  %v11119 = vadd.f32 %v11118, %v10976
  %v11120 = vadd.f32 %v11119, %v10977
  %v11121 = vadd.f32 %v11120, %v10978
  %v11122 = vadd.f32 %v11121, %v10979
  %v11123 = vadd.f32 %v11122, %v10980
  %v11124 = vadd.f32 %v11123, %v10981
  %v11125 = vadd.f32 %v11124, %v10982
  %v11126 = vadd.f32 %v11125, %v10983
  %v11127 = vadd.f32 %v11126, %v10984
  %v11128 = vadd.f32 %v11127, %v10985
  %v11129 = vadd.f32 %v11128, %v10986
  %v11130 = vadd.f32 %v11129, %v10987
  %v11131 = vadd.f32 %v11130, %v10988
  %v11132 = vadd.f32 %v11131, %v10989
  %v11133 = vadd.f32 %v11132, %v10990
  %v11134 = vadd.f32 %v11133, %v10991
  %v11135 = vadd.f32 %v11134, %v10992
  %v11136 = vadd.f32 %v11135, %v10993
  %v11137 = vadd.f32 %v11136, %v10994
  %v11138 = vadd.f32 %v11137, %v10995
  %v11139 = vadd.f32 %v11138, %v10996
  %v11140 = vadd.f32 %v11139, %v10997
  %v11141 = vadd.f32 %v11140, %v10998
  %v11142 = vadd.f32 %v11141, %v10999
  %v11143 = vadd.f32 %v11142, %v11000
  %v11144 = vadd.f32 %v11143, %v11001
  %v11145 = vadd.f32 %v11144, %v11002
  %v11146 = vadd.f32 %v11145, %v11003
  %v11147 = vadd.f32 %v11146, %v11004
  %v11148 = vadd.f32 %v11147, %v11005
  %v11149 = vadd.f32 %v11148, %v11006
  %v11150 = vadd.f32 %v11149, %v11007
  %v11151 = vadd.f32 %v11150, %v11008
  %v11152 = vadd.f32 %v11151, %v11009
  %v11153 = vadd.f32 %v11152, %v11010
  %v11154 = vadd.f32 %v11153, %v11011
  %v11155 = vadd.f32 %v11154, %v11012
  %v11156 = vadd.f32 %v11155, %v11013
  %v11157 = vadd.f32 %v11156, %v11014
  %v11158 = vadd.f32 %v11157, %v11015
  %v11159 = vadd.f32 %v11158, %v11016
  %v11160 = vadd.f32 %v11159, %v11017
  %v11161 = vadd.f32 %v11160, %v11018
  %v11162 = vadd.f32 %v11161, %v11019
  %v11163 = vadd.f32 %v11162, %v11020
  %v11164 = vadd.f32 %v11163, %v11021
  %v11165 = vadd.f32 %v11164, %v11022
  %v11166 = vadd.f32 %v11165, %v11023
  %v11167 = vadd.f32 %v11166, %v11024
  %v11168 = vadd.f32 %v11167, %v11025
  %v11169 = vadd.f32 %v11168, %v11026
  %v11170 = vadd.f32 %v11169, %v11027
  %v11171 = vadd.f32 %v11170, %v11028
  %v11172 = vadd.f32 %v11171, %v11029
  %v11173 = vadd.f32 %v11172, %v11030
  %v11174 = vadd.f32 %v11173, %v11031
  %v11175 = vadd.f32 %v11174, %v11032
  %v11176 = vadd.f32 %v11175, %v11033
  %v11177 = vadd.f32 %v11176, %v11034
  %v11178 = vadd.f32 %v11177, %v11035
  %v11179 = vadd.f32 %v11178, %v11036
  %v11180 = vadd.f32 %v11179, %v11037
  %v11181 = vadd.f32 %v11180, %v11038
  %v11182 = vadd.f32 %v11181, %v11039
  %v11183 = vadd.f32 %v11182, %v11040
  %v11184 = vadd.f32 %v11183, %v11041
  %v11185 = vadd.f32 %v11184, %v11042
  %v11186 = vadd.f32 %v11185, %v11043
  %v11187 = vadd.f32 %v11186, %v11044
  %v11188 = vadd.f32 %v11187, %v11045
  %v11189 = vadd.f32 %v11188, %v11046
  %v11190 = vadd.f32 %v11189, %v11047
  %v11191 = vadd.f32 %v11190, %v11048
  %v11192 = vadd.f32 %v11191, %v11049
  %v11193 = vadd.f32 %v11192, %v11050
  %v11194 = vadd.f32 %v11193, %v11051
  %v11195 = vadd.f32 %v11194, %v11052
  %v11196 = vadd.f32 %v11195, %v11053
  %v11197 = vadd.f32 %v11196, %v11054
  %v11198 = vadd.f32 %v11197, %v11055
  %v11199 = vadd.f32 %v11198, %v11056
  %v11200 = vadd.f32 %v11199, %v11057
  %v11201 = vadd.f32 %v11200, %v11058
  %v11202 = vadd.f32 %v11201, %v11059
  %v11203 = vadd.f32 %v11202, %v11060
  %v11204 = vadd.f32 %v11203, %v11061
  %v11205 = vadd.f32 %v11204, %v11062
  %v11206 = vadd.f32 %v11205, %v11063
  %v11207 = vadd.f32 %v11206, %v11064
  %v11208 = vadd.f32 %v11207, %v11065
  %v11209 = vadd.f32 %v11208, %v11066
  %v11210 = vadd.f32 %v11209, %v11067
  %v11211 = vadd.f32 %v11210, %v11068
  %v11212 = vadd.f32 %v11211, %v11069
  %v11213 = vadd.f32 %v11212, %v11070
  %v11214 = vadd.f32 %v11213, %v11071
  %v11215 = vadd.f32 %v11214, %v11072
  %v11216 = vrot.slane %v11215, 4
  %v11217 = vadd.f32 %v11215, %v11216
  %v11218 = vrot.slane %v11217, 2
  %v11219 = vadd.f32 %v11217, %v11218
  %v11220 = vrot.slane %v11219, 1
  %v11221 = vadd.f32 %v11219, %v11220
  %v11222 = vadd.f32 %v11221, 0.0
  %v11223 = vmul.f32 %v10929, %v8192
  %v11224 = vmul.f32 %v10930, %v8193
  %v11225 = vmul.f32 %v10931, %v8194
  %v11226 = vmul.f32 %v10932, %v8195
  %v11227 = vmul.f32 %v10933, %v8196
  %v11228 = vmul.f32 %v10934, %v8197
  %v11229 = vmul.f32 %v10935, %v8198
  %v11230 = vmul.f32 %v10936, %v8199
  %v11231 = vmul.f32 %v10937, %v8200
  %v11232 = vmul.f32 %v10938, %v8201
  %v11233 = vmul.f32 %v10939, %v8202
  %v11234 = vmul.f32 %v10940, %v8203
  %v11235 = vmul.f32 %v10941, %v8204
  %v11236 = vmul.f32 %v10942, %v8205
  %v11237 = vmul.f32 %v10943, %v8206
  %v11238 = vmul.f32 %v10944, %v8207
  %v11239 = vmul.f32 %v10945, %v8208
  %v11240 = vmul.f32 %v10946, %v8209
  %v11241 = vmul.f32 %v10947, %v8210
  %v11242 = vmul.f32 %v10948, %v8211
  %v11243 = vmul.f32 %v10949, %v8212
  %v11244 = vmul.f32 %v10950, %v8213
  %v11245 = vmul.f32 %v10951, %v8214
  %v11246 = vmul.f32 %v10952, %v8215
  %v11247 = vmul.f32 %v10953, %v8216
  %v11248 = vmul.f32 %v10954, %v8217
  %v11249 = vmul.f32 %v10955, %v8218
  %v11250 = vmul.f32 %v10956, %v8219
  %v11251 = vmul.f32 %v10957, %v8220
  %v11252 = vmul.f32 %v10958, %v8221
  %v11253 = vmul.f32 %v10959, %v8222
  %v11254 = vmul.f32 %v10960, %v8223
  %v11255 = vmul.f32 %v10961, %v8224
  %v11256 = vmul.f32 %v10962, %v8225
  %v11257 = vmul.f32 %v10963, %v8226
  %v11258 = vmul.f32 %v10964, %v8227
  %v11259 = vmul.f32 %v10965, %v8228
  %v11260 = vmul.f32 %v10966, %v8229
  %v11261 = vmul.f32 %v10967, %v8230
  %v11262 = vmul.f32 %v10968, %v8231
  %v11263 = vmul.f32 %v10969, %v8232
  %v11264 = vmul.f32 %v10970, %v8233
  %v11265 = vmul.f32 %v10971, %v8234
  %v11266 = vmul.f32 %v10972, %v8235
  %v11267 = vmul.f32 %v10973, %v8236
  %v11268 = vmul.f32 %v10974, %v8237
  %v11269 = vmul.f32 %v10975, %v8238
  %v11270 = vmul.f32 %v10976, %v8239
  %v11271 = vmul.f32 %v10977, %v8240
  %v11272 = vmul.f32 %v10978, %v8241
  %v11273 = vmul.f32 %v10979, %v8242
  %v11274 = vmul.f32 %v10980, %v8243
  %v11275 = vmul.f32 %v10981, %v8244
  %v11276 = vmul.f32 %v10982, %v8245
  %v11277 = vmul.f32 %v10983, %v8246
  %v11278 = vmul.f32 %v10984, %v8247
  %v11279 = vmul.f32 %v10985, %v8248
  %v11280 = vmul.f32 %v10986, %v8249
  %v11281 = vmul.f32 %v10987, %v8250
  %v11282 = vmul.f32 %v10988, %v8251
  %v11283 = vmul.f32 %v10989, %v8252
  %v11284 = vmul.f32 %v10990, %v8253
  %v11285 = vmul.f32 %v10991, %v8254
  %v11286 = vmul.f32 %v10992, %v8255
  %v11287 = vmul.f32 %v10993, %v8256
  %v11288 = vmul.f32 %v10994, %v8257
  %v11289 = vmul.f32 %v10995, %v8258
  %v11290 = vmul.f32 %v10996, %v8259
  %v11291 = vmul.f32 %v10997, %v8260
  %v11292 = vmul.f32 %v10998, %v8261
  %v11293 = vmul.f32 %v10999, %v8262
  %v11294 = vmul.f32 %v11000, %v8263
  %v11295 = vmul.f32 %v11001, %v8264
  %v11296 = vmul.f32 %v11002, %v8265
  %v11297 = vmul.f32 %v11003, %v8266
  %v11298 = vmul.f32 %v11004, %v8267
  %v11299 = vmul.f32 %v11005, %v8268
  %v11300 = vmul.f32 %v11006, %v8269
  %v11301 = vmul.f32 %v11007, %v8270
  %v11302 = vmul.f32 %v11008, %v8271
  %v11303 = vmul.f32 %v11009, %v8272
  %v11304 = vmul.f32 %v11010, %v8273
  %v11305 = vmul.f32 %v11011, %v8274
  %v11306 = vmul.f32 %v11012, %v8275
  %v11307 = vmul.f32 %v11013, %v8276
  %v11308 = vmul.f32 %v11014, %v8277
  %v11309 = vmul.f32 %v11015, %v8278
  %v11310 = vmul.f32 %v11016, %v8279
  %v11311 = vmul.f32 %v11017, %v8280
  %v11312 = vmul.f32 %v11018, %v8281
  %v11313 = vmul.f32 %v11019, %v8282
  %v11314 = vmul.f32 %v11020, %v8283
  %v11315 = vmul.f32 %v11021, %v8284
  %v11316 = vmul.f32 %v11022, %v8285
  %v11317 = vmul.f32 %v11023, %v8286
  %v11318 = vmul.f32 %v11024, %v8287
  %v11319 = vmul.f32 %v11025, %v8288
  %v11320 = vmul.f32 %v11026, %v8289
  %v11321 = vmul.f32 %v11027, %v8290
  %v11322 = vmul.f32 %v11028, %v8291
  %v11323 = vmul.f32 %v11029, %v8292
  %v11324 = vmul.f32 %v11030, %v8293
  %v11325 = vmul.f32 %v11031, %v8294
  %v11326 = vmul.f32 %v11032, %v8295
  %v11327 = vmul.f32 %v11033, %v8296
  %v11328 = vmul.f32 %v11034, %v8297
  %v11329 = vmul.f32 %v11035, %v8298
  %v11330 = vmul.f32 %v11036, %v8299
  %v11331 = vmul.f32 %v11037, %v8300
  %v11332 = vmul.f32 %v11038, %v8301
  %v11333 = vmul.f32 %v11039, %v8302
  %v11334 = vmul.f32 %v11040, %v8303
  %v11335 = vmul.f32 %v11041, %v8304
  %v11336 = vmul.f32 %v11042, %v8305
  %v11337 = vmul.f32 %v11043, %v8306
  %v11338 = vmul.f32 %v11044, %v8307
  %v11339 = vmul.f32 %v11045, %v8308
  %v11340 = vmul.f32 %v11046, %v8309
  %v11341 = vmul.f32 %v11047, %v8310
  %v11342 = vmul.f32 %v11048, %v8311
  %v11343 = vmul.f32 %v11049, %v8312
  %v11344 = vmul.f32 %v11050, %v8313
  %v11345 = vmul.f32 %v11051, %v8314
  %v11346 = vmul.f32 %v11052, %v8315
  %v11347 = vmul.f32 %v11053, %v8316
  %v11348 = vmul.f32 %v11054, %v8317
  %v11349 = vmul.f32 %v11055, %v8318
  %v11350 = vmul.f32 %v11056, %v8319
  %v11351 = vmul.f32 %v11057, %v8320
  %v11352 = vmul.f32 %v11058, %v8321
  %v11353 = vmul.f32 %v11059, %v8322
  %v11354 = vmul.f32 %v11060, %v8323
  %v11355 = vmul.f32 %v11061, %v8324
  %v11356 = vmul.f32 %v11062, %v8325
  %v11357 = vmul.f32 %v11063, %v8326
  %v11358 = vmul.f32 %v11064, %v8327
  %v11359 = vmul.f32 %v11065, %v8328
  %v11360 = vmul.f32 %v11066, %v8329
  %v11361 = vmul.f32 %v11067, %v8330
  %v11362 = vmul.f32 %v11068, %v8331
  %v11363 = vmul.f32 %v11069, %v8332
  %v11364 = vmul.f32 %v11070, %v8333
  %v11365 = vmul.f32 %v11071, %v8334
  %v11366 = vmul.f32 %v11072, %v8335
  %v11367 = vadd.f32 %v11223, %v11224
  %v11368 = vadd.f32 %v11367, %v11225
  %v11369 = vadd.f32 %v11368, %v11226
  %v11370 = vadd.f32 %v11369, %v11227
  %v11371 = vadd.f32 %v11370, %v11228
  %v11372 = vadd.f32 %v11371, %v11229
  %v11373 = vadd.f32 %v11372, %v11230
  %v11374 = vadd.f32 %v11373, %v11231
  %v11375 = vadd.f32 %v11374, %v11232
  %v11376 = vadd.f32 %v11375, %v11233
  %v11377 = vadd.f32 %v11376, %v11234
  %v11378 = vadd.f32 %v11377, %v11235
  %v11379 = vadd.f32 %v11378, %v11236
  %v11380 = vadd.f32 %v11379, %v11237
  %v11381 = vadd.f32 %v11380, %v11238
  %v11382 = vadd.f32 %v11381, %v11239
  %v11383 = vadd.f32 %v11382, %v11240
  %v11384 = vadd.f32 %v11383, %v11241
  %v11385 = vadd.f32 %v11384, %v11242
  %v11386 = vadd.f32 %v11385, %v11243
  %v11387 = vadd.f32 %v11386, %v11244
  %v11388 = vadd.f32 %v11387, %v11245
  %v11389 = vadd.f32 %v11388, %v11246
  %v11390 = vadd.f32 %v11389, %v11247
  %v11391 = vadd.f32 %v11390, %v11248
  %v11392 = vadd.f32 %v11391, %v11249
  %v11393 = vadd.f32 %v11392, %v11250
  %v11394 = vadd.f32 %v11393, %v11251
  %v11395 = vadd.f32 %v11394, %v11252
  %v11396 = vadd.f32 %v11395, %v11253
  %v11397 = vadd.f32 %v11396, %v11254
  %v11398 = vadd.f32 %v11397, %v11255
  %v11399 = vadd.f32 %v11398, %v11256
  %v11400 = vadd.f32 %v11399, %v11257
  %v11401 = vadd.f32 %v11400, %v11258
  %v11402 = vadd.f32 %v11401, %v11259
  %v11403 = vadd.f32 %v11402, %v11260
  %v11404 = vadd.f32 %v11403, %v11261
  %v11405 = vadd.f32 %v11404, %v11262
  %v11406 = vadd.f32 %v11405, %v11263
  %v11407 = vadd.f32 %v11406, %v11264
  %v11408 = vadd.f32 %v11407, %v11265
  %v11409 = vadd.f32 %v11408, %v11266
  %v11410 = vadd.f32 %v11409, %v11267
  %v11411 = vadd.f32 %v11410, %v11268
  %v11412 = vadd.f32 %v11411, %v11269
  %v11413 = vadd.f32 %v11412, %v11270
  %v11414 = vadd.f32 %v11413, %v11271
  %v11415 = vadd.f32 %v11414, %v11272
  %v11416 = vadd.f32 %v11415, %v11273
  %v11417 = vadd.f32 %v11416, %v11274
  %v11418 = vadd.f32 %v11417, %v11275
  %v11419 = vadd.f32 %v11418, %v11276
  %v11420 = vadd.f32 %v11419, %v11277
  %v11421 = vadd.f32 %v11420, %v11278
  %v11422 = vadd.f32 %v11421, %v11279
  %v11423 = vadd.f32 %v11422, %v11280
  %v11424 = vadd.f32 %v11423, %v11281
  %v11425 = vadd.f32 %v11424, %v11282
  %v11426 = vadd.f32 %v11425, %v11283
  %v11427 = vadd.f32 %v11426, %v11284
  %v11428 = vadd.f32 %v11427, %v11285
  %v11429 = vadd.f32 %v11428, %v11286
  %v11430 = vadd.f32 %v11429, %v11287
  %v11431 = vadd.f32 %v11430, %v11288
  %v11432 = vadd.f32 %v11431, %v11289
  %v11433 = vadd.f32 %v11432, %v11290
  %v11434 = vadd.f32 %v11433, %v11291
  %v11435 = vadd.f32 %v11434, %v11292
  %v11436 = vadd.f32 %v11435, %v11293
  %v11437 = vadd.f32 %v11436, %v11294
  %v11438 = vadd.f32 %v11437, %v11295
  %v11439 = vadd.f32 %v11438, %v11296
  %v11440 = vadd.f32 %v11439, %v11297
  %v11441 = vadd.f32 %v11440, %v11298
  %v11442 = vadd.f32 %v11441, %v11299
  %v11443 = vadd.f32 %v11442, %v11300
  %v11444 = vadd.f32 %v11443, %v11301
  %v11445 = vadd.f32 %v11444, %v11302
  %v11446 = vadd.f32 %v11445, %v11303
  %v11447 = vadd.f32 %v11446, %v11304
  %v11448 = vadd.f32 %v11447, %v11305
  %v11449 = vadd.f32 %v11448, %v11306
  %v11450 = vadd.f32 %v11449, %v11307
  %v11451 = vadd.f32 %v11450, %v11308
  %v11452 = vadd.f32 %v11451, %v11309
  %v11453 = vadd.f32 %v11452, %v11310
  %v11454 = vadd.f32 %v11453, %v11311
  %v11455 = vadd.f32 %v11454, %v11312
  %v11456 = vadd.f32 %v11455, %v11313
  %v11457 = vadd.f32 %v11456, %v11314
  %v11458 = vadd.f32 %v11457, %v11315
  %v11459 = vadd.f32 %v11458, %v11316
  %v11460 = vadd.f32 %v11459, %v11317
  %v11461 = vadd.f32 %v11460, %v11318
  %v11462 = vadd.f32 %v11461, %v11319
  %v11463 = vadd.f32 %v11462, %v11320
  %v11464 = vadd.f32 %v11463, %v11321
  %v11465 = vadd.f32 %v11464, %v11322
  %v11466 = vadd.f32 %v11465, %v11323
  %v11467 = vadd.f32 %v11466, %v11324
  %v11468 = vadd.f32 %v11467, %v11325
  %v11469 = vadd.f32 %v11468, %v11326
  %v11470 = vadd.f32 %v11469, %v11327
  %v11471 = vadd.f32 %v11470, %v11328
  %v11472 = vadd.f32 %v11471, %v11329
  %v11473 = vadd.f32 %v11472, %v11330
  %v11474 = vadd.f32 %v11473, %v11331
  %v11475 = vadd.f32 %v11474, %v11332
  %v11476 = vadd.f32 %v11475, %v11333
  %v11477 = vadd.f32 %v11476, %v11334
  %v11478 = vadd.f32 %v11477, %v11335
  %v11479 = vadd.f32 %v11478, %v11336
  %v11480 = vadd.f32 %v11479, %v11337
  %v11481 = vadd.f32 %v11480, %v11338
  %v11482 = vadd.f32 %v11481, %v11339
  %v11483 = vadd.f32 %v11482, %v11340
  %v11484 = vadd.f32 %v11483, %v11341
  %v11485 = vadd.f32 %v11484, %v11342
  %v11486 = vadd.f32 %v11485, %v11343
  %v11487 = vadd.f32 %v11486, %v11344
  %v11488 = vadd.f32 %v11487, %v11345
  %v11489 = vadd.f32 %v11488, %v11346
  %v11490 = vadd.f32 %v11489, %v11347
  %v11491 = vadd.f32 %v11490, %v11348
  %v11492 = vadd.f32 %v11491, %v11349
  %v11493 = vadd.f32 %v11492, %v11350
  %v11494 = vadd.f32 %v11493, %v11351
  %v11495 = vadd.f32 %v11494, %v11352
  %v11496 = vadd.f32 %v11495, %v11353
  %v11497 = vadd.f32 %v11496, %v11354
  %v11498 = vadd.f32 %v11497, %v11355
  %v11499 = vadd.f32 %v11498, %v11356
  %v11500 = vadd.f32 %v11499, %v11357
  %v11501 = vadd.f32 %v11500, %v11358
  %v11502 = vadd.f32 %v11501, %v11359
  %v11503 = vadd.f32 %v11502, %v11360
  %v11504 = vadd.f32 %v11503, %v11361
  %v11505 = vadd.f32 %v11504, %v11362
  %v11506 = vadd.f32 %v11505, %v11363
  %v11507 = vadd.f32 %v11506, %v11364
  %v11508 = vadd.f32 %v11507, %v11365
  %v11509 = vadd.f32 %v11508, %v11366
  %v11510 = vrot.slane %v11509, 4
  %v11511 = vadd.f32 %v11509, %v11510
  %v11512 = vrot.slane %v11511, 2
  %v11513 = vadd.f32 %v11511, %v11512
  %v11514 = vrot.slane %v11513, 1
  %v11515 = vadd.f32 %v11513, %v11514
  %v11516 = vadd.f32 %v11515, 0.0
  %11517 = vst [vmem:[%s4] sm:$0xff] %v8192
  %11518 = vst [vmem:[%s4 + $0x8] sm:$0xff] %v8193
  %11519 = vst [vmem:[%s4 + $0x10] sm:$0xff] %v8194
  %11520 = vst [vmem:[%s4 + $0x18] sm:$0xff] %v8195
  %11521 = vst [vmem:[%s4 + $0x20] sm:$0xff] %v8196
  %11522 = vst [vmem:[%s4 + $0x28] sm:$0xff] %v8197
  %11523 = vst [vmem:[%s4 + $0x30] sm:$0xff] %v8198
  %11524 = vst [vmem:[%s4 + $0x38] sm:$0xff] %v8199
  %11525 = vst [vmem:[%s4 + $0x40] sm:$0xff] %v8200
  %11526 = vst [vmem:[%s4 + $0x48] sm:$0xff] %v8201
  %11527 = vst [vmem:[%s4 + $0x50] sm:$0xff] %v8202
  %11528 = vst [vmem:[%s4 + $0x58] sm:$0xff] %v8203
  %11529 = vst [vmem:[%s4 + $0x60] sm:$0xff] %v8204
  %11530 = vst [vmem:[%s4 + $0x68] sm:$0xff] %v8205
  %11531 = vst [vmem:[%s4 + $0x70] sm:$0xff] %v8206
  %11532 = vst [vmem:[%s4 + $0x78] sm:$0xff] %v8207
  %11533 = vst [vmem:[%s4 + $0x80] sm:$0xff] %v8208
  %11534 = vst [vmem:[%s4 + $0x88] sm:$0xff] %v8209
  %11535 = vst [vmem:[%s4 + $0x90] sm:$0xff] %v8210
  %11536 = vst [vmem:[%s4 + $0x98] sm:$0xff] %v8211
  %11537 = vst [vmem:[%s4 + $0xa0] sm:$0xff] %v8212
  %11538 = vst [vmem:[%s4 + $0xa8] sm:$0xff] %v8213
  %11539 = vst [vmem:[%s4 + $0xb0] sm:$0xff] %v8214
  %11540 = vst [vmem:[%s4 + $0xb8] sm:$0xff] %v8215
  %11541 = vst [vmem:[%s4 + $0xc0] sm:$0xff] %v8216
  %11542 = vst [vmem:[%s4 + $0xc8] sm:$0xff] %v8217
  %11543 = vst [vmem:[%s4 + $0xd0] sm:$0xff] %v8218
  %11544 = vst [vmem:[%s4 + $0xd8] sm:$0xff] %v8219
  %11545 = vst [vmem:[%s4 + $0xe0] sm:$0xff] %v8220
  %11546 = vst [vmem:[%s4 + $0xe8] sm:$0xff] %v8221
  %11547 = vst [vmem:[%s4 + $0xf0] sm:$0xff] %v8222
  %11548 = vst [vmem:[%s4 + $0xf8] sm:$0xff] %v8223
  %11549 = vst [vmem:[%s4 + $0x100] sm:$0xff] %v8224
  %11550 = vst [vmem:[%s4 + $0x108] sm:$0xff] %v8225
  %11551 = vst [vmem:[%s4 + $0x110] sm:$0xff] %v8226
  %11552 = vst [vmem:[%s4 + $0x118] sm:$0xff] %v8227
  %11553 = vst [vmem:[%s4 + $0x120] sm:$0xff] %v8228
  %11554 = vst [vmem:[%s4 + $0x128] sm:$0xff] %v8229
  %11555 = vst [vmem:[%s4 + $0x130] sm:$0xff] %v8230
  %11556 = vst [vmem:[%s4 + $0x138] sm:$0xff] %v8231
  %11557 = vst [vmem:[%s4 + $0x140] sm:$0xff] %v8232
  %11558 = vst [vmem:[%s4 + $0x148] sm:$0xff] %v8233
  %11559 = vst [vmem:[%s4 + $0x150] sm:$0xff] %v8234
  %11560 = vst [vmem:[%s4 + $0x158] sm:$0xff] %v8235
  %11561 = vst [vmem:[%s4 + $0x160] sm:$0xff] %v8236
  %11562 = vst [vmem:[%s4 + $0x168] sm:$0xff] %v8237
  %11563 = vst [vmem:[%s4 + $0x170] sm:$0xff] %v8238
  %11564 = vst [vmem:[%s4 + $0x178] sm:$0xff] %v8239
  %11565 = vst [vmem:[%s4 + $0x180] sm:$0xff] %v8240
  %11566 = vst [vmem:[%s4 + $0x188] sm:$0xff] %v8241
  %11567 = vst [vmem:[%s4 + $0x190] sm:$0xff] %v8242
  %11568 = vst [vmem:[%s4 + $0x198] sm:$0xff] %v8243
  %11569 = vst [vmem:[%s4 + $0x1a0] sm:$0xff] %v8244
  %11570 = vst [vmem:[%s4 + $0x1a8] sm:$0xff] %v8245
  %11571 = vst [vmem:[%s4 + $0x1b0] sm:$0xff] %v8246
  %11572 = vst [vmem:[%s4 + $0x1b8] sm:$0xff] %v8247
  %11573 = vst [vmem:[%s4 + $0x1c0] sm:$0xff] %v8248
  %11574 = vst [vmem:[%s4 + $0x1c8] sm:$0xff] %v8249
  %11575 = vst [vmem:[%s4 + $0x1d0] sm:$0xff] %v8250
  %11576 = vst [vmem:[%s4 + $0x1d8] sm:$0xff] %v8251
  %11577 = vst [vmem:[%s4 + $0x1e0] sm:$0xff] %v8252
  %11578 = vst [vmem:[%s4 + $0x1e8] sm:$0xff] %v8253
  %11579 = vst [vmem:[%s4 + $0x1f0] sm:$0xff] %v8254
  %11580 = vst [vmem:[%s4 + $0x1f8] sm:$0xff] %v8255
  %11581 = vst [vmem:[%s4 + $0x200] sm:$0xff] %v8256
  %11582 = vst [vmem:[%s4 + $0x208] sm:$0xff] %v8257
  %11583 = vst [vmem:[%s4 + $0x210] sm:$0xff] %v8258
  %11584 = vst [vmem:[%s4 + $0x218] sm:$0xff] %v8259
  %11585 = vst [vmem:[%s4 + $0x220] sm:$0xff] %v8260
  %11586 = vst [vmem:[%s4 + $0x228] sm:$0xff] %v8261
  %11587 = vst [vmem:[%s4 + $0x230] sm:$0xff] %v8262
  %11588 = vst [vmem:[%s4 + $0x238] sm:$0xff] %v8263
  %11589 = vst [vmem:[%s4 + $0x240] sm:$0xff] %v8264
  %11590 = vst [vmem:[%s4 + $0x248] sm:$0xff] %v8265
  %11591 = vst [vmem:[%s4 + $0x250] sm:$0xff] %v8266
  %11592 = vst [vmem:[%s4 + $0x258] sm:$0xff] %v8267
  %11593 = vst [vmem:[%s4 + $0x260] sm:$0xff] %v8268
  %11594 = vst [vmem:[%s4 + $0x268] sm:$0xff] %v8269
  %11595 = vst [vmem:[%s4 + $0x270] sm:$0xff] %v8270
  %11596 = vst [vmem:[%s4 + $0x278] sm:$0xff] %v8271
  %11597 = vst [vmem:[%s4 + $0x280] sm:$0xff] %v8272
  %11598 = vst [vmem:[%s4 + $0x288] sm:$0xff] %v8273
  %11599 = vst [vmem:[%s4 + $0x290] sm:$0xff] %v8274
  %11600 = vst [vmem:[%s4 + $0x298] sm:$0xff] %v8275
  %11601 = vst [vmem:[%s4 + $0x2a0] sm:$0xff] %v8276
  %11602 = vst [vmem:[%s4 + $0x2a8] sm:$0xff] %v8277
  %11603 = vst [vmem:[%s4 + $0x2b0] sm:$0xff] %v8278
  %11604 = vst [vmem:[%s4 + $0x2b8] sm:$0xff] %v8279
  %11605 = vst [vmem:[%s4 + $0x2c0] sm:$0xff] %v8280
  %11606 = vst [vmem:[%s4 + $0x2c8] sm:$0xff] %v8281
  %11607 = vst [vmem:[%s4 + $0x2d0] sm:$0xff] %v8282
  %11608 = vst [vmem:[%s4 + $0x2d8] sm:$0xff] %v8283
  %11609 = vst [vmem:[%s4 + $0x2e0] sm:$0xff] %v8284
  %11610 = vst [vmem:[%s4 + $0x2e8] sm:$0xff] %v8285
  %11611 = vst [vmem:[%s4 + $0x2f0] sm:$0xff] %v8286
  %11612 = vst [vmem:[%s4 + $0x2f8] sm:$0xff] %v8287
  %11613 = vst [vmem:[%s4 + $0x300] sm:$0xff] %v8288
  %11614 = vst [vmem:[%s4 + $0x308] sm:$0xff] %v8289
  %11615 = vst [vmem:[%s4 + $0x310] sm:$0xff] %v8290
  %11616 = vst [vmem:[%s4 + $0x318] sm:$0xff] %v8291
  %11617 = vst [vmem:[%s4 + $0x320] sm:$0xff] %v8292
  %11618 = vst [vmem:[%s4 + $0x328] sm:$0xff] %v8293
  %11619 = vst [vmem:[%s4 + $0x330] sm:$0xff] %v8294
  %11620 = vst [vmem:[%s4 + $0x338] sm:$0xff] %v8295
  %11621 = vst [vmem:[%s4 + $0x340] sm:$0xff] %v8296
  %11622 = vst [vmem:[%s4 + $0x348] sm:$0xff] %v8297
  %11623 = vst [vmem:[%s4 + $0x350] sm:$0xff] %v8298
  %11624 = vst [vmem:[%s4 + $0x358] sm:$0xff] %v8299
  %11625 = vst [vmem:[%s4 + $0x360] sm:$0xff] %v8300
  %11626 = vst [vmem:[%s4 + $0x368] sm:$0xff] %v8301
  %11627 = vst [vmem:[%s4 + $0x370] sm:$0xff] %v8302
  %11628 = vst [vmem:[%s4 + $0x378] sm:$0xff] %v8303
  %11629 = vst [vmem:[%s4 + $0x380] sm:$0xff] %v8304
  %11630 = vst [vmem:[%s4 + $0x388] sm:$0xff] %v8305
  %11631 = vst [vmem:[%s4 + $0x390] sm:$0xff] %v8306
  %11632 = vst [vmem:[%s4 + $0x398] sm:$0xff] %v8307
  %11633 = vst [vmem:[%s4 + $0x3a0] sm:$0xff] %v8308
  %11634 = vst [vmem:[%s4 + $0x3a8] sm:$0xff] %v8309
  %11635 = vst [vmem:[%s4 + $0x3b0] sm:$0xff] %v8310
  %11636 = vst [vmem:[%s4 + $0x3b8] sm:$0xff] %v8311
  %11637 = vst [vmem:[%s4 + $0x3c0] sm:$0xff] %v8312
  %11638 = vst [vmem:[%s4 + $0x3c8] sm:$0xff] %v8313
  %11639 = vst [vmem:[%s4 + $0x3d0] sm:$0xff] %v8314
  %11640 = vst [vmem:[%s4 + $0x3d8] sm:$0xff] %v8315
  %11641 = vst [vmem:[%s4 + $0x3e0] sm:$0xff] %v8316
  %11642 = vst [vmem:[%s4 + $0x3e8] sm:$0xff] %v8317
  %11643 = vst [vmem:[%s4 + $0x3f0] sm:$0xff] %v8318
  %11644 = vst [vmem:[%s4 + $0x3f8] sm:$0xff] %v8319
  %11645 = vst [vmem:[%s4 + $0x400] sm:$0xff] %v8320
  %11646 = vst [vmem:[%s4 + $0x408] sm:$0xff] %v8321
  %11647 = vst [vmem:[%s4 + $0x410] sm:$0xff] %v8322
  %11648 = vst [vmem:[%s4 + $0x418] sm:$0xff] %v8323
  %11649 = vst [vmem:[%s4 + $0x420] sm:$0xff] %v8324
  %11650 = vst [vmem:[%s4 + $0x428] sm:$0xff] %v8325
  %11651 = vst [vmem:[%s4 + $0x430] sm:$0xff] %v8326
  %11652 = vst [vmem:[%s4 + $0x438] sm:$0xff] %v8327
  %11653 = vst [vmem:[%s4 + $0x440] sm:$0xff] %v8328
  %11654 = vst [vmem:[%s4 + $0x448] sm:$0xff] %v8329
  %11655 = vst [vmem:[%s4 + $0x450] sm:$0xff] %v8330
  %11656 = vst [vmem:[%s4 + $0x458] sm:$0xff] %v8331
  %11657 = vst [vmem:[%s4 + $0x460] sm:$0xff] %v8332
  %11658 = vst [vmem:[%s4 + $0x468] sm:$0xff] %v8333
  %11659 = vst [vmem:[%s4 + $0x470] sm:$0xff] %v8334
  %11660 = vst [vmem:[%s4 + $0x478] sm:$0xff] %v8335
  %v11661 = vmul.f32 %v11222, 0.0009469697
  %v11662 = vmul.f32 %v11516, 0.0009469697
  %v11663 = vmul.f32 %v11661, %v11661
  %v11664 = vsub.f32 %v11662, %v11663
  %v11665 = vadd.f32 %v11664, 1e-05
  %v11666 = vrsqrt.pop %v11665
  %v11667 = vld [vmem:[%s2] sm:$0x1]
  %v11668 = vmul.f32 %v11666, %v11667
  %v11669 = vld [vmem:[%s3] sm:$0x1]
  %v11670 = vmul.f32 %v11661, %v11668
  %v11671 = vsub.f32 %v11669, %v11670
  %v11672 = vld [vmem:[%s4] sm:$0xff]
  %v11673 = vld [vmem:[%s4 + $0x8] sm:$0xff]
  %v11674 = vld [vmem:[%s4 + $0x10] sm:$0xff]
  %v11675 = vld [vmem:[%s4 + $0x18] sm:$0xff]
  %v11676 = vld [vmem:[%s4 + $0x20] sm:$0xff]
  %v11677 = vld [vmem:[%s4 + $0x28] sm:$0xff]
  %v11678 = vld [vmem:[%s4 + $0x30] sm:$0xff]
  %v11679 = vld [vmem:[%s4 + $0x38] sm:$0xff]
  %v11680 = vld [vmem:[%s4 + $0x40] sm:$0xff]
  %v11681 = vld [vmem:[%s4 + $0x48] sm:$0xff]
  %v11682 = vld [vmem:[%s4 + $0x50] sm:$0xff]
  %v11683 = vld [vmem:[%s4 + $0x58] sm:$0xff]
  %v11684 = vld [vmem:[%s4 + $0x60] sm:$0xff]
  %v11685 = vld [vmem:[%s4 + $0x68] sm:$0xff]
  %v11686 = vld [vmem:[%s4 + $0x70] sm:$0xff]
  %v11687 = vld [vmem:[%s4 + $0x78] sm:$0xff]
  %v11688 = vld [vmem:[%s4 + $0x80] sm:$0xff]
  %v11689 = vld [vmem:[%s4 + $0x88] sm:$0xff]
  %v11690 = vld [vmem:[%s4 + $0x90] sm:$0xff]
  %v11691 = vld [vmem:[%s4 + $0x98] sm:$0xff]
  %v11692 = vld [vmem:[%s4 + $0xa0] sm:$0xff]
  %v11693 = vld [vmem:[%s4 + $0xa8] sm:$0xff]
  %v11694 = vld [vmem:[%s4 + $0xb0] sm:$0xff]
  %v11695 = vld [vmem:[%s4 + $0xb8] sm:$0xff]
  %v11696 = vld [vmem:[%s4 + $0xc0] sm:$0xff]
  %v11697 = vld [vmem:[%s4 + $0xc8] sm:$0xff]
  %v11698 = vld [vmem:[%s4 + $0xd0] sm:$0xff]
  %v11699 = vld [vmem:[%s4 + $0xd8] sm:$0xff]
  %v11700 = vld [vmem:[%s4 + $0xe0] sm:$0xff]
  %v11701 = vld [vmem:[%s4 + $0xe8] sm:$0xff]
  %v11702 = vld [vmem:[%s4 + $0xf0] sm:$0xff]
  %v11703 = vld [vmem:[%s4 + $0xf8] sm:$0xff]
  %v11704 = vld [vmem:[%s4 + $0x100] sm:$0xff]
  %v11705 = vld [vmem:[%s4 + $0x108] sm:$0xff]
  %v11706 = vld [vmem:[%s4 + $0x110] sm:$0xff]
  %v11707 = vld [vmem:[%s4 + $0x118] sm:$0xff]
  %v11708 = vld [vmem:[%s4 + $0x120] sm:$0xff]
  %v11709 = vld [vmem:[%s4 + $0x128] sm:$0xff]
  %v11710 = vld [vmem:[%s4 + $0x130] sm:$0xff]
  %v11711 = vld [vmem:[%s4 + $0x138] sm:$0xff]
  %v11712 = vld [vmem:[%s4 + $0x140] sm:$0xff]
  %v11713 = vld [vmem:[%s4 + $0x148] sm:$0xff]
  %v11714 = vld [vmem:[%s4 + $0x150] sm:$0xff]
  %v11715 = vld [vmem:[%s4 + $0x158] sm:$0xff]
  %v11716 = vld [vmem:[%s4 + $0x160] sm:$0xff]
  %v11717 = vld [vmem:[%s4 + $0x168] sm:$0xff]
  %v11718 = vld [vmem:[%s4 + $0x170] sm:$0xff]
  %v11719 = vld [vmem:[%s4 + $0x178] sm:$0xff]
  %v11720 = vld [vmem:[%s4 + $0x180] sm:$0xff]
  %v11721 = vld [vmem:[%s4 + $0x188] sm:$0xff]
  %v11722 = vld [vmem:[%s4 + $0x190] sm:$0xff]
  %v11723 = vld [vmem:[%s4 + $0x198] sm:$0xff]
  %v11724 = vld [vmem:[%s4 + $0x1a0] sm:$0xff]
  %v11725 = vld [vmem:[%s4 + $0x1a8] sm:$0xff]
  %v11726 = vld [vmem:[%s4 + $0x1b0] sm:$0xff]
  %v11727 = vld [vmem:[%s4 + $0x1b8] sm:$0xff]
  %v11728 = vld [vmem:[%s4 + $0x1c0] sm:$0xff]
  %v11729 = vld [vmem:[%s4 + $0x1c8] sm:$0xff]
  %v11730 = vld [vmem:[%s4 + $0x1d0] sm:$0xff]
  %v11731 = vld [vmem:[%s4 + $0x1d8] sm:$0xff]
  %v11732 = vld [vmem:[%s4 + $0x1e0] sm:$0xff]
  %v11733 = vld [vmem:[%s4 + $0x1e8] sm:$0xff]
  %v11734 = vld [vmem:[%s4 + $0x1f0] sm:$0xff]
  %v11735 = vld [vmem:[%s4 + $0x1f8] sm:$0xff]
  %v11736 = vld [vmem:[%s4 + $0x200] sm:$0xff]
  %v11737 = vld [vmem:[%s4 + $0x208] sm:$0xff]
  %v11738 = vld [vmem:[%s4 + $0x210] sm:$0xff]
  %v11739 = vld [vmem:[%s4 + $0x218] sm:$0xff]
  %v11740 = vld [vmem:[%s4 + $0x220] sm:$0xff]
  %v11741 = vld [vmem:[%s4 + $0x228] sm:$0xff]
  %v11742 = vld [vmem:[%s4 + $0x230] sm:$0xff]
  %v11743 = vld [vmem:[%s4 + $0x238] sm:$0xff]
  %v11744 = vld [vmem:[%s4 + $0x240] sm:$0xff]
  %v11745 = vld [vmem:[%s4 + $0x248] sm:$0xff]
  %v11746 = vld [vmem:[%s4 + $0x250] sm:$0xff]
  %v11747 = vld [vmem:[%s4 + $0x258] sm:$0xff]
  %v11748 = vld [vmem:[%s4 + $0x260] sm:$0xff]
  %v11749 = vld [vmem:[%s4 + $0x268] sm:$0xff]
  %v11750 = vld [vmem:[%s4 + $0x270] sm:$0xff]
  %v11751 = vld [vmem:[%s4 + $0x278] sm:$0xff]
  %v11752 = vld [vmem:[%s4 + $0x280] sm:$0xff]
  %v11753 = vld [vmem:[%s4 + $0x288] sm:$0xff]
  %v11754 = vld [vmem:[%s4 + $0x290] sm:$0xff]
  %v11755 = vld [vmem:[%s4 + $0x298] sm:$0xff]
  %v11756 = vld [vmem:[%s4 + $0x2a0] sm:$0xff]
  %v11757 = vld [vmem:[%s4 + $0x2a8] sm:$0xff]
  %v11758 = vld [vmem:[%s4 + $0x2b0] sm:$0xff]
  %v11759 = vld [vmem:[%s4 + $0x2b8] sm:$0xff]
  %v11760 = vld [vmem:[%s4 + $0x2c0] sm:$0xff]
  %v11761 = vld [vmem:[%s4 + $0x2c8] sm:$0xff]
  %v11762 = vld [vmem:[%s4 + $0x2d0] sm:$0xff]
  %v11763 = vld [vmem:[%s4 + $0x2d8] sm:$0xff]
  %v11764 = vld [vmem:[%s4 + $0x2e0] sm:$0xff]
  %v11765 = vld [vmem:[%s4 + $0x2e8] sm:$0xff]
  %v11766 = vld [vmem:[%s4 + $0x2f0] sm:$0xff]
  %v11767 = vld [vmem:[%s4 + $0x2f8] sm:$0xff]
  %v11768 = vld [vmem:[%s4 + $0x300] sm:$0xff]
  %v11769 = vld [vmem:[%s4 + $0x308] sm:$0xff]
  %v11770 = vld [vmem:[%s4 + $0x310] sm:$0xff]
  %v11771 = vld [vmem:[%s4 + $0x318] sm:$0xff]
  %v11772 = vld [vmem:[%s4 + $0x320] sm:$0xff]
  %v11773 = vld [vmem:[%s4 + $0x328] sm:$0xff]
  %v11774 = vld [vmem:[%s4 + $0x330] sm:$0xff]
  %v11775 = vld [vmem:[%s4 + $0x338] sm:$0xff]
  %v11776 = vld [vmem:[%s4 + $0x340] sm:$0xff]
  %v11777 = vld [vmem:[%s4 + $0x348] sm:$0xff]
  %v11778 = vld [vmem:[%s4 + $0x350] sm:$0xff]
  %v11779 = vld [vmem:[%s4 + $0x358] sm:$0xff]
  %v11780 = vld [vmem:[%s4 + $0x360] sm:$0xff]
  %v11781 = vld [vmem:[%s4 + $0x368] sm:$0xff]
  %v11782 = vld [vmem:[%s4 + $0x370] sm:$0xff]
  %v11783 = vld [vmem:[%s4 + $0x378] sm:$0xff]
  %v11784 = vld [vmem:[%s4 + $0x380] sm:$0xff]
  %v11785 = vld [vmem:[%s4 + $0x388] sm:$0xff]
  %v11786 = vld [vmem:[%s4 + $0x390] sm:$0xff]
  %v11787 = vld [vmem:[%s4 + $0x398] sm:$0xff]
  %v11788 = vld [vmem:[%s4 + $0x3a0] sm:$0xff]
  %v11789 = vld [vmem:[%s4 + $0x3a8] sm:$0xff]
  %v11790 = vld [vmem:[%s4 + $0x3b0] sm:$0xff]
  %v11791 = vld [vmem:[%s4 + $0x3b8] sm:$0xff]
  %v11792 = vld [vmem:[%s4 + $0x3c0] sm:$0xff]
  %v11793 = vld [vmem:[%s4 + $0x3c8] sm:$0xff]
  %v11794 = vld [vmem:[%s4 + $0x3d0] sm:$0xff]
  %v11795 = vld [vmem:[%s4 + $0x3d8] sm:$0xff]
  %v11796 = vld [vmem:[%s4 + $0x3e0] sm:$0xff]
  %v11797 = vld [vmem:[%s4 + $0x3e8] sm:$0xff]
  %v11798 = vld [vmem:[%s4 + $0x3f0] sm:$0xff]
  %v11799 = vld [vmem:[%s4 + $0x3f8] sm:$0xff]
  %v11800 = vld [vmem:[%s4 + $0x400] sm:$0xff]
  %v11801 = vld [vmem:[%s4 + $0x408] sm:$0xff]
  %v11802 = vld [vmem:[%s4 + $0x410] sm:$0xff]
  %v11803 = vld [vmem:[%s4 + $0x418] sm:$0xff]
  %v11804 = vld [vmem:[%s4 + $0x420] sm:$0xff]
  %v11805 = vld [vmem:[%s4 + $0x428] sm:$0xff]
  %v11806 = vld [vmem:[%s4 + $0x430] sm:$0xff]
  %v11807 = vld [vmem:[%s4 + $0x438] sm:$0xff]
  %v11808 = vld [vmem:[%s4 + $0x440] sm:$0xff]
  %v11809 = vld [vmem:[%s4 + $0x448] sm:$0xff]
  %v11810 = vld [vmem:[%s4 + $0x450] sm:$0xff]
  %v11811 = vld [vmem:[%s4 + $0x458] sm:$0xff]
  %v11812 = vld [vmem:[%s4 + $0x460] sm:$0xff]
  %v11813 = vld [vmem:[%s4 + $0x468] sm:$0xff]
  %v11814 = vld [vmem:[%s4 + $0x470] sm:$0xff]
  %v11815 = vld [vmem:[%s4 + $0x478] sm:$0xff]
  %v11816 = vlaneseq
  %v11817 = vshrl.u32 %v11816, 7
  %v11818 = vsub.s32 0, %v11817
  %v11819 = vrot.slane %v11668, %v11818
  %v11820 = vmul.f32 %v11672, %v11819
  %v11821 = vmul.f32 %v11673, %v11819
  %v11822 = vmul.f32 %v11674, %v11819
  %v11823 = vmul.f32 %v11675, %v11819
  %v11824 = vmul.f32 %v11676, %v11819
  %v11825 = vmul.f32 %v11677, %v11819
  %v11826 = vmul.f32 %v11678, %v11819
  %v11827 = vmul.f32 %v11679, %v11819
  %v11828 = vmul.f32 %v11680, %v11819
  %v11829 = vmul.f32 %v11681, %v11819
  %v11830 = vmul.f32 %v11682, %v11819
  %v11831 = vmul.f32 %v11683, %v11819
  %v11832 = vmul.f32 %v11684, %v11819
  %v11833 = vmul.f32 %v11685, %v11819
  %v11834 = vmul.f32 %v11686, %v11819
  %v11835 = vmul.f32 %v11687, %v11819
  %v11836 = vmul.f32 %v11688, %v11819
  %v11837 = vmul.f32 %v11689, %v11819
  %v11838 = vmul.f32 %v11690, %v11819
  %v11839 = vmul.f32 %v11691, %v11819
  %v11840 = vmul.f32 %v11692, %v11819
  %v11841 = vmul.f32 %v11693, %v11819
  %v11842 = vmul.f32 %v11694, %v11819
  %v11843 = vmul.f32 %v11695, %v11819
  %v11844 = vmul.f32 %v11696, %v11819
  %v11845 = vmul.f32 %v11697, %v11819
  %v11846 = vmul.f32 %v11698, %v11819
  %v11847 = vmul.f32 %v11699, %v11819
  %v11848 = vmul.f32 %v11700, %v11819
  %v11849 = vmul.f32 %v11701, %v11819
  %v11850 = vmul.f32 %v11702, %v11819
  %v11851 = vmul.f32 %v11703, %v11819
  %v11852 = vmul.f32 %v11704, %v11819
  %v11853 = vmul.f32 %v11705, %v11819
  %v11854 = vmul.f32 %v11706, %v11819
  %v11855 = vmul.f32 %v11707, %v11819
  %v11856 = vmul.f32 %v11708, %v11819
  %v11857 = vmul.f32 %v11709, %v11819
  %v11858 = vmul.f32 %v11710, %v11819
  %v11859 = vmul.f32 %v11711, %v11819
  %v11860 = vmul.f32 %v11712, %v11819
  %v11861 = vmul.f32 %v11713, %v11819
  %v11862 = vmul.f32 %v11714, %v11819
  %v11863 = vmul.f32 %v11715, %v11819
  %v11864 = vmul.f32 %v11716, %v11819
  %v11865 = vmul.f32 %v11717, %v11819
  %v11866 = vmul.f32 %v11718, %v11819
  %v11867 = vmul.f32 %v11719, %v11819
  %v11868 = vmul.f32 %v11720, %v11819
  %v11869 = vmul.f32 %v11721, %v11819
  %v11870 = vmul.f32 %v11722, %v11819
  %v11871 = vmul.f32 %v11723, %v11819
  %v11872 = vmul.f32 %v11724, %v11819
  %v11873 = vmul.f32 %v11725, %v11819
  %v11874 = vmul.f32 %v11726, %v11819
  %v11875 = vmul.f32 %v11727, %v11819
  %v11876 = vmul.f32 %v11728, %v11819
  %v11877 = vmul.f32 %v11729, %v11819
  %v11878 = vmul.f32 %v11730, %v11819
  %v11879 = vmul.f32 %v11731, %v11819
  %v11880 = vmul.f32 %v11732, %v11819
  %v11881 = vmul.f32 %v11733, %v11819
  %v11882 = vmul.f32 %v11734, %v11819
  %v11883 = vmul.f32 %v11735, %v11819
  %v11884 = vmul.f32 %v11736, %v11819
  %v11885 = vmul.f32 %v11737, %v11819
  %v11886 = vmul.f32 %v11738, %v11819
  %v11887 = vmul.f32 %v11739, %v11819
  %v11888 = vmul.f32 %v11740, %v11819
  %v11889 = vmul.f32 %v11741, %v11819
  %v11890 = vmul.f32 %v11742, %v11819
  %v11891 = vmul.f32 %v11743, %v11819
  %v11892 = vmul.f32 %v11744, %v11819
  %v11893 = vmul.f32 %v11745, %v11819
  %v11894 = vmul.f32 %v11746, %v11819
  %v11895 = vmul.f32 %v11747, %v11819
  %v11896 = vmul.f32 %v11748, %v11819
  %v11897 = vmul.f32 %v11749, %v11819
  %v11898 = vmul.f32 %v11750, %v11819
  %v11899 = vmul.f32 %v11751, %v11819
  %v11900 = vmul.f32 %v11752, %v11819
  %v11901 = vmul.f32 %v11753, %v11819
  %v11902 = vmul.f32 %v11754, %v11819
  %v11903 = vmul.f32 %v11755, %v11819
  %v11904 = vmul.f32 %v11756, %v11819
  %v11905 = vmul.f32 %v11757, %v11819
  %v11906 = vmul.f32 %v11758, %v11819
  %v11907 = vmul.f32 %v11759, %v11819
  %v11908 = vmul.f32 %v11760, %v11819
  %v11909 = vmul.f32 %v11761, %v11819
  %v11910 = vmul.f32 %v11762, %v11819
  %v11911 = vmul.f32 %v11763, %v11819
  %v11912 = vmul.f32 %v11764, %v11819
  %v11913 = vmul.f32 %v11765, %v11819
  %v11914 = vmul.f32 %v11766, %v11819
  %v11915 = vmul.f32 %v11767, %v11819
  %v11916 = vmul.f32 %v11768, %v11819
  %v11917 = vmul.f32 %v11769, %v11819
  %v11918 = vmul.f32 %v11770, %v11819
  %v11919 = vmul.f32 %v11771, %v11819
  %v11920 = vmul.f32 %v11772, %v11819
  %v11921 = vmul.f32 %v11773, %v11819
  %v11922 = vmul.f32 %v11774, %v11819
  %v11923 = vmul.f32 %v11775, %v11819
  %v11924 = vmul.f32 %v11776, %v11819
  %v11925 = vmul.f32 %v11777, %v11819
  %v11926 = vmul.f32 %v11778, %v11819
  %v11927 = vmul.f32 %v11779, %v11819
  %v11928 = vmul.f32 %v11780, %v11819
  %v11929 = vmul.f32 %v11781, %v11819
  %v11930 = vmul.f32 %v11782, %v11819
  %v11931 = vmul.f32 %v11783, %v11819
  %v11932 = vmul.f32 %v11784, %v11819
  %v11933 = vmul.f32 %v11785, %v11819
  %v11934 = vmul.f32 %v11786, %v11819
  %v11935 = vmul.f32 %v11787, %v11819
  %v11936 = vmul.f32 %v11788, %v11819
  %v11937 = vmul.f32 %v11789, %v11819
  %v11938 = vmul.f32 %v11790, %v11819
  %v11939 = vmul.f32 %v11791, %v11819
  %v11940 = vmul.f32 %v11792, %v11819
  %v11941 = vmul.f32 %v11793, %v11819
  %v11942 = vmul.f32 %v11794, %v11819
  %v11943 = vmul.f32 %v11795, %v11819
  %v11944 = vmul.f32 %v11796, %v11819
  %v11945 = vmul.f32 %v11797, %v11819
  %v11946 = vmul.f32 %v11798, %v11819
  %v11947 = vmul.f32 %v11799, %v11819
  %v11948 = vmul.f32 %v11800, %v11819
  %v11949 = vmul.f32 %v11801, %v11819
  %v11950 = vmul.f32 %v11802, %v11819
  %v11951 = vmul.f32 %v11803, %v11819
  %v11952 = vmul.f32 %v11804, %v11819
  %v11953 = vmul.f32 %v11805, %v11819
  %v11954 = vmul.f32 %v11806, %v11819
  %v11955 = vmul.f32 %v11807, %v11819
  %v11956 = vmul.f32 %v11808, %v11819
  %v11957 = vmul.f32 %v11809, %v11819
  %v11958 = vmul.f32 %v11810, %v11819
  %v11959 = vmul.f32 %v11811, %v11819
  %v11960 = vmul.f32 %v11812, %v11819
  %v11961 = vmul.f32 %v11813, %v11819
  %v11962 = vmul.f32 %v11814, %v11819
  %v11963 = vmul.f32 %v11815, %v11819
  %v11965 = vlaneseq
  %v11966 = vshrl.u32 %v11965, 7
  %v11967 = vsub.s32 0, %v11966
  %v11968 = vrot.slane %v11671, %v11967
  %v11970 = vadd.f32 %v11820, %v11968
  %v11971 = vadd.f32 %v11821, %v11968
  %v11972 = vadd.f32 %v11822, %v11968
  %v11973 = vadd.f32 %v11823, %v11968
  %v11974 = vadd.f32 %v11824, %v11968
  %v11975 = vadd.f32 %v11825, %v11968
  %v11976 = vadd.f32 %v11826, %v11968
  %v11977 = vadd.f32 %v11827, %v11968
  %v11978 = vadd.f32 %v11828, %v11968
  %v11979 = vadd.f32 %v11829, %v11968
  %v11980 = vadd.f32 %v11830, %v11968
  %v11981 = vadd.f32 %v11831, %v11968
  %v11982 = vadd.f32 %v11832, %v11968
  %v11983 = vadd.f32 %v11833, %v11968
  %v11984 = vadd.f32 %v11834, %v11968
  %v11985 = vadd.f32 %v11835, %v11968
  %v11986 = vadd.f32 %v11836, %v11968
  %v11987 = vadd.f32 %v11837, %v11968
  %v11988 = vadd.f32 %v11838, %v11968
  %v11989 = vadd.f32 %v11839, %v11968
  %v11990 = vadd.f32 %v11840, %v11968
  %v11991 = vadd.f32 %v11841, %v11968
  %v11992 = vadd.f32 %v11842, %v11968
  %v11993 = vadd.f32 %v11843, %v11968
  %v11994 = vadd.f32 %v11844, %v11968
  %v11995 = vadd.f32 %v11845, %v11968
  %v11996 = vadd.f32 %v11846, %v11968
  %v11997 = vadd.f32 %v11847, %v11968
  %v11998 = vadd.f32 %v11848, %v11968
  %v11999 = vadd.f32 %v11849, %v11968
  %v12000 = vadd.f32 %v11850, %v11968
  %v12001 = vadd.f32 %v11851, %v11968
  %v12002 = vadd.f32 %v11852, %v11968
  %v12003 = vadd.f32 %v11853, %v11968
  %v12004 = vadd.f32 %v11854, %v11968
  %v12005 = vadd.f32 %v11855, %v11968
  %v12006 = vadd.f32 %v11856, %v11968
  %v12007 = vadd.f32 %v11857, %v11968
  %v12008 = vadd.f32 %v11858, %v11968
  %v12009 = vadd.f32 %v11859, %v11968
  %v12010 = vadd.f32 %v11860, %v11968
  %v12011 = vadd.f32 %v11861, %v11968
  %v12012 = vadd.f32 %v11862, %v11968
  %v12013 = vadd.f32 %v11863, %v11968
  %v12014 = vadd.f32 %v11864, %v11968
  %v12015 = vadd.f32 %v11865, %v11968
  %v12016 = vadd.f32 %v11866, %v11968
  %v12017 = vadd.f32 %v11867, %v11968
  %v12018 = vadd.f32 %v11868, %v11968
  %v12019 = vadd.f32 %v11869, %v11968
  %v12020 = vadd.f32 %v11870, %v11968
  %v12021 = vadd.f32 %v11871, %v11968
  %v12022 = vadd.f32 %v11872, %v11968
  %v12023 = vadd.f32 %v11873, %v11968
  %v12024 = vadd.f32 %v11874, %v11968
  %v12025 = vadd.f32 %v11875, %v11968
  %v12026 = vadd.f32 %v11876, %v11968
  %v12027 = vadd.f32 %v11877, %v11968
  %v12028 = vadd.f32 %v11878, %v11968
  %v12029 = vadd.f32 %v11879, %v11968
  %v12030 = vadd.f32 %v11880, %v11968
  %v12031 = vadd.f32 %v11881, %v11968
  %v12032 = vadd.f32 %v11882, %v11968
  %v12033 = vadd.f32 %v11883, %v11968
  %v12034 = vadd.f32 %v11884, %v11968
  %v12035 = vadd.f32 %v11885, %v11968
  %v12036 = vadd.f32 %v11886, %v11968
  %v12037 = vadd.f32 %v11887, %v11968
  %v12038 = vadd.f32 %v11888, %v11968
  %v12039 = vadd.f32 %v11889, %v11968
  %v12040 = vadd.f32 %v11890, %v11968
  %v12041 = vadd.f32 %v11891, %v11968
  %v12042 = vadd.f32 %v11892, %v11968
  %v12043 = vadd.f32 %v11893, %v11968
  %v12044 = vadd.f32 %v11894, %v11968
  %v12045 = vadd.f32 %v11895, %v11968
  %v12046 = vadd.f32 %v11896, %v11968
  %v12047 = vadd.f32 %v11897, %v11968
  %v12048 = vadd.f32 %v11898, %v11968
  %v12049 = vadd.f32 %v11899, %v11968
  %v12050 = vadd.f32 %v11900, %v11968
  %v12051 = vadd.f32 %v11901, %v11968
  %v12052 = vadd.f32 %v11902, %v11968
  %v12053 = vadd.f32 %v11903, %v11968
  %v12054 = vadd.f32 %v11904, %v11968
  %v12055 = vadd.f32 %v11905, %v11968
  %v12056 = vadd.f32 %v11906, %v11968
  %v12057 = vadd.f32 %v11907, %v11968
  %v12058 = vadd.f32 %v11908, %v11968
  %v12059 = vadd.f32 %v11909, %v11968
  %v12060 = vadd.f32 %v11910, %v11968
  %v12061 = vadd.f32 %v11911, %v11968
  %v12062 = vadd.f32 %v11912, %v11968
  %v12063 = vadd.f32 %v11913, %v11968
  %v12064 = vadd.f32 %v11914, %v11968
  %v12065 = vadd.f32 %v11915, %v11968
  %v12066 = vadd.f32 %v11916, %v11968
  %v12067 = vadd.f32 %v11917, %v11968
  %v12068 = vadd.f32 %v11918, %v11968
  %v12069 = vadd.f32 %v11919, %v11968
  %v12070 = vadd.f32 %v11920, %v11968
  %v12071 = vadd.f32 %v11921, %v11968
  %v12072 = vadd.f32 %v11922, %v11968
  %v12073 = vadd.f32 %v11923, %v11968
  %v12074 = vadd.f32 %v11924, %v11968
  %v12075 = vadd.f32 %v11925, %v11968
  %v12076 = vadd.f32 %v11926, %v11968
  %v12077 = vadd.f32 %v11927, %v11968
  %v12078 = vadd.f32 %v11928, %v11968
  %v12079 = vadd.f32 %v11929, %v11968
  %v12080 = vadd.f32 %v11930, %v11968
  %v12081 = vadd.f32 %v11931, %v11968
  %v12082 = vadd.f32 %v11932, %v11968
  %v12083 = vadd.f32 %v11933, %v11968
  %v12084 = vadd.f32 %v11934, %v11968
  %v12085 = vadd.f32 %v11935, %v11968
  %v12086 = vadd.f32 %v11936, %v11968
  %v12087 = vadd.f32 %v11937, %v11968
  %v12088 = vadd.f32 %v11938, %v11968
  %v12089 = vadd.f32 %v11939, %v11968
  %v12090 = vadd.f32 %v11940, %v11968
  %v12091 = vadd.f32 %v11941, %v11968
  %v12092 = vadd.f32 %v11942, %v11968
  %v12093 = vadd.f32 %v11943, %v11968
  %v12094 = vadd.f32 %v11944, %v11968
  %v12095 = vadd.f32 %v11945, %v11968
  %v12096 = vadd.f32 %v11946, %v11968
  %v12097 = vadd.f32 %v11947, %v11968
  %v12098 = vadd.f32 %v11948, %v11968
  %v12099 = vadd.f32 %v11949, %v11968
  %v12100 = vadd.f32 %v11950, %v11968
  %v12101 = vadd.f32 %v11951, %v11968
  %v12102 = vadd.f32 %v11952, %v11968
  %v12103 = vadd.f32 %v11953, %v11968
  %v12104 = vadd.f32 %v11954, %v11968
  %v12105 = vadd.f32 %v11955, %v11968
  %v12106 = vadd.f32 %v11956, %v11968
  %v12107 = vadd.f32 %v11957, %v11968
  %v12108 = vadd.f32 %v11958, %v11968
  %v12109 = vadd.f32 %v11959, %v11968
  %v12110 = vadd.f32 %v11960, %v11968
  %v12111 = vadd.f32 %v11961, %v11968
  %v12112 = vadd.f32 %v11962, %v11968
  %v12113 = vadd.f32 %v11963, %v11968
  %v12114 = vtanh.pop %v11970
  %v12115 = vtanh.pop %v11971
  %v12116 = vtanh.pop %v11972
  %v12117 = vtanh.pop %v11973
  %v12118 = vtanh.pop %v11974
  %v12119 = vtanh.pop %v11975
  %v12120 = vtanh.pop %v11976
  %v12121 = vtanh.pop %v11977
  %v12122 = vtanh.pop %v11978
  %v12123 = vtanh.pop %v11979
  %v12124 = vtanh.pop %v11980
  %v12125 = vtanh.pop %v11981
  %v12126 = vtanh.pop %v11982
  %v12127 = vtanh.pop %v11983
  %v12128 = vtanh.pop %v11984
  %v12129 = vtanh.pop %v11985
  %v12130 = vtanh.pop %v11986
  %v12131 = vtanh.pop %v11987
  %v12132 = vtanh.pop %v11988
  %v12133 = vtanh.pop %v11989
  %v12134 = vtanh.pop %v11990
  %v12135 = vtanh.pop %v11991
  %v12136 = vtanh.pop %v11992
  %v12137 = vtanh.pop %v11993
  %v12138 = vtanh.pop %v11994
  %v12139 = vtanh.pop %v11995
  %v12140 = vtanh.pop %v11996
  %v12141 = vtanh.pop %v11997
  %v12142 = vtanh.pop %v11998
  %v12143 = vtanh.pop %v11999
  %v12144 = vtanh.pop %v12000
  %v12145 = vtanh.pop %v12001
  %v12146 = vtanh.pop %v12002
  %v12147 = vtanh.pop %v12003
  %v12148 = vtanh.pop %v12004
  %v12149 = vtanh.pop %v12005
  %v12150 = vtanh.pop %v12006
  %v12151 = vtanh.pop %v12007
  %v12152 = vtanh.pop %v12008
  %v12153 = vtanh.pop %v12009
  %v12154 = vtanh.pop %v12010
  %v12155 = vtanh.pop %v12011
  %v12156 = vtanh.pop %v12012
  %v12157 = vtanh.pop %v12013
  %v12158 = vtanh.pop %v12014
  %v12159 = vtanh.pop %v12015
  %v12160 = vtanh.pop %v12016
  %v12161 = vtanh.pop %v12017
  %v12162 = vtanh.pop %v12018
  %v12163 = vtanh.pop %v12019
  %v12164 = vtanh.pop %v12020
  %v12165 = vtanh.pop %v12021
  %v12166 = vtanh.pop %v12022
  %v12167 = vtanh.pop %v12023
  %v12168 = vtanh.pop %v12024
  %v12169 = vtanh.pop %v12025
  %v12170 = vtanh.pop %v12026
  %v12171 = vtanh.pop %v12027
  %v12172 = vtanh.pop %v12028
  %v12173 = vtanh.pop %v12029
  %v12174 = vtanh.pop %v12030
  %v12175 = vtanh.pop %v12031
  %v12176 = vtanh.pop %v12032
  %v12177 = vtanh.pop %v12033
  %v12178 = vtanh.pop %v12034
  %v12179 = vtanh.pop %v12035
  %v12180 = vtanh.pop %v12036
  %v12181 = vtanh.pop %v12037
  %v12182 = vtanh.pop %v12038
  %v12183 = vtanh.pop %v12039
  %v12184 = vtanh.pop %v12040
  %v12185 = vtanh.pop %v12041
  %v12186 = vtanh.pop %v12042
  %v12187 = vtanh.pop %v12043
  %v12188 = vtanh.pop %v12044
  %v12189 = vtanh.pop %v12045
  %v12190 = vtanh.pop %v12046
  %v12191 = vtanh.pop %v12047
  %v12192 = vtanh.pop %v12048
  %v12193 = vtanh.pop %v12049
  %v12194 = vtanh.pop %v12050
  %v12195 = vtanh.pop %v12051
  %v12196 = vtanh.pop %v12052
  %v12197 = vtanh.pop %v12053
  %v12198 = vtanh.pop %v12054
  %v12199 = vtanh.pop %v12055
  %v12200 = vtanh.pop %v12056
  %v12201 = vtanh.pop %v12057
  %v12202 = vtanh.pop %v12058
  %v12203 = vtanh.pop %v12059
  %v12204 = vtanh.pop %v12060
  %v12205 = vtanh.pop %v12061
  %v12206 = vtanh.pop %v12062
  %v12207 = vtanh.pop %v12063
  %v12208 = vtanh.pop %v12064
  %v12209 = vtanh.pop %v12065
  %v12210 = vtanh.pop %v12066
  %v12211 = vtanh.pop %v12067
  %v12212 = vtanh.pop %v12068
  %v12213 = vtanh.pop %v12069
  %v12214 = vtanh.pop %v12070
  %v12215 = vtanh.pop %v12071
  %v12216 = vtanh.pop %v12072
  %v12217 = vtanh.pop %v12073
  %v12218 = vtanh.pop %v12074
  %v12219 = vtanh.pop %v12075
  %v12220 = vtanh.pop %v12076
  %v12221 = vtanh.pop %v12077
  %v12222 = vtanh.pop %v12078
  %v12223 = vtanh.pop %v12079
  %v12224 = vtanh.pop %v12080
  %v12225 = vtanh.pop %v12081
  %v12226 = vtanh.pop %v12082
  %v12227 = vtanh.pop %v12083
  %v12228 = vtanh.pop %v12084
  %v12229 = vtanh.pop %v12085
  %v12230 = vtanh.pop %v12086
  %v12231 = vtanh.pop %v12087
  %v12232 = vtanh.pop %v12088
  %v12233 = vtanh.pop %v12089
  %v12234 = vtanh.pop %v12090
  %v12235 = vtanh.pop %v12091
  %v12236 = vtanh.pop %v12092
  %v12237 = vtanh.pop %v12093
  %v12238 = vtanh.pop %v12094
  %v12239 = vtanh.pop %v12095
  %v12240 = vtanh.pop %v12096
  %v12241 = vtanh.pop %v12097
  %v12242 = vtanh.pop %v12098
  %v12243 = vtanh.pop %v12099
  %v12244 = vtanh.pop %v12100
  %v12245 = vtanh.pop %v12101
  %v12246 = vtanh.pop %v12102
  %v12247 = vtanh.pop %v12103
  %v12248 = vtanh.pop %v12104
  %v12249 = vtanh.pop %v12105
  %v12250 = vtanh.pop %v12106
  %v12251 = vtanh.pop %v12107
  %v12252 = vtanh.pop %v12108
  %v12253 = vtanh.pop %v12109
  %v12254 = vtanh.pop %v12110
  %v12255 = vtanh.pop %v12111
  %v12256 = vtanh.pop %v12112
  %v12257 = vtanh.pop %v12113
  %12258 = vst [vmem:[%s4] sm:$0xff] %v12114
  %12259 = vst [vmem:[%s4 + $0x8] sm:$0xff] %v12115
  %12260 = vst [vmem:[%s4 + $0x10] sm:$0xff] %v12116
  %12261 = vst [vmem:[%s4 + $0x18] sm:$0xff] %v12117
  %12262 = vst [vmem:[%s4 + $0x20] sm:$0xff] %v12118
  %12263 = vst [vmem:[%s4 + $0x28] sm:$0xff] %v12119
  %12264 = vst [vmem:[%s4 + $0x30] sm:$0xff] %v12120
  %12265 = vst [vmem:[%s4 + $0x38] sm:$0xff] %v12121
  %12266 = vst [vmem:[%s4 + $0x40] sm:$0xff] %v12122
  %12267 = vst [vmem:[%s4 + $0x48] sm:$0xff] %v12123
  %12268 = vst [vmem:[%s4 + $0x50] sm:$0xff] %v12124
  %12269 = vst [vmem:[%s4 + $0x58] sm:$0xff] %v12125
  %12270 = vst [vmem:[%s4 + $0x60] sm:$0xff] %v12126
  %12271 = vst [vmem:[%s4 + $0x68] sm:$0xff] %v12127
  %12272 = vst [vmem:[%s4 + $0x70] sm:$0xff] %v12128
  %12273 = vst [vmem:[%s4 + $0x78] sm:$0xff] %v12129
  %12274 = vst [vmem:[%s4 + $0x80] sm:$0xff] %v12130
  %12275 = vst [vmem:[%s4 + $0x88] sm:$0xff] %v12131
  %12276 = vst [vmem:[%s4 + $0x90] sm:$0xff] %v12132
  %12277 = vst [vmem:[%s4 + $0x98] sm:$0xff] %v12133
  %12278 = vst [vmem:[%s4 + $0xa0] sm:$0xff] %v12134
  %12279 = vst [vmem:[%s4 + $0xa8] sm:$0xff] %v12135
  %12280 = vst [vmem:[%s4 + $0xb0] sm:$0xff] %v12136
  %12281 = vst [vmem:[%s4 + $0xb8] sm:$0xff] %v12137
  %12282 = vst [vmem:[%s4 + $0xc0] sm:$0xff] %v12138
  %12283 = vst [vmem:[%s4 + $0xc8] sm:$0xff] %v12139
  %12284 = vst [vmem:[%s4 + $0xd0] sm:$0xff] %v12140
  %12285 = vst [vmem:[%s4 + $0xd8] sm:$0xff] %v12141
  %12286 = vst [vmem:[%s4 + $0xe0] sm:$0xff] %v12142
  %12287 = vst [vmem:[%s4 + $0xe8] sm:$0xff] %v12143
  %12288 = vst [vmem:[%s4 + $0xf0] sm:$0xff] %v12144
  %12289 = vst [vmem:[%s4 + $0xf8] sm:$0xff] %v12145
  %12290 = vst [vmem:[%s4 + $0x100] sm:$0xff] %v12146
  %12291 = vst [vmem:[%s4 + $0x108] sm:$0xff] %v12147
  %12292 = vst [vmem:[%s4 + $0x110] sm:$0xff] %v12148
  %12293 = vst [vmem:[%s4 + $0x118] sm:$0xff] %v12149
  %12294 = vst [vmem:[%s4 + $0x120] sm:$0xff] %v12150
  %12295 = vst [vmem:[%s4 + $0x128] sm:$0xff] %v12151
  %12296 = vst [vmem:[%s4 + $0x130] sm:$0xff] %v12152
  %12297 = vst [vmem:[%s4 + $0x138] sm:$0xff] %v12153
  %12298 = vst [vmem:[%s4 + $0x140] sm:$0xff] %v12154
  %12299 = vst [vmem:[%s4 + $0x148] sm:$0xff] %v12155
  %12300 = vst [vmem:[%s4 + $0x150] sm:$0xff] %v12156
  %12301 = vst [vmem:[%s4 + $0x158] sm:$0xff] %v12157
  %12302 = vst [vmem:[%s4 + $0x160] sm:$0xff] %v12158
  %12303 = vst [vmem:[%s4 + $0x168] sm:$0xff] %v12159
  %12304 = vst [vmem:[%s4 + $0x170] sm:$0xff] %v12160
  %12305 = vst [vmem:[%s4 + $0x178] sm:$0xff] %v12161
  %12306 = vst [vmem:[%s4 + $0x180] sm:$0xff] %v12162
  %12307 = vst [vmem:[%s4 + $0x188] sm:$0xff] %v12163
  %12308 = vst [vmem:[%s4 + $0x190] sm:$0xff] %v12164
  %12309 = vst [vmem:[%s4 + $0x198] sm:$0xff] %v12165
  %12310 = vst [vmem:[%s4 + $0x1a0] sm:$0xff] %v12166
  %12311 = vst [vmem:[%s4 + $0x1a8] sm:$0xff] %v12167
  %12312 = vst [vmem:[%s4 + $0x1b0] sm:$0xff] %v12168
  %12313 = vst [vmem:[%s4 + $0x1b8] sm:$0xff] %v12169
  %12314 = vst [vmem:[%s4 + $0x1c0] sm:$0xff] %v12170
  %12315 = vst [vmem:[%s4 + $0x1c8] sm:$0xff] %v12171
  %12316 = vst [vmem:[%s4 + $0x1d0] sm:$0xff] %v12172
  %12317 = vst [vmem:[%s4 + $0x1d8] sm:$0xff] %v12173
  %12318 = vst [vmem:[%s4 + $0x1e0] sm:$0xff] %v12174
  %12319 = vst [vmem:[%s4 + $0x1e8] sm:$0xff] %v12175
  %12320 = vst [vmem:[%s4 + $0x1f0] sm:$0xff] %v12176
  %12321 = vst [vmem:[%s4 + $0x1f8] sm:$0xff] %v12177
  %12322 = vst [vmem:[%s4 + $0x200] sm:$0xff] %v12178
  %12323 = vst [vmem:[%s4 + $0x208] sm:$0xff] %v12179
  %12324 = vst [vmem:[%s4 + $0x210] sm:$0xff] %v12180
  %12325 = vst [vmem:[%s4 + $0x218] sm:$0xff] %v12181
  %12326 = vst [vmem:[%s4 + $0x220] sm:$0xff] %v12182
  %12327 = vst [vmem:[%s4 + $0x228] sm:$0xff] %v12183
  %12328 = vst [vmem:[%s4 + $0x230] sm:$0xff] %v12184
  %12329 = vst [vmem:[%s4 + $0x238] sm:$0xff] %v12185
  %12330 = vst [vmem:[%s4 + $0x240] sm:$0xff] %v12186
  %12331 = vst [vmem:[%s4 + $0x248] sm:$0xff] %v12187
  %12332 = vst [vmem:[%s4 + $0x250] sm:$0xff] %v12188
  %12333 = vst [vmem:[%s4 + $0x258] sm:$0xff] %v12189
  %12334 = vst [vmem:[%s4 + $0x260] sm:$0xff] %v12190
  %12335 = vst [vmem:[%s4 + $0x268] sm:$0xff] %v12191
  %12336 = vst [vmem:[%s4 + $0x270] sm:$0xff] %v12192
  %12337 = vst [vmem:[%s4 + $0x278] sm:$0xff] %v12193
  %12338 = vst [vmem:[%s4 + $0x280] sm:$0xff] %v12194
  %12339 = vst [vmem:[%s4 + $0x288] sm:$0xff] %v12195
  %12340 = vst [vmem:[%s4 + $0x290] sm:$0xff] %v12196
  %12341 = vst [vmem:[%s4 + $0x298] sm:$0xff] %v12197
  %12342 = vst [vmem:[%s4 + $0x2a0] sm:$0xff] %v12198
  %12343 = vst [vmem:[%s4 + $0x2a8] sm:$0xff] %v12199
  %12344 = vst [vmem:[%s4 + $0x2b0] sm:$0xff] %v12200
  %12345 = vst [vmem:[%s4 + $0x2b8] sm:$0xff] %v12201
  %12346 = vst [vmem:[%s4 + $0x2c0] sm:$0xff] %v12202
  %12347 = vst [vmem:[%s4 + $0x2c8] sm:$0xff] %v12203
  %12348 = vst [vmem:[%s4 + $0x2d0] sm:$0xff] %v12204
  %12349 = vst [vmem:[%s4 + $0x2d8] sm:$0xff] %v12205
  %12350 = vst [vmem:[%s4 + $0x2e0] sm:$0xff] %v12206
  %12351 = vst [vmem:[%s4 + $0x2e8] sm:$0xff] %v12207
  %12352 = vst [vmem:[%s4 + $0x2f0] sm:$0xff] %v12208
  %12353 = vst [vmem:[%s4 + $0x2f8] sm:$0xff] %v12209
  %12354 = vst [vmem:[%s4 + $0x300] sm:$0xff] %v12210
  %12355 = vst [vmem:[%s4 + $0x308] sm:$0xff] %v12211
  %12356 = vst [vmem:[%s4 + $0x310] sm:$0xff] %v12212
  %12357 = vst [vmem:[%s4 + $0x318] sm:$0xff] %v12213
  %12358 = vst [vmem:[%s4 + $0x320] sm:$0xff] %v12214
  %12359 = vst [vmem:[%s4 + $0x328] sm:$0xff] %v12215
  %12360 = vst [vmem:[%s4 + $0x330] sm:$0xff] %v12216
  %12361 = vst [vmem:[%s4 + $0x338] sm:$0xff] %v12217
  %12362 = vst [vmem:[%s4 + $0x340] sm:$0xff] %v12218
  %12363 = vst [vmem:[%s4 + $0x348] sm:$0xff] %v12219
  %12364 = vst [vmem:[%s4 + $0x350] sm:$0xff] %v12220
  %12365 = vst [vmem:[%s4 + $0x358] sm:$0xff] %v12221
  %12366 = vst [vmem:[%s4 + $0x360] sm:$0xff] %v12222
  %12367 = vst [vmem:[%s4 + $0x368] sm:$0xff] %v12223
  %12368 = vst [vmem:[%s4 + $0x370] sm:$0xff] %v12224
  %12369 = vst [vmem:[%s4 + $0x378] sm:$0xff] %v12225
  %12370 = vst [vmem:[%s4 + $0x380] sm:$0xff] %v12226
  %12371 = vst [vmem:[%s4 + $0x388] sm:$0xff] %v12227
  %12372 = vst [vmem:[%s4 + $0x390] sm:$0xff] %v12228
  %12373 = vst [vmem:[%s4 + $0x398] sm:$0xff] %v12229
  %12374 = vst [vmem:[%s4 + $0x3a0] sm:$0xff] %v12230
  %12375 = vst [vmem:[%s4 + $0x3a8] sm:$0xff] %v12231
  %12376 = vst [vmem:[%s4 + $0x3b0] sm:$0xff] %v12232
  %12377 = vst [vmem:[%s4 + $0x3b8] sm:$0xff] %v12233
  %12378 = vst [vmem:[%s4 + $0x3c0] sm:$0xff] %v12234
  %12379 = vst [vmem:[%s4 + $0x3c8] sm:$0xff] %v12235
  %12380 = vst [vmem:[%s4 + $0x3d0] sm:$0xff] %v12236
  %12381 = vst [vmem:[%s4 + $0x3d8] sm:$0xff] %v12237
  %12382 = vst [vmem:[%s4 + $0x3e0] sm:$0xff] %v12238
  %12383 = vst [vmem:[%s4 + $0x3e8] sm:$0xff] %v12239
  %12384 = vst [vmem:[%s4 + $0x3f0] sm:$0xff] %v12240
  %12385 = vst [vmem:[%s4 + $0x3f8] sm:$0xff] %v12241
  %12386 = vst [vmem:[%s4 + $0x400] sm:$0xff] %v12242
  %12387 = vst [vmem:[%s4 + $0x408] sm:$0xff] %v12243
  %12388 = vst [vmem:[%s4 + $0x410] sm:$0xff] %v12244
  %12389 = vst [vmem:[%s4 + $0x418] sm:$0xff] %v12245
  %12390 = vst [vmem:[%s4 + $0x420] sm:$0xff] %v12246
  %12391 = vst [vmem:[%s4 + $0x428] sm:$0xff] %v12247
  %12392 = vst [vmem:[%s4 + $0x430] sm:$0xff] %v12248
  %12393 = vst [vmem:[%s4 + $0x438] sm:$0xff] %v12249
  %12394 = vst [vmem:[%s4 + $0x440] sm:$0xff] %v12250
  %12395 = vst [vmem:[%s4 + $0x448] sm:$0xff] %v12251
  %12396 = vst [vmem:[%s4 + $0x450] sm:$0xff] %v12252
  %12397 = vst [vmem:[%s4 + $0x458] sm:$0xff] %v12253
  %12398 = vst [vmem:[%s4 + $0x460] sm:$0xff] %v12254
  %12399 = vst [vmem:[%s4 + $0x468] sm:$0xff] %v12255
  %12400 = vst [vmem:[%s4 + $0x470] sm:$0xff] %v12256
  %12401 = vst [vmem:[%s4 + $0x478] sm:$0xff] %v12257
  // Predicated region
  $region18: #{model_forward.1} parent=0 // pred_check
    _
  $region19: #{model_forward.1} parent=0 // pred_check_branch
    %12403 = sbr.rel (0) target = $region21
  $region20: #{model_forward.1} parent=0 // pred_region
    _
  $region21: #{model_forward.1} parent=0 // pred_fallthru
    _
  // Predicated region
  $region22: #{model_forward.1} parent=0 // pred_check
    _
  $region23: #{model_forward.1} parent=0 // pred_check_branch
    %12405 = sbr.rel (0) target = $region25
  $region24: #{model_forward.1} parent=0 // pred_region
    _
  $region25: #{model_forward.1} parent=0 // pred_fallthru
    _

</llo_original>
